<compile_context>
chip_gen: v7x
topology: tpu7x:2x2x1
jax: 0.10.0
libtpu: 0.0.40
codegen_flags: <defaults>
</compile_context>

<pallas_src>
import functools

import jax
import jax.numpy as jnp
from jax import lax
from jax.experimental import pallas as pl
from jax.experimental.pallas import tpu as pltpu

SEQ = 4096          # hard-coded in the PyTorch forward (reshape(-1, 4096))
INPUT_SIZE = 3
HIDDEN = 1
NUM_LAYERS = 2
OUT_FEATURES = 1
LSTM_UNROLL = 16    # steps per group; multiple of 8, keeps vreg pressure < 64
# Set to jnp.bfloat16 to halve lin1's HBM weight traffic (slight numerics change).
LIN1_WEIGHT_DTYPE = jnp.float32


# --------------------------------------------------------------------------
# Pallas kernel 1: fused bidirectional LSTM layer recurrence (hidden size == 1)
#
# z_ref:   (T, 4, C) packed gate pre-activations, rows = [i, f, g, o] per step,
#          C = 2*B chains on lanes (lanes [0:B] = forward direction, lanes
#          [B:2B] = reverse direction with its time axis pre-reversed by the
#          wrapper).  i/f/o rows are pre-scaled by 0.5 (tanh-form sigmoid).
# whh_ref: (4, C) per-chain recurrent weights (i/f/o rows pre-scaled by 0.5).
# o_ref:   (T, C) hidden state per loop step per chain.
# --------------------------------------------------------------------------
def _lstm_fused_kernel(z_ref, whh_ref, o_ref, *, unroll):
    T, _, C = z_ref.shape
    whh = whh_ref[...]                              # (4, C), loaded once

    def group(g, carry):
        h, c = carry                                # (1, C) each
        base = pl.multiple_of(g * unroll, unroll)
        # One aligned load per group instead of 4 masked loads per step.
        zg = z_ref[pl.ds(base, unroll), :, :]       # (unroll, 4, C)
        hs = []
        for u in range(unroll):                     # statically unrolled
            zt = zg[u]                              # (4, C)
            # All four gates in ONE EUP push:
            #   sigmoid(v) = 0.5*tanh(0.5*v) + 0.5 (0.5 arg-scale pre-folded).
            t4 = jnp.tanh(zt + h * whh)             # (4, C)
            i = t4[0:1] * 0.5 + 0.5
            f = t4[1:2] * 0.5 + 0.5
            gg = t4[2:3]                            # cell gate keeps plain tanh
            o = t4[3:4] * 0.5 + 0.5
            c = f * c + i * gg
            h = o * jnp.tanh(c)
            hs.append(h)
        # One store per group instead of `unroll` masked single-row stores.
        o_ref[pl.ds(base, unroll), :] = jnp.concatenate(hs, axis=0)
        return h, c

    h0 = jnp.zeros((1, C), jnp.float32)
    c0 = jnp.zeros((1, C), jnp.float32)
    lax.fori_loop(0, T // unroll, group, (h0, c0))


def lstm_bidir_layer_pallas(x_seq, p_fwd, p_bwd, *, unroll=LSTM_UNROLL):
    """One bidirectional LSTM layer (hidden=1).  x_seq: (B, T, Din) -> (B, T, 2)."""
    B, T, _ = x_seq.shape
    C = 2 * B  # independent chains: [fwd batch 0..B-1, rev batch 0..B-1]
    while unroll > 1 and T % unroll:
        unroll //= 2

    # Input projection is tiny (Din in {3, 2}); done in plain JAX as glue.
    def preact(p, xs):
        z = jnp.einsum("btd,gd->tgb", xs, p["w_ih"])           # (T, 4, B)
        return z + (p["b_ih"] + p["b_hh"])[None, :, None]

    # Reverse-direction chains consume the time-reversed input; the kernel then
    # runs every chain forward in loop time and the wrapper un-reverses below.
    z = jnp.concatenate(
        [preact(p_fwd, x_seq), preact(p_bwd, x_seq[:, ::-1, :])], axis=-1)  # (T, 4, C)
    whh = jnp.concatenate(
        [jnp.tile(p_fwd["w_hh"], (1, B)), jnp.tile(p_bwd["w_hh"], (1, B))],
        axis=1)                                                 # (4, C)

    # Fold the 0.5 of sigmoid(v) = 0.5*tanh(0.5*v)+0.5 into the i/f/o gate
    # pre-activations and recurrent weights (g keeps a plain tanh).
    gate_scale = jnp.array([0.5, 0.5, 1.0, 0.5], jnp.float32)
    z = (z * gate_scale[None, :, None]).astype(jnp.float32)     # (T, 4, C)
    whh = (whh * gate_scale[:, None]).astype(jnp.float32)       # (4, C)

    h_seq = pl.pallas_call(
        functools.partial(_lstm_fused_kernel, unroll=unroll),
        out_shape=jax.ShapeDtypeStruct((T, C), jnp.float32),
        in_specs=[pl.BlockSpec(memory_space=pltpu.MemorySpace.VMEM)] * 2,
        out_specs=pl.BlockSpec(memory_space=pltpu.MemorySpace.VMEM),
        # ~18 MiB padded residency; 32 MiB scoped limit is safe on v5e/v6e/v7x.
        compiler_params=pltpu.CompilerParams(
            vmem_limit_bytes=32 * 1024 * 1024),
    )(z, whh)

    hf = jnp.transpose(h_seq[:, 0:B])             # (B, T)  forward hidden
    hb = jnp.transpose(h_seq[::-1, B:2 * B])      # un-reverse the reverse chains
    return jnp.stack([hf, hb], axis=-1)           # (B, T, 2) like PyTorch's output


# --------------------------------------------------------------------------
# Pallas kernel 2: tiled Linear (y = x @ W + b), accumulating into the
# resident output block across the K grid axis (used for lin1).
# --------------------------------------------------------------------------
def _linear_kernel(x_ref, w_ref, b_ref, o_ref):
    @pl.when(pl.program_id(1) == 0)
    def _():
        o_ref[...] = jnp.broadcast_to(b_ref[...], o_ref.shape)  # bias init

    o_ref[...] += jnp.dot(x_ref[...].astype(w_ref.dtype), w_ref[...],
                          preferred_element_type=jnp.float32)


def linear_pallas(x, w, b, *, tn=1024, tk=2048):
    """x: (M, K) f32, w: (K, N) f32/bf16, b: (N,) f32 -> (M, N) f32."""
    M, K = x.shape
    Kw, N = w.shape
    assert K == Kw
    tn = min(tn, N)
    tk = min(tk, K)
    grid = (pl.cdiv(N, tn), pl.cdiv(K, tk))
    return pl.pallas_call(
        _linear_kernel,
        out_shape=jax.ShapeDtypeStruct((M, N), jnp.float32),
        grid=grid,
        in_specs=[
            pl.BlockSpec((M, tk), lambda n, k: (0, k)),
            pl.BlockSpec((tk, tn), lambda n, k: (k, n)),
            pl.BlockSpec((1, tn), lambda n, k: (0, n)),
        ],
        out_specs=pl.BlockSpec((M, tn), lambda n, k: (0, n)),
        compiler_params=pltpu.CompilerParams(
            dimension_semantics=("parallel", "arbitrary"),
            # 8 MiB weight tile x2 buffers + small blocks (~17 MiB) fits the
            # 32 MiB scoped VMEM on every generation (incl. v7x's 64 MiB phys).
            vmem_limit_bytes=32 * 1024 * 1024),
    )(x, w, b.reshape(1, N))


# --------------------------------------------------------------------------
# Pallas kernel 3: fused head  relu(x @ W2 + b2) @ W3 + b3  (lin2 + lin3)
# --------------------------------------------------------------------------
def _mlp_head_kernel(x_ref, w2_ref, b2_ref, w3_ref, b3_ref, o_ref):
    h = jnp.dot(x_ref[...], w2_ref[...], preferred_element_type=jnp.float32)
    h = jnp.maximum(h + b2_ref[...], 0.0)
    # TODO(synk): F.dropout(p=0.5) is identity in eval mode.
    y = jnp.dot(h, w3_ref[...], preferred_element_type=jnp.float32) + b3_ref[...]
    o_ref[...] = y.astype(o_ref.dtype)


def mlp_head_pallas(x, w2, b2, w3, b3):
    M = x.shape[0]
    N3 = w3.shape[1]
    return pl.pallas_call(
        _mlp_head_kernel,
        out_shape=jax.ShapeDtypeStruct((M, N3), jnp.float32),
        in_specs=[pl.BlockSpec(memory_space=pltpu.MemorySpace.VMEM)] * 5,
        out_specs=pl.BlockSpec(memory_space=pltpu.MemorySpace.VMEM),
    )(x, w2, b2.reshape(1, -1), w3, b3.reshape(1, -1))


# --------------------------------------------------------------------------
# Parameters (deterministic, synthetic) and the full forward pass
# --------------------------------------------------------------------------
def init_params(key):
    def uniform(k, shape, scale):
        return jax.random.uniform(k, shape, jnp.float32, -scale, scale)

    keys = jax.random.split(key, 32)
    ki = iter(keys)
    params = {}

    lstm = []
    for layer in range(NUM_LAYERS):
        din = INPUT_SIZE if layer == 0 else 2 * HIDDEN
        scale = 1.0 / float(HIDDEN) ** 0.5
        dirs = []
        for _ in range(2):  # forward, reverse
            dirs.append(dict(
                w_ih=uniform(next(ki), (4 * HIDDEN, din), scale),
                w_hh=uniform(next(ki), (4 * HIDDEN, HIDDEN), scale),
                b_ih=uniform(next(ki), (4 * HIDDEN,), scale),
                b_hh=uniform(next(ki), (4 * HIDDEN,), scale),
            ))
        lstm.append(dirs)
    params["lstm"] = lstm

    def linear(kw, kb, fin, fout):
        s = 1.0 / float(fin) ** 0.5
        return dict(w=uniform(kw, (fin, fout), s), b=uniform(kb, (fout,), s))

    # lin1 in_features = 2*SEQ = 8192 (see TODO(synk) above).
    params["lin1"] = linear(next(ki), next(ki), 2 * SEQ, 2048)
    params["lin1"]["w"] = params["lin1"]["w"].astype(LIN1_WEIGHT_DTYPE)
    params["lin2"] = linear(next(ki), next(ki), 2048, 512)
    params["lin3"] = linear(next(ki), next(ki), 512, OUT_FEATURES)
    return params


def net_lstm_forward(params, pos, batch):
    batch_size = batch.reshape(-1, SEQ).shape[0]
    x = pos.reshape(batch_size, SEQ, -1).astype(jnp.float32)  # (B, T, 3)

    h = x
    for layer in range(NUM_LAYERS):
        p_f, p_b = params["lstm"][layer]
        h = lstm_bidir_layer_pallas(h, p_f, p_b)              # (B, T, 2)
        # TODO(synk): inter-layer dropout(p=0.3) is identity in eval mode.

    y = h.reshape(batch_size, -1)                             # (B, 2*T) = (B, 8192)
    y = linear_pallas(y, params["lin1"]["w"], params["lin1"]["b"])
    y = mlp_head_pallas(y, params["lin2"]["w"], params["lin2"]["b"],
                        params["lin3"]["w"], params["lin3"]["b"])
    return y                                                  # (B, OUT_FEATURES)


if __name__ == "__main__":
    key = jax.random.PRNGKey(0)
    k_pos, k_params = jax.random.split(key)

    batch_size = 2
    pos = jax.random.normal(k_pos, (batch_size * SEQ, INPUT_SIZE), jnp.float32)
    batch = jnp.repeat(jnp.arange(batch_size, dtype=jnp.int32), SEQ)

    params = init_params(k_params)

    fwd = jax.jit(net_lstm_forward)
    out = jax.block_until_ready(fwd(params, pos, batch))
    assert out.shape == (batch_size, OUT_FEATURES)
    assert bool(jnp.all(jnp.isfinite(out)))
    print("KERNEL_OK")
</pallas_src>

<mosaic_0001>
module attributes {stable_mosaic.version = 11 : i64} {
  func.func @_lstm_fused_kernel(%arg0: memref<4096x4x4xf32, #tpu.memory_space<vmem>>, %arg1: memref<4x4xf32, #tpu.memory_space<vmem>>, %arg2: memref<4096x4xf32, #tpu.memory_space<vmem>>) attributes {dimension_semantics = [], scalar_prefetch = 0 : i64, scratch_operands = 0 : i64, tpu.core_type = #tpu.core_type<tc>} {
    %c0 = arith.constant 0 : index
    %c0_0 = arith.constant 0 : index
    %0 = vector.load %arg1[%c0, %c0_0] : memref<4x4xf32, #tpu.memory_space<vmem>>, vector<4x4xf32>
    %cst = arith.constant 0.000000e+00 : f32
    %1 = vector.broadcast %cst : f32 to vector<1x4xf32>
    %cst_1 = arith.constant 0.000000e+00 : f32
    %2 = vector.broadcast %cst_1 : f32 to vector<1x4xf32>
    %c0_i32 = arith.constant 0 : i32
    %c256_i32 = arith.constant 256 : i32
    %3 = arith.addi %c0_i32, %c256_i32 : i32
    %c1_i32 = arith.constant 1 : i32
    %4:2 = scf.for %arg3 = %c0_i32 to %3 step %c1_i32 iter_args(%arg4 = %1, %arg5 = %2) -> (vector<1x4xf32>, vector<1x4xf32>)  : i32 {
      %c16_i32 = arith.constant 16 : i32
      %5 = arith.muli %arg3, %c16_i32 : i32
      %6 = tpu.assume_multiple %5, 16 : i32
      %7 = arith.index_cast %6 : i32 to index
      %c0_3 = arith.constant 0 : index
      %c0_4 = arith.constant 0 : index
      %8 = vector.load %arg0[%7, %c0_3, %c0_4] : memref<4096x4x4xf32, #tpu.memory_space<vmem>>, vector<16x4x4xf32>
      %9 = vector.extract_strided_slice %8 {offsets = [0, 0, 0], sizes = [1, 4, 4], strides = [1, 1, 1]} : vector<16x4x4xf32> to vector<1x4x4xf32>
      %10 = vector.shape_cast %9 : vector<1x4x4xf32> to vector<4x4xf32>
      %11 = vector.broadcast %arg4 : vector<1x4xf32> to vector<4x4xf32>
      %12 = arith.mulf %11, %0 : vector<4x4xf32>
      %13 = arith.addf %10, %12 : vector<4x4xf32>
      %14 = math.tanh %13 : vector<4x4xf32>
      %15 = vector.extract_strided_slice %14 {offsets = [0, 0], sizes = [1, 4], strides = [1, 1]} : vector<4x4xf32> to vector<1x4xf32>
      %cst_5 = arith.constant 5.000000e-01 : f32
      %16 = vector.broadcast %cst_5 : f32 to vector<1x4xf32>
      %17 = arith.mulf %15, %16 : vector<1x4xf32>
      %cst_6 = arith.constant 5.000000e-01 : f32
      %18 = vector.broadcast %cst_6 : f32 to vector<1x4xf32>
      %19 = arith.addf %17, %18 : vector<1x4xf32>
      %20 = vector.extract_strided_slice %14 {offsets = [1, 0], sizes = [1, 4], strides = [1, 1]} : vector<4x4xf32> to vector<1x4xf32>
      %cst_7 = arith.constant 5.000000e-01 : f32
      %21 = vector.broadcast %cst_7 : f32 to vector<1x4xf32>
      %22 = arith.mulf %20, %21 : vector<1x4xf32>
      %cst_8 = arith.constant 5.000000e-01 : f32
      %23 = vector.broadcast %cst_8 : f32 to vector<1x4xf32>
      %24 = arith.addf %22, %23 : vector<1x4xf32>
      %25 = vector.extract_strided_slice %14 {offsets = [2, 0], sizes = [1, 4], strides = [1, 1]} : vector<4x4xf32> to vector<1x4xf32>
      %26 = vector.extract_strided_slice %14 {offsets = [3, 0], sizes = [1, 4], strides = [1, 1]} : vector<4x4xf32> to vector<1x4xf32>
      %cst_9 = arith.constant 5.000000e-01 : f32
      %27 = vector.broadcast %cst_9 : f32 to vector<1x4xf32>
      %28 = arith.mulf %26, %27 : vector<1x4xf32>
      %cst_10 = arith.constant 5.000000e-01 : f32
      %29 = vector.broadcast %cst_10 : f32 to vector<1x4xf32>
      %30 = arith.addf %28, %29 : vector<1x4xf32>
      %31 = arith.mulf %24, %arg5 : vector<1x4xf32>
      %32 = arith.mulf %19, %25 : vector<1x4xf32>
      %33 = arith.addf %31, %32 : vector<1x4xf32>
      %34 = math.tanh %33 : vector<1x4xf32>
      %35 = arith.mulf %30, %34 : vector<1x4xf32>
      %36 = vector.extract_strided_slice %8 {offsets = [1, 0, 0], sizes = [1, 4, 4], strides = [1, 1, 1]} : vector<16x4x4xf32> to vector<1x4x4xf32>
      %37 = vector.shape_cast %36 : vector<1x4x4xf32> to vector<4x4xf32>
      %38 = vector.broadcast %35 : vector<1x4xf32> to vector<4x4xf32>
      %39 = arith.mulf %38, %0 : vector<4x4xf32>
      %40 = arith.addf %37, %39 : vector<4x4xf32>
      %41 = math.tanh %40 : vector<4x4xf32>
      %42 = vector.extract_strided_slice %41 {offsets = [0, 0], sizes = [1, 4], strides = [1, 1]} : vector<4x4xf32> to vector<1x4xf32>
      %cst_11 = arith.constant 5.000000e-01 : f32
      %43 = vector.broadcast %cst_11 : f32 to vector<1x4xf32>
      %44 = arith.mulf %42, %43 : vector<1x4xf32>
      %cst_12 = arith.constant 5.000000e-01 : f32
      %45 = vector.broadcast %cst_12 : f32 to vector<1x4xf32>
      %46 = arith.addf %44, %45 : vector<1x4xf32>
      %47 = vector.extract_strided_slice %41 {offsets = [1, 0], sizes = [1, 4], strides = [1, 1]} : vector<4x4xf32> to vector<1x4xf32>
      %cst_13 = arith.constant 5.000000e-01 : f32
      %48 = vector.broadcast %cst_13 : f32 to vector<1x4xf32>
      %49 = arith.mulf %47, %48 : vector<1x4xf32>
      %cst_14 = arith.constant 5.000000e-01 : f32
      %50 = vector.broadcast %cst_14 : f32 to vector<1x4xf32>
      %51 = arith.addf %49, %50 : vector<1x4xf32>
      %52 = vector.extract_strided_slice %41 {offsets = [2, 0], sizes = [1, 4], strides = [1, 1]} : vector<4x4xf32> to vector<1x4xf32>
      %53 = vector.extract_strided_slice %41 {offsets = [3, 0], sizes = [1, 4], strides = [1, 1]} : vector<4x4xf32> to vector<1x4xf32>
      %cst_15 = arith.constant 5.000000e-01 : f32
      %54 = vector.broadcast %cst_15 : f32 to vector<1x4xf32>
      %55 = arith.mulf %53, %54 : vector<1x4xf32>
      %cst_16 = arith.constant 5.000000e-01 : f32
      %56 = vector.broadcast %cst_16 : f32 to vector<1x4xf32>
      %57 = arith.addf %55, %56 : vector<1x4xf32>
      %58 = arith.mulf %51, %33 : vector<1x4xf32>
      %59 = arith.mulf %46, %52 : vector<1x4xf32>
      %60 = arith.addf %58, %59 : vector<1x4xf32>
      %61 = math.tanh %60 : vector<1x4xf32>
      %62 = arith.mulf %57, %61 : vector<1x4xf32>
      %63 = vector.extract_strided_slice %8 {offsets = [2, 0, 0], sizes = [1, 4, 4], strides = [1, 1, 1]} : vector<16x4x4xf32> to vector<1x4x4xf32>
      %64 = vector.shape_cast %63 : vector<1x4x4xf32> to vector<4x4xf32>
      %65 = vector.broadcast %62 : vector<1x4xf32> to vector<4x4xf32>
      %66 = arith.mulf %65, %0 : vector<4x4xf32>
      %67 = arith.addf %64, %66 : vector<4x4xf32>
      %68 = math.tanh %67 : vector<4x4xf32>
      %69 = vector.extract_strided_slice %68 {offsets = [0, 0], sizes = [1, 4], strides = [1, 1]} : vector<4x4xf32> to vector<1x4xf32>
      %cst_17 = arith.constant 5.000000e-01 : f32
      %70 = vector.broadcast %cst_17 : f32 to vector<1x4xf32>
      %71 = arith.mulf %69, %70 : vector<1x4xf32>
      %cst_18 = arith.constant 5.000000e-01 : f32
      %72 = vector.broadcast %cst_18 : f32 to vector<1x4xf32>
      %73 = arith.addf %71, %72 : vector<1x4xf32>
      %74 = vector.extract_strided_slice %68 {offsets = [1, 0], sizes = [1, 4], strides = [1, 1]} : vector<4x4xf32> to vector<1x4xf32>
      %cst_19 = arith.constant 5.000000e-01 : f32
      %75 = vector.broadcast %cst_19 : f32 to vector<1x4xf32>
      %76 = arith.mulf %74, %75 : vector<1x4xf32>
      %cst_20 = arith.constant 5.000000e-01 : f32
      %77 = vector.broadcast %cst_20 : f32 to vector<1x4xf32>
      %78 = arith.addf %76, %77 : vector<1x4xf32>
      %79 = vector.extract_strided_slice %68 {offsets = [2, 0], sizes = [1, 4], strides = [1, 1]} : vector<4x4xf32> to vector<1x4xf32>
      %80 = vector.extract_strided_slice %68 {offsets = [3, 0], sizes = [1, 4], strides = [1, 1]} : vector<4x4xf32> to vector<1x4xf32>
      %cst_21 = arith.constant 5.000000e-01 : f32
      %81 = vector.broadcast %cst_21 : f32 to vector<1x4xf32>
      %82 = arith.mulf %80, %81 : vector<1x4xf32>
      %cst_22 = arith.constant 5.000000e-01 : f32
      %83 = vector.broadcast %cst_22 : f32 to vector<1x4xf32>
      %84 = arith.addf %82, %83 : vector<1x4xf32>
      %85 = arith.mulf %78, %60 : vector<1x4xf32>
      %86 = arith.mulf %73, %79 : vector<1x4xf32>
      %87 = arith.addf %85, %86 : vector<1x4xf32>
      %88 = math.tanh %87 : vector<1x4xf32>
      %89 = arith.mulf %84, %88 : vector<1x4xf32>
      %90 = vector.extract_strided_slice %8 {offsets = [3, 0, 0], sizes = [1, 4, 4], strides = [1, 1, 1]} : vector<16x4x4xf32> to vector<1x4x4xf32>
      %91 = vector.shape_cast %90 : vector<1x4x4xf32> to vector<4x4xf32>
      %92 = vector.broadcast %89 : vector<1x4xf32> to vector<4x4xf32>
      %93 = arith.mulf %92, %0 : vector<4x4xf32>
      %94 = arith.addf %91, %93 : vector<4x4xf32>
      %95 = math.tanh %94 : vector<4x4xf32>
      %96 = vector.extract_strided_slice %95 {offsets = [0, 0], sizes = [1, 4], strides = [1, 1]} : vector<4x4xf32> to vector<1x4xf32>
      %cst_23 = arith.constant 5.000000e-01 : f32
      %97 = vector.broadcast %cst_23 : f32 to vector<1x4xf32>
      %98 = arith.mulf %96, %97 : vector<1x4xf32>
      %cst_24 = arith.constant 5.000000e-01 : f32
      %99 = vector.broadcast %cst_24 : f32 to vector<1x4xf32>
      %100 = arith.addf %98, %99 : vector<1x4xf32>
      %101 = vector.extract_strided_slice %95 {offsets = [1, 0], sizes = [1, 4], strides = [1, 1]} : vector<4x4xf32> to vector<1x4xf32>
      %cst_25 = arith.constant 5.000000e-01 : f32
      %102 = vector.broadcast %cst_25 : f32 to vector<1x4xf32>
      %103 = arith.mulf %101, %102 : vector<1x4xf32>
      %cst_26 = arith.constant 5.000000e-01 : f32
      %104 = vector.broadcast %cst_26 : f32 to vector<1x4xf32>
      %105 = arith.addf %103, %104 : vector<1x4xf32>
      %106 = vector.extract_strided_slice %95 {offsets = [2, 0], sizes = [1, 4], strides = [1, 1]} : vector<4x4xf32> to vector<1x4xf32>
      %107 = vector.extract_strided_slice %95 {offsets = [3, 0], sizes = [1, 4], strides = [1, 1]} : vector<4x4xf32> to vector<1x4xf32>
      %cst_27 = arith.constant 5.000000e-01 : f32
      %108 = vector.broadcast %cst_27 : f32 to vector<1x4xf32>
      %109 = arith.mulf %107, %108 : vector<1x4xf32>
      %cst_28 = arith.constant 5.000000e-01 : f32
      %110 = vector.broadcast %cst_28 : f32 to vector<1x4xf32>
      %111 = arith.addf %109, %110 : vector<1x4xf32>
      %112 = arith.mulf %105, %87 : vector<1x4xf32>
      %113 = arith.mulf %100, %106 : vector<1x4xf32>
      %114 = arith.addf %112, %113 : vector<1x4xf32>
      %115 = math.tanh %114 : vector<1x4xf32>
      %116 = arith.mulf %111, %115 : vector<1x4xf32>
      %117 = vector.extract_strided_slice %8 {offsets = [4, 0, 0], sizes = [1, 4, 4], strides = [1, 1, 1]} : vector<16x4x4xf32> to vector<1x4x4xf32>
      %118 = vector.shape_cast %117 : vector<1x4x4xf32> to vector<4x4xf32>
      %119 = vector.broadcast %116 : vector<1x4xf32> to vector<4x4xf32>
      %120 = arith.mulf %119, %0 : vector<4x4xf32>
      %121 = arith.addf %118, %120 : vector<4x4xf32>
      %122 = math.tanh %121 : vector<4x4xf32>
      %123 = vector.extract_strided_slice %122 {offsets = [0, 0], sizes = [1, 4], strides = [1, 1]} : vector<4x4xf32> to vector<1x4xf32>
      %cst_29 = arith.constant 5.000000e-01 : f32
      %124 = vector.broadcast %cst_29 : f32 to vector<1x4xf32>
      %125 = arith.mulf %123, %124 : vector<1x4xf32>
      %cst_30 = arith.constant 5.000000e-01 : f32
      %126 = vector.broadcast %cst_30 : f32 to vector<1x4xf32>
      %127 = arith.addf %125, %126 : vector<1x4xf32>
      %128 = vector.extract_strided_slice %122 {offsets = [1, 0], sizes = [1, 4], strides = [1, 1]} : vector<4x4xf32> to vector<1x4xf32>
      %cst_31 = arith.constant 5.000000e-01 : f32
      %129 = vector.broadcast %cst_31 : f32 to vector<1x4xf32>
      %130 = arith.mulf %128, %129 : vector<1x4xf32>
      %cst_32 = arith.constant 5.000000e-01 : f32
      %131 = vector.broadcast %cst_32 : f32 to vector<1x4xf32>
      %132 = arith.addf %130, %131 : vector<1x4xf32>
      %133 = vector.extract_strided_slice %122 {offsets = [2, 0], sizes = [1, 4], strides = [1, 1]} : vector<4x4xf32> to vector<1x4xf32>
      %134 = vector.extract_strided_slice %122 {offsets = [3, 0], sizes = [1, 4], strides = [1, 1]} : vector<4x4xf32> to vector<1x4xf32>
      %cst_33 = arith.constant 5.000000e-01 : f32
      %135 = vector.broadcast %cst_33 : f32 to vector<1x4xf32>
      %136 = arith.mulf %134, %135 : vector<1x4xf32>
      %cst_34 = arith.constant 5.000000e-01 : f32
      %137 = vector.broadcast %cst_34 : f32 to vector<1x4xf32>
      %138 = arith.addf %136, %137 : vector<1x4xf32>
      %139 = arith.mulf %132, %114 : vector<1x4xf32>
      %140 = arith.mulf %127, %133 : vector<1x4xf32>
      %141 = arith.addf %139, %140 : vector<1x4xf32>
      %142 = math.tanh %141 : vector<1x4xf32>
      %143 = arith.mulf %138, %142 : vector<1x4xf32>
      %144 = vector.extract_strided_slice %8 {offsets = [5, 0, 0], sizes = [1, 4, 4], strides = [1, 1, 1]} : vector<16x4x4xf32> to vector<1x4x4xf32>
      %145 = vector.shape_cast %144 : vector<1x4x4xf32> to vector<4x4xf32>
      %146 = vector.broadcast %143 : vector<1x4xf32> to vector<4x4xf32>
      %147 = arith.mulf %146, %0 : vector<4x4xf32>
      %148 = arith.addf %145, %147 : vector<4x4xf32>
      %149 = math.tanh %148 : vector<4x4xf32>
      %150 = vector.extract_strided_slice %149 {offsets = [0, 0], sizes = [1, 4], strides = [1, 1]} : vector<4x4xf32> to vector<1x4xf32>
      %cst_35 = arith.constant 5.000000e-01 : f32
      %151 = vector.broadcast %cst_35 : f32 to vector<1x4xf32>
      %152 = arith.mulf %150, %151 : vector<1x4xf32>
      %cst_36 = arith.constant 5.000000e-01 : f32
      %153 = vector.broadcast %cst_36 : f32 to vector<1x4xf32>
      %154 = arith.addf %152, %153 : vector<1x4xf32>
      %155 = vector.extract_strided_slice %149 {offsets = [1, 0], sizes = [1, 4], strides = [1, 1]} : vector<4x4xf32> to vector<1x4xf32>
      %cst_37 = arith.constant 5.000000e-01 : f32
      %156 = vector.broadcast %cst_37 : f32 to vector<1x4xf32>
      %157 = arith.mulf %155, %156 : vector<1x4xf32>
      %cst_38 = arith.constant 5.000000e-01 : f32
      %158 = vector.broadcast %cst_38 : f32 to vector<1x4xf32>
      %159 = arith.addf %157, %158 : vector<1x4xf32>
      %160 = vector.extract_strided_slice %149 {offsets = [2, 0], sizes = [1, 4], strides = [1, 1]} : vector<4x4xf32> to vector<1x4xf32>
      %161 = vector.extract_strided_slice %149 {offsets = [3, 0], sizes = [1, 4], strides = [1, 1]} : vector<4x4xf32> to vector<1x4xf32>
      %cst_39 = arith.constant 5.000000e-01 : f32
      %162 = vector.broadcast %cst_39 : f32 to vector<1x4xf32>
      %163 = arith.mulf %161, %162 : vector<1x4xf32>
      %cst_40 = arith.constant 5.000000e-01 : f32
      %164 = vector.broadcast %cst_40 : f32 to vector<1x4xf32>
      %165 = arith.addf %163, %164 : vector<1x4xf32>
      %166 = arith.mulf %159, %141 : vector<1x4xf32>
      %167 = arith.mulf %154, %160 : vector<1x4xf32>
      %168 = arith.addf %166, %167 : vector<1x4xf32>
      %169 = math.tanh %168 : vector<1x4xf32>
      %170 = arith.mulf %165, %169 : vector<1x4xf32>
      %171 = vector.extract_strided_slice %8 {offsets = [6, 0, 0], sizes = [1, 4, 4], strides = [1, 1, 1]} : vector<16x4x4xf32> to vector<1x4x4xf32>
      %172 = vector.shape_cast %171 : vector<1x4x4xf32> to vector<4x4xf32>
      %173 = vector.broadcast %170 : vector<1x4xf32> to vector<4x4xf32>
      %174 = arith.mulf %173, %0 : vector<4x4xf32>
      %175 = arith.addf %172, %174 : vector<4x4xf32>
      %176 = math.tanh %175 : vector<4x4xf32>
      %177 = vector.extract_strided_slice %176 {offsets = [0, 0], sizes = [1, 4], strides = [1, 1]} : vector<4x4xf32> to vector<1x4xf32>
      %cst_41 = arith.constant 5.000000e-01 : f32
      %178 = vector.broadcast %cst_41 : f32 to vector<1x4xf32>
      %179 = arith.mulf %177, %178 : vector<1x4xf32>
      %cst_42 = arith.constant 5.000000e-01 : f32
      %180 = vector.broadcast %cst_42 : f32 to vector<1x4xf32>
      %181 = arith.addf %179, %180 : vector<1x4xf32>
      %182 = vector.extract_strided_slice %176 {offsets = [1, 0], sizes = [1, 4], strides = [1, 1]} : vector<4x4xf32> to vector<1x4xf32>
      %cst_43 = arith.constant 5.000000e-01 : f32
      %183 = vector.broadcast %cst_43 : f32 to vector<1x4xf32>
      %184 = arith.mulf %182, %183 : vector<1x4xf32>
      %cst_44 = arith.constant 5.000000e-01 : f32
      %185 = vector.broadcast %cst_44 : f32 to vector<1x4xf32>
      %186 = arith.addf %184, %185 : vector<1x4xf32>
      %187 = vector.extract_strided_slice %176 {offsets = [2, 0], sizes = [1, 4], strides = [1, 1]} : vector<4x4xf32> to vector<1x4xf32>
      %188 = vector.extract_strided_slice %176 {offsets = [3, 0], sizes = [1, 4], strides = [1, 1]} : vector<4x4xf32> to vector<1x4xf32>
      %cst_45 = arith.constant 5.000000e-01 : f32
      %189 = vector.broadcast %cst_45 : f32 to vector<1x4xf32>
      %190 = arith.mulf %188, %189 : vector<1x4xf32>
      %cst_46 = arith.constant 5.000000e-01 : f32
      %191 = vector.broadcast %cst_46 : f32 to vector<1x4xf32>
      %192 = arith.addf %190, %191 : vector<1x4xf32>
      %193 = arith.mulf %186, %168 : vector<1x4xf32>
      %194 = arith.mulf %181, %187 : vector<1x4xf32>
      %195 = arith.addf %193, %194 : vector<1x4xf32>
      %196 = math.tanh %195 : vector<1x4xf32>
      %197 = arith.mulf %192, %196 : vector<1x4xf32>
      %198 = vector.extract_strided_slice %8 {offsets = [7, 0, 0], sizes = [1, 4, 4], strides = [1, 1, 1]} : vector<16x4x4xf32> to vector<1x4x4xf32>
      %199 = vector.shape_cast %198 : vector<1x4x4xf32> to vector<4x4xf32>
      %200 = vector.broadcast %197 : vector<1x4xf32> to vector<4x4xf32>
      %201 = arith.mulf %200, %0 : vector<4x4xf32>
      %202 = arith.addf %199, %201 : vector<4x4xf32>
      %203 = math.tanh %202 : vector<4x4xf32>
      %204 = vector.extract_strided_slice %203 {offsets = [0, 0], sizes = [1, 4], strides = [1, 1]} : vector<4x4xf32> to vector<1x4xf32>
      %cst_47 = arith.constant 5.000000e-01 : f32
      %205 = vector.broadcast %cst_47 : f32 to vector<1x4xf32>
      %206 = arith.mulf %204, %205 : vector<1x4xf32>
      %cst_48 = arith.constant 5.000000e-01 : f32
      %207 = vector.broadcast %cst_48 : f32 to vector<1x4xf32>
      %208 = arith.addf %206, %207 : vector<1x4xf32>
      %209 = vector.extract_strided_slice %203 {offsets = [1, 0], sizes = [1, 4], strides = [1, 1]} : vector<4x4xf32> to vector<1x4xf32>
      %cst_49 = arith.constant 5.000000e-01 : f32
      %210 = vector.broadcast %cst_49 : f32 to vector<1x4xf32>
      %211 = arith.mulf %209, %210 : vector<1x4xf32>
      %cst_50 = arith.constant 5.000000e-01 : f32
      %212 = vector.broadcast %cst_50 : f32 to vector<1x4xf32>
      %213 = arith.addf %211, %212 : vector<1x4xf32>
      %214 = vector.extract_strided_slice %203 {offsets = [2, 0], sizes = [1, 4], strides = [1, 1]} : vector<4x4xf32> to vector<1x4xf32>
      %215 = vector.extract_strided_slice %203 {offsets = [3, 0], sizes = [1, 4], strides = [1, 1]} : vector<4x4xf32> to vector<1x4xf32>
      %cst_51 = arith.constant 5.000000e-01 : f32
      %216 = vector.broadcast %cst_51 : f32 to vector<1x4xf32>
      %217 = arith.mulf %215, %216 : vector<1x4xf32>
      %cst_52 = arith.constant 5.000000e-01 : f32
      %218 = vector.broadcast %cst_52 : f32 to vector<1x4xf32>
      %219 = arith.addf %217, %218 : vector<1x4xf32>
      %220 = arith.mulf %213, %195 : vector<1x4xf32>
      %221 = arith.mulf %208, %214 : vector<1x4xf32>
      %222 = arith.addf %220, %221 : vector<1x4xf32>
      %223 = math.tanh %222 : vector<1x4xf32>
      %224 = arith.mulf %219, %223 : vector<1x4xf32>
      %225 = vector.extract_strided_slice %8 {offsets = [8, 0, 0], sizes = [1, 4, 4], strides = [1, 1, 1]} : vector<16x4x4xf32> to vector<1x4x4xf32>
      %226 = vector.shape_cast %225 : vector<1x4x4xf32> to vector<4x4xf32>
      %227 = vector.broadcast %224 : vector<1x4xf32> to vector<4x4xf32>
      %228 = arith.mulf %227, %0 : vector<4x4xf32>
      %229 = arith.addf %226, %228 : vector<4x4xf32>
      %230 = math.tanh %229 : vector<4x4xf32>
      %231 = vector.extract_strided_slice %230 {offsets = [0, 0], sizes = [1, 4], strides = [1, 1]} : vector<4x4xf32> to vector<1x4xf32>
      %cst_53 = arith.constant 5.000000e-01 : f32
      %232 = vector.broadcast %cst_53 : f32 to vector<1x4xf32>
      %233 = arith.mulf %231, %232 : vector<1x4xf32>
      %cst_54 = arith.constant 5.000000e-01 : f32
      %234 = vector.broadcast %cst_54 : f32 to vector<1x4xf32>
      %235 = arith.addf %233, %234 : vector<1x4xf32>
      %236 = vector.extract_strided_slice %230 {offsets = [1, 0], sizes = [1, 4], strides = [1, 1]} : vector<4x4xf32> to vector<1x4xf32>
      %cst_55 = arith.constant 5.000000e-01 : f32
      %237 = vector.broadcast %cst_55 : f32 to vector<1x4xf32>
      %238 = arith.mulf %236, %237 : vector<1x4xf32>
      %cst_56 = arith.constant 5.000000e-01 : f32
      %239 = vector.broadcast %cst_56 : f32 to vector<1x4xf32>
      %240 = arith.addf %238, %239 : vector<1x4xf32>
      %241 = vector.extract_strided_slice %230 {offsets = [2, 0], sizes = [1, 4], strides = [1, 1]} : vector<4x4xf32> to vector<1x4xf32>
      %242 = vector.extract_strided_slice %230 {offsets = [3, 0], sizes = [1, 4], strides = [1, 1]} : vector<4x4xf32> to vector<1x4xf32>
      %cst_57 = arith.constant 5.000000e-01 : f32
      %243 = vector.broadcast %cst_57 : f32 to vector<1x4xf32>
      %244 = arith.mulf %242, %243 : vector<1x4xf32>
      %cst_58 = arith.constant 5.000000e-01 : f32
      %245 = vector.broadcast %cst_58 : f32 to vector<1x4xf32>
      %246 = arith.addf %244, %245 : vector<1x4xf32>
      %247 = arith.mulf %240, %222 : vector<1x4xf32>
      %248 = arith.mulf %235, %241 : vector<1x4xf32>
      %249 = arith.addf %247, %248 : vector<1x4xf32>
      %250 = math.tanh %249 : vector<1x4xf32>
      %251 = arith.mulf %246, %250 : vector<1x4xf32>
      %252 = vector.extract_strided_slice %8 {offsets = [9, 0, 0], sizes = [1, 4, 4], strides = [1, 1, 1]} : vector<16x4x4xf32> to vector<1x4x4xf32>
      %253 = vector.shape_cast %252 : vector<1x4x4xf32> to vector<4x4xf32>
      %254 = vector.broadcast %251 : vector<1x4xf32> to vector<4x4xf32>
      %255 = arith.mulf %254, %0 : vector<4x4xf32>
      %256 = arith.addf %253, %255 : vector<4x4xf32>
      %257 = math.tanh %256 : vector<4x4xf32>
      %258 = vector.extract_strided_slice %257 {offsets = [0, 0], sizes = [1, 4], strides = [1, 1]} : vector<4x4xf32> to vector<1x4xf32>
      %cst_59 = arith.constant 5.000000e-01 : f32
      %259 = vector.broadcast %cst_59 : f32 to vector<1x4xf32>
      %260 = arith.mulf %258, %259 : vector<1x4xf32>
      %cst_60 = arith.constant 5.000000e-01 : f32
      %261 = vector.broadcast %cst_60 : f32 to vector<1x4xf32>
      %262 = arith.addf %260, %261 : vector<1x4xf32>
      %263 = vector.extract_strided_slice %257 {offsets = [1, 0], sizes = [1, 4], strides = [1, 1]} : vector<4x4xf32> to vector<1x4xf32>
      %cst_61 = arith.constant 5.000000e-01 : f32
      %264 = vector.broadcast %cst_61 : f32 to vector<1x4xf32>
      %265 = arith.mulf %263, %264 : vector<1x4xf32>
      %cst_62 = arith.constant 5.000000e-01 : f32
      %266 = vector.broadcast %cst_62 : f32 to vector<1x4xf32>
      %267 = arith.addf %265, %266 : vector<1x4xf32>
      %268 = vector.extract_strided_slice %257 {offsets = [2, 0], sizes = [1, 4], strides = [1, 1]} : vector<4x4xf32> to vector<1x4xf32>
      %269 = vector.extract_strided_slice %257 {offsets = [3, 0], sizes = [1, 4], strides = [1, 1]} : vector<4x4xf32> to vector<1x4xf32>
      %cst_63 = arith.constant 5.000000e-01 : f32
      %270 = vector.broadcast %cst_63 : f32 to vector<1x4xf32>
      %271 = arith.mulf %269, %270 : vector<1x4xf32>
      %cst_64 = arith.constant 5.000000e-01 : f32
      %272 = vector.broadcast %cst_64 : f32 to vector<1x4xf32>
      %273 = arith.addf %271, %272 : vector<1x4xf32>
      %274 = arith.mulf %267, %249 : vector<1x4xf32>
      %275 = arith.mulf %262, %268 : vector<1x4xf32>
      %276 = arith.addf %274, %275 : vector<1x4xf32>
      %277 = math.tanh %276 : vector<1x4xf32>
      %278 = arith.mulf %273, %277 : vector<1x4xf32>
      %279 = vector.extract_strided_slice %8 {offsets = [10, 0, 0], sizes = [1, 4, 4], strides = [1, 1, 1]} : vector<16x4x4xf32> to vector<1x4x4xf32>
      %280 = vector.shape_cast %279 : vector<1x4x4xf32> to vector<4x4xf32>
      %281 = vector.broadcast %278 : vector<1x4xf32> to vector<4x4xf32>
      %282 = arith.mulf %281, %0 : vector<4x4xf32>
      %283 = arith.addf %280, %282 : vector<4x4xf32>
      %284 = math.tanh %283 : vector<4x4xf32>
      %285 = vector.extract_strided_slice %284 {offsets = [0, 0], sizes = [1, 4], strides = [1, 1]} : vector<4x4xf32> to vector<1x4xf32>
      %cst_65 = arith.constant 5.000000e-01 : f32
      %286 = vector.broadcast %cst_65 : f32 to vector<1x4xf32>
      %287 = arith.mulf %285, %286 : vector<1x4xf32>
      %cst_66 = arith.constant 5.000000e-01 : f32
      %288 = vector.broadcast %cst_66 : f32 to vector<1x4xf32>
      %289 = arith.addf %287, %288 : vector<1x4xf32>
      %290 = vector.extract_strided_slice %284 {offsets = [1, 0], sizes = [1, 4], strides = [1, 1]} : vector<4x4xf32> to vector<1x4xf32>
      %cst_67 = arith.constant 5.000000e-01 : f32
      %291 = vector.broadcast %cst_67 : f32 to vector<1x4xf32>
      %292 = arith.mulf %290, %291 : vector<1x4xf32>
      %cst_68 = arith.constant 5.000000e-01 : f32
      %293 = vector.broadcast %cst_68 : f32 to vector<1x4xf32>
      %294 = arith.addf %292, %293 : vector<1x4xf32>
      %295 = vector.extract_strided_slice %284 {offsets = [2, 0], sizes = [1, 4], strides = [1, 1]} : vector<4x4xf32> to vector<1x4xf32>
      %296 = vector.extract_strided_slice %284 {offsets = [3, 0], sizes = [1, 4], strides = [1, 1]} : vector<4x4xf32> to vector<1x4xf32>
      %cst_69 = arith.constant 5.000000e-01 : f32
      %297 = vector.broadcast %cst_69 : f32 to vector<1x4xf32>
      %298 = arith.mulf %296, %297 : vector<1x4xf32>
      %cst_70 = arith.constant 5.000000e-01 : f32
      %299 = vector.broadcast %cst_70 : f32 to vector<1x4xf32>
      %300 = arith.addf %298, %299 : vector<1x4xf32>
      %301 = arith.mulf %294, %276 : vector<1x4xf32>
      %302 = arith.mulf %289, %295 : vector<1x4xf32>
      %303 = arith.addf %301, %302 : vector<1x4xf32>
      %304 = math.tanh %303 : vector<1x4xf32>
      %305 = arith.mulf %300, %304 : vector<1x4xf32>
      %306 = vector.extract_strided_slice %8 {offsets = [11, 0, 0], sizes = [1, 4, 4], strides = [1, 1, 1]} : vector<16x4x4xf32> to vector<1x4x4xf32>
      %307 = vector.shape_cast %306 : vector<1x4x4xf32> to vector<4x4xf32>
      %308 = vector.broadcast %305 : vector<1x4xf32> to vector<4x4xf32>
      %309 = arith.mulf %308, %0 : vector<4x4xf32>
      %310 = arith.addf %307, %309 : vector<4x4xf32>
      %311 = math.tanh %310 : vector<4x4xf32>
      %312 = vector.extract_strided_slice %311 {offsets = [0, 0], sizes = [1, 4], strides = [1, 1]} : vector<4x4xf32> to vector<1x4xf32>
      %cst_71 = arith.constant 5.000000e-01 : f32
      %313 = vector.broadcast %cst_71 : f32 to vector<1x4xf32>
      %314 = arith.mulf %312, %313 : vector<1x4xf32>
      %cst_72 = arith.constant 5.000000e-01 : f32
      %315 = vector.broadcast %cst_72 : f32 to vector<1x4xf32>
      %316 = arith.addf %314, %315 : vector<1x4xf32>
      %317 = vector.extract_strided_slice %311 {offsets = [1, 0], sizes = [1, 4], strides = [1, 1]} : vector<4x4xf32> to vector<1x4xf32>
      %cst_73 = arith.constant 5.000000e-01 : f32
      %318 = vector.broadcast %cst_73 : f32 to vector<1x4xf32>
      %319 = arith.mulf %317, %318 : vector<1x4xf32>
      %cst_74 = arith.constant 5.000000e-01 : f32
      %320 = vector.broadcast %cst_74 : f32 to vector<1x4xf32>
      %321 = arith.addf %319, %320 : vector<1x4xf32>
      %322 = vector.extract_strided_slice %311 {offsets = [2, 0], sizes = [1, 4], strides = [1, 1]} : vector<4x4xf32> to vector<1x4xf32>
      %323 = vector.extract_strided_slice %311 {offsets = [3, 0], sizes = [1, 4], strides = [1, 1]} : vector<4x4xf32> to vector<1x4xf32>
      %cst_75 = arith.constant 5.000000e-01 : f32
      %324 = vector.broadcast %cst_75 : f32 to vector<1x4xf32>
      %325 = arith.mulf %323, %324 : vector<1x4xf32>
      %cst_76 = arith.constant 5.000000e-01 : f32
      %326 = vector.broadcast %cst_76 : f32 to vector<1x4xf32>
      %327 = arith.addf %325, %326 : vector<1x4xf32>
      %328 = arith.mulf %321, %303 : vector<1x4xf32>
      %329 = arith.mulf %316, %322 : vector<1x4xf32>
      %330 = arith.addf %328, %329 : vector<1x4xf32>
      %331 = math.tanh %330 : vector<1x4xf32>
      %332 = arith.mulf %327, %331 : vector<1x4xf32>
      %333 = vector.extract_strided_slice %8 {offsets = [12, 0, 0], sizes = [1, 4, 4], strides = [1, 1, 1]} : vector<16x4x4xf32> to vector<1x4x4xf32>
      %334 = vector.shape_cast %333 : vector<1x4x4xf32> to vector<4x4xf32>
      %335 = vector.broadcast %332 : vector<1x4xf32> to vector<4x4xf32>
      %336 = arith.mulf %335, %0 : vector<4x4xf32>
      %337 = arith.addf %334, %336 : vector<4x4xf32>
      %338 = math.tanh %337 : vector<4x4xf32>
      %339 = vector.extract_strided_slice %338 {offsets = [0, 0], sizes = [1, 4], strides = [1, 1]} : vector<4x4xf32> to vector<1x4xf32>
      %cst_77 = arith.constant 5.000000e-01 : f32
      %340 = vector.broadcast %cst_77 : f32 to vector<1x4xf32>
      %341 = arith.mulf %339, %340 : vector<1x4xf32>
      %cst_78 = arith.constant 5.000000e-01 : f32
      %342 = vector.broadcast %cst_78 : f32 to vector<1x4xf32>
      %343 = arith.addf %341, %342 : vector<1x4xf32>
      %344 = vector.extract_strided_slice %338 {offsets = [1, 0], sizes = [1, 4], strides = [1, 1]} : vector<4x4xf32> to vector<1x4xf32>
      %cst_79 = arith.constant 5.000000e-01 : f32
      %345 = vector.broadcast %cst_79 : f32 to vector<1x4xf32>
      %346 = arith.mulf %344, %345 : vector<1x4xf32>
      %cst_80 = arith.constant 5.000000e-01 : f32
      %347 = vector.broadcast %cst_80 : f32 to vector<1x4xf32>
      %348 = arith.addf %346, %347 : vector<1x4xf32>
      %349 = vector.extract_strided_slice %338 {offsets = [2, 0], sizes = [1, 4], strides = [1, 1]} : vector<4x4xf32> to vector<1x4xf32>
      %350 = vector.extract_strided_slice %338 {offsets = [3, 0], sizes = [1, 4], strides = [1, 1]} : vector<4x4xf32> to vector<1x4xf32>
      %cst_81 = arith.constant 5.000000e-01 : f32
      %351 = vector.broadcast %cst_81 : f32 to vector<1x4xf32>
      %352 = arith.mulf %350, %351 : vector<1x4xf32>
      %cst_82 = arith.constant 5.000000e-01 : f32
      %353 = vector.broadcast %cst_82 : f32 to vector<1x4xf32>
      %354 = arith.addf %352, %353 : vector<1x4xf32>
      %355 = arith.mulf %348, %330 : vector<1x4xf32>
      %356 = arith.mulf %343, %349 : vector<1x4xf32>
      %357 = arith.addf %355, %356 : vector<1x4xf32>
      %358 = math.tanh %357 : vector<1x4xf32>
      %359 = arith.mulf %354, %358 : vector<1x4xf32>
      %360 = vector.extract_strided_slice %8 {offsets = [13, 0, 0], sizes = [1, 4, 4], strides = [1, 1, 1]} : vector<16x4x4xf32> to vector<1x4x4xf32>
      %361 = vector.shape_cast %360 : vector<1x4x4xf32> to vector<4x4xf32>
      %362 = vector.broadcast %359 : vector<1x4xf32> to vector<4x4xf32>
      %363 = arith.mulf %362, %0 : vector<4x4xf32>
      %364 = arith.addf %361, %363 : vector<4x4xf32>
      %365 = math.tanh %364 : vector<4x4xf32>
      %366 = vector.extract_strided_slice %365 {offsets = [0, 0], sizes = [1, 4], strides = [1, 1]} : vector<4x4xf32> to vector<1x4xf32>
      %cst_83 = arith.constant 5.000000e-01 : f32
      %367 = vector.broadcast %cst_83 : f32 to vector<1x4xf32>
      %368 = arith.mulf %366, %367 : vector<1x4xf32>
      %cst_84 = arith.constant 5.000000e-01 : f32
      %369 = vector.broadcast %cst_84 : f32 to vector<1x4xf32>
      %370 = arith.addf %368, %369 : vector<1x4xf32>
      %371 = vector.extract_strided_slice %365 {offsets = [1, 0], sizes = [1, 4], strides = [1, 1]} : vector<4x4xf32> to vector<1x4xf32>
      %cst_85 = arith.constant 5.000000e-01 : f32
      %372 = vector.broadcast %cst_85 : f32 to vector<1x4xf32>
      %373 = arith.mulf %371, %372 : vector<1x4xf32>
      %cst_86 = arith.constant 5.000000e-01 : f32
      %374 = vector.broadcast %cst_86 : f32 to vector<1x4xf32>
      %375 = arith.addf %373, %374 : vector<1x4xf32>
      %376 = vector.extract_strided_slice %365 {offsets = [2, 0], sizes = [1, 4], strides = [1, 1]} : vector<4x4xf32> to vector<1x4xf32>
      %377 = vector.extract_strided_slice %365 {offsets = [3, 0], sizes = [1, 4], strides = [1, 1]} : vector<4x4xf32> to vector<1x4xf32>
      %cst_87 = arith.constant 5.000000e-01 : f32
      %378 = vector.broadcast %cst_87 : f32 to vector<1x4xf32>
      %379 = arith.mulf %377, %378 : vector<1x4xf32>
      %cst_88 = arith.constant 5.000000e-01 : f32
      %380 = vector.broadcast %cst_88 : f32 to vector<1x4xf32>
      %381 = arith.addf %379, %380 : vector<1x4xf32>
      %382 = arith.mulf %375, %357 : vector<1x4xf32>
      %383 = arith.mulf %370, %376 : vector<1x4xf32>
      %384 = arith.addf %382, %383 : vector<1x4xf32>
      %385 = math.tanh %384 : vector<1x4xf32>
      %386 = arith.mulf %381, %385 : vector<1x4xf32>
      %387 = vector.extract_strided_slice %8 {offsets = [14, 0, 0], sizes = [1, 4, 4], strides = [1, 1, 1]} : vector<16x4x4xf32> to vector<1x4x4xf32>
      %388 = vector.shape_cast %387 : vector<1x4x4xf32> to vector<4x4xf32>
      %389 = vector.broadcast %386 : vector<1x4xf32> to vector<4x4xf32>
      %390 = arith.mulf %389, %0 : vector<4x4xf32>
      %391 = arith.addf %388, %390 : vector<4x4xf32>
      %392 = math.tanh %391 : vector<4x4xf32>
      %393 = vector.extract_strided_slice %392 {offsets = [0, 0], sizes = [1, 4], strides = [1, 1]} : vector<4x4xf32> to vector<1x4xf32>
      %cst_89 = arith.constant 5.000000e-01 : f32
      %394 = vector.broadcast %cst_89 : f32 to vector<1x4xf32>
      %395 = arith.mulf %393, %394 : vector<1x4xf32>
      %cst_90 = arith.constant 5.000000e-01 : f32
      %396 = vector.broadcast %cst_90 : f32 to vector<1x4xf32>
      %397 = arith.addf %395, %396 : vector<1x4xf32>
      %398 = vector.extract_strided_slice %392 {offsets = [1, 0], sizes = [1, 4], strides = [1, 1]} : vector<4x4xf32> to vector<1x4xf32>
      %cst_91 = arith.constant 5.000000e-01 : f32
      %399 = vector.broadcast %cst_91 : f32 to vector<1x4xf32>
      %400 = arith.mulf %398, %399 : vector<1x4xf32>
      %cst_92 = arith.constant 5.000000e-01 : f32
      %401 = vector.broadcast %cst_92 : f32 to vector<1x4xf32>
      %402 = arith.addf %400, %401 : vector<1x4xf32>
      %403 = vector.extract_strided_slice %392 {offsets = [2, 0], sizes = [1, 4], strides = [1, 1]} : vector<4x4xf32> to vector<1x4xf32>
      %404 = vector.extract_strided_slice %392 {offsets = [3, 0], sizes = [1, 4], strides = [1, 1]} : vector<4x4xf32> to vector<1x4xf32>
      %cst_93 = arith.constant 5.000000e-01 : f32
      %405 = vector.broadcast %cst_93 : f32 to vector<1x4xf32>
      %406 = arith.mulf %404, %405 : vector<1x4xf32>
      %cst_94 = arith.constant 5.000000e-01 : f32
      %407 = vector.broadcast %cst_94 : f32 to vector<1x4xf32>
      %408 = arith.addf %406, %407 : vector<1x4xf32>
      %409 = arith.mulf %402, %384 : vector<1x4xf32>
      %410 = arith.mulf %397, %403 : vector<1x4xf32>
      %411 = arith.addf %409, %410 : vector<1x4xf32>
      %412 = math.tanh %411 : vector<1x4xf32>
      %413 = arith.mulf %408, %412 : vector<1x4xf32>
      %414 = vector.extract_strided_slice %8 {offsets = [15, 0, 0], sizes = [1, 4, 4], strides = [1, 1, 1]} : vector<16x4x4xf32> to vector<1x4x4xf32>
      %415 = vector.shape_cast %414 : vector<1x4x4xf32> to vector<4x4xf32>
      %416 = vector.broadcast %413 : vector<1x4xf32> to vector<4x4xf32>
      %417 = arith.mulf %416, %0 : vector<4x4xf32>
      %418 = arith.addf %415, %417 : vector<4x4xf32>
      %419 = math.tanh %418 : vector<4x4xf32>
      %420 = vector.extract_strided_slice %419 {offsets = [0, 0], sizes = [1, 4], strides = [1, 1]} : vector<4x4xf32> to vector<1x4xf32>
      %cst_95 = arith.constant 5.000000e-01 : f32
      %421 = vector.broadcast %cst_95 : f32 to vector<1x4xf32>
      %422 = arith.mulf %420, %421 : vector<1x4xf32>
      %cst_96 = arith.constant 5.000000e-01 : f32
      %423 = vector.broadcast %cst_96 : f32 to vector<1x4xf32>
      %424 = arith.addf %422, %423 : vector<1x4xf32>
      %425 = vector.extract_strided_slice %419 {offsets = [1, 0], sizes = [1, 4], strides = [1, 1]} : vector<4x4xf32> to vector<1x4xf32>
      %cst_97 = arith.constant 5.000000e-01 : f32
      %426 = vector.broadcast %cst_97 : f32 to vector<1x4xf32>
      %427 = arith.mulf %425, %426 : vector<1x4xf32>
      %cst_98 = arith.constant 5.000000e-01 : f32
      %428 = vector.broadcast %cst_98 : f32 to vector<1x4xf32>
      %429 = arith.addf %427, %428 : vector<1x4xf32>
      %430 = vector.extract_strided_slice %419 {offsets = [2, 0], sizes = [1, 4], strides = [1, 1]} : vector<4x4xf32> to vector<1x4xf32>
      %431 = vector.extract_strided_slice %419 {offsets = [3, 0], sizes = [1, 4], strides = [1, 1]} : vector<4x4xf32> to vector<1x4xf32>
      %cst_99 = arith.constant 5.000000e-01 : f32
      %432 = vector.broadcast %cst_99 : f32 to vector<1x4xf32>
      %433 = arith.mulf %431, %432 : vector<1x4xf32>
      %cst_100 = arith.constant 5.000000e-01 : f32
      %434 = vector.broadcast %cst_100 : f32 to vector<1x4xf32>
      %435 = arith.addf %433, %434 : vector<1x4xf32>
      %436 = arith.mulf %429, %411 : vector<1x4xf32>
      %437 = arith.mulf %424, %430 : vector<1x4xf32>
      %438 = arith.addf %436, %437 : vector<1x4xf32>
      %439 = math.tanh %438 : vector<1x4xf32>
      %440 = arith.mulf %435, %439 : vector<1x4xf32>
      %441 = tpu.concatenate %35, %62, %89, %116, %143, %170, %197, %224, %251, %278, %305, %332, %359, %386, %413, %440 in 0 : vector<1x4xf32>, vector<1x4xf32>, vector<1x4xf32>, vector<1x4xf32>, vector<1x4xf32>, vector<1x4xf32>, vector<1x4xf32>, vector<1x4xf32>, vector<1x4xf32>, vector<1x4xf32>, vector<1x4xf32>, vector<1x4xf32>, vector<1x4xf32>, vector<1x4xf32>, vector<1x4xf32>, vector<1x4xf32> -> vector<16x4xf32>
      %442 = arith.index_cast %6 : i32 to index
      %c0_101 = arith.constant 0 : index
      %443 = vector.load %arg2[%442, %c0_101] : memref<4096x4xf32, #tpu.memory_space<vmem>>, vector<16x4xf32>
      tpu.vector_store %arg2[%442, %c0_101], %441 {strides = array<i32>} : memref<4096x4xf32, #tpu.memory_space<vmem>>, vector<16x4xf32>,
      scf.yield %440, %438 : vector<1x4xf32>, vector<1x4xf32>
    }
    %c256_i32_2 = arith.constant 256 : i32
    return
  }
}

module attributes {stable_mosaic.version = 11 : i64} {
  func.func @_linear_kernel(%arg0: i32, %arg1: i32, %arg2: memref<2x2048xf32, #tpu.memory_space<vmem>>, %arg3: memref<2048x1024xf32, #tpu.memory_space<vmem>>, %arg4: memref<1x1024xf32, #tpu.memory_space<vmem>>, %arg5: memref<2x1024xf32, #tpu.memory_space<vmem>>) attributes {dimension_semantics = [#tpu.dimension_semantics<parallel>, #tpu.dimension_semantics<arbitrary>], iteration_bounds = array<i64: 2, 4>, scalar_prefetch = 0 : i64, scratch_operands = 0 : i64, tpu.core_type = #tpu.core_type<tc>, window_params = [{transform_indices = @transform_0, window_bounds = array<i64: 2, 2048>}, {transform_indices = @transform_1, window_bounds = array<i64: 2048, 1024>}, {transform_indices = @transform_2, window_bounds = array<i64: 1, 1024>}, {transform_indices = @transform_3, window_bounds = array<i64: 2, 1024>}]} {
    %c0_i32 = arith.constant 0 : i32
    %0 = arith.cmpi eq, %arg1, %c0_i32 : i32
    %1 = arith.extui %0 : i1 to i32
    %c0_i32_0 = arith.constant 0 : i32
    %2 = arith.cmpi ne, %1, %c0_i32_0 : i32
    scf.if %2 {
      %c0_8 = arith.constant 0 : index
      %c0_9 = arith.constant 0 : index
      %9 = vector.load %arg4[%c0_8, %c0_9] : memref<1x1024xf32, #tpu.memory_space<vmem>>, vector<1x1024xf32>
      %10 = vector.shape_cast %9 : vector<1x1024xf32> to vector<1x1024xf32>
      %11 = vector.broadcast %10 : vector<1x1024xf32> to vector<2x1024xf32>
      %c0_10 = arith.constant 0 : index
      %c0_11 = arith.constant 0 : index
      %12 = vector.load %arg5[%c0_10, %c0_11] : memref<2x1024xf32, #tpu.memory_space<vmem>>, vector<2x1024xf32>
      tpu.vector_store %arg5[%c0_10, %c0_11], %11 {strides = array<i32>} : memref<2x1024xf32, #tpu.memory_space<vmem>>, vector<2x1024xf32>,
    } else {
    }
    %c0 = arith.constant 0 : index
    %c0_1 = arith.constant 0 : index
    %3 = vector.load %arg5[%c0, %c0_1] : memref<2x1024xf32, #tpu.memory_space<vmem>>, vector<2x1024xf32>
    %c0_2 = arith.constant 0 : index
    %c0_3 = arith.constant 0 : index
    %4 = vector.load %arg2[%c0_2, %c0_3] : memref<2x2048xf32, #tpu.memory_space<vmem>>, vector<2x2048xf32>
    %c0_4 = arith.constant 0 : index
    %c0_5 = arith.constant 0 : index
    %5 = vector.load %arg3[%c0_4, %c0_5] : memref<2048x1024xf32, #tpu.memory_space<vmem>>, vector<2048x1024xf32>
    %cst = arith.constant dense<0.000000e+00> : vector<2x1024xf32>
    %6 = tpu.matmul %4, %5, %cst {dimension_numbers = #tpu.dot_dimension_numbers<[1], [0], [0], [1], [0, 0, 1, 1], [], []>} : vector<2x2048xf32>, vector<2048x1024xf32>, vector<2x1024xf32> -> vector<2x1024xf32>
    %7 = arith.addf %3, %6 : vector<2x1024xf32>
    %c0_6 = arith.constant 0 : index
    %c0_7 = arith.constant 0 : index
    %8 = vector.load %arg5[%c0_6, %c0_7] : memref<2x1024xf32, #tpu.memory_space<vmem>>, vector<2x1024xf32>
    tpu.vector_store %arg5[%c0_6, %c0_7], %7 {strides = array<i32>} : memref<2x1024xf32, #tpu.memory_space<vmem>>, vector<2x1024xf32>,
    return
  }
  func.func @transform_0(%arg0: i32, %arg1: i32) -> (i32, i32) {
    %c0_i32 = arith.constant 0 : i32
    %c0_i32_0 = arith.constant 0 : i32
    return %c0_i32, %arg1 : i32, i32
  }
  func.func @transform_1(%arg0: i32, %arg1: i32) -> (i32, i32) {
    %c0_i32 = arith.constant 0 : i32
    return %arg1, %arg0 : i32, i32
  }
  func.func @transform_2(%arg0: i32, %arg1: i32) -> (i32, i32) {
    %c0_i32 = arith.constant 0 : i32
    %c0_i32_0 = arith.constant 0 : i32
    return %c0_i32, %arg0 : i32, i32
  }
  func.func @transform_3(%arg0: i32, %arg1: i32) -> (i32, i32) {
    %c0_i32 = arith.constant 0 : i32
    %c0_i32_0 = arith.constant 0 : i32
    return %c0_i32, %arg0 : i32, i32
  }
}

module attributes {stable_mosaic.version = 11 : i64} {
  func.func @_mlp_head_kernel(%arg0: memref<2x2048xf32, #tpu.memory_space<vmem>>, %arg1: memref<2048x512xf32, #tpu.memory_space<vmem>>, %arg2: memref<1x512xf32, #tpu.memory_space<vmem>>, %arg3: memref<512x1xf32, #tpu.memory_space<vmem>>, %arg4: memref<1x1xf32, #tpu.memory_space<vmem>>, %arg5: memref<2x1xf32, #tpu.memory_space<vmem>>) attributes {dimension_semantics = [], scalar_prefetch = 0 : i64, scratch_operands = 0 : i64, tpu.core_type = #tpu.core_type<tc>} {
    %c0 = arith.constant 0 : index
    %c0_0 = arith.constant 0 : index
    %0 = vector.load %arg0[%c0, %c0_0] : memref<2x2048xf32, #tpu.memory_space<vmem>>, vector<2x2048xf32>
    %c0_1 = arith.constant 0 : index
    %c0_2 = arith.constant 0 : index
    %1 = vector.load %arg1[%c0_1, %c0_2] : memref<2048x512xf32, #tpu.memory_space<vmem>>, vector<2048x512xf32>
    %cst = arith.constant dense<0.000000e+00> : vector<2x512xf32>
    %2 = tpu.matmul %0, %1, %cst {dimension_numbers = #tpu.dot_dimension_numbers<[1], [0], [0], [1], [0, 0, 1, 1], [], []>} : vector<2x2048xf32>, vector<2048x512xf32>, vector<2x512xf32> -> vector<2x512xf32>
    %c0_3 = arith.constant 0 : index
    %c0_4 = arith.constant 0 : index
    %3 = vector.load %arg2[%c0_3, %c0_4] : memref<1x512xf32, #tpu.memory_space<vmem>>, vector<1x512xf32>
    %4 = vector.broadcast %3 : vector<1x512xf32> to vector<2x512xf32>
    %5 = arith.addf %2, %4 : vector<2x512xf32>
    %cst_5 = arith.constant 0.000000e+00 : f32
    %6 = vector.broadcast %cst_5 : f32 to vector<2x512xf32>
    %7 = arith.maximumf %5, %6 : vector<2x512xf32>
    %c0_6 = arith.constant 0 : index
    %c0_7 = arith.constant 0 : index
    %8 = vector.load %arg3[%c0_6, %c0_7] : memref<512x1xf32, #tpu.memory_space<vmem>>, vector<512x1xf32>
    %cst_8 = arith.constant dense<0.000000e+00> : vector<2x1xf32>
    %9 = tpu.matmul %7, %8, %cst_8 {dimension_numbers = #tpu.dot_dimension_numbers<[1], [0], [0], [1], [0, 0, 1, 1], [], []>} : vector<2x512xf32>, vector<512x1xf32>, vector<2x1xf32> -> vector<2x1xf32>
    %c0_9 = arith.constant 0 : index
    %c0_10 = arith.constant 0 : index
    %10 = vector.load %arg4[%c0_9, %c0_10] : memref<1x1xf32, #tpu.memory_space<vmem>>, vector<1x1xf32>
    %11 = vector.broadcast %10 : vector<1x1xf32> to vector<2x1xf32>
    %12 = arith.addf %9, %11 : vector<2x1xf32>
    %c0_11 = arith.constant 0 : index
    %c0_12 = arith.constant 0 : index
    %13 = vector.load %arg5[%c0_11, %c0_12] : memref<2x1xf32, #tpu.memory_space<vmem>>, vector<2x1xf32>
    tpu.vector_store %arg5[%c0_11, %c0_12], %12 {strides = array<i32>} : memref<2x1xf32, #tpu.memory_space<vmem>>, vector<2x1xf32>,
    return
  }
}

</mosaic_0001>

<llo_original>
// kernel: net_lstm_forward.4
$region0: #{net_lstm_forward.4}
  #allocation0 [shape = 'u32[]', space=smem, size = 0x4, offset = 0x4, fixed_abs, tag = 'smem constant byte address 0x4 - core index']
  #allocation1 [shape = 'u32[144,128]{1,0:T(1,128)}', space=vmem, size = 0x12000, scoped, tag = 'internal scratch']
  %s0 = inlined_call_operand.vmem [shape: f32[4096,4,4], index: 0, kind: input, shape index: {}]
  %s1 = inlined_call_operand.vmem [shape: f32[4,4], index: 1, kind: input, shape index: {}]
  %s2 = inlined_call_operand.vmem [shape: f32[4096,4], index: 2, kind: output, shape index: {}]
  %s3 = sld [smem:[#allocation0]]
  $region25: #{net_lstm_forward.4} parent=0
    _
  %s5 = ssub.s32 1, %s3
  %s6 = scalar_select 0, %s5, %s3
  // Predicated region
  $region2: #{net_lstm_forward.4} parent=0 // pred_check
    _
  $region3: #{net_lstm_forward.4} parent=0 // pred_check_branch
    %8 = sbr.rel (0) target = $region5
  $region4: #{net_lstm_forward.4} parent=0 // pred_region
    _
  $region5: #{net_lstm_forward.4} parent=0 // pred_fallthru
    _
  // Predicated region
  $region6: #{net_lstm_forward.4} parent=0 // pred_check
    _
  $region7: #{net_lstm_forward.4} parent=0 // pred_check_branch
    %10 = sbr.rel (0) target = $region9
  $region8: #{net_lstm_forward.4} parent=0 // pred_region
    _
  $region9: #{net_lstm_forward.4} parent=0 // pred_fallthru
    _
  %v11 = vld [vmem:[%s1] sm:$0xf]
  loop: start=0, step=1, limit=256
  $region10: #{net_lstm_forward.4} parent=0 // loop_pre_header
    _
  $region11: #{net_lstm_forward.4} parent=0 // loop_header
    %s13 = sphi 0, %s17
    %p14 = scmp.ge.s32.totalorder %s13, 256
    %v18 = vphi 0.0, %v406
    %v19 = vphi 0.0, %v401
  $region12: #{net_lstm_forward.4} parent=0 // loop_header_branch
    %16 = sbr.rel (%p14) target = $region16
  $region13: #{net_lstm_forward.4} parent=0 // loop_body
    %s20 = smul.u32 %s13, 16
    %s21 = smul.u32 %s20, 4
    %s22 = scalar_lea.vmem %s0, %s21
    %v23 = vld [vmem:[%s22] sm:$0xf]
    %v24 = vld [vmem:[%s22 + $0x4] sm:$0xf]
    %v25 = vld [vmem:[%s22 + $0x8] sm:$0xf]
    %v26 = vld [vmem:[%s22 + $0xc] sm:$0xf]
    %v27 = vld [vmem:[%s22 + $0x10] sm:$0xf]
    %v28 = vld [vmem:[%s22 + $0x14] sm:$0xf]
    %v29 = vld [vmem:[%s22 + $0x18] sm:$0xf]
    %v30 = vld [vmem:[%s22 + $0x1c] sm:$0xf]
    %v31 = vld [vmem:[%s22 + $0x20] sm:$0xf]
    %v32 = vld [vmem:[%s22 + $0x24] sm:$0xf]
    %v33 = vld [vmem:[%s22 + $0x28] sm:$0xf]
    %v34 = vld [vmem:[%s22 + $0x2c] sm:$0xf]
    %v35 = vld [vmem:[%s22 + $0x30] sm:$0xf]
    %v36 = vld [vmem:[%s22 + $0x34] sm:$0xf]
    %v37 = vld [vmem:[%s22 + $0x38] sm:$0xf]
    %v38 = vld [vmem:[%s22 + $0x3c] sm:$0xf]
    %v39 = vlaneseq
    %v40 = vshrl.u32 %v39, 7
    %v41 = vsub.s32 3, %v40
    %v42 = vrot.slane %v18, %v41
    %v43 = vmul.f32 %v42, %v11
    %v44 = vadd.f32 %v23, %v43
    %v45 = vtanh.pop %v44
    %v46 = vmul.f32 %v45, 0.5
    %v47 = vadd.f32 %v46, 0.5
    %v48 = vmul.f32 %v47, %v19
    %v50 = vrot.slane %v45, 2
    %v52 = vmul.f32 %v47, %v50
    %v54 = vrot.slane %v52, 7
    %v56 = vadd.f32 %v48, %v54
    %v57 = vtanh.pop %v56
    %v59 = vrot.slane %v57, 6
    %v61 = vmul.f32 %v47, %v59
    %v62 = vlaneseq
    %v63 = vshrl.u32 %v62, 7
    %v64 = vsub.s32 3, %v63
    %v65 = vrot.slane %v61, %v64
    %v66 = vmul.f32 %v65, %v11
    %v67 = vadd.f32 %v24, %v66
    %v68 = vtanh.pop %v67
    %v69 = vmul.f32 %v68, 0.5
    %v70 = vadd.f32 %v69, 0.5
    %v71 = vmul.f32 %v70, %v56
    %v73 = vrot.slane %v68, 2
    %v75 = vmul.f32 %v70, %v73
    %v77 = vrot.slane %v75, 7
    %v79 = vadd.f32 %v71, %v77
    %v80 = vtanh.pop %v79
    %v82 = vrot.slane %v80, 6
    %v84 = vmul.f32 %v70, %v82
    %v85 = vlaneseq
    %v86 = vshrl.u32 %v85, 7
    %v87 = vsub.s32 3, %v86
    %v88 = vrot.slane %v84, %v87
    %v89 = vmul.f32 %v88, %v11
    %v90 = vadd.f32 %v25, %v89
    %v91 = vtanh.pop %v90
    %v92 = vmul.f32 %v91, 0.5
    %v93 = vadd.f32 %v92, 0.5
    %v94 = vmul.f32 %v93, %v79
    %v96 = vrot.slane %v91, 2
    %v98 = vmul.f32 %v93, %v96
    %v100 = vrot.slane %v98, 7
    %v102 = vadd.f32 %v94, %v100
    %v103 = vtanh.pop %v102
    %v105 = vrot.slane %v103, 6
    %v107 = vmul.f32 %v93, %v105
    %v108 = vlaneseq
    %v109 = vshrl.u32 %v108, 7
    %v110 = vsub.s32 3, %v109
    %v111 = vrot.slane %v107, %v110
    %v112 = vmul.f32 %v111, %v11
    %v113 = vadd.f32 %v26, %v112
    %v114 = vtanh.pop %v113
    %v115 = vmul.f32 %v114, 0.5
    %v116 = vadd.f32 %v115, 0.5
    %v117 = vmul.f32 %v116, %v102
    %v119 = vrot.slane %v114, 2
    %v121 = vmul.f32 %v116, %v119
    %v123 = vrot.slane %v121, 7
    %v125 = vadd.f32 %v117, %v123
    %v126 = vtanh.pop %v125
    %v128 = vrot.slane %v126, 6
    %v130 = vmul.f32 %v116, %v128
    %v131 = vlaneseq
    %v132 = vshrl.u32 %v131, 7
    %v133 = vsub.s32 3, %v132
    %v134 = vrot.slane %v130, %v133
    %v135 = vmul.f32 %v134, %v11
    %v136 = vadd.f32 %v27, %v135
    %v137 = vtanh.pop %v136
    %v138 = vmul.f32 %v137, 0.5
    %v139 = vadd.f32 %v138, 0.5
    %v140 = vmul.f32 %v139, %v125
    %v142 = vrot.slane %v137, 2
    %v144 = vmul.f32 %v139, %v142
    %v146 = vrot.slane %v144, 7
    %v148 = vadd.f32 %v140, %v146
    %v149 = vtanh.pop %v148
    %v151 = vrot.slane %v149, 6
    %v153 = vmul.f32 %v139, %v151
    %v154 = vlaneseq
    %v155 = vshrl.u32 %v154, 7
    %v156 = vsub.s32 3, %v155
    %v157 = vrot.slane %v153, %v156
    %v158 = vmul.f32 %v157, %v11
    %v159 = vadd.f32 %v28, %v158
    %v160 = vtanh.pop %v159
    %v161 = vmul.f32 %v160, 0.5
    %v162 = vadd.f32 %v161, 0.5
    %v163 = vmul.f32 %v162, %v148
    %v165 = vrot.slane %v160, 2
    %v167 = vmul.f32 %v162, %v165
    %v169 = vrot.slane %v167, 7
    %v171 = vadd.f32 %v163, %v169
    %v172 = vtanh.pop %v171
    %v174 = vrot.slane %v172, 6
    %v176 = vmul.f32 %v162, %v174
    %v177 = vlaneseq
    %v178 = vshrl.u32 %v177, 7
    %v179 = vsub.s32 3, %v178
    %v180 = vrot.slane %v176, %v179
    %v181 = vmul.f32 %v180, %v11
    %v182 = vadd.f32 %v29, %v181
    %v183 = vtanh.pop %v182
    %v184 = vmul.f32 %v183, 0.5
    %v185 = vadd.f32 %v184, 0.5
    %v186 = vmul.f32 %v185, %v171
    %v188 = vrot.slane %v183, 2
    %v190 = vmul.f32 %v185, %v188
    %v192 = vrot.slane %v190, 7
    %v194 = vadd.f32 %v186, %v192
    %v195 = vtanh.pop %v194
    %v197 = vrot.slane %v195, 6
    %v199 = vmul.f32 %v185, %v197
    %v200 = vlaneseq
    %v201 = vshrl.u32 %v200, 7
    %v202 = vsub.s32 3, %v201
    %v203 = vrot.slane %v199, %v202
    %v204 = vmul.f32 %v203, %v11
    %v205 = vadd.f32 %v30, %v204
    %v206 = vtanh.pop %v205
    %v207 = vmul.f32 %v206, 0.5
    %v208 = vadd.f32 %v207, 0.5
    %v209 = vmul.f32 %v208, %v194
    %v211 = vrot.slane %v206, 2
    %v213 = vmul.f32 %v208, %v211
    %v215 = vrot.slane %v213, 7
    %v217 = vadd.f32 %v209, %v215
    %v218 = vtanh.pop %v217
    %v220 = vrot.slane %v218, 6
    %v222 = vmul.f32 %v208, %v220
    %v223 = vlaneseq
    %v224 = vshrl.u32 %v223, 7
    %v225 = vsub.s32 3, %v224
    %v226 = vrot.slane %v222, %v225
    %v227 = vmul.f32 %v226, %v11
    %v228 = vadd.f32 %v31, %v227
    %v229 = vtanh.pop %v228
    %v230 = vmul.f32 %v229, 0.5
    %v231 = vadd.f32 %v230, 0.5
    %v232 = vmul.f32 %v231, %v217
    %v234 = vrot.slane %v229, 2
    %v236 = vmul.f32 %v231, %v234
    %v238 = vrot.slane %v236, 7
    %v240 = vadd.f32 %v232, %v238
    %v241 = vtanh.pop %v240
    %v243 = vrot.slane %v241, 6
    %v245 = vmul.f32 %v231, %v243
    %v246 = vlaneseq
    %v247 = vshrl.u32 %v246, 7
    %v248 = vsub.s32 3, %v247
    %v249 = vrot.slane %v245, %v248
    %v250 = vmul.f32 %v249, %v11
    %v251 = vadd.f32 %v32, %v250
    %v252 = vtanh.pop %v251
    %v253 = vmul.f32 %v252, 0.5
    %v254 = vadd.f32 %v253, 0.5
    %v255 = vmul.f32 %v254, %v240
    %v257 = vrot.slane %v252, 2
    %v259 = vmul.f32 %v254, %v257
    %v261 = vrot.slane %v259, 7
    %v263 = vadd.f32 %v255, %v261
    %v264 = vtanh.pop %v263
    %v266 = vrot.slane %v264, 6
    %v268 = vmul.f32 %v254, %v266
    %v269 = vlaneseq
    %v270 = vshrl.u32 %v269, 7
    %v271 = vsub.s32 3, %v270
    %v272 = vrot.slane %v268, %v271
    %v273 = vmul.f32 %v272, %v11
    %v274 = vadd.f32 %v33, %v273
    %v275 = vtanh.pop %v274
    %v276 = vmul.f32 %v275, 0.5
    %v277 = vadd.f32 %v276, 0.5
    %v278 = vmul.f32 %v277, %v263
    %v280 = vrot.slane %v275, 2
    %v282 = vmul.f32 %v277, %v280
    %v284 = vrot.slane %v282, 7
    %v286 = vadd.f32 %v278, %v284
    %v287 = vtanh.pop %v286
    %v289 = vrot.slane %v287, 6
    %v291 = vmul.f32 %v277, %v289
    %v292 = vlaneseq
    %v293 = vshrl.u32 %v292, 7
    %v294 = vsub.s32 3, %v293
    %v295 = vrot.slane %v291, %v294
    %v296 = vmul.f32 %v295, %v11
    %v297 = vadd.f32 %v34, %v296
    %v298 = vtanh.pop %v297
    %v299 = vmul.f32 %v298, 0.5
    %v300 = vadd.f32 %v299, 0.5
    %v301 = vmul.f32 %v300, %v286
    %v303 = vrot.slane %v298, 2
    %v305 = vmul.f32 %v300, %v303
    %v307 = vrot.slane %v305, 7
    %v309 = vadd.f32 %v301, %v307
    %v310 = vtanh.pop %v309
    %v312 = vrot.slane %v310, 6
    %v314 = vmul.f32 %v300, %v312
    %v315 = vlaneseq
    %v316 = vshrl.u32 %v315, 7
    %v317 = vsub.s32 3, %v316
    %v318 = vrot.slane %v314, %v317
    %v319 = vmul.f32 %v318, %v11
    %v320 = vadd.f32 %v35, %v319
    %v321 = vtanh.pop %v320
    %v322 = vmul.f32 %v321, 0.5
    %v323 = vadd.f32 %v322, 0.5
    %v324 = vmul.f32 %v323, %v309
    %v326 = vrot.slane %v321, 2
    %v328 = vmul.f32 %v323, %v326
    %v330 = vrot.slane %v328, 7
    %v332 = vadd.f32 %v324, %v330
    %v333 = vtanh.pop %v332
    %v335 = vrot.slane %v333, 6
    %v337 = vmul.f32 %v323, %v335
    %v338 = vlaneseq
    %v339 = vshrl.u32 %v338, 7
    %v340 = vsub.s32 3, %v339
    %v341 = vrot.slane %v337, %v340
    %v342 = vmul.f32 %v341, %v11
    %v343 = vadd.f32 %v36, %v342
    %v344 = vtanh.pop %v343
    %v345 = vmul.f32 %v344, 0.5
    %v346 = vadd.f32 %v345, 0.5
    %v347 = vmul.f32 %v346, %v332
    %v349 = vrot.slane %v344, 2
    %v351 = vmul.f32 %v346, %v349
    %v353 = vrot.slane %v351, 7
    %v355 = vadd.f32 %v347, %v353
    %v356 = vtanh.pop %v355
    %v358 = vrot.slane %v356, 6
    %v360 = vmul.f32 %v346, %v358
    %v361 = vlaneseq
    %v362 = vshrl.u32 %v361, 7
    %v363 = vsub.s32 3, %v362
    %v364 = vrot.slane %v360, %v363
    %v365 = vmul.f32 %v364, %v11
    %v366 = vadd.f32 %v37, %v365
    %v367 = vtanh.pop %v366
    %v368 = vmul.f32 %v367, 0.5
    %v369 = vadd.f32 %v368, 0.5
    %v370 = vmul.f32 %v369, %v355
    %v372 = vrot.slane %v367, 2
    %v374 = vmul.f32 %v369, %v372
    %v376 = vrot.slane %v374, 7
    %v378 = vadd.f32 %v370, %v376
    %v379 = vtanh.pop %v378
    %v381 = vrot.slane %v379, 6
    %v383 = vmul.f32 %v369, %v381
    %v384 = vlaneseq
    %v385 = vshrl.u32 %v384, 7
    %v386 = vsub.s32 3, %v385
    %v387 = vrot.slane %v383, %v386
    %v388 = vmul.f32 %v387, %v11
    %v389 = vadd.f32 %v38, %v388
    %v390 = vtanh.pop %v389
    %v391 = vmul.f32 %v390, 0.5
    %v392 = vadd.f32 %v391, 0.5
    %v393 = vmul.f32 %v392, %v378
    %v395 = vrot.slane %v390, 2
    %v397 = vmul.f32 %v392, %v395
    %v399 = vrot.slane %v397, 7
    %v401 = vadd.f32 %v393, %v399
    %v402 = vtanh.pop %v401
    %v404 = vrot.slane %v402, 6
    %v406 = vmul.f32 %v392, %v404
    %v408 = vrot.slane %v61, 3
    %v411 = vrot.slane %v84, 2
    %v414 = vrot.slane %v107, 1
    %v417 = vrot.slane %v153, 7
    %v420 = vrot.slane %v176, 6
    %v423 = vrot.slane %v199, 5
    %v426 = vrot.slane %v222, 4
    %v429 = vrot.slane %v245, 3
    %v432 = vrot.slane %v268, 2
    %v435 = vrot.slane %v291, 1
    %v438 = vrot.slane %v337, 7
    %v441 = vrot.slane %v360, 6
    %v444 = vrot.slane %v383, 5
    %v447 = vrot.slane %v406, 4
    %vm449 = vcmask 1040384
    %v450 = vsel %vm449, %v408, %v411
    %vm451 = vcmask 1041408
    %v452 = vsel %vm451, %v450, %v414
    %vm453 = vcmask 1042432
    %v454 = vsel %vm453, %v452, %v130
    %vm455 = vcmask 1043456
    %v456 = vsel %vm455, %v454, %v417
    %vm457 = vcmask 1044480
    %v458 = vsel %vm457, %v456, %v420
    %vm459 = vcmask 1045504
    %v460 = vsel %vm459, %v458, %v423
    %vm461 = vcmask 1046528
    %v462 = vsel %vm461, %v460, %v426
    %v463 = vsel %vm449, %v429, %v432
    %v464 = vsel %vm451, %v463, %v435
    %v465 = vsel %vm453, %v464, %v314
    %v466 = vsel %vm455, %v465, %v438
    %v467 = vsel %vm457, %v466, %v441
    %v468 = vsel %vm459, %v467, %v444
    %v469 = vsel %vm461, %v468, %v447
    %s470 = scalar_lea.vmem %s2, %s20
    %vm471 = vcmask 31744
    %472 = vst.msk [vmem:[%s470] sm:$0xff] %vm471, %v462
    %473 = vst.msk [vmem:[%s470 + $0x8] sm:$0xff] %vm471, %v469
  $region14: #{net_lstm_forward.4} parent=0 // loop_footer
    %s17 = sadd.s32 1, %s13
  $region15: #{net_lstm_forward.4} parent=0 // loop_footer_branch
    %12 = sbr.rel target = $region11
  $region16: #{net_lstm_forward.4} parent=0 // loop_exit
    _
  // Predicated region
  $region17: #{net_lstm_forward.4} parent=0 // pred_check
    _
  $region18: #{net_lstm_forward.4} parent=0 // pred_check_branch
    %475 = sbr.rel (0) target = $region20
  $region19: #{net_lstm_forward.4} parent=0 // pred_region
    _
  $region20: #{net_lstm_forward.4} parent=0 // pred_fallthru
    _
  // Predicated region
  $region21: #{net_lstm_forward.4} parent=0 // pred_check
    _
  $region22: #{net_lstm_forward.4} parent=0 // pred_check_branch
    %477 = sbr.rel (0) target = $region24
  $region23: #{net_lstm_forward.4} parent=0 // pred_region
    _
  $region24: #{net_lstm_forward.4} parent=0 // pred_fallthru
    _

// kernel: net_lstm_forward.6
$region0: #{net_lstm_forward.6}
  #allocation0 [shape = 'u32[]', space=smem, size = 0x4, offset = 0x4, fixed_abs, tag = 'smem constant byte address 0x4 - core index']
  #allocation1 [shape = 'u32[144,128]{1,0:T(1,128)}', space=vmem, size = 0x12000, scoped, tag = 'internal scratch']
  %s0 = inlined_call_operand.vmem [shape: f32[2,8192], index: 0, kind: input, shape index: {}]
  %s1 = inlined_call_operand.hbm [shape: f32[8192,2048], index: 1, kind: input, shape index: {}]
  %s2 = inlined_call_operand.vmem [shape: f32[1,2048], index: 2, kind: input, shape index: {}]
  %s3 = inlined_call_operand.vmem [shape: f32[2,2048], index: 3, kind: output, shape index: {}]
  %s4 = sld [smem:[#allocation0]]
  $region53: #{net_lstm_forward.6} parent=0
    _
  %s6 = ssub.s32 1, %s4
  %s7 = scalar_select 0, %s6, %s4
  $region1: #{net_lstm_forward.6} parent=0
    #allocation2 [shape = 'u8[16777216]{0}', space=vmem, size = 0x1000000, scoped, tag = 'input window, operand 1']
    #allocation3 [shape = 's32[2]{0}', space=sflag, size = 0x8, scoped, tag = 'scoped memory for net_lstm_forward.6']
    %8 = vsyncpa [#allocation3], 0
    %s9 = scalar_lea.sflag [#allocation3], 1
    %10 = vsyncpa %s9, 0
    loop: start=0, step=1, limit=10
    $region2: #{net_lstm_forward.6} parent=1 // loop_pre_header
      _
    $region3: #{net_lstm_forward.6} parent=1 // loop_header
      %s12 = sphi 0, %s16
      %p13 = scmp.ge.s32.totalorder %s12, 10
      %s19 = sphi 0, %s31
      %s20 = sphi 0, %s27
      %s21 = sphi 0, %s19
      %s22 = sphi 0, %s20
      %s23 = sphi 0, %s21
      %s24 = sphi 0, %s22
      %s34 = sphi 0, %s36
      %s37 = sphi 0, %s34
      %s38 = sphi 0, %s37
      %s54 = sphi 0, %s38
      %s62 = sphi 0, %s64
      %s65 = sphi 0, %s62
      %s66 = sphi 0, %s65
      %s82 = sphi 0, %s66
      %s88 = sphi 0, %s90
      %s91 = sphi 0, %s88
      %s92 = sphi 0, %s91
      %s108 = sphi 0, %s92
      %s114 = sphi 0, %s116
      %s117 = sphi 0, %s114
      %s118 = sphi 0, %s117
      %s134 = sphi 0, %s118
    $region4: #{net_lstm_forward.6} parent=1 // loop_header_branch
      %15 = sbr.rel (%p13) target = $region8
    $region5: #{net_lstm_forward.6} parent=1 // loop_body
      %s17 = ssub.s32 %s12, 1
      %s18 = ssub.s32 %s12, 2
      %s25 = sadd.s32 1, %s20
      %p26 = scmp.ge.s32.totalorder %s25, 4
      %s27 = scalar_select %p26, 0, %s25
      %s28 = sadd.s32 1, %s19
      %s29 = scalar_select %p26, %s28, %s19
      %p30 = scmp.ge.s32.totalorder %s29, 2
      %s31 = scalar_select %p30, 0, %s29
      %s32 = ssub.s32 %s20, %s27
      %p33 = scmp.eq.s32.totalorder %s32, 0
      %s35 = sadd.s32 %s34, 1
      %s36 = scalar_select %p33, %s34, %s35
      %p39 = pneg %p33
      %p40 = scmp.eq.s32.totalorder %s12, 7
      %p41 = por %p39, %p40
      %p42 = scmp.ne.s32.totalorder %s34, %s37
      %p43 = scmp.eq.s32.totalorder %s12, 0
      %p44 = por %p42, %p43
      %p45 = scmp.ne.s32.totalorder %s34, %s37
      %p46 = scmp.eq.s32.totalorder %s17, 7
      %p47 = por %p45, %p46
      %p48 = scmp.ne.s32.totalorder %s37, %s38
      %p49 = scmp.eq.s32.totalorder %s17, 0
      %p50 = por %p48, %p49
      %p51 = scmp.ne.s32.totalorder %s37, %s38
      %p52 = scmp.eq.s32.totalorder %s18, 7
      %p53 = por %p51, %p52
      %p55 = scmp.ne.s32.totalorder %s38, %s54
      %p56 = scmp.eq.s32.totalorder %s18, 0
      %p57 = por %p55, %p56
      %s58 = ssub.s32 %s20, %s27
      %s59 = ssub.s32 %s19, %s31
      %s60 = sor.u32 %s58, %s59
      %p61 = scmp.eq.s32.totalorder %s60, 0
      %s63 = sadd.s32 %s62, 1
      %s64 = scalar_select %p61, %s62, %s63
      %p67 = pneg %p61
      %p68 = scmp.eq.s32.totalorder %s12, 7
      %p69 = por %p67, %p68
      %p70 = scmp.ne.s32.totalorder %s62, %s65
      %p71 = scmp.eq.s32.totalorder %s12, 0
      %p72 = por %p70, %p71
      %p73 = scmp.ne.s32.totalorder %s62, %s65
      %p74 = scmp.eq.s32.totalorder %s17, 7
      %p75 = por %p73, %p74
      %p76 = scmp.ne.s32.totalorder %s65, %s66
      %p77 = scmp.eq.s32.totalorder %s17, 0
      %p78 = por %p76, %p77
      %p79 = scmp.ne.s32.totalorder %s65, %s66
      %p80 = scmp.eq.s32.totalorder %s18, 7
      %p81 = por %p79, %p80
      %p83 = scmp.ne.s32.totalorder %s66, %s82
      %p84 = scmp.eq.s32.totalorder %s18, 0
      %p85 = por %p83, %p84
      %s86 = ssub.s32 %s19, %s31
      %p87 = scmp.eq.s32.totalorder %s86, 0
      %s89 = sadd.s32 %s88, 1
      %s90 = scalar_select %p87, %s88, %s89
      %p93 = pneg %p87
      %p94 = scmp.eq.s32.totalorder %s12, 7
      %p95 = por %p93, %p94
      %p96 = scmp.ne.s32.totalorder %s88, %s91
      %p97 = scmp.eq.s32.totalorder %s12, 0
      %p98 = por %p96, %p97
      %p99 = scmp.ne.s32.totalorder %s88, %s91
      %p100 = scmp.eq.s32.totalorder %s17, 7
      %p101 = por %p99, %p100
      %p102 = scmp.ne.s32.totalorder %s91, %s92
      %p103 = scmp.eq.s32.totalorder %s17, 0
      %p104 = por %p102, %p103
      %p105 = scmp.ne.s32.totalorder %s91, %s92
      %p106 = scmp.eq.s32.totalorder %s18, 7
      %p107 = por %p105, %p106
      %p109 = scmp.ne.s32.totalorder %s92, %s108
      %p110 = scmp.eq.s32.totalorder %s18, 0
      %p111 = por %p109, %p110
      %s112 = ssub.s32 %s19, %s31
      %p113 = scmp.eq.s32.totalorder %s112, 0
      %s115 = sadd.s32 %s114, 1
      %s116 = scalar_select %p113, %s114, %s115
      %p119 = pneg %p113
      %p120 = scmp.eq.s32.totalorder %s12, 7
      %p121 = por %p119, %p120
      %p122 = scmp.ne.s32.totalorder %s114, %s117
      %p123 = scmp.eq.s32.totalorder %s12, 0
      %p124 = por %p122, %p123
      %p125 = scmp.ne.s32.totalorder %s114, %s117
      %p126 = scmp.eq.s32.totalorder %s17, 7
      %p127 = por %p125, %p126
      %p128 = scmp.ne.s32.totalorder %s117, %s118
      %p129 = scmp.eq.s32.totalorder %s17, 0
      %p130 = por %p128, %p129
      %p131 = scmp.ne.s32.totalorder %s117, %s118
      %p132 = scmp.eq.s32.totalorder %s18, 7
      %p133 = por %p131, %p132
      %p135 = scmp.ne.s32.totalorder %s118, %s134
      %p136 = scmp.eq.s32.totalorder %s18, 0
      %p137 = por %p135, %p136
      %p138 = scmp.le.s32.totalorder 1, %s12
      %p139 = scmp.lt.s32.totalorder %s12, 9
      %p140 = pnand %p138, %p139
      %p141 = pneg %p140
      // Predicated region
      $region9: #{net_lstm_forward.6} parent=5 // pred_check
        _
      $region10: #{net_lstm_forward.6} parent=5 // pred_check_branch
        %143 = sbr.rel (%p140) target = $region12
      $region11: #{net_lstm_forward.6} parent=5 // pred_region
        %s144 = ssub.s32 %s12, 1
      $region12: #{net_lstm_forward.6} parent=5 // pred_fallthru
        _
      %p145 = scmp.lt.s32.totalorder %s12, 8
      // Predicated region
      $region13: #{net_lstm_forward.6} parent=5 // pred_check
        %p146 = pneg %p145
      $region14: #{net_lstm_forward.6} parent=5 // pred_check_branch
        %148 = sbr.rel (%p146) target = $region16
      $region15: #{net_lstm_forward.6} parent=5 // pred_region
        // Predicated region
        $region17: #{net_lstm_forward.6} parent=15 // pred_check
          %p149 = pneg %p44
        $region18: #{net_lstm_forward.6} parent=15 // pred_check_branch
          %151 = sbr.rel (%p149) target = $region20
        $region19: #{net_lstm_forward.6} parent=15 // pred_region
          %s152 = smul.u32 16, %s20
          %p153 = scmp.lt.s32.totalorder %s152, 63
          %s154 = scalar_select %p153, %s152, 63
          %s155 = smul.addr %s154, 2
          %s156 = scalar_lea.vmem %s0, %s155
          %s157 = smul.u32 16, %s20
        $region20: #{net_lstm_forward.6} parent=15 // pred_fallthru
          _
        // Predicated region
        $region21: #{net_lstm_forward.6} parent=15 // pred_check
          %p158 = pneg %p72
        $region22: #{net_lstm_forward.6} parent=15 // pred_check_branch
          %160 = sbr.rel (%p158) target = $region24
        $region23: #{net_lstm_forward.6} parent=15 // pred_region
          %s161 = sand.u32 %s62, 1
          %s162 = scalar_lea.sflag [#allocation3], %s161
          %s163 = sand.u32 %s62, 1
          %s164 = smul.addr %s163, 16384
          %s165 = scalar_lea.vmem [#allocation2], %s164
          %s166 = smul.u32 256, %s20
          %s167 = smul.u32 8, %s19
          %s169 = ssub.s32 262144, 262144
          %170 = vsyncadd %s162, %s169
          %s171 = smul.addr %s166, 16
          %s172 = sadd.s32 %s167, %s171
          %s173 = smul.addr %s172, 128
          %s174 = scalar_lea.hbm %s1, %s173
          %s175 = sshll.u32 %s165, 4
          %s176 = int_to_ptr.vmem [resolvable:$true] %s175
          %181 = dma.hbm_to_vmem [thread:$0]  %s174, 262144, %s176, %s162, 2048, 1024, 64
        $region24: #{net_lstm_forward.6} parent=15 // pred_fallthru
          _
        // Predicated region
        $region25: #{net_lstm_forward.6} parent=15 // pred_check
          %p182 = pneg %p98
        $region26: #{net_lstm_forward.6} parent=15 // pred_check_branch
          %184 = sbr.rel (%p182) target = $region28
        $region27: #{net_lstm_forward.6} parent=15 // pred_region
          %s185 = smul.u32 8, %s19
          %p186 = scmp.lt.s32.totalorder %s185, 15
          %s187 = scalar_select %p186, %s185, 15
          %s188 = scalar_lea.vmem %s2, %s187
          %s189 = smul.u32 8, %s19
        $region28: #{net_lstm_forward.6} parent=15 // pred_fallthru
          _
      $region16: #{net_lstm_forward.6} parent=5 // pred_fallthru
        _
      %p190 = scmp.le.s32.totalorder 1, %s12
      %p191 = scmp.lt.s32.totalorder %s12, 9
      %p192 = pnand %p190, %p191
      %p193 = pneg %p192
      // Predicated region
      $region29: #{net_lstm_forward.6} parent=5 // pred_check
        _
      $region30: #{net_lstm_forward.6} parent=5 // pred_check_branch
        %195 = sbr.rel (%p192) target = $region32
      $region31: #{net_lstm_forward.6} parent=5 // pred_region
        %s196 = ssub.s32 %s12, 1
        %s197 = sand.u32 %s65, 1
        %s198 = scalar_lea.sflag [#allocation3], %s197
        %s199 = sand.u32 %s65, 1
        %s200 = smul.addr %s199, 16384
        %s201 = scalar_lea.vmem [#allocation2], %s200
        // Predicated region
        $region33: #{net_lstm_forward.6} parent=31 // pred_check
          %p202 = pneg %p78
        $region34: #{net_lstm_forward.6} parent=31 // pred_check_branch
          %204 = sbr.rel (%p202) target = $region36
        $region35: #{net_lstm_forward.6} parent=31 // pred_region
          %205 = dma.done %s198, 262144
        $region36: #{net_lstm_forward.6} parent=31 // pred_fallthru
          _
        %s206 = smul.u32 16, %s22
        %p207 = scmp.lt.s32.totalorder %s206, 63
        %s208 = scalar_select %p207, %s206, 63
        %s209 = smul.addr %s208, 2
        %s210 = scalar_lea.vmem %s0, %s209
        %p211 = pneg %p50
        %p212 = pneg %p47
        %s213 = sand.u32 %s65, 1
        %s214 = scalar_lea.sflag [#allocation3], %s213
        %s215 = sand.u32 %s65, 1
        %s216 = smul.addr %s215, 16384
        %s217 = scalar_lea.vmem [#allocation2], %s216
        %p218 = pneg %p78
        %p219 = pneg %p75
        %s220 = smul.u32 8, %s21
        %p221 = scmp.lt.s32.totalorder %s220, 15
        %s222 = scalar_select %p221, %s220, 15
        %s223 = scalar_lea.vmem %s2, %s222
        %p224 = pneg %p104
        %p225 = pneg %p101
        %p226 = pneg %p130
        %p227 = pneg %p127
        %s228 = smul.u32 8, %s21
        %p229 = scmp.lt.s32.totalorder %s228, 15
        %s230 = scalar_select %p229, %s228, 15
        %s231 = smul.addr %s230, 2
        %s232 = scalar_lea.vmem %s3, %s231
        %s233 = smul.u32 16, %s22
        %p234 = scmp.lt.s32.totalorder %s233, 63
        %s235 = scalar_select %p234, %s233, 63
        %s236 = smul.addr %s235, 2
        %s237 = scalar_lea.vmem %s0, %s236
        %s238 = smul.u32 16, %s22
        %s239 = smul.u32 256, %s22
        %s240 = smul.u32 8, %s21
        %s241 = smul.u32 8, %s21
        %p242 = scmp.lt.s32.totalorder %s241, 15
        %s243 = scalar_select %p242, %s241, 15
        %s244 = scalar_lea.vmem %s2, %s243
        %s245 = smul.u32 8, %s21
        %s246 = smul.u32 8, %s21
        %p247 = scmp.lt.s32.totalorder %s246, 15
        %s248 = scalar_select %p247, %s246, 15
        %s249 = smul.addr %s248, 2
        %s250 = scalar_lea.vmem %s3, %s249
        %s251 = smul.u32 8, %s21
        %p252 = scmp.eq.s32.totalorder %s22, 0
        // Predicated region
        $region37: #{net_lstm_forward.6} parent=31 // pred_check
          %p253 = pneg %p252
        $region38: #{net_lstm_forward.6} parent=31 // pred_check_branch
          %255 = sbr.rel (%p253) target = $region40
        $region39: #{net_lstm_forward.6} parent=31 // pred_region
          %v256 = vld [vmem:[%s244] sm:$0xff]
          %v258 = vlaneseq
          %v259 = vshrl.u32 %v258, 7
          %v260 = vsub.s32 0, %v259
          %v261 = vrot.slane %v256, %v260
          %v262 = vlaneseq
          %v263 = vshrl.u32 %v262, 7
          %v264 = vsub.s32 1, %v263
          %v265 = vrot.slane %v256, %v264
          %v266 = vlaneseq
          %v267 = vshrl.u32 %v266, 7
          %v268 = vsub.s32 2, %v267
          %v269 = vrot.slane %v256, %v268
          %v270 = vlaneseq
          %v271 = vshrl.u32 %v270, 7
          %v272 = vsub.s32 3, %v271
          %v273 = vrot.slane %v256, %v272
          %v274 = vlaneseq
          %v275 = vshrl.u32 %v274, 7
          %v276 = vsub.s32 4, %v275
          %v277 = vrot.slane %v256, %v276
          %v278 = vlaneseq
          %v279 = vshrl.u32 %v278, 7
          %v280 = vsub.s32 5, %v279
          %v281 = vrot.slane %v256, %v280
          %v282 = vlaneseq
          %v283 = vshrl.u32 %v282, 7
          %v284 = vsub.s32 6, %v283
          %v285 = vrot.slane %v256, %v284
          %v286 = vlaneseq
          %v287 = vshrl.u32 %v286, 7
          %v288 = vsub.s32 7, %v287
          %v289 = vrot.slane %v256, %v288
          %v290 = vcombine.low %v261, %v265
          %v291 = vcombine.low %v269, %v273
          %v293 = vunpack.c.l.s4 1983009808
          %v294 = vunpack.c.0.s8 %v293
          %v295 = vlaneseq
          %v296 = vshrl.u32 %v295, 7
          %v297 = vsub.s32 %v294, %v296
          %v298 = vrot.slane %v290, %v297
          %v300 = vunpack.c.l.s4 1983009808
          %v301 = vunpack.c.0.s8 %v300
          %v302 = vlaneseq
          %v303 = vshrl.u32 %v302, 7
          %v304 = vsub.s32 %v301, %v303
          %v305 = vrot.slane %v291, %v304
          %v306 = vcombine.low %v298, %v305
          %v307 = vcombine.low %v277, %v281
          %v308 = vcombine.low %v285, %v289
          %v310 = vunpack.c.l.s4 1983009808
          %v311 = vunpack.c.0.s8 %v310
          %v312 = vlaneseq
          %v313 = vshrl.u32 %v312, 7
          %v314 = vsub.s32 %v311, %v313
          %v315 = vrot.slane %v307, %v314
          %v317 = vunpack.c.l.s4 1983009808
          %v318 = vunpack.c.0.s8 %v317
          %v319 = vlaneseq
          %v320 = vshrl.u32 %v319, 7
          %v321 = vsub.s32 %v318, %v320
          %v322 = vrot.slane %v308, %v321
          %v323 = vcombine.low %v315, %v322
          %326 = vst [vmem:[%s250] sm:$0xff] %v306
          %327 = vst [vmem:[%s250 + $0x8] sm:$0xff] %v323
        $region40: #{net_lstm_forward.6} parent=31 // pred_fallthru
          _
        %v328 = vld [vmem:[%s250] sm:$0xff]
        %v329 = vld [vmem:[%s250 + $0x8] sm:$0xff]
        %v330 = vld [vmem:[%s237] sm:$0xff]
        %v331 = vld [vmem:[%s237 + $0x8] sm:$0xff]
        %v332 = vld [vmem:[%s237 + $0x10] sm:$0xff]
        %v333 = vld [vmem:[%s237 + $0x18] sm:$0xff]
        %v334 = vld [vmem:[%s201] sm:$0xff]
        %v335 = vld [vmem:[%s201 + $0x8] sm:$0xff]
        %v336 = vld [vmem:[%s201 + $0x10] sm:$0xff]
        %v337 = vld [vmem:[%s201 + $0x18] sm:$0xff]
        %v338 = vld [vmem:[%s201 + $0x20] sm:$0xff]
        %v339 = vld [vmem:[%s201 + $0x28] sm:$0xff]
        %v340 = vld [vmem:[%s201 + $0x30] sm:$0xff]
        %v341 = vld [vmem:[%s201 + $0x38] sm:$0xff]
        %v342 = vld [vmem:[%s201 + $0x40] sm:$0xff]
        %v343 = vld [vmem:[%s201 + $0x48] sm:$0xff]
        %v344 = vld [vmem:[%s201 + $0x50] sm:$0xff]
        %v345 = vld [vmem:[%s201 + $0x58] sm:$0xff]
        %v346 = vld [vmem:[%s201 + $0x60] sm:$0xff]
        %v347 = vld [vmem:[%s201 + $0x68] sm:$0xff]
        %v348 = vld [vmem:[%s201 + $0x70] sm:$0xff]
        %v349 = vld [vmem:[%s201 + $0x78] sm:$0xff]
        %v350 = vld [vmem:[%s201 + $0x80] sm:$0xff]
        %v351 = vld [vmem:[%s201 + $0x88] sm:$0xff]
        %v352 = vld [vmem:[%s201 + $0x90] sm:$0xff]
        %v353 = vld [vmem:[%s201 + $0x98] sm:$0xff]
        %v354 = vld [vmem:[%s201 + $0xa0] sm:$0xff]
        %v355 = vld [vmem:[%s201 + $0xa8] sm:$0xff]
        %v356 = vld [vmem:[%s201 + $0xb0] sm:$0xff]
        %v357 = vld [vmem:[%s201 + $0xb8] sm:$0xff]
        %v358 = vld [vmem:[%s201 + $0xc0] sm:$0xff]
        %v359 = vld [vmem:[%s201 + $0xc8] sm:$0xff]
        %v360 = vld [vmem:[%s201 + $0xd0] sm:$0xff]
        %v361 = vld [vmem:[%s201 + $0xd8] sm:$0xff]
        %v362 = vld [vmem:[%s201 + $0xe0] sm:$0xff]
        %v363 = vld [vmem:[%s201 + $0xe8] sm:$0xff]
        %v364 = vld [vmem:[%s201 + $0xf0] sm:$0xff]
        %v365 = vld [vmem:[%s201 + $0xf8] sm:$0xff]
        %v366 = vld [vmem:[%s201 + $0x100] sm:$0xff]
        %v367 = vld [vmem:[%s201 + $0x108] sm:$0xff]
        %v368 = vld [vmem:[%s201 + $0x110] sm:$0xff]
        %v369 = vld [vmem:[%s201 + $0x118] sm:$0xff]
        %v370 = vld [vmem:[%s201 + $0x120] sm:$0xff]
        %v371 = vld [vmem:[%s201 + $0x128] sm:$0xff]
        %v372 = vld [vmem:[%s201 + $0x130] sm:$0xff]
        %v373 = vld [vmem:[%s201 + $0x138] sm:$0xff]
        %v374 = vld [vmem:[%s201 + $0x140] sm:$0xff]
        %v375 = vld [vmem:[%s201 + $0x148] sm:$0xff]
        %v376 = vld [vmem:[%s201 + $0x150] sm:$0xff]
        %v377 = vld [vmem:[%s201 + $0x158] sm:$0xff]
        %v378 = vld [vmem:[%s201 + $0x160] sm:$0xff]
        %v379 = vld [vmem:[%s201 + $0x168] sm:$0xff]
        %v380 = vld [vmem:[%s201 + $0x170] sm:$0xff]
        %v381 = vld [vmem:[%s201 + $0x178] sm:$0xff]
        %v382 = vld [vmem:[%s201 + $0x180] sm:$0xff]
        %v383 = vld [vmem:[%s201 + $0x188] sm:$0xff]
        %v384 = vld [vmem:[%s201 + $0x190] sm:$0xff]
        %v385 = vld [vmem:[%s201 + $0x198] sm:$0xff]
        %v386 = vld [vmem:[%s201 + $0x1a0] sm:$0xff]
        %v387 = vld [vmem:[%s201 + $0x1a8] sm:$0xff]
        %v388 = vld [vmem:[%s201 + $0x1b0] sm:$0xff]
        %v389 = vld [vmem:[%s201 + $0x1b8] sm:$0xff]
        %v390 = vld [vmem:[%s201 + $0x1c0] sm:$0xff]
        %v391 = vld [vmem:[%s201 + $0x1c8] sm:$0xff]
        %v392 = vld [vmem:[%s201 + $0x1d0] sm:$0xff]
        %v393 = vld [vmem:[%s201 + $0x1d8] sm:$0xff]
        %v394 = vld [vmem:[%s201 + $0x1e0] sm:$0xff]
        %v395 = vld [vmem:[%s201 + $0x1e8] sm:$0xff]
        %v396 = vld [vmem:[%s201 + $0x1f0] sm:$0xff]
        %v397 = vld [vmem:[%s201 + $0x1f8] sm:$0xff]
        %v398 = vld [vmem:[%s201 + $0x200] sm:$0xff]
        %v399 = vld [vmem:[%s201 + $0x208] sm:$0xff]
        %v400 = vld [vmem:[%s201 + $0x210] sm:$0xff]
        %v401 = vld [vmem:[%s201 + $0x218] sm:$0xff]
        %v402 = vld [vmem:[%s201 + $0x220] sm:$0xff]
        %v403 = vld [vmem:[%s201 + $0x228] sm:$0xff]
        %v404 = vld [vmem:[%s201 + $0x230] sm:$0xff]
        %v405 = vld [vmem:[%s201 + $0x238] sm:$0xff]
        %v406 = vld [vmem:[%s201 + $0x240] sm:$0xff]
        %v407 = vld [vmem:[%s201 + $0x248] sm:$0xff]
        %v408 = vld [vmem:[%s201 + $0x250] sm:$0xff]
        %v409 = vld [vmem:[%s201 + $0x258] sm:$0xff]
        %v410 = vld [vmem:[%s201 + $0x260] sm:$0xff]
        %v411 = vld [vmem:[%s201 + $0x268] sm:$0xff]
        %v412 = vld [vmem:[%s201 + $0x270] sm:$0xff]
        %v413 = vld [vmem:[%s201 + $0x278] sm:$0xff]
        %v414 = vld [vmem:[%s201 + $0x280] sm:$0xff]
        %v415 = vld [vmem:[%s201 + $0x288] sm:$0xff]
        %v416 = vld [vmem:[%s201 + $0x290] sm:$0xff]
        %v417 = vld [vmem:[%s201 + $0x298] sm:$0xff]
        %v418 = vld [vmem:[%s201 + $0x2a0] sm:$0xff]
        %v419 = vld [vmem:[%s201 + $0x2a8] sm:$0xff]
        %v420 = vld [vmem:[%s201 + $0x2b0] sm:$0xff]
        %v421 = vld [vmem:[%s201 + $0x2b8] sm:$0xff]
        %v422 = vld [vmem:[%s201 + $0x2c0] sm:$0xff]
        %v423 = vld [vmem:[%s201 + $0x2c8] sm:$0xff]
        %v424 = vld [vmem:[%s201 + $0x2d0] sm:$0xff]
        %v425 = vld [vmem:[%s201 + $0x2d8] sm:$0xff]
        %v426 = vld [vmem:[%s201 + $0x2e0] sm:$0xff]
        %v427 = vld [vmem:[%s201 + $0x2e8] sm:$0xff]
        %v428 = vld [vmem:[%s201 + $0x2f0] sm:$0xff]
        %v429 = vld [vmem:[%s201 + $0x2f8] sm:$0xff]
        %v430 = vld [vmem:[%s201 + $0x300] sm:$0xff]
        %v431 = vld [vmem:[%s201 + $0x308] sm:$0xff]
        %v432 = vld [vmem:[%s201 + $0x310] sm:$0xff]
        %v433 = vld [vmem:[%s201 + $0x318] sm:$0xff]
        %v434 = vld [vmem:[%s201 + $0x320] sm:$0xff]
        %v435 = vld [vmem:[%s201 + $0x328] sm:$0xff]
        %v436 = vld [vmem:[%s201 + $0x330] sm:$0xff]
        %v437 = vld [vmem:[%s201 + $0x338] sm:$0xff]
        %v438 = vld [vmem:[%s201 + $0x340] sm:$0xff]
        %v439 = vld [vmem:[%s201 + $0x348] sm:$0xff]
        %v440 = vld [vmem:[%s201 + $0x350] sm:$0xff]
        %v441 = vld [vmem:[%s201 + $0x358] sm:$0xff]
        %v442 = vld [vmem:[%s201 + $0x360] sm:$0xff]
        %v443 = vld [vmem:[%s201 + $0x368] sm:$0xff]
        %v444 = vld [vmem:[%s201 + $0x370] sm:$0xff]
        %v445 = vld [vmem:[%s201 + $0x378] sm:$0xff]
        %v446 = vld [vmem:[%s201 + $0x380] sm:$0xff]
        %v447 = vld [vmem:[%s201 + $0x388] sm:$0xff]
        %v448 = vld [vmem:[%s201 + $0x390] sm:$0xff]
        %v449 = vld [vmem:[%s201 + $0x398] sm:$0xff]
        %v450 = vld [vmem:[%s201 + $0x3a0] sm:$0xff]
        %v451 = vld [vmem:[%s201 + $0x3a8] sm:$0xff]
        %v452 = vld [vmem:[%s201 + $0x3b0] sm:$0xff]
        %v453 = vld [vmem:[%s201 + $0x3b8] sm:$0xff]
        %v454 = vld [vmem:[%s201 + $0x3c0] sm:$0xff]
        %v455 = vld [vmem:[%s201 + $0x3c8] sm:$0xff]
        %v456 = vld [vmem:[%s201 + $0x3d0] sm:$0xff]
        %v457 = vld [vmem:[%s201 + $0x3d8] sm:$0xff]
        %v458 = vld [vmem:[%s201 + $0x3e0] sm:$0xff]
        %v459 = vld [vmem:[%s201 + $0x3e8] sm:$0xff]
        %v460 = vld [vmem:[%s201 + $0x3f0] sm:$0xff]
        %v461 = vld [vmem:[%s201 + $0x3f8] sm:$0xff]
        %v462 = vld [vmem:[%s201 + $0x400] sm:$0xff]
        %v463 = vld [vmem:[%s201 + $0x408] sm:$0xff]
        %v464 = vld [vmem:[%s201 + $0x410] sm:$0xff]
        %v465 = vld [vmem:[%s201 + $0x418] sm:$0xff]
        %v466 = vld [vmem:[%s201 + $0x420] sm:$0xff]
        %v467 = vld [vmem:[%s201 + $0x428] sm:$0xff]
        %v468 = vld [vmem:[%s201 + $0x430] sm:$0xff]
        %v469 = vld [vmem:[%s201 + $0x438] sm:$0xff]
        %v470 = vld [vmem:[%s201 + $0x440] sm:$0xff]
        %v471 = vld [vmem:[%s201 + $0x448] sm:$0xff]
        %v472 = vld [vmem:[%s201 + $0x450] sm:$0xff]
        %v473 = vld [vmem:[%s201 + $0x458] sm:$0xff]
        %v474 = vld [vmem:[%s201 + $0x460] sm:$0xff]
        %v475 = vld [vmem:[%s201 + $0x468] sm:$0xff]
        %v476 = vld [vmem:[%s201 + $0x470] sm:$0xff]
        %v477 = vld [vmem:[%s201 + $0x478] sm:$0xff]
        %v478 = vld [vmem:[%s201 + $0x480] sm:$0xff]
        %v479 = vld [vmem:[%s201 + $0x488] sm:$0xff]
        %v480 = vld [vmem:[%s201 + $0x490] sm:$0xff]
        %v481 = vld [vmem:[%s201 + $0x498] sm:$0xff]
        %v482 = vld [vmem:[%s201 + $0x4a0] sm:$0xff]
        %v483 = vld [vmem:[%s201 + $0x4a8] sm:$0xff]
        %v484 = vld [vmem:[%s201 + $0x4b0] sm:$0xff]
        %v485 = vld [vmem:[%s201 + $0x4b8] sm:$0xff]
        %v486 = vld [vmem:[%s201 + $0x4c0] sm:$0xff]
        %v487 = vld [vmem:[%s201 + $0x4c8] sm:$0xff]
        %v488 = vld [vmem:[%s201 + $0x4d0] sm:$0xff]
        %v489 = vld [vmem:[%s201 + $0x4d8] sm:$0xff]
        %v490 = vld [vmem:[%s201 + $0x4e0] sm:$0xff]
        %v491 = vld [vmem:[%s201 + $0x4e8] sm:$0xff]
        %v492 = vld [vmem:[%s201 + $0x4f0] sm:$0xff]
        %v493 = vld [vmem:[%s201 + $0x4f8] sm:$0xff]
        %v494 = vld [vmem:[%s201 + $0x500] sm:$0xff]
        %v495 = vld [vmem:[%s201 + $0x508] sm:$0xff]
        %v496 = vld [vmem:[%s201 + $0x510] sm:$0xff]
        %v497 = vld [vmem:[%s201 + $0x518] sm:$0xff]
        %v498 = vld [vmem:[%s201 + $0x520] sm:$0xff]
        %v499 = vld [vmem:[%s201 + $0x528] sm:$0xff]
        %v500 = vld [vmem:[%s201 + $0x530] sm:$0xff]
        %v501 = vld [vmem:[%s201 + $0x538] sm:$0xff]
        %v502 = vld [vmem:[%s201 + $0x540] sm:$0xff]
        %v503 = vld [vmem:[%s201 + $0x548] sm:$0xff]
        %v504 = vld [vmem:[%s201 + $0x550] sm:$0xff]
        %v505 = vld [vmem:[%s201 + $0x558] sm:$0xff]
        %v506 = vld [vmem:[%s201 + $0x560] sm:$0xff]
        %v507 = vld [vmem:[%s201 + $0x568] sm:$0xff]
        %v508 = vld [vmem:[%s201 + $0x570] sm:$0xff]
        %v509 = vld [vmem:[%s201 + $0x578] sm:$0xff]
        %v510 = vld [vmem:[%s201 + $0x580] sm:$0xff]
        %v511 = vld [vmem:[%s201 + $0x588] sm:$0xff]
        %v512 = vld [vmem:[%s201 + $0x590] sm:$0xff]
        %v513 = vld [vmem:[%s201 + $0x598] sm:$0xff]
        %v514 = vld [vmem:[%s201 + $0x5a0] sm:$0xff]
        %v515 = vld [vmem:[%s201 + $0x5a8] sm:$0xff]
        %v516 = vld [vmem:[%s201 + $0x5b0] sm:$0xff]
        %v517 = vld [vmem:[%s201 + $0x5b8] sm:$0xff]
        %v518 = vld [vmem:[%s201 + $0x5c0] sm:$0xff]
        %v519 = vld [vmem:[%s201 + $0x5c8] sm:$0xff]
        %v520 = vld [vmem:[%s201 + $0x5d0] sm:$0xff]
        %v521 = vld [vmem:[%s201 + $0x5d8] sm:$0xff]
        %v522 = vld [vmem:[%s201 + $0x5e0] sm:$0xff]
        %v523 = vld [vmem:[%s201 + $0x5e8] sm:$0xff]
        %v524 = vld [vmem:[%s201 + $0x5f0] sm:$0xff]
        %v525 = vld [vmem:[%s201 + $0x5f8] sm:$0xff]
        %v526 = vld [vmem:[%s201 + $0x600] sm:$0xff]
        %v527 = vld [vmem:[%s201 + $0x608] sm:$0xff]
        %v528 = vld [vmem:[%s201 + $0x610] sm:$0xff]
        %v529 = vld [vmem:[%s201 + $0x618] sm:$0xff]
        %v530 = vld [vmem:[%s201 + $0x620] sm:$0xff]
        %v531 = vld [vmem:[%s201 + $0x628] sm:$0xff]
        %v532 = vld [vmem:[%s201 + $0x630] sm:$0xff]
        %v533 = vld [vmem:[%s201 + $0x638] sm:$0xff]
        %v534 = vld [vmem:[%s201 + $0x640] sm:$0xff]
        %v535 = vld [vmem:[%s201 + $0x648] sm:$0xff]
        %v536 = vld [vmem:[%s201 + $0x650] sm:$0xff]
        %v537 = vld [vmem:[%s201 + $0x658] sm:$0xff]
        %v538 = vld [vmem:[%s201 + $0x660] sm:$0xff]
        %v539 = vld [vmem:[%s201 + $0x668] sm:$0xff]
        %v540 = vld [vmem:[%s201 + $0x670] sm:$0xff]
        %v541 = vld [vmem:[%s201 + $0x678] sm:$0xff]
        %v542 = vld [vmem:[%s201 + $0x680] sm:$0xff]
        %v543 = vld [vmem:[%s201 + $0x688] sm:$0xff]
        %v544 = vld [vmem:[%s201 + $0x690] sm:$0xff]
        %v545 = vld [vmem:[%s201 + $0x698] sm:$0xff]
        %v546 = vld [vmem:[%s201 + $0x6a0] sm:$0xff]
        %v547 = vld [vmem:[%s201 + $0x6a8] sm:$0xff]
        %v548 = vld [vmem:[%s201 + $0x6b0] sm:$0xff]
        %v549 = vld [vmem:[%s201 + $0x6b8] sm:$0xff]
        %v550 = vld [vmem:[%s201 + $0x6c0] sm:$0xff]
        %v551 = vld [vmem:[%s201 + $0x6c8] sm:$0xff]
        %v552 = vld [vmem:[%s201 + $0x6d0] sm:$0xff]
        %v553 = vld [vmem:[%s201 + $0x6d8] sm:$0xff]
        %v554 = vld [vmem:[%s201 + $0x6e0] sm:$0xff]
        %v555 = vld [vmem:[%s201 + $0x6e8] sm:$0xff]
        %v556 = vld [vmem:[%s201 + $0x6f0] sm:$0xff]
        %v557 = vld [vmem:[%s201 + $0x6f8] sm:$0xff]
        %v558 = vld [vmem:[%s201 + $0x700] sm:$0xff]
        %v559 = vld [vmem:[%s201 + $0x708] sm:$0xff]
        %v560 = vld [vmem:[%s201 + $0x710] sm:$0xff]
        %v561 = vld [vmem:[%s201 + $0x718] sm:$0xff]
        %v562 = vld [vmem:[%s201 + $0x720] sm:$0xff]
        %v563 = vld [vmem:[%s201 + $0x728] sm:$0xff]
        %v564 = vld [vmem:[%s201 + $0x730] sm:$0xff]
        %v565 = vld [vmem:[%s201 + $0x738] sm:$0xff]
        %v566 = vld [vmem:[%s201 + $0x740] sm:$0xff]
        %v567 = vld [vmem:[%s201 + $0x748] sm:$0xff]
        %v568 = vld [vmem:[%s201 + $0x750] sm:$0xff]
        %v569 = vld [vmem:[%s201 + $0x758] sm:$0xff]
        %v570 = vld [vmem:[%s201 + $0x760] sm:$0xff]
        %v571 = vld [vmem:[%s201 + $0x768] sm:$0xff]
        %v572 = vld [vmem:[%s201 + $0x770] sm:$0xff]
        %v573 = vld [vmem:[%s201 + $0x778] sm:$0xff]
        %v574 = vld [vmem:[%s201 + $0x780] sm:$0xff]
        %v575 = vld [vmem:[%s201 + $0x788] sm:$0xff]
        %v576 = vld [vmem:[%s201 + $0x790] sm:$0xff]
        %v577 = vld [vmem:[%s201 + $0x798] sm:$0xff]
        %v578 = vld [vmem:[%s201 + $0x7a0] sm:$0xff]
        %v579 = vld [vmem:[%s201 + $0x7a8] sm:$0xff]
        %v580 = vld [vmem:[%s201 + $0x7b0] sm:$0xff]
        %v581 = vld [vmem:[%s201 + $0x7b8] sm:$0xff]
        %v582 = vld [vmem:[%s201 + $0x7c0] sm:$0xff]
        %v583 = vld [vmem:[%s201 + $0x7c8] sm:$0xff]
        %v584 = vld [vmem:[%s201 + $0x7d0] sm:$0xff]
        %v585 = vld [vmem:[%s201 + $0x7d8] sm:$0xff]
        %v586 = vld [vmem:[%s201 + $0x7e0] sm:$0xff]
        %v587 = vld [vmem:[%s201 + $0x7e8] sm:$0xff]
        %v588 = vld [vmem:[%s201 + $0x7f0] sm:$0xff]
        %v589 = vld [vmem:[%s201 + $0x7f8] sm:$0xff]
        %v590 = vld [vmem:[%s201 + $0x800] sm:$0xff]
        %v591 = vld [vmem:[%s201 + $0x808] sm:$0xff]
        %v592 = vld [vmem:[%s201 + $0x810] sm:$0xff]
        %v593 = vld [vmem:[%s201 + $0x818] sm:$0xff]
        %v594 = vld [vmem:[%s201 + $0x820] sm:$0xff]
        %v595 = vld [vmem:[%s201 + $0x828] sm:$0xff]
        %v596 = vld [vmem:[%s201 + $0x830] sm:$0xff]
        %v597 = vld [vmem:[%s201 + $0x838] sm:$0xff]
        %v598 = vld [vmem:[%s201 + $0x840] sm:$0xff]
        %v599 = vld [vmem:[%s201 + $0x848] sm:$0xff]
        %v600 = vld [vmem:[%s201 + $0x850] sm:$0xff]
        %v601 = vld [vmem:[%s201 + $0x858] sm:$0xff]
        %v602 = vld [vmem:[%s201 + $0x860] sm:$0xff]
        %v603 = vld [vmem:[%s201 + $0x868] sm:$0xff]
        %v604 = vld [vmem:[%s201 + $0x870] sm:$0xff]
        %v605 = vld [vmem:[%s201 + $0x878] sm:$0xff]
        %v606 = vld [vmem:[%s201 + $0x880] sm:$0xff]
        %v607 = vld [vmem:[%s201 + $0x888] sm:$0xff]
        %v608 = vld [vmem:[%s201 + $0x890] sm:$0xff]
        %v609 = vld [vmem:[%s201 + $0x898] sm:$0xff]
        %v610 = vld [vmem:[%s201 + $0x8a0] sm:$0xff]
        %v611 = vld [vmem:[%s201 + $0x8a8] sm:$0xff]
        %v612 = vld [vmem:[%s201 + $0x8b0] sm:$0xff]
        %v613 = vld [vmem:[%s201 + $0x8b8] sm:$0xff]
        %v614 = vld [vmem:[%s201 + $0x8c0] sm:$0xff]
        %v615 = vld [vmem:[%s201 + $0x8c8] sm:$0xff]
        %v616 = vld [vmem:[%s201 + $0x8d0] sm:$0xff]
        %v617 = vld [vmem:[%s201 + $0x8d8] sm:$0xff]
        %v618 = vld [vmem:[%s201 + $0x8e0] sm:$0xff]
        %v619 = vld [vmem:[%s201 + $0x8e8] sm:$0xff]
        %v620 = vld [vmem:[%s201 + $0x8f0] sm:$0xff]
        %v621 = vld [vmem:[%s201 + $0x8f8] sm:$0xff]
        %v622 = vld [vmem:[%s201 + $0x900] sm:$0xff]
        %v623 = vld [vmem:[%s201 + $0x908] sm:$0xff]
        %v624 = vld [vmem:[%s201 + $0x910] sm:$0xff]
        %v625 = vld [vmem:[%s201 + $0x918] sm:$0xff]
        %v626 = vld [vmem:[%s201 + $0x920] sm:$0xff]
        %v627 = vld [vmem:[%s201 + $0x928] sm:$0xff]
        %v628 = vld [vmem:[%s201 + $0x930] sm:$0xff]
        %v629 = vld [vmem:[%s201 + $0x938] sm:$0xff]
        %v630 = vld [vmem:[%s201 + $0x940] sm:$0xff]
        %v631 = vld [vmem:[%s201 + $0x948] sm:$0xff]
        %v632 = vld [vmem:[%s201 + $0x950] sm:$0xff]
        %v633 = vld [vmem:[%s201 + $0x958] sm:$0xff]
        %v634 = vld [vmem:[%s201 + $0x960] sm:$0xff]
        %v635 = vld [vmem:[%s201 + $0x968] sm:$0xff]
        %v636 = vld [vmem:[%s201 + $0x970] sm:$0xff]
        %v637 = vld [vmem:[%s201 + $0x978] sm:$0xff]
        %v638 = vld [vmem:[%s201 + $0x980] sm:$0xff]
        %v639 = vld [vmem:[%s201 + $0x988] sm:$0xff]
        %v640 = vld [vmem:[%s201 + $0x990] sm:$0xff]
        %v641 = vld [vmem:[%s201 + $0x998] sm:$0xff]
        %v642 = vld [vmem:[%s201 + $0x9a0] sm:$0xff]
        %v643 = vld [vmem:[%s201 + $0x9a8] sm:$0xff]
        %v644 = vld [vmem:[%s201 + $0x9b0] sm:$0xff]
        %v645 = vld [vmem:[%s201 + $0x9b8] sm:$0xff]
        %v646 = vld [vmem:[%s201 + $0x9c0] sm:$0xff]
        %v647 = vld [vmem:[%s201 + $0x9c8] sm:$0xff]
        %v648 = vld [vmem:[%s201 + $0x9d0] sm:$0xff]
        %v649 = vld [vmem:[%s201 + $0x9d8] sm:$0xff]
        %v650 = vld [vmem:[%s201 + $0x9e0] sm:$0xff]
        %v651 = vld [vmem:[%s201 + $0x9e8] sm:$0xff]
        %v652 = vld [vmem:[%s201 + $0x9f0] sm:$0xff]
        %v653 = vld [vmem:[%s201 + $0x9f8] sm:$0xff]
        %v654 = vld [vmem:[%s201 + $0xa00] sm:$0xff]
        %v655 = vld [vmem:[%s201 + $0xa08] sm:$0xff]
        %v656 = vld [vmem:[%s201 + $0xa10] sm:$0xff]
        %v657 = vld [vmem:[%s201 + $0xa18] sm:$0xff]
        %v658 = vld [vmem:[%s201 + $0xa20] sm:$0xff]
        %v659 = vld [vmem:[%s201 + $0xa28] sm:$0xff]
        %v660 = vld [vmem:[%s201 + $0xa30] sm:$0xff]
        %v661 = vld [vmem:[%s201 + $0xa38] sm:$0xff]
        %v662 = vld [vmem:[%s201 + $0xa40] sm:$0xff]
        %v663 = vld [vmem:[%s201 + $0xa48] sm:$0xff]
        %v664 = vld [vmem:[%s201 + $0xa50] sm:$0xff]
        %v665 = vld [vmem:[%s201 + $0xa58] sm:$0xff]
        %v666 = vld [vmem:[%s201 + $0xa60] sm:$0xff]
        %v667 = vld [vmem:[%s201 + $0xa68] sm:$0xff]
        %v668 = vld [vmem:[%s201 + $0xa70] sm:$0xff]
        %v669 = vld [vmem:[%s201 + $0xa78] sm:$0xff]
        %v670 = vld [vmem:[%s201 + $0xa80] sm:$0xff]
        %v671 = vld [vmem:[%s201 + $0xa88] sm:$0xff]
        %v672 = vld [vmem:[%s201 + $0xa90] sm:$0xff]
        %v673 = vld [vmem:[%s201 + $0xa98] sm:$0xff]
        %v674 = vld [vmem:[%s201 + $0xaa0] sm:$0xff]
        %v675 = vld [vmem:[%s201 + $0xaa8] sm:$0xff]
        %v676 = vld [vmem:[%s201 + $0xab0] sm:$0xff]
        %v677 = vld [vmem:[%s201 + $0xab8] sm:$0xff]
        %v678 = vld [vmem:[%s201 + $0xac0] sm:$0xff]
        %v679 = vld [vmem:[%s201 + $0xac8] sm:$0xff]
        %v680 = vld [vmem:[%s201 + $0xad0] sm:$0xff]
        %v681 = vld [vmem:[%s201 + $0xad8] sm:$0xff]
        %v682 = vld [vmem:[%s201 + $0xae0] sm:$0xff]
        %v683 = vld [vmem:[%s201 + $0xae8] sm:$0xff]
        %v684 = vld [vmem:[%s201 + $0xaf0] sm:$0xff]
        %v685 = vld [vmem:[%s201 + $0xaf8] sm:$0xff]
        %v686 = vld [vmem:[%s201 + $0xb00] sm:$0xff]
        %v687 = vld [vmem:[%s201 + $0xb08] sm:$0xff]
        %v688 = vld [vmem:[%s201 + $0xb10] sm:$0xff]
        %v689 = vld [vmem:[%s201 + $0xb18] sm:$0xff]
        %v690 = vld [vmem:[%s201 + $0xb20] sm:$0xff]
        %v691 = vld [vmem:[%s201 + $0xb28] sm:$0xff]
        %v692 = vld [vmem:[%s201 + $0xb30] sm:$0xff]
        %v693 = vld [vmem:[%s201 + $0xb38] sm:$0xff]
        %v694 = vld [vmem:[%s201 + $0xb40] sm:$0xff]
        %v695 = vld [vmem:[%s201 + $0xb48] sm:$0xff]
        %v696 = vld [vmem:[%s201 + $0xb50] sm:$0xff]
        %v697 = vld [vmem:[%s201 + $0xb58] sm:$0xff]
        %v698 = vld [vmem:[%s201 + $0xb60] sm:$0xff]
        %v699 = vld [vmem:[%s201 + $0xb68] sm:$0xff]
        %v700 = vld [vmem:[%s201 + $0xb70] sm:$0xff]
        %v701 = vld [vmem:[%s201 + $0xb78] sm:$0xff]
        %v702 = vld [vmem:[%s201 + $0xb80] sm:$0xff]
        %v703 = vld [vmem:[%s201 + $0xb88] sm:$0xff]
        %v704 = vld [vmem:[%s201 + $0xb90] sm:$0xff]
        %v705 = vld [vmem:[%s201 + $0xb98] sm:$0xff]
        %v706 = vld [vmem:[%s201 + $0xba0] sm:$0xff]
        %v707 = vld [vmem:[%s201 + $0xba8] sm:$0xff]
        %v708 = vld [vmem:[%s201 + $0xbb0] sm:$0xff]
        %v709 = vld [vmem:[%s201 + $0xbb8] sm:$0xff]
        %v710 = vld [vmem:[%s201 + $0xbc0] sm:$0xff]
        %v711 = vld [vmem:[%s201 + $0xbc8] sm:$0xff]
        %v712 = vld [vmem:[%s201 + $0xbd0] sm:$0xff]
        %v713 = vld [vmem:[%s201 + $0xbd8] sm:$0xff]
        %v714 = vld [vmem:[%s201 + $0xbe0] sm:$0xff]
        %v715 = vld [vmem:[%s201 + $0xbe8] sm:$0xff]
        %v716 = vld [vmem:[%s201 + $0xbf0] sm:$0xff]
        %v717 = vld [vmem:[%s201 + $0xbf8] sm:$0xff]
        %v718 = vld [vmem:[%s201 + $0xc00] sm:$0xff]
        %v719 = vld [vmem:[%s201 + $0xc08] sm:$0xff]
        %v720 = vld [vmem:[%s201 + $0xc10] sm:$0xff]
        %v721 = vld [vmem:[%s201 + $0xc18] sm:$0xff]
        %v722 = vld [vmem:[%s201 + $0xc20] sm:$0xff]
        %v723 = vld [vmem:[%s201 + $0xc28] sm:$0xff]
        %v724 = vld [vmem:[%s201 + $0xc30] sm:$0xff]
        %v725 = vld [vmem:[%s201 + $0xc38] sm:$0xff]
        %v726 = vld [vmem:[%s201 + $0xc40] sm:$0xff]
        %v727 = vld [vmem:[%s201 + $0xc48] sm:$0xff]
        %v728 = vld [vmem:[%s201 + $0xc50] sm:$0xff]
        %v729 = vld [vmem:[%s201 + $0xc58] sm:$0xff]
        %v730 = vld [vmem:[%s201 + $0xc60] sm:$0xff]
        %v731 = vld [vmem:[%s201 + $0xc68] sm:$0xff]
        %v732 = vld [vmem:[%s201 + $0xc70] sm:$0xff]
        %v733 = vld [vmem:[%s201 + $0xc78] sm:$0xff]
        %v734 = vld [vmem:[%s201 + $0xc80] sm:$0xff]
        %v735 = vld [vmem:[%s201 + $0xc88] sm:$0xff]
        %v736 = vld [vmem:[%s201 + $0xc90] sm:$0xff]
        %v737 = vld [vmem:[%s201 + $0xc98] sm:$0xff]
        %v738 = vld [vmem:[%s201 + $0xca0] sm:$0xff]
        %v739 = vld [vmem:[%s201 + $0xca8] sm:$0xff]
        %v740 = vld [vmem:[%s201 + $0xcb0] sm:$0xff]
        %v741 = vld [vmem:[%s201 + $0xcb8] sm:$0xff]
        %v742 = vld [vmem:[%s201 + $0xcc0] sm:$0xff]
        %v743 = vld [vmem:[%s201 + $0xcc8] sm:$0xff]
        %v744 = vld [vmem:[%s201 + $0xcd0] sm:$0xff]
        %v745 = vld [vmem:[%s201 + $0xcd8] sm:$0xff]
        %v746 = vld [vmem:[%s201 + $0xce0] sm:$0xff]
        %v747 = vld [vmem:[%s201 + $0xce8] sm:$0xff]
        %v748 = vld [vmem:[%s201 + $0xcf0] sm:$0xff]
        %v749 = vld [vmem:[%s201 + $0xcf8] sm:$0xff]
        %v750 = vld [vmem:[%s201 + $0xd00] sm:$0xff]
        %v751 = vld [vmem:[%s201 + $0xd08] sm:$0xff]
        %v752 = vld [vmem:[%s201 + $0xd10] sm:$0xff]
        %v753 = vld [vmem:[%s201 + $0xd18] sm:$0xff]
        %v754 = vld [vmem:[%s201 + $0xd20] sm:$0xff]
        %v755 = vld [vmem:[%s201 + $0xd28] sm:$0xff]
        %v756 = vld [vmem:[%s201 + $0xd30] sm:$0xff]
        %v757 = vld [vmem:[%s201 + $0xd38] sm:$0xff]
        %v758 = vld [vmem:[%s201 + $0xd40] sm:$0xff]
        %v759 = vld [vmem:[%s201 + $0xd48] sm:$0xff]
        %v760 = vld [vmem:[%s201 + $0xd50] sm:$0xff]
        %v761 = vld [vmem:[%s201 + $0xd58] sm:$0xff]
        %v762 = vld [vmem:[%s201 + $0xd60] sm:$0xff]
        %v763 = vld [vmem:[%s201 + $0xd68] sm:$0xff]
        %v764 = vld [vmem:[%s201 + $0xd70] sm:$0xff]
        %v765 = vld [vmem:[%s201 + $0xd78] sm:$0xff]
        %v766 = vld [vmem:[%s201 + $0xd80] sm:$0xff]
        %v767 = vld [vmem:[%s201 + $0xd88] sm:$0xff]
        %v768 = vld [vmem:[%s201 + $0xd90] sm:$0xff]
        %v769 = vld [vmem:[%s201 + $0xd98] sm:$0xff]
        %v770 = vld [vmem:[%s201 + $0xda0] sm:$0xff]
        %v771 = vld [vmem:[%s201 + $0xda8] sm:$0xff]
        %v772 = vld [vmem:[%s201 + $0xdb0] sm:$0xff]
        %v773 = vld [vmem:[%s201 + $0xdb8] sm:$0xff]
        %v774 = vld [vmem:[%s201 + $0xdc0] sm:$0xff]
        %v775 = vld [vmem:[%s201 + $0xdc8] sm:$0xff]
        %v776 = vld [vmem:[%s201 + $0xdd0] sm:$0xff]
        %v777 = vld [vmem:[%s201 + $0xdd8] sm:$0xff]
        %v778 = vld [vmem:[%s201 + $0xde0] sm:$0xff]
        %v779 = vld [vmem:[%s201 + $0xde8] sm:$0xff]
        %v780 = vld [vmem:[%s201 + $0xdf0] sm:$0xff]
        %v781 = vld [vmem:[%s201 + $0xdf8] sm:$0xff]
        %v782 = vld [vmem:[%s201 + $0xe00] sm:$0xff]
        %v783 = vld [vmem:[%s201 + $0xe08] sm:$0xff]
        %v784 = vld [vmem:[%s201 + $0xe10] sm:$0xff]
        %v785 = vld [vmem:[%s201 + $0xe18] sm:$0xff]
        %v786 = vld [vmem:[%s201 + $0xe20] sm:$0xff]
        %v787 = vld [vmem:[%s201 + $0xe28] sm:$0xff]
        %v788 = vld [vmem:[%s201 + $0xe30] sm:$0xff]
        %v789 = vld [vmem:[%s201 + $0xe38] sm:$0xff]
        %v790 = vld [vmem:[%s201 + $0xe40] sm:$0xff]
        %v791 = vld [vmem:[%s201 + $0xe48] sm:$0xff]
        %v792 = vld [vmem:[%s201 + $0xe50] sm:$0xff]
        %v793 = vld [vmem:[%s201 + $0xe58] sm:$0xff]
        %v794 = vld [vmem:[%s201 + $0xe60] sm:$0xff]
        %v795 = vld [vmem:[%s201 + $0xe68] sm:$0xff]
        %v796 = vld [vmem:[%s201 + $0xe70] sm:$0xff]
        %v797 = vld [vmem:[%s201 + $0xe78] sm:$0xff]
        %v798 = vld [vmem:[%s201 + $0xe80] sm:$0xff]
        %v799 = vld [vmem:[%s201 + $0xe88] sm:$0xff]
        %v800 = vld [vmem:[%s201 + $0xe90] sm:$0xff]
        %v801 = vld [vmem:[%s201 + $0xe98] sm:$0xff]
        %v802 = vld [vmem:[%s201 + $0xea0] sm:$0xff]
        %v803 = vld [vmem:[%s201 + $0xea8] sm:$0xff]
        %v804 = vld [vmem:[%s201 + $0xeb0] sm:$0xff]
        %v805 = vld [vmem:[%s201 + $0xeb8] sm:$0xff]
        %v806 = vld [vmem:[%s201 + $0xec0] sm:$0xff]
        %v807 = vld [vmem:[%s201 + $0xec8] sm:$0xff]
        %v808 = vld [vmem:[%s201 + $0xed0] sm:$0xff]
        %v809 = vld [vmem:[%s201 + $0xed8] sm:$0xff]
        %v810 = vld [vmem:[%s201 + $0xee0] sm:$0xff]
        %v811 = vld [vmem:[%s201 + $0xee8] sm:$0xff]
        %v812 = vld [vmem:[%s201 + $0xef0] sm:$0xff]
        %v813 = vld [vmem:[%s201 + $0xef8] sm:$0xff]
        %v814 = vld [vmem:[%s201 + $0xf00] sm:$0xff]
        %v815 = vld [vmem:[%s201 + $0xf08] sm:$0xff]
        %v816 = vld [vmem:[%s201 + $0xf10] sm:$0xff]
        %v817 = vld [vmem:[%s201 + $0xf18] sm:$0xff]
        %v818 = vld [vmem:[%s201 + $0xf20] sm:$0xff]
        %v819 = vld [vmem:[%s201 + $0xf28] sm:$0xff]
        %v820 = vld [vmem:[%s201 + $0xf30] sm:$0xff]
        %v821 = vld [vmem:[%s201 + $0xf38] sm:$0xff]
        %v822 = vld [vmem:[%s201 + $0xf40] sm:$0xff]
        %v823 = vld [vmem:[%s201 + $0xf48] sm:$0xff]
        %v824 = vld [vmem:[%s201 + $0xf50] sm:$0xff]
        %v825 = vld [vmem:[%s201 + $0xf58] sm:$0xff]
        %v826 = vld [vmem:[%s201 + $0xf60] sm:$0xff]
        %v827 = vld [vmem:[%s201 + $0xf68] sm:$0xff]
        %v828 = vld [vmem:[%s201 + $0xf70] sm:$0xff]
        %v829 = vld [vmem:[%s201 + $0xf78] sm:$0xff]
        %v830 = vld [vmem:[%s201 + $0xf80] sm:$0xff]
        %v831 = vld [vmem:[%s201 + $0xf88] sm:$0xff]
        %v832 = vld [vmem:[%s201 + $0xf90] sm:$0xff]
        %v833 = vld [vmem:[%s201 + $0xf98] sm:$0xff]
        %v834 = vld [vmem:[%s201 + $0xfa0] sm:$0xff]
        %v835 = vld [vmem:[%s201 + $0xfa8] sm:$0xff]
        %v836 = vld [vmem:[%s201 + $0xfb0] sm:$0xff]
        %v837 = vld [vmem:[%s201 + $0xfb8] sm:$0xff]
        %v838 = vld [vmem:[%s201 + $0xfc0] sm:$0xff]
        %v839 = vld [vmem:[%s201 + $0xfc8] sm:$0xff]
        %v840 = vld [vmem:[%s201 + $0xfd0] sm:$0xff]
        %v841 = vld [vmem:[%s201 + $0xfd8] sm:$0xff]
        %v842 = vld [vmem:[%s201 + $0xfe0] sm:$0xff]
        %v843 = vld [vmem:[%s201 + $0xfe8] sm:$0xff]
        %v844 = vld [vmem:[%s201 + $0xff0] sm:$0xff]
        %v845 = vld [vmem:[%s201 + $0xff8] sm:$0xff]
        %v846 = vld [vmem:[%s201 + $0x1000] sm:$0xff]
        %v847 = vld [vmem:[%s201 + $0x1008] sm:$0xff]
        %v848 = vld [vmem:[%s201 + $0x1010] sm:$0xff]
        %v849 = vld [vmem:[%s201 + $0x1018] sm:$0xff]
        %v850 = vld [vmem:[%s201 + $0x1020] sm:$0xff]
        %v851 = vld [vmem:[%s201 + $0x1028] sm:$0xff]
        %v852 = vld [vmem:[%s201 + $0x1030] sm:$0xff]
        %v853 = vld [vmem:[%s201 + $0x1038] sm:$0xff]
        %v854 = vld [vmem:[%s201 + $0x1040] sm:$0xff]
        %v855 = vld [vmem:[%s201 + $0x1048] sm:$0xff]
        %v856 = vld [vmem:[%s201 + $0x1050] sm:$0xff]
        %v857 = vld [vmem:[%s201 + $0x1058] sm:$0xff]
        %v858 = vld [vmem:[%s201 + $0x1060] sm:$0xff]
        %v859 = vld [vmem:[%s201 + $0x1068] sm:$0xff]
        %v860 = vld [vmem:[%s201 + $0x1070] sm:$0xff]
        %v861 = vld [vmem:[%s201 + $0x1078] sm:$0xff]
        %v862 = vld [vmem:[%s201 + $0x1080] sm:$0xff]
        %v863 = vld [vmem:[%s201 + $0x1088] sm:$0xff]
        %v864 = vld [vmem:[%s201 + $0x1090] sm:$0xff]
        %v865 = vld [vmem:[%s201 + $0x1098] sm:$0xff]
        %v866 = vld [vmem:[%s201 + $0x10a0] sm:$0xff]
        %v867 = vld [vmem:[%s201 + $0x10a8] sm:$0xff]
        %v868 = vld [vmem:[%s201 + $0x10b0] sm:$0xff]
        %v869 = vld [vmem:[%s201 + $0x10b8] sm:$0xff]
        %v870 = vld [vmem:[%s201 + $0x10c0] sm:$0xff]
        %v871 = vld [vmem:[%s201 + $0x10c8] sm:$0xff]
        %v872 = vld [vmem:[%s201 + $0x10d0] sm:$0xff]
        %v873 = vld [vmem:[%s201 + $0x10d8] sm:$0xff]
        %v874 = vld [vmem:[%s201 + $0x10e0] sm:$0xff]
        %v875 = vld [vmem:[%s201 + $0x10e8] sm:$0xff]
        %v876 = vld [vmem:[%s201 + $0x10f0] sm:$0xff]
        %v877 = vld [vmem:[%s201 + $0x10f8] sm:$0xff]
        %v878 = vld [vmem:[%s201 + $0x1100] sm:$0xff]
        %v879 = vld [vmem:[%s201 + $0x1108] sm:$0xff]
        %v880 = vld [vmem:[%s201 + $0x1110] sm:$0xff]
        %v881 = vld [vmem:[%s201 + $0x1118] sm:$0xff]
        %v882 = vld [vmem:[%s201 + $0x1120] sm:$0xff]
        %v883 = vld [vmem:[%s201 + $0x1128] sm:$0xff]
        %v884 = vld [vmem:[%s201 + $0x1130] sm:$0xff]
        %v885 = vld [vmem:[%s201 + $0x1138] sm:$0xff]
        %v886 = vld [vmem:[%s201 + $0x1140] sm:$0xff]
        %v887 = vld [vmem:[%s201 + $0x1148] sm:$0xff]
        %v888 = vld [vmem:[%s201 + $0x1150] sm:$0xff]
        %v889 = vld [vmem:[%s201 + $0x1158] sm:$0xff]
        %v890 = vld [vmem:[%s201 + $0x1160] sm:$0xff]
        %v891 = vld [vmem:[%s201 + $0x1168] sm:$0xff]
        %v892 = vld [vmem:[%s201 + $0x1170] sm:$0xff]
        %v893 = vld [vmem:[%s201 + $0x1178] sm:$0xff]
        %v894 = vld [vmem:[%s201 + $0x1180] sm:$0xff]
        %v895 = vld [vmem:[%s201 + $0x1188] sm:$0xff]
        %v896 = vld [vmem:[%s201 + $0x1190] sm:$0xff]
        %v897 = vld [vmem:[%s201 + $0x1198] sm:$0xff]
        %v898 = vld [vmem:[%s201 + $0x11a0] sm:$0xff]
        %v899 = vld [vmem:[%s201 + $0x11a8] sm:$0xff]
        %v900 = vld [vmem:[%s201 + $0x11b0] sm:$0xff]
        %v901 = vld [vmem:[%s201 + $0x11b8] sm:$0xff]
        %v902 = vld [vmem:[%s201 + $0x11c0] sm:$0xff]
        %v903 = vld [vmem:[%s201 + $0x11c8] sm:$0xff]
        %v904 = vld [vmem:[%s201 + $0x11d0] sm:$0xff]
        %v905 = vld [vmem:[%s201 + $0x11d8] sm:$0xff]
        %v906 = vld [vmem:[%s201 + $0x11e0] sm:$0xff]
        %v907 = vld [vmem:[%s201 + $0x11e8] sm:$0xff]
        %v908 = vld [vmem:[%s201 + $0x11f0] sm:$0xff]
        %v909 = vld [vmem:[%s201 + $0x11f8] sm:$0xff]
        %v910 = vld [vmem:[%s201 + $0x1200] sm:$0xff]
        %v911 = vld [vmem:[%s201 + $0x1208] sm:$0xff]
        %v912 = vld [vmem:[%s201 + $0x1210] sm:$0xff]
        %v913 = vld [vmem:[%s201 + $0x1218] sm:$0xff]
        %v914 = vld [vmem:[%s201 + $0x1220] sm:$0xff]
        %v915 = vld [vmem:[%s201 + $0x1228] sm:$0xff]
        %v916 = vld [vmem:[%s201 + $0x1230] sm:$0xff]
        %v917 = vld [vmem:[%s201 + $0x1238] sm:$0xff]
        %v918 = vld [vmem:[%s201 + $0x1240] sm:$0xff]
        %v919 = vld [vmem:[%s201 + $0x1248] sm:$0xff]
        %v920 = vld [vmem:[%s201 + $0x1250] sm:$0xff]
        %v921 = vld [vmem:[%s201 + $0x1258] sm:$0xff]
        %v922 = vld [vmem:[%s201 + $0x1260] sm:$0xff]
        %v923 = vld [vmem:[%s201 + $0x1268] sm:$0xff]
        %v924 = vld [vmem:[%s201 + $0x1270] sm:$0xff]
        %v925 = vld [vmem:[%s201 + $0x1278] sm:$0xff]
        %v926 = vld [vmem:[%s201 + $0x1280] sm:$0xff]
        %v927 = vld [vmem:[%s201 + $0x1288] sm:$0xff]
        %v928 = vld [vmem:[%s201 + $0x1290] sm:$0xff]
        %v929 = vld [vmem:[%s201 + $0x1298] sm:$0xff]
        %v930 = vld [vmem:[%s201 + $0x12a0] sm:$0xff]
        %v931 = vld [vmem:[%s201 + $0x12a8] sm:$0xff]
        %v932 = vld [vmem:[%s201 + $0x12b0] sm:$0xff]
        %v933 = vld [vmem:[%s201 + $0x12b8] sm:$0xff]
        %v934 = vld [vmem:[%s201 + $0x12c0] sm:$0xff]
        %v935 = vld [vmem:[%s201 + $0x12c8] sm:$0xff]
        %v936 = vld [vmem:[%s201 + $0x12d0] sm:$0xff]
        %v937 = vld [vmem:[%s201 + $0x12d8] sm:$0xff]
        %v938 = vld [vmem:[%s201 + $0x12e0] sm:$0xff]
        %v939 = vld [vmem:[%s201 + $0x12e8] sm:$0xff]
        %v940 = vld [vmem:[%s201 + $0x12f0] sm:$0xff]
        %v941 = vld [vmem:[%s201 + $0x12f8] sm:$0xff]
        %v942 = vld [vmem:[%s201 + $0x1300] sm:$0xff]
        %v943 = vld [vmem:[%s201 + $0x1308] sm:$0xff]
        %v944 = vld [vmem:[%s201 + $0x1310] sm:$0xff]
        %v945 = vld [vmem:[%s201 + $0x1318] sm:$0xff]
        %v946 = vld [vmem:[%s201 + $0x1320] sm:$0xff]
        %v947 = vld [vmem:[%s201 + $0x1328] sm:$0xff]
        %v948 = vld [vmem:[%s201 + $0x1330] sm:$0xff]
        %v949 = vld [vmem:[%s201 + $0x1338] sm:$0xff]
        %v950 = vld [vmem:[%s201 + $0x1340] sm:$0xff]
        %v951 = vld [vmem:[%s201 + $0x1348] sm:$0xff]
        %v952 = vld [vmem:[%s201 + $0x1350] sm:$0xff]
        %v953 = vld [vmem:[%s201 + $0x1358] sm:$0xff]
        %v954 = vld [vmem:[%s201 + $0x1360] sm:$0xff]
        %v955 = vld [vmem:[%s201 + $0x1368] sm:$0xff]
        %v956 = vld [vmem:[%s201 + $0x1370] sm:$0xff]
        %v957 = vld [vmem:[%s201 + $0x1378] sm:$0xff]
        %v958 = vld [vmem:[%s201 + $0x1380] sm:$0xff]
        %v959 = vld [vmem:[%s201 + $0x1388] sm:$0xff]
        %v960 = vld [vmem:[%s201 + $0x1390] sm:$0xff]
        %v961 = vld [vmem:[%s201 + $0x1398] sm:$0xff]
        %v962 = vld [vmem:[%s201 + $0x13a0] sm:$0xff]
        %v963 = vld [vmem:[%s201 + $0x13a8] sm:$0xff]
        %v964 = vld [vmem:[%s201 + $0x13b0] sm:$0xff]
        %v965 = vld [vmem:[%s201 + $0x13b8] sm:$0xff]
        %v966 = vld [vmem:[%s201 + $0x13c0] sm:$0xff]
        %v967 = vld [vmem:[%s201 + $0x13c8] sm:$0xff]
        %v968 = vld [vmem:[%s201 + $0x13d0] sm:$0xff]
        %v969 = vld [vmem:[%s201 + $0x13d8] sm:$0xff]
        %v970 = vld [vmem:[%s201 + $0x13e0] sm:$0xff]
        %v971 = vld [vmem:[%s201 + $0x13e8] sm:$0xff]
        %v972 = vld [vmem:[%s201 + $0x13f0] sm:$0xff]
        %v973 = vld [vmem:[%s201 + $0x13f8] sm:$0xff]
        %v974 = vld [vmem:[%s201 + $0x1400] sm:$0xff]
        %v975 = vld [vmem:[%s201 + $0x1408] sm:$0xff]
        %v976 = vld [vmem:[%s201 + $0x1410] sm:$0xff]
        %v977 = vld [vmem:[%s201 + $0x1418] sm:$0xff]
        %v978 = vld [vmem:[%s201 + $0x1420] sm:$0xff]
        %v979 = vld [vmem:[%s201 + $0x1428] sm:$0xff]
        %v980 = vld [vmem:[%s201 + $0x1430] sm:$0xff]
        %v981 = vld [vmem:[%s201 + $0x1438] sm:$0xff]
        %v982 = vld [vmem:[%s201 + $0x1440] sm:$0xff]
        %v983 = vld [vmem:[%s201 + $0x1448] sm:$0xff]
        %v984 = vld [vmem:[%s201 + $0x1450] sm:$0xff]
        %v985 = vld [vmem:[%s201 + $0x1458] sm:$0xff]
        %v986 = vld [vmem:[%s201 + $0x1460] sm:$0xff]
        %v987 = vld [vmem:[%s201 + $0x1468] sm:$0xff]
        %v988 = vld [vmem:[%s201 + $0x1470] sm:$0xff]
        %v989 = vld [vmem:[%s201 + $0x1478] sm:$0xff]
        %v990 = vld [vmem:[%s201 + $0x1480] sm:$0xff]
        %v991 = vld [vmem:[%s201 + $0x1488] sm:$0xff]
        %v992 = vld [vmem:[%s201 + $0x1490] sm:$0xff]
        %v993 = vld [vmem:[%s201 + $0x1498] sm:$0xff]
        %v994 = vld [vmem:[%s201 + $0x14a0] sm:$0xff]
        %v995 = vld [vmem:[%s201 + $0x14a8] sm:$0xff]
        %v996 = vld [vmem:[%s201 + $0x14b0] sm:$0xff]
        %v997 = vld [vmem:[%s201 + $0x14b8] sm:$0xff]
        %v998 = vld [vmem:[%s201 + $0x14c0] sm:$0xff]
        %v999 = vld [vmem:[%s201 + $0x14c8] sm:$0xff]
        %v1000 = vld [vmem:[%s201 + $0x14d0] sm:$0xff]
        %v1001 = vld [vmem:[%s201 + $0x14d8] sm:$0xff]
        %v1002 = vld [vmem:[%s201 + $0x14e0] sm:$0xff]
        %v1003 = vld [vmem:[%s201 + $0x14e8] sm:$0xff]
        %v1004 = vld [vmem:[%s201 + $0x14f0] sm:$0xff]
        %v1005 = vld [vmem:[%s201 + $0x14f8] sm:$0xff]
        %v1006 = vld [vmem:[%s201 + $0x1500] sm:$0xff]
        %v1007 = vld [vmem:[%s201 + $0x1508] sm:$0xff]
        %v1008 = vld [vmem:[%s201 + $0x1510] sm:$0xff]
        %v1009 = vld [vmem:[%s201 + $0x1518] sm:$0xff]
        %v1010 = vld [vmem:[%s201 + $0x1520] sm:$0xff]
        %v1011 = vld [vmem:[%s201 + $0x1528] sm:$0xff]
        %v1012 = vld [vmem:[%s201 + $0x1530] sm:$0xff]
        %v1013 = vld [vmem:[%s201 + $0x1538] sm:$0xff]
        %v1014 = vld [vmem:[%s201 + $0x1540] sm:$0xff]
        %v1015 = vld [vmem:[%s201 + $0x1548] sm:$0xff]
        %v1016 = vld [vmem:[%s201 + $0x1550] sm:$0xff]
        %v1017 = vld [vmem:[%s201 + $0x1558] sm:$0xff]
        %v1018 = vld [vmem:[%s201 + $0x1560] sm:$0xff]
        %v1019 = vld [vmem:[%s201 + $0x1568] sm:$0xff]
        %v1020 = vld [vmem:[%s201 + $0x1570] sm:$0xff]
        %v1021 = vld [vmem:[%s201 + $0x1578] sm:$0xff]
        %v1022 = vld [vmem:[%s201 + $0x1580] sm:$0xff]
        %v1023 = vld [vmem:[%s201 + $0x1588] sm:$0xff]
        %v1024 = vld [vmem:[%s201 + $0x1590] sm:$0xff]
        %v1025 = vld [vmem:[%s201 + $0x1598] sm:$0xff]
        %v1026 = vld [vmem:[%s201 + $0x15a0] sm:$0xff]
        %v1027 = vld [vmem:[%s201 + $0x15a8] sm:$0xff]
        %v1028 = vld [vmem:[%s201 + $0x15b0] sm:$0xff]
        %v1029 = vld [vmem:[%s201 + $0x15b8] sm:$0xff]
        %v1030 = vld [vmem:[%s201 + $0x15c0] sm:$0xff]
        %v1031 = vld [vmem:[%s201 + $0x15c8] sm:$0xff]
        %v1032 = vld [vmem:[%s201 + $0x15d0] sm:$0xff]
        %v1033 = vld [vmem:[%s201 + $0x15d8] sm:$0xff]
        %v1034 = vld [vmem:[%s201 + $0x15e0] sm:$0xff]
        %v1035 = vld [vmem:[%s201 + $0x15e8] sm:$0xff]
        %v1036 = vld [vmem:[%s201 + $0x15f0] sm:$0xff]
        %v1037 = vld [vmem:[%s201 + $0x15f8] sm:$0xff]
        %v1038 = vld [vmem:[%s201 + $0x1600] sm:$0xff]
        %v1039 = vld [vmem:[%s201 + $0x1608] sm:$0xff]
        %v1040 = vld [vmem:[%s201 + $0x1610] sm:$0xff]
        %v1041 = vld [vmem:[%s201 + $0x1618] sm:$0xff]
        %v1042 = vld [vmem:[%s201 + $0x1620] sm:$0xff]
        %v1043 = vld [vmem:[%s201 + $0x1628] sm:$0xff]
        %v1044 = vld [vmem:[%s201 + $0x1630] sm:$0xff]
        %v1045 = vld [vmem:[%s201 + $0x1638] sm:$0xff]
        %v1046 = vld [vmem:[%s201 + $0x1640] sm:$0xff]
        %v1047 = vld [vmem:[%s201 + $0x1648] sm:$0xff]
        %v1048 = vld [vmem:[%s201 + $0x1650] sm:$0xff]
        %v1049 = vld [vmem:[%s201 + $0x1658] sm:$0xff]
        %v1050 = vld [vmem:[%s201 + $0x1660] sm:$0xff]
        %v1051 = vld [vmem:[%s201 + $0x1668] sm:$0xff]
        %v1052 = vld [vmem:[%s201 + $0x1670] sm:$0xff]
        %v1053 = vld [vmem:[%s201 + $0x1678] sm:$0xff]
        %v1054 = vld [vmem:[%s201 + $0x1680] sm:$0xff]
        %v1055 = vld [vmem:[%s201 + $0x1688] sm:$0xff]
        %v1056 = vld [vmem:[%s201 + $0x1690] sm:$0xff]
        %v1057 = vld [vmem:[%s201 + $0x1698] sm:$0xff]
        %v1058 = vld [vmem:[%s201 + $0x16a0] sm:$0xff]
        %v1059 = vld [vmem:[%s201 + $0x16a8] sm:$0xff]
        %v1060 = vld [vmem:[%s201 + $0x16b0] sm:$0xff]
        %v1061 = vld [vmem:[%s201 + $0x16b8] sm:$0xff]
        %v1062 = vld [vmem:[%s201 + $0x16c0] sm:$0xff]
        %v1063 = vld [vmem:[%s201 + $0x16c8] sm:$0xff]
        %v1064 = vld [vmem:[%s201 + $0x16d0] sm:$0xff]
        %v1065 = vld [vmem:[%s201 + $0x16d8] sm:$0xff]
        %v1066 = vld [vmem:[%s201 + $0x16e0] sm:$0xff]
        %v1067 = vld [vmem:[%s201 + $0x16e8] sm:$0xff]
        %v1068 = vld [vmem:[%s201 + $0x16f0] sm:$0xff]
        %v1069 = vld [vmem:[%s201 + $0x16f8] sm:$0xff]
        %v1070 = vld [vmem:[%s201 + $0x1700] sm:$0xff]
        %v1071 = vld [vmem:[%s201 + $0x1708] sm:$0xff]
        %v1072 = vld [vmem:[%s201 + $0x1710] sm:$0xff]
        %v1073 = vld [vmem:[%s201 + $0x1718] sm:$0xff]
        %v1074 = vld [vmem:[%s201 + $0x1720] sm:$0xff]
        %v1075 = vld [vmem:[%s201 + $0x1728] sm:$0xff]
        %v1076 = vld [vmem:[%s201 + $0x1730] sm:$0xff]
        %v1077 = vld [vmem:[%s201 + $0x1738] sm:$0xff]
        %v1078 = vld [vmem:[%s201 + $0x1740] sm:$0xff]
        %v1079 = vld [vmem:[%s201 + $0x1748] sm:$0xff]
        %v1080 = vld [vmem:[%s201 + $0x1750] sm:$0xff]
        %v1081 = vld [vmem:[%s201 + $0x1758] sm:$0xff]
        %v1082 = vld [vmem:[%s201 + $0x1760] sm:$0xff]
        %v1083 = vld [vmem:[%s201 + $0x1768] sm:$0xff]
        %v1084 = vld [vmem:[%s201 + $0x1770] sm:$0xff]
        %v1085 = vld [vmem:[%s201 + $0x1778] sm:$0xff]
        %v1086 = vld [vmem:[%s201 + $0x1780] sm:$0xff]
        %v1087 = vld [vmem:[%s201 + $0x1788] sm:$0xff]
        %v1088 = vld [vmem:[%s201 + $0x1790] sm:$0xff]
        %v1089 = vld [vmem:[%s201 + $0x1798] sm:$0xff]
        %v1090 = vld [vmem:[%s201 + $0x17a0] sm:$0xff]
        %v1091 = vld [vmem:[%s201 + $0x17a8] sm:$0xff]
        %v1092 = vld [vmem:[%s201 + $0x17b0] sm:$0xff]
        %v1093 = vld [vmem:[%s201 + $0x17b8] sm:$0xff]
        %v1094 = vld [vmem:[%s201 + $0x17c0] sm:$0xff]
        %v1095 = vld [vmem:[%s201 + $0x17c8] sm:$0xff]
        %v1096 = vld [vmem:[%s201 + $0x17d0] sm:$0xff]
        %v1097 = vld [vmem:[%s201 + $0x17d8] sm:$0xff]
        %v1098 = vld [vmem:[%s201 + $0x17e0] sm:$0xff]
        %v1099 = vld [vmem:[%s201 + $0x17e8] sm:$0xff]
        %v1100 = vld [vmem:[%s201 + $0x17f0] sm:$0xff]
        %v1101 = vld [vmem:[%s201 + $0x17f8] sm:$0xff]
        %v1102 = vld [vmem:[%s201 + $0x1800] sm:$0xff]
        %v1103 = vld [vmem:[%s201 + $0x1808] sm:$0xff]
        %v1104 = vld [vmem:[%s201 + $0x1810] sm:$0xff]
        %v1105 = vld [vmem:[%s201 + $0x1818] sm:$0xff]
        %v1106 = vld [vmem:[%s201 + $0x1820] sm:$0xff]
        %v1107 = vld [vmem:[%s201 + $0x1828] sm:$0xff]
        %v1108 = vld [vmem:[%s201 + $0x1830] sm:$0xff]
        %v1109 = vld [vmem:[%s201 + $0x1838] sm:$0xff]
        %v1110 = vld [vmem:[%s201 + $0x1840] sm:$0xff]
        %v1111 = vld [vmem:[%s201 + $0x1848] sm:$0xff]
        %v1112 = vld [vmem:[%s201 + $0x1850] sm:$0xff]
        %v1113 = vld [vmem:[%s201 + $0x1858] sm:$0xff]
        %v1114 = vld [vmem:[%s201 + $0x1860] sm:$0xff]
        %v1115 = vld [vmem:[%s201 + $0x1868] sm:$0xff]
        %v1116 = vld [vmem:[%s201 + $0x1870] sm:$0xff]
        %v1117 = vld [vmem:[%s201 + $0x1878] sm:$0xff]
        %v1118 = vld [vmem:[%s201 + $0x1880] sm:$0xff]
        %v1119 = vld [vmem:[%s201 + $0x1888] sm:$0xff]
        %v1120 = vld [vmem:[%s201 + $0x1890] sm:$0xff]
        %v1121 = vld [vmem:[%s201 + $0x1898] sm:$0xff]
        %v1122 = vld [vmem:[%s201 + $0x18a0] sm:$0xff]
        %v1123 = vld [vmem:[%s201 + $0x18a8] sm:$0xff]
        %v1124 = vld [vmem:[%s201 + $0x18b0] sm:$0xff]
        %v1125 = vld [vmem:[%s201 + $0x18b8] sm:$0xff]
        %v1126 = vld [vmem:[%s201 + $0x18c0] sm:$0xff]
        %v1127 = vld [vmem:[%s201 + $0x18c8] sm:$0xff]
        %v1128 = vld [vmem:[%s201 + $0x18d0] sm:$0xff]
        %v1129 = vld [vmem:[%s201 + $0x18d8] sm:$0xff]
        %v1130 = vld [vmem:[%s201 + $0x18e0] sm:$0xff]
        %v1131 = vld [vmem:[%s201 + $0x18e8] sm:$0xff]
        %v1132 = vld [vmem:[%s201 + $0x18f0] sm:$0xff]
        %v1133 = vld [vmem:[%s201 + $0x18f8] sm:$0xff]
        %v1134 = vld [vmem:[%s201 + $0x1900] sm:$0xff]
        %v1135 = vld [vmem:[%s201 + $0x1908] sm:$0xff]
        %v1136 = vld [vmem:[%s201 + $0x1910] sm:$0xff]
        %v1137 = vld [vmem:[%s201 + $0x1918] sm:$0xff]
        %v1138 = vld [vmem:[%s201 + $0x1920] sm:$0xff]
        %v1139 = vld [vmem:[%s201 + $0x1928] sm:$0xff]
        %v1140 = vld [vmem:[%s201 + $0x1930] sm:$0xff]
        %v1141 = vld [vmem:[%s201 + $0x1938] sm:$0xff]
        %v1142 = vld [vmem:[%s201 + $0x1940] sm:$0xff]
        %v1143 = vld [vmem:[%s201 + $0x1948] sm:$0xff]
        %v1144 = vld [vmem:[%s201 + $0x1950] sm:$0xff]
        %v1145 = vld [vmem:[%s201 + $0x1958] sm:$0xff]
        %v1146 = vld [vmem:[%s201 + $0x1960] sm:$0xff]
        %v1147 = vld [vmem:[%s201 + $0x1968] sm:$0xff]
        %v1148 = vld [vmem:[%s201 + $0x1970] sm:$0xff]
        %v1149 = vld [vmem:[%s201 + $0x1978] sm:$0xff]
        %v1150 = vld [vmem:[%s201 + $0x1980] sm:$0xff]
        %v1151 = vld [vmem:[%s201 + $0x1988] sm:$0xff]
        %v1152 = vld [vmem:[%s201 + $0x1990] sm:$0xff]
        %v1153 = vld [vmem:[%s201 + $0x1998] sm:$0xff]
        %v1154 = vld [vmem:[%s201 + $0x19a0] sm:$0xff]
        %v1155 = vld [vmem:[%s201 + $0x19a8] sm:$0xff]
        %v1156 = vld [vmem:[%s201 + $0x19b0] sm:$0xff]
        %v1157 = vld [vmem:[%s201 + $0x19b8] sm:$0xff]
        %v1158 = vld [vmem:[%s201 + $0x19c0] sm:$0xff]
        %v1159 = vld [vmem:[%s201 + $0x19c8] sm:$0xff]
        %v1160 = vld [vmem:[%s201 + $0x19d0] sm:$0xff]
        %v1161 = vld [vmem:[%s201 + $0x19d8] sm:$0xff]
        %v1162 = vld [vmem:[%s201 + $0x19e0] sm:$0xff]
        %v1163 = vld [vmem:[%s201 + $0x19e8] sm:$0xff]
        %v1164 = vld [vmem:[%s201 + $0x19f0] sm:$0xff]
        %v1165 = vld [vmem:[%s201 + $0x19f8] sm:$0xff]
        %v1166 = vld [vmem:[%s201 + $0x1a00] sm:$0xff]
        %v1167 = vld [vmem:[%s201 + $0x1a08] sm:$0xff]
        %v1168 = vld [vmem:[%s201 + $0x1a10] sm:$0xff]
        %v1169 = vld [vmem:[%s201 + $0x1a18] sm:$0xff]
        %v1170 = vld [vmem:[%s201 + $0x1a20] sm:$0xff]
        %v1171 = vld [vmem:[%s201 + $0x1a28] sm:$0xff]
        %v1172 = vld [vmem:[%s201 + $0x1a30] sm:$0xff]
        %v1173 = vld [vmem:[%s201 + $0x1a38] sm:$0xff]
        %v1174 = vld [vmem:[%s201 + $0x1a40] sm:$0xff]
        %v1175 = vld [vmem:[%s201 + $0x1a48] sm:$0xff]
        %v1176 = vld [vmem:[%s201 + $0x1a50] sm:$0xff]
        %v1177 = vld [vmem:[%s201 + $0x1a58] sm:$0xff]
        %v1178 = vld [vmem:[%s201 + $0x1a60] sm:$0xff]
        %v1179 = vld [vmem:[%s201 + $0x1a68] sm:$0xff]
        %v1180 = vld [vmem:[%s201 + $0x1a70] sm:$0xff]
        %v1181 = vld [vmem:[%s201 + $0x1a78] sm:$0xff]
        %v1182 = vld [vmem:[%s201 + $0x1a80] sm:$0xff]
        %v1183 = vld [vmem:[%s201 + $0x1a88] sm:$0xff]
        %v1184 = vld [vmem:[%s201 + $0x1a90] sm:$0xff]
        %v1185 = vld [vmem:[%s201 + $0x1a98] sm:$0xff]
        %v1186 = vld [vmem:[%s201 + $0x1aa0] sm:$0xff]
        %v1187 = vld [vmem:[%s201 + $0x1aa8] sm:$0xff]
        %v1188 = vld [vmem:[%s201 + $0x1ab0] sm:$0xff]
        %v1189 = vld [vmem:[%s201 + $0x1ab8] sm:$0xff]
        %v1190 = vld [vmem:[%s201 + $0x1ac0] sm:$0xff]
        %v1191 = vld [vmem:[%s201 + $0x1ac8] sm:$0xff]
        %v1192 = vld [vmem:[%s201 + $0x1ad0] sm:$0xff]
        %v1193 = vld [vmem:[%s201 + $0x1ad8] sm:$0xff]
        %v1194 = vld [vmem:[%s201 + $0x1ae0] sm:$0xff]
        %v1195 = vld [vmem:[%s201 + $0x1ae8] sm:$0xff]
        %v1196 = vld [vmem:[%s201 + $0x1af0] sm:$0xff]
        %v1197 = vld [vmem:[%s201 + $0x1af8] sm:$0xff]
        %v1198 = vld [vmem:[%s201 + $0x1b00] sm:$0xff]
        %v1199 = vld [vmem:[%s201 + $0x1b08] sm:$0xff]
        %v1200 = vld [vmem:[%s201 + $0x1b10] sm:$0xff]
        %v1201 = vld [vmem:[%s201 + $0x1b18] sm:$0xff]
        %v1202 = vld [vmem:[%s201 + $0x1b20] sm:$0xff]
        %v1203 = vld [vmem:[%s201 + $0x1b28] sm:$0xff]
        %v1204 = vld [vmem:[%s201 + $0x1b30] sm:$0xff]
        %v1205 = vld [vmem:[%s201 + $0x1b38] sm:$0xff]
        %v1206 = vld [vmem:[%s201 + $0x1b40] sm:$0xff]
        %v1207 = vld [vmem:[%s201 + $0x1b48] sm:$0xff]
        %v1208 = vld [vmem:[%s201 + $0x1b50] sm:$0xff]
        %v1209 = vld [vmem:[%s201 + $0x1b58] sm:$0xff]
        %v1210 = vld [vmem:[%s201 + $0x1b60] sm:$0xff]
        %v1211 = vld [vmem:[%s201 + $0x1b68] sm:$0xff]
        %v1212 = vld [vmem:[%s201 + $0x1b70] sm:$0xff]
        %v1213 = vld [vmem:[%s201 + $0x1b78] sm:$0xff]
        %v1214 = vld [vmem:[%s201 + $0x1b80] sm:$0xff]
        %v1215 = vld [vmem:[%s201 + $0x1b88] sm:$0xff]
        %v1216 = vld [vmem:[%s201 + $0x1b90] sm:$0xff]
        %v1217 = vld [vmem:[%s201 + $0x1b98] sm:$0xff]
        %v1218 = vld [vmem:[%s201 + $0x1ba0] sm:$0xff]
        %v1219 = vld [vmem:[%s201 + $0x1ba8] sm:$0xff]
        %v1220 = vld [vmem:[%s201 + $0x1bb0] sm:$0xff]
        %v1221 = vld [vmem:[%s201 + $0x1bb8] sm:$0xff]
        %v1222 = vld [vmem:[%s201 + $0x1bc0] sm:$0xff]
        %v1223 = vld [vmem:[%s201 + $0x1bc8] sm:$0xff]
        %v1224 = vld [vmem:[%s201 + $0x1bd0] sm:$0xff]
        %v1225 = vld [vmem:[%s201 + $0x1bd8] sm:$0xff]
        %v1226 = vld [vmem:[%s201 + $0x1be0] sm:$0xff]
        %v1227 = vld [vmem:[%s201 + $0x1be8] sm:$0xff]
        %v1228 = vld [vmem:[%s201 + $0x1bf0] sm:$0xff]
        %v1229 = vld [vmem:[%s201 + $0x1bf8] sm:$0xff]
        %v1230 = vld [vmem:[%s201 + $0x1c00] sm:$0xff]
        %v1231 = vld [vmem:[%s201 + $0x1c08] sm:$0xff]
        %v1232 = vld [vmem:[%s201 + $0x1c10] sm:$0xff]
        %v1233 = vld [vmem:[%s201 + $0x1c18] sm:$0xff]
        %v1234 = vld [vmem:[%s201 + $0x1c20] sm:$0xff]
        %v1235 = vld [vmem:[%s201 + $0x1c28] sm:$0xff]
        %v1236 = vld [vmem:[%s201 + $0x1c30] sm:$0xff]
        %v1237 = vld [vmem:[%s201 + $0x1c38] sm:$0xff]
        %v1238 = vld [vmem:[%s201 + $0x1c40] sm:$0xff]
        %v1239 = vld [vmem:[%s201 + $0x1c48] sm:$0xff]
        %v1240 = vld [vmem:[%s201 + $0x1c50] sm:$0xff]
        %v1241 = vld [vmem:[%s201 + $0x1c58] sm:$0xff]
        %v1242 = vld [vmem:[%s201 + $0x1c60] sm:$0xff]
        %v1243 = vld [vmem:[%s201 + $0x1c68] sm:$0xff]
        %v1244 = vld [vmem:[%s201 + $0x1c70] sm:$0xff]
        %v1245 = vld [vmem:[%s201 + $0x1c78] sm:$0xff]
        %v1246 = vld [vmem:[%s201 + $0x1c80] sm:$0xff]
        %v1247 = vld [vmem:[%s201 + $0x1c88] sm:$0xff]
        %v1248 = vld [vmem:[%s201 + $0x1c90] sm:$0xff]
        %v1249 = vld [vmem:[%s201 + $0x1c98] sm:$0xff]
        %v1250 = vld [vmem:[%s201 + $0x1ca0] sm:$0xff]
        %v1251 = vld [vmem:[%s201 + $0x1ca8] sm:$0xff]
        %v1252 = vld [vmem:[%s201 + $0x1cb0] sm:$0xff]
        %v1253 = vld [vmem:[%s201 + $0x1cb8] sm:$0xff]
        %v1254 = vld [vmem:[%s201 + $0x1cc0] sm:$0xff]
        %v1255 = vld [vmem:[%s201 + $0x1cc8] sm:$0xff]
        %v1256 = vld [vmem:[%s201 + $0x1cd0] sm:$0xff]
        %v1257 = vld [vmem:[%s201 + $0x1cd8] sm:$0xff]
        %v1258 = vld [vmem:[%s201 + $0x1ce0] sm:$0xff]
        %v1259 = vld [vmem:[%s201 + $0x1ce8] sm:$0xff]
        %v1260 = vld [vmem:[%s201 + $0x1cf0] sm:$0xff]
        %v1261 = vld [vmem:[%s201 + $0x1cf8] sm:$0xff]
        %v1262 = vld [vmem:[%s201 + $0x1d00] sm:$0xff]
        %v1263 = vld [vmem:[%s201 + $0x1d08] sm:$0xff]
        %v1264 = vld [vmem:[%s201 + $0x1d10] sm:$0xff]
        %v1265 = vld [vmem:[%s201 + $0x1d18] sm:$0xff]
        %v1266 = vld [vmem:[%s201 + $0x1d20] sm:$0xff]
        %v1267 = vld [vmem:[%s201 + $0x1d28] sm:$0xff]
        %v1268 = vld [vmem:[%s201 + $0x1d30] sm:$0xff]
        %v1269 = vld [vmem:[%s201 + $0x1d38] sm:$0xff]
        %v1270 = vld [vmem:[%s201 + $0x1d40] sm:$0xff]
        %v1271 = vld [vmem:[%s201 + $0x1d48] sm:$0xff]
        %v1272 = vld [vmem:[%s201 + $0x1d50] sm:$0xff]
        %v1273 = vld [vmem:[%s201 + $0x1d58] sm:$0xff]
        %v1274 = vld [vmem:[%s201 + $0x1d60] sm:$0xff]
        %v1275 = vld [vmem:[%s201 + $0x1d68] sm:$0xff]
        %v1276 = vld [vmem:[%s201 + $0x1d70] sm:$0xff]
        %v1277 = vld [vmem:[%s201 + $0x1d78] sm:$0xff]
        %v1278 = vld [vmem:[%s201 + $0x1d80] sm:$0xff]
        %v1279 = vld [vmem:[%s201 + $0x1d88] sm:$0xff]
        %v1280 = vld [vmem:[%s201 + $0x1d90] sm:$0xff]
        %v1281 = vld [vmem:[%s201 + $0x1d98] sm:$0xff]
        %v1282 = vld [vmem:[%s201 + $0x1da0] sm:$0xff]
        %v1283 = vld [vmem:[%s201 + $0x1da8] sm:$0xff]
        %v1284 = vld [vmem:[%s201 + $0x1db0] sm:$0xff]
        %v1285 = vld [vmem:[%s201 + $0x1db8] sm:$0xff]
        %v1286 = vld [vmem:[%s201 + $0x1dc0] sm:$0xff]
        %v1287 = vld [vmem:[%s201 + $0x1dc8] sm:$0xff]
        %v1288 = vld [vmem:[%s201 + $0x1dd0] sm:$0xff]
        %v1289 = vld [vmem:[%s201 + $0x1dd8] sm:$0xff]
        %v1290 = vld [vmem:[%s201 + $0x1de0] sm:$0xff]
        %v1291 = vld [vmem:[%s201 + $0x1de8] sm:$0xff]
        %v1292 = vld [vmem:[%s201 + $0x1df0] sm:$0xff]
        %v1293 = vld [vmem:[%s201 + $0x1df8] sm:$0xff]
        %v1294 = vld [vmem:[%s201 + $0x1e00] sm:$0xff]
        %v1295 = vld [vmem:[%s201 + $0x1e08] sm:$0xff]
        %v1296 = vld [vmem:[%s201 + $0x1e10] sm:$0xff]
        %v1297 = vld [vmem:[%s201 + $0x1e18] sm:$0xff]
        %v1298 = vld [vmem:[%s201 + $0x1e20] sm:$0xff]
        %v1299 = vld [vmem:[%s201 + $0x1e28] sm:$0xff]
        %v1300 = vld [vmem:[%s201 + $0x1e30] sm:$0xff]
        %v1301 = vld [vmem:[%s201 + $0x1e38] sm:$0xff]
        %v1302 = vld [vmem:[%s201 + $0x1e40] sm:$0xff]
        %v1303 = vld [vmem:[%s201 + $0x1e48] sm:$0xff]
        %v1304 = vld [vmem:[%s201 + $0x1e50] sm:$0xff]
        %v1305 = vld [vmem:[%s201 + $0x1e58] sm:$0xff]
        %v1306 = vld [vmem:[%s201 + $0x1e60] sm:$0xff]
        %v1307 = vld [vmem:[%s201 + $0x1e68] sm:$0xff]
        %v1308 = vld [vmem:[%s201 + $0x1e70] sm:$0xff]
        %v1309 = vld [vmem:[%s201 + $0x1e78] sm:$0xff]
        %v1310 = vld [vmem:[%s201 + $0x1e80] sm:$0xff]
        %v1311 = vld [vmem:[%s201 + $0x1e88] sm:$0xff]
        %v1312 = vld [vmem:[%s201 + $0x1e90] sm:$0xff]
        %v1313 = vld [vmem:[%s201 + $0x1e98] sm:$0xff]
        %v1314 = vld [vmem:[%s201 + $0x1ea0] sm:$0xff]
        %v1315 = vld [vmem:[%s201 + $0x1ea8] sm:$0xff]
        %v1316 = vld [vmem:[%s201 + $0x1eb0] sm:$0xff]
        %v1317 = vld [vmem:[%s201 + $0x1eb8] sm:$0xff]
        %v1318 = vld [vmem:[%s201 + $0x1ec0] sm:$0xff]
        %v1319 = vld [vmem:[%s201 + $0x1ec8] sm:$0xff]
        %v1320 = vld [vmem:[%s201 + $0x1ed0] sm:$0xff]
        %v1321 = vld [vmem:[%s201 + $0x1ed8] sm:$0xff]
        %v1322 = vld [vmem:[%s201 + $0x1ee0] sm:$0xff]
        %v1323 = vld [vmem:[%s201 + $0x1ee8] sm:$0xff]
        %v1324 = vld [vmem:[%s201 + $0x1ef0] sm:$0xff]
        %v1325 = vld [vmem:[%s201 + $0x1ef8] sm:$0xff]
        %v1326 = vld [vmem:[%s201 + $0x1f00] sm:$0xff]
        %v1327 = vld [vmem:[%s201 + $0x1f08] sm:$0xff]
        %v1328 = vld [vmem:[%s201 + $0x1f10] sm:$0xff]
        %v1329 = vld [vmem:[%s201 + $0x1f18] sm:$0xff]
        %v1330 = vld [vmem:[%s201 + $0x1f20] sm:$0xff]
        %v1331 = vld [vmem:[%s201 + $0x1f28] sm:$0xff]
        %v1332 = vld [vmem:[%s201 + $0x1f30] sm:$0xff]
        %v1333 = vld [vmem:[%s201 + $0x1f38] sm:$0xff]
        %v1334 = vld [vmem:[%s201 + $0x1f40] sm:$0xff]
        %v1335 = vld [vmem:[%s201 + $0x1f48] sm:$0xff]
        %v1336 = vld [vmem:[%s201 + $0x1f50] sm:$0xff]
        %v1337 = vld [vmem:[%s201 + $0x1f58] sm:$0xff]
        %v1338 = vld [vmem:[%s201 + $0x1f60] sm:$0xff]
        %v1339 = vld [vmem:[%s201 + $0x1f68] sm:$0xff]
        %v1340 = vld [vmem:[%s201 + $0x1f70] sm:$0xff]
        %v1341 = vld [vmem:[%s201 + $0x1f78] sm:$0xff]
        %v1342 = vld [vmem:[%s201 + $0x1f80] sm:$0xff]
        %v1343 = vld [vmem:[%s201 + $0x1f88] sm:$0xff]
        %v1344 = vld [vmem:[%s201 + $0x1f90] sm:$0xff]
        %v1345 = vld [vmem:[%s201 + $0x1f98] sm:$0xff]
        %v1346 = vld [vmem:[%s201 + $0x1fa0] sm:$0xff]
        %v1347 = vld [vmem:[%s201 + $0x1fa8] sm:$0xff]
        %v1348 = vld [vmem:[%s201 + $0x1fb0] sm:$0xff]
        %v1349 = vld [vmem:[%s201 + $0x1fb8] sm:$0xff]
        %v1350 = vld [vmem:[%s201 + $0x1fc0] sm:$0xff]
        %v1351 = vld [vmem:[%s201 + $0x1fc8] sm:$0xff]
        %v1352 = vld [vmem:[%s201 + $0x1fd0] sm:$0xff]
        %v1353 = vld [vmem:[%s201 + $0x1fd8] sm:$0xff]
        %v1354 = vld [vmem:[%s201 + $0x1fe0] sm:$0xff]
        %v1355 = vld [vmem:[%s201 + $0x1fe8] sm:$0xff]
        %v1356 = vld [vmem:[%s201 + $0x1ff0] sm:$0xff]
        %v1357 = vld [vmem:[%s201 + $0x1ff8] sm:$0xff]
        %v1358 = vld [vmem:[%s201 + $0x2000] sm:$0xff]
        %v1359 = vld [vmem:[%s201 + $0x2008] sm:$0xff]
        %v1360 = vld [vmem:[%s201 + $0x2010] sm:$0xff]
        %v1361 = vld [vmem:[%s201 + $0x2018] sm:$0xff]
        %v1362 = vld [vmem:[%s201 + $0x2020] sm:$0xff]
        %v1363 = vld [vmem:[%s201 + $0x2028] sm:$0xff]
        %v1364 = vld [vmem:[%s201 + $0x2030] sm:$0xff]
        %v1365 = vld [vmem:[%s201 + $0x2038] sm:$0xff]
        %v1366 = vld [vmem:[%s201 + $0x2040] sm:$0xff]
        %v1367 = vld [vmem:[%s201 + $0x2048] sm:$0xff]
        %v1368 = vld [vmem:[%s201 + $0x2050] sm:$0xff]
        %v1369 = vld [vmem:[%s201 + $0x2058] sm:$0xff]
        %v1370 = vld [vmem:[%s201 + $0x2060] sm:$0xff]
        %v1371 = vld [vmem:[%s201 + $0x2068] sm:$0xff]
        %v1372 = vld [vmem:[%s201 + $0x2070] sm:$0xff]
        %v1373 = vld [vmem:[%s201 + $0x2078] sm:$0xff]
        %v1374 = vld [vmem:[%s201 + $0x2080] sm:$0xff]
        %v1375 = vld [vmem:[%s201 + $0x2088] sm:$0xff]
        %v1376 = vld [vmem:[%s201 + $0x2090] sm:$0xff]
        %v1377 = vld [vmem:[%s201 + $0x2098] sm:$0xff]
        %v1378 = vld [vmem:[%s201 + $0x20a0] sm:$0xff]
        %v1379 = vld [vmem:[%s201 + $0x20a8] sm:$0xff]
        %v1380 = vld [vmem:[%s201 + $0x20b0] sm:$0xff]
        %v1381 = vld [vmem:[%s201 + $0x20b8] sm:$0xff]
        %v1382 = vld [vmem:[%s201 + $0x20c0] sm:$0xff]
        %v1383 = vld [vmem:[%s201 + $0x20c8] sm:$0xff]
        %v1384 = vld [vmem:[%s201 + $0x20d0] sm:$0xff]
        %v1385 = vld [vmem:[%s201 + $0x20d8] sm:$0xff]
        %v1386 = vld [vmem:[%s201 + $0x20e0] sm:$0xff]
        %v1387 = vld [vmem:[%s201 + $0x20e8] sm:$0xff]
        %v1388 = vld [vmem:[%s201 + $0x20f0] sm:$0xff]
        %v1389 = vld [vmem:[%s201 + $0x20f8] sm:$0xff]
        %v1390 = vld [vmem:[%s201 + $0x2100] sm:$0xff]
        %v1391 = vld [vmem:[%s201 + $0x2108] sm:$0xff]
        %v1392 = vld [vmem:[%s201 + $0x2110] sm:$0xff]
        %v1393 = vld [vmem:[%s201 + $0x2118] sm:$0xff]
        %v1394 = vld [vmem:[%s201 + $0x2120] sm:$0xff]
        %v1395 = vld [vmem:[%s201 + $0x2128] sm:$0xff]
        %v1396 = vld [vmem:[%s201 + $0x2130] sm:$0xff]
        %v1397 = vld [vmem:[%s201 + $0x2138] sm:$0xff]
        %v1398 = vld [vmem:[%s201 + $0x2140] sm:$0xff]
        %v1399 = vld [vmem:[%s201 + $0x2148] sm:$0xff]
        %v1400 = vld [vmem:[%s201 + $0x2150] sm:$0xff]
        %v1401 = vld [vmem:[%s201 + $0x2158] sm:$0xff]
        %v1402 = vld [vmem:[%s201 + $0x2160] sm:$0xff]
        %v1403 = vld [vmem:[%s201 + $0x2168] sm:$0xff]
        %v1404 = vld [vmem:[%s201 + $0x2170] sm:$0xff]
        %v1405 = vld [vmem:[%s201 + $0x2178] sm:$0xff]
        %v1406 = vld [vmem:[%s201 + $0x2180] sm:$0xff]
        %v1407 = vld [vmem:[%s201 + $0x2188] sm:$0xff]
        %v1408 = vld [vmem:[%s201 + $0x2190] sm:$0xff]
        %v1409 = vld [vmem:[%s201 + $0x2198] sm:$0xff]
        %v1410 = vld [vmem:[%s201 + $0x21a0] sm:$0xff]
        %v1411 = vld [vmem:[%s201 + $0x21a8] sm:$0xff]
        %v1412 = vld [vmem:[%s201 + $0x21b0] sm:$0xff]
        %v1413 = vld [vmem:[%s201 + $0x21b8] sm:$0xff]
        %v1414 = vld [vmem:[%s201 + $0x21c0] sm:$0xff]
        %v1415 = vld [vmem:[%s201 + $0x21c8] sm:$0xff]
        %v1416 = vld [vmem:[%s201 + $0x21d0] sm:$0xff]
        %v1417 = vld [vmem:[%s201 + $0x21d8] sm:$0xff]
        %v1418 = vld [vmem:[%s201 + $0x21e0] sm:$0xff]
        %v1419 = vld [vmem:[%s201 + $0x21e8] sm:$0xff]
        %v1420 = vld [vmem:[%s201 + $0x21f0] sm:$0xff]
        %v1421 = vld [vmem:[%s201 + $0x21f8] sm:$0xff]
        %v1422 = vld [vmem:[%s201 + $0x2200] sm:$0xff]
        %v1423 = vld [vmem:[%s201 + $0x2208] sm:$0xff]
        %v1424 = vld [vmem:[%s201 + $0x2210] sm:$0xff]
        %v1425 = vld [vmem:[%s201 + $0x2218] sm:$0xff]
        %v1426 = vld [vmem:[%s201 + $0x2220] sm:$0xff]
        %v1427 = vld [vmem:[%s201 + $0x2228] sm:$0xff]
        %v1428 = vld [vmem:[%s201 + $0x2230] sm:$0xff]
        %v1429 = vld [vmem:[%s201 + $0x2238] sm:$0xff]
        %v1430 = vld [vmem:[%s201 + $0x2240] sm:$0xff]
        %v1431 = vld [vmem:[%s201 + $0x2248] sm:$0xff]
        %v1432 = vld [vmem:[%s201 + $0x2250] sm:$0xff]
        %v1433 = vld [vmem:[%s201 + $0x2258] sm:$0xff]
        %v1434 = vld [vmem:[%s201 + $0x2260] sm:$0xff]
        %v1435 = vld [vmem:[%s201 + $0x2268] sm:$0xff]
        %v1436 = vld [vmem:[%s201 + $0x2270] sm:$0xff]
        %v1437 = vld [vmem:[%s201 + $0x2278] sm:$0xff]
        %v1438 = vld [vmem:[%s201 + $0x2280] sm:$0xff]
        %v1439 = vld [vmem:[%s201 + $0x2288] sm:$0xff]
        %v1440 = vld [vmem:[%s201 + $0x2290] sm:$0xff]
        %v1441 = vld [vmem:[%s201 + $0x2298] sm:$0xff]
        %v1442 = vld [vmem:[%s201 + $0x22a0] sm:$0xff]
        %v1443 = vld [vmem:[%s201 + $0x22a8] sm:$0xff]
        %v1444 = vld [vmem:[%s201 + $0x22b0] sm:$0xff]
        %v1445 = vld [vmem:[%s201 + $0x22b8] sm:$0xff]
        %v1446 = vld [vmem:[%s201 + $0x22c0] sm:$0xff]
        %v1447 = vld [vmem:[%s201 + $0x22c8] sm:$0xff]
        %v1448 = vld [vmem:[%s201 + $0x22d0] sm:$0xff]
        %v1449 = vld [vmem:[%s201 + $0x22d8] sm:$0xff]
        %v1450 = vld [vmem:[%s201 + $0x22e0] sm:$0xff]
        %v1451 = vld [vmem:[%s201 + $0x22e8] sm:$0xff]
        %v1452 = vld [vmem:[%s201 + $0x22f0] sm:$0xff]
        %v1453 = vld [vmem:[%s201 + $0x22f8] sm:$0xff]
        %v1454 = vld [vmem:[%s201 + $0x2300] sm:$0xff]
        %v1455 = vld [vmem:[%s201 + $0x2308] sm:$0xff]
        %v1456 = vld [vmem:[%s201 + $0x2310] sm:$0xff]
        %v1457 = vld [vmem:[%s201 + $0x2318] sm:$0xff]
        %v1458 = vld [vmem:[%s201 + $0x2320] sm:$0xff]
        %v1459 = vld [vmem:[%s201 + $0x2328] sm:$0xff]
        %v1460 = vld [vmem:[%s201 + $0x2330] sm:$0xff]
        %v1461 = vld [vmem:[%s201 + $0x2338] sm:$0xff]
        %v1462 = vld [vmem:[%s201 + $0x2340] sm:$0xff]
        %v1463 = vld [vmem:[%s201 + $0x2348] sm:$0xff]
        %v1464 = vld [vmem:[%s201 + $0x2350] sm:$0xff]
        %v1465 = vld [vmem:[%s201 + $0x2358] sm:$0xff]
        %v1466 = vld [vmem:[%s201 + $0x2360] sm:$0xff]
        %v1467 = vld [vmem:[%s201 + $0x2368] sm:$0xff]
        %v1468 = vld [vmem:[%s201 + $0x2370] sm:$0xff]
        %v1469 = vld [vmem:[%s201 + $0x2378] sm:$0xff]
        %v1470 = vld [vmem:[%s201 + $0x2380] sm:$0xff]
        %v1471 = vld [vmem:[%s201 + $0x2388] sm:$0xff]
        %v1472 = vld [vmem:[%s201 + $0x2390] sm:$0xff]
        %v1473 = vld [vmem:[%s201 + $0x2398] sm:$0xff]
        %v1474 = vld [vmem:[%s201 + $0x23a0] sm:$0xff]
        %v1475 = vld [vmem:[%s201 + $0x23a8] sm:$0xff]
        %v1476 = vld [vmem:[%s201 + $0x23b0] sm:$0xff]
        %v1477 = vld [vmem:[%s201 + $0x23b8] sm:$0xff]
        %v1478 = vld [vmem:[%s201 + $0x23c0] sm:$0xff]
        %v1479 = vld [vmem:[%s201 + $0x23c8] sm:$0xff]
        %v1480 = vld [vmem:[%s201 + $0x23d0] sm:$0xff]
        %v1481 = vld [vmem:[%s201 + $0x23d8] sm:$0xff]
        %v1482 = vld [vmem:[%s201 + $0x23e0] sm:$0xff]
        %v1483 = vld [vmem:[%s201 + $0x23e8] sm:$0xff]
        %v1484 = vld [vmem:[%s201 + $0x23f0] sm:$0xff]
        %v1485 = vld [vmem:[%s201 + $0x23f8] sm:$0xff]
        %v1486 = vld [vmem:[%s201 + $0x2400] sm:$0xff]
        %v1487 = vld [vmem:[%s201 + $0x2408] sm:$0xff]
        %v1488 = vld [vmem:[%s201 + $0x2410] sm:$0xff]
        %v1489 = vld [vmem:[%s201 + $0x2418] sm:$0xff]
        %v1490 = vld [vmem:[%s201 + $0x2420] sm:$0xff]
        %v1491 = vld [vmem:[%s201 + $0x2428] sm:$0xff]
        %v1492 = vld [vmem:[%s201 + $0x2430] sm:$0xff]
        %v1493 = vld [vmem:[%s201 + $0x2438] sm:$0xff]
        %v1494 = vld [vmem:[%s201 + $0x2440] sm:$0xff]
        %v1495 = vld [vmem:[%s201 + $0x2448] sm:$0xff]
        %v1496 = vld [vmem:[%s201 + $0x2450] sm:$0xff]
        %v1497 = vld [vmem:[%s201 + $0x2458] sm:$0xff]
        %v1498 = vld [vmem:[%s201 + $0x2460] sm:$0xff]
        %v1499 = vld [vmem:[%s201 + $0x2468] sm:$0xff]
        %v1500 = vld [vmem:[%s201 + $0x2470] sm:$0xff]
        %v1501 = vld [vmem:[%s201 + $0x2478] sm:$0xff]
        %v1502 = vld [vmem:[%s201 + $0x2480] sm:$0xff]
        %v1503 = vld [vmem:[%s201 + $0x2488] sm:$0xff]
        %v1504 = vld [vmem:[%s201 + $0x2490] sm:$0xff]
        %v1505 = vld [vmem:[%s201 + $0x2498] sm:$0xff]
        %v1506 = vld [vmem:[%s201 + $0x24a0] sm:$0xff]
        %v1507 = vld [vmem:[%s201 + $0x24a8] sm:$0xff]
        %v1508 = vld [vmem:[%s201 + $0x24b0] sm:$0xff]
        %v1509 = vld [vmem:[%s201 + $0x24b8] sm:$0xff]
        %v1510 = vld [vmem:[%s201 + $0x24c0] sm:$0xff]
        %v1511 = vld [vmem:[%s201 + $0x24c8] sm:$0xff]
        %v1512 = vld [vmem:[%s201 + $0x24d0] sm:$0xff]
        %v1513 = vld [vmem:[%s201 + $0x24d8] sm:$0xff]
        %v1514 = vld [vmem:[%s201 + $0x24e0] sm:$0xff]
        %v1515 = vld [vmem:[%s201 + $0x24e8] sm:$0xff]
        %v1516 = vld [vmem:[%s201 + $0x24f0] sm:$0xff]
        %v1517 = vld [vmem:[%s201 + $0x24f8] sm:$0xff]
        %v1518 = vld [vmem:[%s201 + $0x2500] sm:$0xff]
        %v1519 = vld [vmem:[%s201 + $0x2508] sm:$0xff]
        %v1520 = vld [vmem:[%s201 + $0x2510] sm:$0xff]
        %v1521 = vld [vmem:[%s201 + $0x2518] sm:$0xff]
        %v1522 = vld [vmem:[%s201 + $0x2520] sm:$0xff]
        %v1523 = vld [vmem:[%s201 + $0x2528] sm:$0xff]
        %v1524 = vld [vmem:[%s201 + $0x2530] sm:$0xff]
        %v1525 = vld [vmem:[%s201 + $0x2538] sm:$0xff]
        %v1526 = vld [vmem:[%s201 + $0x2540] sm:$0xff]
        %v1527 = vld [vmem:[%s201 + $0x2548] sm:$0xff]
        %v1528 = vld [vmem:[%s201 + $0x2550] sm:$0xff]
        %v1529 = vld [vmem:[%s201 + $0x2558] sm:$0xff]
        %v1530 = vld [vmem:[%s201 + $0x2560] sm:$0xff]
        %v1531 = vld [vmem:[%s201 + $0x2568] sm:$0xff]
        %v1532 = vld [vmem:[%s201 + $0x2570] sm:$0xff]
        %v1533 = vld [vmem:[%s201 + $0x2578] sm:$0xff]
        %v1534 = vld [vmem:[%s201 + $0x2580] sm:$0xff]
        %v1535 = vld [vmem:[%s201 + $0x2588] sm:$0xff]
        %v1536 = vld [vmem:[%s201 + $0x2590] sm:$0xff]
        %v1537 = vld [vmem:[%s201 + $0x2598] sm:$0xff]
        %v1538 = vld [vmem:[%s201 + $0x25a0] sm:$0xff]
        %v1539 = vld [vmem:[%s201 + $0x25a8] sm:$0xff]
        %v1540 = vld [vmem:[%s201 + $0x25b0] sm:$0xff]
        %v1541 = vld [vmem:[%s201 + $0x25b8] sm:$0xff]
        %v1542 = vld [vmem:[%s201 + $0x25c0] sm:$0xff]
        %v1543 = vld [vmem:[%s201 + $0x25c8] sm:$0xff]
        %v1544 = vld [vmem:[%s201 + $0x25d0] sm:$0xff]
        %v1545 = vld [vmem:[%s201 + $0x25d8] sm:$0xff]
        %v1546 = vld [vmem:[%s201 + $0x25e0] sm:$0xff]
        %v1547 = vld [vmem:[%s201 + $0x25e8] sm:$0xff]
        %v1548 = vld [vmem:[%s201 + $0x25f0] sm:$0xff]
        %v1549 = vld [vmem:[%s201 + $0x25f8] sm:$0xff]
        %v1550 = vld [vmem:[%s201 + $0x2600] sm:$0xff]
        %v1551 = vld [vmem:[%s201 + $0x2608] sm:$0xff]
        %v1552 = vld [vmem:[%s201 + $0x2610] sm:$0xff]
        %v1553 = vld [vmem:[%s201 + $0x2618] sm:$0xff]
        %v1554 = vld [vmem:[%s201 + $0x2620] sm:$0xff]
        %v1555 = vld [vmem:[%s201 + $0x2628] sm:$0xff]
        %v1556 = vld [vmem:[%s201 + $0x2630] sm:$0xff]
        %v1557 = vld [vmem:[%s201 + $0x2638] sm:$0xff]
        %v1558 = vld [vmem:[%s201 + $0x2640] sm:$0xff]
        %v1559 = vld [vmem:[%s201 + $0x2648] sm:$0xff]
        %v1560 = vld [vmem:[%s201 + $0x2650] sm:$0xff]
        %v1561 = vld [vmem:[%s201 + $0x2658] sm:$0xff]
        %v1562 = vld [vmem:[%s201 + $0x2660] sm:$0xff]
        %v1563 = vld [vmem:[%s201 + $0x2668] sm:$0xff]
        %v1564 = vld [vmem:[%s201 + $0x2670] sm:$0xff]
        %v1565 = vld [vmem:[%s201 + $0x2678] sm:$0xff]
        %v1566 = vld [vmem:[%s201 + $0x2680] sm:$0xff]
        %v1567 = vld [vmem:[%s201 + $0x2688] sm:$0xff]
        %v1568 = vld [vmem:[%s201 + $0x2690] sm:$0xff]
        %v1569 = vld [vmem:[%s201 + $0x2698] sm:$0xff]
        %v1570 = vld [vmem:[%s201 + $0x26a0] sm:$0xff]
        %v1571 = vld [vmem:[%s201 + $0x26a8] sm:$0xff]
        %v1572 = vld [vmem:[%s201 + $0x26b0] sm:$0xff]
        %v1573 = vld [vmem:[%s201 + $0x26b8] sm:$0xff]
        %v1574 = vld [vmem:[%s201 + $0x26c0] sm:$0xff]
        %v1575 = vld [vmem:[%s201 + $0x26c8] sm:$0xff]
        %v1576 = vld [vmem:[%s201 + $0x26d0] sm:$0xff]
        %v1577 = vld [vmem:[%s201 + $0x26d8] sm:$0xff]
        %v1578 = vld [vmem:[%s201 + $0x26e0] sm:$0xff]
        %v1579 = vld [vmem:[%s201 + $0x26e8] sm:$0xff]
        %v1580 = vld [vmem:[%s201 + $0x26f0] sm:$0xff]
        %v1581 = vld [vmem:[%s201 + $0x26f8] sm:$0xff]
        %v1582 = vld [vmem:[%s201 + $0x2700] sm:$0xff]
        %v1583 = vld [vmem:[%s201 + $0x2708] sm:$0xff]
        %v1584 = vld [vmem:[%s201 + $0x2710] sm:$0xff]
        %v1585 = vld [vmem:[%s201 + $0x2718] sm:$0xff]
        %v1586 = vld [vmem:[%s201 + $0x2720] sm:$0xff]
        %v1587 = vld [vmem:[%s201 + $0x2728] sm:$0xff]
        %v1588 = vld [vmem:[%s201 + $0x2730] sm:$0xff]
        %v1589 = vld [vmem:[%s201 + $0x2738] sm:$0xff]
        %v1590 = vld [vmem:[%s201 + $0x2740] sm:$0xff]
        %v1591 = vld [vmem:[%s201 + $0x2748] sm:$0xff]
        %v1592 = vld [vmem:[%s201 + $0x2750] sm:$0xff]
        %v1593 = vld [vmem:[%s201 + $0x2758] sm:$0xff]
        %v1594 = vld [vmem:[%s201 + $0x2760] sm:$0xff]
        %v1595 = vld [vmem:[%s201 + $0x2768] sm:$0xff]
        %v1596 = vld [vmem:[%s201 + $0x2770] sm:$0xff]
        %v1597 = vld [vmem:[%s201 + $0x2778] sm:$0xff]
        %v1598 = vld [vmem:[%s201 + $0x2780] sm:$0xff]
        %v1599 = vld [vmem:[%s201 + $0x2788] sm:$0xff]
        %v1600 = vld [vmem:[%s201 + $0x2790] sm:$0xff]
        %v1601 = vld [vmem:[%s201 + $0x2798] sm:$0xff]
        %v1602 = vld [vmem:[%s201 + $0x27a0] sm:$0xff]
        %v1603 = vld [vmem:[%s201 + $0x27a8] sm:$0xff]
        %v1604 = vld [vmem:[%s201 + $0x27b0] sm:$0xff]
        %v1605 = vld [vmem:[%s201 + $0x27b8] sm:$0xff]
        %v1606 = vld [vmem:[%s201 + $0x27c0] sm:$0xff]
        %v1607 = vld [vmem:[%s201 + $0x27c8] sm:$0xff]
        %v1608 = vld [vmem:[%s201 + $0x27d0] sm:$0xff]
        %v1609 = vld [vmem:[%s201 + $0x27d8] sm:$0xff]
        %v1610 = vld [vmem:[%s201 + $0x27e0] sm:$0xff]
        %v1611 = vld [vmem:[%s201 + $0x27e8] sm:$0xff]
        %v1612 = vld [vmem:[%s201 + $0x27f0] sm:$0xff]
        %v1613 = vld [vmem:[%s201 + $0x27f8] sm:$0xff]
        %v1614 = vld [vmem:[%s201 + $0x2800] sm:$0xff]
        %v1615 = vld [vmem:[%s201 + $0x2808] sm:$0xff]
        %v1616 = vld [vmem:[%s201 + $0x2810] sm:$0xff]
        %v1617 = vld [vmem:[%s201 + $0x2818] sm:$0xff]
        %v1618 = vld [vmem:[%s201 + $0x2820] sm:$0xff]
        %v1619 = vld [vmem:[%s201 + $0x2828] sm:$0xff]
        %v1620 = vld [vmem:[%s201 + $0x2830] sm:$0xff]
        %v1621 = vld [vmem:[%s201 + $0x2838] sm:$0xff]
        %v1622 = vld [vmem:[%s201 + $0x2840] sm:$0xff]
        %v1623 = vld [vmem:[%s201 + $0x2848] sm:$0xff]
        %v1624 = vld [vmem:[%s201 + $0x2850] sm:$0xff]
        %v1625 = vld [vmem:[%s201 + $0x2858] sm:$0xff]
        %v1626 = vld [vmem:[%s201 + $0x2860] sm:$0xff]
        %v1627 = vld [vmem:[%s201 + $0x2868] sm:$0xff]
        %v1628 = vld [vmem:[%s201 + $0x2870] sm:$0xff]
        %v1629 = vld [vmem:[%s201 + $0x2878] sm:$0xff]
        %v1630 = vld [vmem:[%s201 + $0x2880] sm:$0xff]
        %v1631 = vld [vmem:[%s201 + $0x2888] sm:$0xff]
        %v1632 = vld [vmem:[%s201 + $0x2890] sm:$0xff]
        %v1633 = vld [vmem:[%s201 + $0x2898] sm:$0xff]
        %v1634 = vld [vmem:[%s201 + $0x28a0] sm:$0xff]
        %v1635 = vld [vmem:[%s201 + $0x28a8] sm:$0xff]
        %v1636 = vld [vmem:[%s201 + $0x28b0] sm:$0xff]
        %v1637 = vld [vmem:[%s201 + $0x28b8] sm:$0xff]
        %v1638 = vld [vmem:[%s201 + $0x28c0] sm:$0xff]
        %v1639 = vld [vmem:[%s201 + $0x28c8] sm:$0xff]
        %v1640 = vld [vmem:[%s201 + $0x28d0] sm:$0xff]
        %v1641 = vld [vmem:[%s201 + $0x28d8] sm:$0xff]
        %v1642 = vld [vmem:[%s201 + $0x28e0] sm:$0xff]
        %v1643 = vld [vmem:[%s201 + $0x28e8] sm:$0xff]
        %v1644 = vld [vmem:[%s201 + $0x28f0] sm:$0xff]
        %v1645 = vld [vmem:[%s201 + $0x28f8] sm:$0xff]
        %v1646 = vld [vmem:[%s201 + $0x2900] sm:$0xff]
        %v1647 = vld [vmem:[%s201 + $0x2908] sm:$0xff]
        %v1648 = vld [vmem:[%s201 + $0x2910] sm:$0xff]
        %v1649 = vld [vmem:[%s201 + $0x2918] sm:$0xff]
        %v1650 = vld [vmem:[%s201 + $0x2920] sm:$0xff]
        %v1651 = vld [vmem:[%s201 + $0x2928] sm:$0xff]
        %v1652 = vld [vmem:[%s201 + $0x2930] sm:$0xff]
        %v1653 = vld [vmem:[%s201 + $0x2938] sm:$0xff]
        %v1654 = vld [vmem:[%s201 + $0x2940] sm:$0xff]
        %v1655 = vld [vmem:[%s201 + $0x2948] sm:$0xff]
        %v1656 = vld [vmem:[%s201 + $0x2950] sm:$0xff]
        %v1657 = vld [vmem:[%s201 + $0x2958] sm:$0xff]
        %v1658 = vld [vmem:[%s201 + $0x2960] sm:$0xff]
        %v1659 = vld [vmem:[%s201 + $0x2968] sm:$0xff]
        %v1660 = vld [vmem:[%s201 + $0x2970] sm:$0xff]
        %v1661 = vld [vmem:[%s201 + $0x2978] sm:$0xff]
        %v1662 = vld [vmem:[%s201 + $0x2980] sm:$0xff]
        %v1663 = vld [vmem:[%s201 + $0x2988] sm:$0xff]
        %v1664 = vld [vmem:[%s201 + $0x2990] sm:$0xff]
        %v1665 = vld [vmem:[%s201 + $0x2998] sm:$0xff]
        %v1666 = vld [vmem:[%s201 + $0x29a0] sm:$0xff]
        %v1667 = vld [vmem:[%s201 + $0x29a8] sm:$0xff]
        %v1668 = vld [vmem:[%s201 + $0x29b0] sm:$0xff]
        %v1669 = vld [vmem:[%s201 + $0x29b8] sm:$0xff]
        %v1670 = vld [vmem:[%s201 + $0x29c0] sm:$0xff]
        %v1671 = vld [vmem:[%s201 + $0x29c8] sm:$0xff]
        %v1672 = vld [vmem:[%s201 + $0x29d0] sm:$0xff]
        %v1673 = vld [vmem:[%s201 + $0x29d8] sm:$0xff]
        %v1674 = vld [vmem:[%s201 + $0x29e0] sm:$0xff]
        %v1675 = vld [vmem:[%s201 + $0x29e8] sm:$0xff]
        %v1676 = vld [vmem:[%s201 + $0x29f0] sm:$0xff]
        %v1677 = vld [vmem:[%s201 + $0x29f8] sm:$0xff]
        %v1678 = vld [vmem:[%s201 + $0x2a00] sm:$0xff]
        %v1679 = vld [vmem:[%s201 + $0x2a08] sm:$0xff]
        %v1680 = vld [vmem:[%s201 + $0x2a10] sm:$0xff]
        %v1681 = vld [vmem:[%s201 + $0x2a18] sm:$0xff]
        %v1682 = vld [vmem:[%s201 + $0x2a20] sm:$0xff]
        %v1683 = vld [vmem:[%s201 + $0x2a28] sm:$0xff]
        %v1684 = vld [vmem:[%s201 + $0x2a30] sm:$0xff]
        %v1685 = vld [vmem:[%s201 + $0x2a38] sm:$0xff]
        %v1686 = vld [vmem:[%s201 + $0x2a40] sm:$0xff]
        %v1687 = vld [vmem:[%s201 + $0x2a48] sm:$0xff]
        %v1688 = vld [vmem:[%s201 + $0x2a50] sm:$0xff]
        %v1689 = vld [vmem:[%s201 + $0x2a58] sm:$0xff]
        %v1690 = vld [vmem:[%s201 + $0x2a60] sm:$0xff]
        %v1691 = vld [vmem:[%s201 + $0x2a68] sm:$0xff]
        %v1692 = vld [vmem:[%s201 + $0x2a70] sm:$0xff]
        %v1693 = vld [vmem:[%s201 + $0x2a78] sm:$0xff]
        %v1694 = vld [vmem:[%s201 + $0x2a80] sm:$0xff]
        %v1695 = vld [vmem:[%s201 + $0x2a88] sm:$0xff]
        %v1696 = vld [vmem:[%s201 + $0x2a90] sm:$0xff]
        %v1697 = vld [vmem:[%s201 + $0x2a98] sm:$0xff]
        %v1698 = vld [vmem:[%s201 + $0x2aa0] sm:$0xff]
        %v1699 = vld [vmem:[%s201 + $0x2aa8] sm:$0xff]
        %v1700 = vld [vmem:[%s201 + $0x2ab0] sm:$0xff]
        %v1701 = vld [vmem:[%s201 + $0x2ab8] sm:$0xff]
        %v1702 = vld [vmem:[%s201 + $0x2ac0] sm:$0xff]
        %v1703 = vld [vmem:[%s201 + $0x2ac8] sm:$0xff]
        %v1704 = vld [vmem:[%s201 + $0x2ad0] sm:$0xff]
        %v1705 = vld [vmem:[%s201 + $0x2ad8] sm:$0xff]
        %v1706 = vld [vmem:[%s201 + $0x2ae0] sm:$0xff]
        %v1707 = vld [vmem:[%s201 + $0x2ae8] sm:$0xff]
        %v1708 = vld [vmem:[%s201 + $0x2af0] sm:$0xff]
        %v1709 = vld [vmem:[%s201 + $0x2af8] sm:$0xff]
        %v1710 = vld [vmem:[%s201 + $0x2b00] sm:$0xff]
        %v1711 = vld [vmem:[%s201 + $0x2b08] sm:$0xff]
        %v1712 = vld [vmem:[%s201 + $0x2b10] sm:$0xff]
        %v1713 = vld [vmem:[%s201 + $0x2b18] sm:$0xff]
        %v1714 = vld [vmem:[%s201 + $0x2b20] sm:$0xff]
        %v1715 = vld [vmem:[%s201 + $0x2b28] sm:$0xff]
        %v1716 = vld [vmem:[%s201 + $0x2b30] sm:$0xff]
        %v1717 = vld [vmem:[%s201 + $0x2b38] sm:$0xff]
        %v1718 = vld [vmem:[%s201 + $0x2b40] sm:$0xff]
        %v1719 = vld [vmem:[%s201 + $0x2b48] sm:$0xff]
        %v1720 = vld [vmem:[%s201 + $0x2b50] sm:$0xff]
        %v1721 = vld [vmem:[%s201 + $0x2b58] sm:$0xff]
        %v1722 = vld [vmem:[%s201 + $0x2b60] sm:$0xff]
        %v1723 = vld [vmem:[%s201 + $0x2b68] sm:$0xff]
        %v1724 = vld [vmem:[%s201 + $0x2b70] sm:$0xff]
        %v1725 = vld [vmem:[%s201 + $0x2b78] sm:$0xff]
        %v1726 = vld [vmem:[%s201 + $0x2b80] sm:$0xff]
        %v1727 = vld [vmem:[%s201 + $0x2b88] sm:$0xff]
        %v1728 = vld [vmem:[%s201 + $0x2b90] sm:$0xff]
        %v1729 = vld [vmem:[%s201 + $0x2b98] sm:$0xff]
        %v1730 = vld [vmem:[%s201 + $0x2ba0] sm:$0xff]
        %v1731 = vld [vmem:[%s201 + $0x2ba8] sm:$0xff]
        %v1732 = vld [vmem:[%s201 + $0x2bb0] sm:$0xff]
        %v1733 = vld [vmem:[%s201 + $0x2bb8] sm:$0xff]
        %v1734 = vld [vmem:[%s201 + $0x2bc0] sm:$0xff]
        %v1735 = vld [vmem:[%s201 + $0x2bc8] sm:$0xff]
        %v1736 = vld [vmem:[%s201 + $0x2bd0] sm:$0xff]
        %v1737 = vld [vmem:[%s201 + $0x2bd8] sm:$0xff]
        %v1738 = vld [vmem:[%s201 + $0x2be0] sm:$0xff]
        %v1739 = vld [vmem:[%s201 + $0x2be8] sm:$0xff]
        %v1740 = vld [vmem:[%s201 + $0x2bf0] sm:$0xff]
        %v1741 = vld [vmem:[%s201 + $0x2bf8] sm:$0xff]
        %v1742 = vld [vmem:[%s201 + $0x2c00] sm:$0xff]
        %v1743 = vld [vmem:[%s201 + $0x2c08] sm:$0xff]
        %v1744 = vld [vmem:[%s201 + $0x2c10] sm:$0xff]
        %v1745 = vld [vmem:[%s201 + $0x2c18] sm:$0xff]
        %v1746 = vld [vmem:[%s201 + $0x2c20] sm:$0xff]
        %v1747 = vld [vmem:[%s201 + $0x2c28] sm:$0xff]
        %v1748 = vld [vmem:[%s201 + $0x2c30] sm:$0xff]
        %v1749 = vld [vmem:[%s201 + $0x2c38] sm:$0xff]
        %v1750 = vld [vmem:[%s201 + $0x2c40] sm:$0xff]
        %v1751 = vld [vmem:[%s201 + $0x2c48] sm:$0xff]
        %v1752 = vld [vmem:[%s201 + $0x2c50] sm:$0xff]
        %v1753 = vld [vmem:[%s201 + $0x2c58] sm:$0xff]
        %v1754 = vld [vmem:[%s201 + $0x2c60] sm:$0xff]
        %v1755 = vld [vmem:[%s201 + $0x2c68] sm:$0xff]
        %v1756 = vld [vmem:[%s201 + $0x2c70] sm:$0xff]
        %v1757 = vld [vmem:[%s201 + $0x2c78] sm:$0xff]
        %v1758 = vld [vmem:[%s201 + $0x2c80] sm:$0xff]
        %v1759 = vld [vmem:[%s201 + $0x2c88] sm:$0xff]
        %v1760 = vld [vmem:[%s201 + $0x2c90] sm:$0xff]
        %v1761 = vld [vmem:[%s201 + $0x2c98] sm:$0xff]
        %v1762 = vld [vmem:[%s201 + $0x2ca0] sm:$0xff]
        %v1763 = vld [vmem:[%s201 + $0x2ca8] sm:$0xff]
        %v1764 = vld [vmem:[%s201 + $0x2cb0] sm:$0xff]
        %v1765 = vld [vmem:[%s201 + $0x2cb8] sm:$0xff]
        %v1766 = vld [vmem:[%s201 + $0x2cc0] sm:$0xff]
        %v1767 = vld [vmem:[%s201 + $0x2cc8] sm:$0xff]
        %v1768 = vld [vmem:[%s201 + $0x2cd0] sm:$0xff]
        %v1769 = vld [vmem:[%s201 + $0x2cd8] sm:$0xff]
        %v1770 = vld [vmem:[%s201 + $0x2ce0] sm:$0xff]
        %v1771 = vld [vmem:[%s201 + $0x2ce8] sm:$0xff]
        %v1772 = vld [vmem:[%s201 + $0x2cf0] sm:$0xff]
        %v1773 = vld [vmem:[%s201 + $0x2cf8] sm:$0xff]
        %v1774 = vld [vmem:[%s201 + $0x2d00] sm:$0xff]
        %v1775 = vld [vmem:[%s201 + $0x2d08] sm:$0xff]
        %v1776 = vld [vmem:[%s201 + $0x2d10] sm:$0xff]
        %v1777 = vld [vmem:[%s201 + $0x2d18] sm:$0xff]
        %v1778 = vld [vmem:[%s201 + $0x2d20] sm:$0xff]
        %v1779 = vld [vmem:[%s201 + $0x2d28] sm:$0xff]
        %v1780 = vld [vmem:[%s201 + $0x2d30] sm:$0xff]
        %v1781 = vld [vmem:[%s201 + $0x2d38] sm:$0xff]
        %v1782 = vld [vmem:[%s201 + $0x2d40] sm:$0xff]
        %v1783 = vld [vmem:[%s201 + $0x2d48] sm:$0xff]
        %v1784 = vld [vmem:[%s201 + $0x2d50] sm:$0xff]
        %v1785 = vld [vmem:[%s201 + $0x2d58] sm:$0xff]
        %v1786 = vld [vmem:[%s201 + $0x2d60] sm:$0xff]
        %v1787 = vld [vmem:[%s201 + $0x2d68] sm:$0xff]
        %v1788 = vld [vmem:[%s201 + $0x2d70] sm:$0xff]
        %v1789 = vld [vmem:[%s201 + $0x2d78] sm:$0xff]
        %v1790 = vld [vmem:[%s201 + $0x2d80] sm:$0xff]
        %v1791 = vld [vmem:[%s201 + $0x2d88] sm:$0xff]
        %v1792 = vld [vmem:[%s201 + $0x2d90] sm:$0xff]
        %v1793 = vld [vmem:[%s201 + $0x2d98] sm:$0xff]
        %v1794 = vld [vmem:[%s201 + $0x2da0] sm:$0xff]
        %v1795 = vld [vmem:[%s201 + $0x2da8] sm:$0xff]
        %v1796 = vld [vmem:[%s201 + $0x2db0] sm:$0xff]
        %v1797 = vld [vmem:[%s201 + $0x2db8] sm:$0xff]
        %v1798 = vld [vmem:[%s201 + $0x2dc0] sm:$0xff]
        %v1799 = vld [vmem:[%s201 + $0x2dc8] sm:$0xff]
        %v1800 = vld [vmem:[%s201 + $0x2dd0] sm:$0xff]
        %v1801 = vld [vmem:[%s201 + $0x2dd8] sm:$0xff]
        %v1802 = vld [vmem:[%s201 + $0x2de0] sm:$0xff]
        %v1803 = vld [vmem:[%s201 + $0x2de8] sm:$0xff]
        %v1804 = vld [vmem:[%s201 + $0x2df0] sm:$0xff]
        %v1805 = vld [vmem:[%s201 + $0x2df8] sm:$0xff]
        %v1806 = vld [vmem:[%s201 + $0x2e00] sm:$0xff]
        %v1807 = vld [vmem:[%s201 + $0x2e08] sm:$0xff]
        %v1808 = vld [vmem:[%s201 + $0x2e10] sm:$0xff]
        %v1809 = vld [vmem:[%s201 + $0x2e18] sm:$0xff]
        %v1810 = vld [vmem:[%s201 + $0x2e20] sm:$0xff]
        %v1811 = vld [vmem:[%s201 + $0x2e28] sm:$0xff]
        %v1812 = vld [vmem:[%s201 + $0x2e30] sm:$0xff]
        %v1813 = vld [vmem:[%s201 + $0x2e38] sm:$0xff]
        %v1814 = vld [vmem:[%s201 + $0x2e40] sm:$0xff]
        %v1815 = vld [vmem:[%s201 + $0x2e48] sm:$0xff]
        %v1816 = vld [vmem:[%s201 + $0x2e50] sm:$0xff]
        %v1817 = vld [vmem:[%s201 + $0x2e58] sm:$0xff]
        %v1818 = vld [vmem:[%s201 + $0x2e60] sm:$0xff]
        %v1819 = vld [vmem:[%s201 + $0x2e68] sm:$0xff]
        %v1820 = vld [vmem:[%s201 + $0x2e70] sm:$0xff]
        %v1821 = vld [vmem:[%s201 + $0x2e78] sm:$0xff]
        %v1822 = vld [vmem:[%s201 + $0x2e80] sm:$0xff]
        %v1823 = vld [vmem:[%s201 + $0x2e88] sm:$0xff]
        %v1824 = vld [vmem:[%s201 + $0x2e90] sm:$0xff]
        %v1825 = vld [vmem:[%s201 + $0x2e98] sm:$0xff]
        %v1826 = vld [vmem:[%s201 + $0x2ea0] sm:$0xff]
        %v1827 = vld [vmem:[%s201 + $0x2ea8] sm:$0xff]
        %v1828 = vld [vmem:[%s201 + $0x2eb0] sm:$0xff]
        %v1829 = vld [vmem:[%s201 + $0x2eb8] sm:$0xff]
        %v1830 = vld [vmem:[%s201 + $0x2ec0] sm:$0xff]
        %v1831 = vld [vmem:[%s201 + $0x2ec8] sm:$0xff]
        %v1832 = vld [vmem:[%s201 + $0x2ed0] sm:$0xff]
        %v1833 = vld [vmem:[%s201 + $0x2ed8] sm:$0xff]
        %v1834 = vld [vmem:[%s201 + $0x2ee0] sm:$0xff]
        %v1835 = vld [vmem:[%s201 + $0x2ee8] sm:$0xff]
        %v1836 = vld [vmem:[%s201 + $0x2ef0] sm:$0xff]
        %v1837 = vld [vmem:[%s201 + $0x2ef8] sm:$0xff]
        %v1838 = vld [vmem:[%s201 + $0x2f00] sm:$0xff]
        %v1839 = vld [vmem:[%s201 + $0x2f08] sm:$0xff]
        %v1840 = vld [vmem:[%s201 + $0x2f10] sm:$0xff]
        %v1841 = vld [vmem:[%s201 + $0x2f18] sm:$0xff]
        %v1842 = vld [vmem:[%s201 + $0x2f20] sm:$0xff]
        %v1843 = vld [vmem:[%s201 + $0x2f28] sm:$0xff]
        %v1844 = vld [vmem:[%s201 + $0x2f30] sm:$0xff]
        %v1845 = vld [vmem:[%s201 + $0x2f38] sm:$0xff]
        %v1846 = vld [vmem:[%s201 + $0x2f40] sm:$0xff]
        %v1847 = vld [vmem:[%s201 + $0x2f48] sm:$0xff]
        %v1848 = vld [vmem:[%s201 + $0x2f50] sm:$0xff]
        %v1849 = vld [vmem:[%s201 + $0x2f58] sm:$0xff]
        %v1850 = vld [vmem:[%s201 + $0x2f60] sm:$0xff]
        %v1851 = vld [vmem:[%s201 + $0x2f68] sm:$0xff]
        %v1852 = vld [vmem:[%s201 + $0x2f70] sm:$0xff]
        %v1853 = vld [vmem:[%s201 + $0x2f78] sm:$0xff]
        %v1854 = vld [vmem:[%s201 + $0x2f80] sm:$0xff]
        %v1855 = vld [vmem:[%s201 + $0x2f88] sm:$0xff]
        %v1856 = vld [vmem:[%s201 + $0x2f90] sm:$0xff]
        %v1857 = vld [vmem:[%s201 + $0x2f98] sm:$0xff]
        %v1858 = vld [vmem:[%s201 + $0x2fa0] sm:$0xff]
        %v1859 = vld [vmem:[%s201 + $0x2fa8] sm:$0xff]
        %v1860 = vld [vmem:[%s201 + $0x2fb0] sm:$0xff]
        %v1861 = vld [vmem:[%s201 + $0x2fb8] sm:$0xff]
        %v1862 = vld [vmem:[%s201 + $0x2fc0] sm:$0xff]
        %v1863 = vld [vmem:[%s201 + $0x2fc8] sm:$0xff]
        %v1864 = vld [vmem:[%s201 + $0x2fd0] sm:$0xff]
        %v1865 = vld [vmem:[%s201 + $0x2fd8] sm:$0xff]
        %v1866 = vld [vmem:[%s201 + $0x2fe0] sm:$0xff]
        %v1867 = vld [vmem:[%s201 + $0x2fe8] sm:$0xff]
        %v1868 = vld [vmem:[%s201 + $0x2ff0] sm:$0xff]
        %v1869 = vld [vmem:[%s201 + $0x2ff8] sm:$0xff]
        %v1870 = vld [vmem:[%s201 + $0x3000] sm:$0xff]
        %v1871 = vld [vmem:[%s201 + $0x3008] sm:$0xff]
        %v1872 = vld [vmem:[%s201 + $0x3010] sm:$0xff]
        %v1873 = vld [vmem:[%s201 + $0x3018] sm:$0xff]
        %v1874 = vld [vmem:[%s201 + $0x3020] sm:$0xff]
        %v1875 = vld [vmem:[%s201 + $0x3028] sm:$0xff]
        %v1876 = vld [vmem:[%s201 + $0x3030] sm:$0xff]
        %v1877 = vld [vmem:[%s201 + $0x3038] sm:$0xff]
        %v1878 = vld [vmem:[%s201 + $0x3040] sm:$0xff]
        %v1879 = vld [vmem:[%s201 + $0x3048] sm:$0xff]
        %v1880 = vld [vmem:[%s201 + $0x3050] sm:$0xff]
        %v1881 = vld [vmem:[%s201 + $0x3058] sm:$0xff]
        %v1882 = vld [vmem:[%s201 + $0x3060] sm:$0xff]
        %v1883 = vld [vmem:[%s201 + $0x3068] sm:$0xff]
        %v1884 = vld [vmem:[%s201 + $0x3070] sm:$0xff]
        %v1885 = vld [vmem:[%s201 + $0x3078] sm:$0xff]
        %v1886 = vld [vmem:[%s201 + $0x3080] sm:$0xff]
        %v1887 = vld [vmem:[%s201 + $0x3088] sm:$0xff]
        %v1888 = vld [vmem:[%s201 + $0x3090] sm:$0xff]
        %v1889 = vld [vmem:[%s201 + $0x3098] sm:$0xff]
        %v1890 = vld [vmem:[%s201 + $0x30a0] sm:$0xff]
        %v1891 = vld [vmem:[%s201 + $0x30a8] sm:$0xff]
        %v1892 = vld [vmem:[%s201 + $0x30b0] sm:$0xff]
        %v1893 = vld [vmem:[%s201 + $0x30b8] sm:$0xff]
        %v1894 = vld [vmem:[%s201 + $0x30c0] sm:$0xff]
        %v1895 = vld [vmem:[%s201 + $0x30c8] sm:$0xff]
        %v1896 = vld [vmem:[%s201 + $0x30d0] sm:$0xff]
        %v1897 = vld [vmem:[%s201 + $0x30d8] sm:$0xff]
        %v1898 = vld [vmem:[%s201 + $0x30e0] sm:$0xff]
        %v1899 = vld [vmem:[%s201 + $0x30e8] sm:$0xff]
        %v1900 = vld [vmem:[%s201 + $0x30f0] sm:$0xff]
        %v1901 = vld [vmem:[%s201 + $0x30f8] sm:$0xff]
        %v1902 = vld [vmem:[%s201 + $0x3100] sm:$0xff]
        %v1903 = vld [vmem:[%s201 + $0x3108] sm:$0xff]
        %v1904 = vld [vmem:[%s201 + $0x3110] sm:$0xff]
        %v1905 = vld [vmem:[%s201 + $0x3118] sm:$0xff]
        %v1906 = vld [vmem:[%s201 + $0x3120] sm:$0xff]
        %v1907 = vld [vmem:[%s201 + $0x3128] sm:$0xff]
        %v1908 = vld [vmem:[%s201 + $0x3130] sm:$0xff]
        %v1909 = vld [vmem:[%s201 + $0x3138] sm:$0xff]
        %v1910 = vld [vmem:[%s201 + $0x3140] sm:$0xff]
        %v1911 = vld [vmem:[%s201 + $0x3148] sm:$0xff]
        %v1912 = vld [vmem:[%s201 + $0x3150] sm:$0xff]
        %v1913 = vld [vmem:[%s201 + $0x3158] sm:$0xff]
        %v1914 = vld [vmem:[%s201 + $0x3160] sm:$0xff]
        %v1915 = vld [vmem:[%s201 + $0x3168] sm:$0xff]
        %v1916 = vld [vmem:[%s201 + $0x3170] sm:$0xff]
        %v1917 = vld [vmem:[%s201 + $0x3178] sm:$0xff]
        %v1918 = vld [vmem:[%s201 + $0x3180] sm:$0xff]
        %v1919 = vld [vmem:[%s201 + $0x3188] sm:$0xff]
        %v1920 = vld [vmem:[%s201 + $0x3190] sm:$0xff]
        %v1921 = vld [vmem:[%s201 + $0x3198] sm:$0xff]
        %v1922 = vld [vmem:[%s201 + $0x31a0] sm:$0xff]
        %v1923 = vld [vmem:[%s201 + $0x31a8] sm:$0xff]
        %v1924 = vld [vmem:[%s201 + $0x31b0] sm:$0xff]
        %v1925 = vld [vmem:[%s201 + $0x31b8] sm:$0xff]
        %v1926 = vld [vmem:[%s201 + $0x31c0] sm:$0xff]
        %v1927 = vld [vmem:[%s201 + $0x31c8] sm:$0xff]
        %v1928 = vld [vmem:[%s201 + $0x31d0] sm:$0xff]
        %v1929 = vld [vmem:[%s201 + $0x31d8] sm:$0xff]
        %v1930 = vld [vmem:[%s201 + $0x31e0] sm:$0xff]
        %v1931 = vld [vmem:[%s201 + $0x31e8] sm:$0xff]
        %v1932 = vld [vmem:[%s201 + $0x31f0] sm:$0xff]
        %v1933 = vld [vmem:[%s201 + $0x31f8] sm:$0xff]
        %v1934 = vld [vmem:[%s201 + $0x3200] sm:$0xff]
        %v1935 = vld [vmem:[%s201 + $0x3208] sm:$0xff]
        %v1936 = vld [vmem:[%s201 + $0x3210] sm:$0xff]
        %v1937 = vld [vmem:[%s201 + $0x3218] sm:$0xff]
        %v1938 = vld [vmem:[%s201 + $0x3220] sm:$0xff]
        %v1939 = vld [vmem:[%s201 + $0x3228] sm:$0xff]
        %v1940 = vld [vmem:[%s201 + $0x3230] sm:$0xff]
        %v1941 = vld [vmem:[%s201 + $0x3238] sm:$0xff]
        %v1942 = vld [vmem:[%s201 + $0x3240] sm:$0xff]
        %v1943 = vld [vmem:[%s201 + $0x3248] sm:$0xff]
        %v1944 = vld [vmem:[%s201 + $0x3250] sm:$0xff]
        %v1945 = vld [vmem:[%s201 + $0x3258] sm:$0xff]
        %v1946 = vld [vmem:[%s201 + $0x3260] sm:$0xff]
        %v1947 = vld [vmem:[%s201 + $0x3268] sm:$0xff]
        %v1948 = vld [vmem:[%s201 + $0x3270] sm:$0xff]
        %v1949 = vld [vmem:[%s201 + $0x3278] sm:$0xff]
        %v1950 = vld [vmem:[%s201 + $0x3280] sm:$0xff]
        %v1951 = vld [vmem:[%s201 + $0x3288] sm:$0xff]
        %v1952 = vld [vmem:[%s201 + $0x3290] sm:$0xff]
        %v1953 = vld [vmem:[%s201 + $0x3298] sm:$0xff]
        %v1954 = vld [vmem:[%s201 + $0x32a0] sm:$0xff]
        %v1955 = vld [vmem:[%s201 + $0x32a8] sm:$0xff]
        %v1956 = vld [vmem:[%s201 + $0x32b0] sm:$0xff]
        %v1957 = vld [vmem:[%s201 + $0x32b8] sm:$0xff]
        %v1958 = vld [vmem:[%s201 + $0x32c0] sm:$0xff]
        %v1959 = vld [vmem:[%s201 + $0x32c8] sm:$0xff]
        %v1960 = vld [vmem:[%s201 + $0x32d0] sm:$0xff]
        %v1961 = vld [vmem:[%s201 + $0x32d8] sm:$0xff]
        %v1962 = vld [vmem:[%s201 + $0x32e0] sm:$0xff]
        %v1963 = vld [vmem:[%s201 + $0x32e8] sm:$0xff]
        %v1964 = vld [vmem:[%s201 + $0x32f0] sm:$0xff]
        %v1965 = vld [vmem:[%s201 + $0x32f8] sm:$0xff]
        %v1966 = vld [vmem:[%s201 + $0x3300] sm:$0xff]
        %v1967 = vld [vmem:[%s201 + $0x3308] sm:$0xff]
        %v1968 = vld [vmem:[%s201 + $0x3310] sm:$0xff]
        %v1969 = vld [vmem:[%s201 + $0x3318] sm:$0xff]
        %v1970 = vld [vmem:[%s201 + $0x3320] sm:$0xff]
        %v1971 = vld [vmem:[%s201 + $0x3328] sm:$0xff]
        %v1972 = vld [vmem:[%s201 + $0x3330] sm:$0xff]
        %v1973 = vld [vmem:[%s201 + $0x3338] sm:$0xff]
        %v1974 = vld [vmem:[%s201 + $0x3340] sm:$0xff]
        %v1975 = vld [vmem:[%s201 + $0x3348] sm:$0xff]
        %v1976 = vld [vmem:[%s201 + $0x3350] sm:$0xff]
        %v1977 = vld [vmem:[%s201 + $0x3358] sm:$0xff]
        %v1978 = vld [vmem:[%s201 + $0x3360] sm:$0xff]
        %v1979 = vld [vmem:[%s201 + $0x3368] sm:$0xff]
        %v1980 = vld [vmem:[%s201 + $0x3370] sm:$0xff]
        %v1981 = vld [vmem:[%s201 + $0x3378] sm:$0xff]
        %v1982 = vld [vmem:[%s201 + $0x3380] sm:$0xff]
        %v1983 = vld [vmem:[%s201 + $0x3388] sm:$0xff]
        %v1984 = vld [vmem:[%s201 + $0x3390] sm:$0xff]
        %v1985 = vld [vmem:[%s201 + $0x3398] sm:$0xff]
        %v1986 = vld [vmem:[%s201 + $0x33a0] sm:$0xff]
        %v1987 = vld [vmem:[%s201 + $0x33a8] sm:$0xff]
        %v1988 = vld [vmem:[%s201 + $0x33b0] sm:$0xff]
        %v1989 = vld [vmem:[%s201 + $0x33b8] sm:$0xff]
        %v1990 = vld [vmem:[%s201 + $0x33c0] sm:$0xff]
        %v1991 = vld [vmem:[%s201 + $0x33c8] sm:$0xff]
        %v1992 = vld [vmem:[%s201 + $0x33d0] sm:$0xff]
        %v1993 = vld [vmem:[%s201 + $0x33d8] sm:$0xff]
        %v1994 = vld [vmem:[%s201 + $0x33e0] sm:$0xff]
        %v1995 = vld [vmem:[%s201 + $0x33e8] sm:$0xff]
        %v1996 = vld [vmem:[%s201 + $0x33f0] sm:$0xff]
        %v1997 = vld [vmem:[%s201 + $0x33f8] sm:$0xff]
        %v1998 = vld [vmem:[%s201 + $0x3400] sm:$0xff]
        %v1999 = vld [vmem:[%s201 + $0x3408] sm:$0xff]
        %v2000 = vld [vmem:[%s201 + $0x3410] sm:$0xff]
        %v2001 = vld [vmem:[%s201 + $0x3418] sm:$0xff]
        %v2002 = vld [vmem:[%s201 + $0x3420] sm:$0xff]
        %v2003 = vld [vmem:[%s201 + $0x3428] sm:$0xff]
        %v2004 = vld [vmem:[%s201 + $0x3430] sm:$0xff]
        %v2005 = vld [vmem:[%s201 + $0x3438] sm:$0xff]
        %v2006 = vld [vmem:[%s201 + $0x3440] sm:$0xff]
        %v2007 = vld [vmem:[%s201 + $0x3448] sm:$0xff]
        %v2008 = vld [vmem:[%s201 + $0x3450] sm:$0xff]
        %v2009 = vld [vmem:[%s201 + $0x3458] sm:$0xff]
        %v2010 = vld [vmem:[%s201 + $0x3460] sm:$0xff]
        %v2011 = vld [vmem:[%s201 + $0x3468] sm:$0xff]
        %v2012 = vld [vmem:[%s201 + $0x3470] sm:$0xff]
        %v2013 = vld [vmem:[%s201 + $0x3478] sm:$0xff]
        %v2014 = vld [vmem:[%s201 + $0x3480] sm:$0xff]
        %v2015 = vld [vmem:[%s201 + $0x3488] sm:$0xff]
        %v2016 = vld [vmem:[%s201 + $0x3490] sm:$0xff]
        %v2017 = vld [vmem:[%s201 + $0x3498] sm:$0xff]
        %v2018 = vld [vmem:[%s201 + $0x34a0] sm:$0xff]
        %v2019 = vld [vmem:[%s201 + $0x34a8] sm:$0xff]
        %v2020 = vld [vmem:[%s201 + $0x34b0] sm:$0xff]
        %v2021 = vld [vmem:[%s201 + $0x34b8] sm:$0xff]
        %v2022 = vld [vmem:[%s201 + $0x34c0] sm:$0xff]
        %v2023 = vld [vmem:[%s201 + $0x34c8] sm:$0xff]
        %v2024 = vld [vmem:[%s201 + $0x34d0] sm:$0xff]
        %v2025 = vld [vmem:[%s201 + $0x34d8] sm:$0xff]
        %v2026 = vld [vmem:[%s201 + $0x34e0] sm:$0xff]
        %v2027 = vld [vmem:[%s201 + $0x34e8] sm:$0xff]
        %v2028 = vld [vmem:[%s201 + $0x34f0] sm:$0xff]
        %v2029 = vld [vmem:[%s201 + $0x34f8] sm:$0xff]
        %v2030 = vld [vmem:[%s201 + $0x3500] sm:$0xff]
        %v2031 = vld [vmem:[%s201 + $0x3508] sm:$0xff]
        %v2032 = vld [vmem:[%s201 + $0x3510] sm:$0xff]
        %v2033 = vld [vmem:[%s201 + $0x3518] sm:$0xff]
        %v2034 = vld [vmem:[%s201 + $0x3520] sm:$0xff]
        %v2035 = vld [vmem:[%s201 + $0x3528] sm:$0xff]
        %v2036 = vld [vmem:[%s201 + $0x3530] sm:$0xff]
        %v2037 = vld [vmem:[%s201 + $0x3538] sm:$0xff]
        %v2038 = vld [vmem:[%s201 + $0x3540] sm:$0xff]
        %v2039 = vld [vmem:[%s201 + $0x3548] sm:$0xff]
        %v2040 = vld [vmem:[%s201 + $0x3550] sm:$0xff]
        %v2041 = vld [vmem:[%s201 + $0x3558] sm:$0xff]
        %v2042 = vld [vmem:[%s201 + $0x3560] sm:$0xff]
        %v2043 = vld [vmem:[%s201 + $0x3568] sm:$0xff]
        %v2044 = vld [vmem:[%s201 + $0x3570] sm:$0xff]
        %v2045 = vld [vmem:[%s201 + $0x3578] sm:$0xff]
        %v2046 = vld [vmem:[%s201 + $0x3580] sm:$0xff]
        %v2047 = vld [vmem:[%s201 + $0x3588] sm:$0xff]
        %v2048 = vld [vmem:[%s201 + $0x3590] sm:$0xff]
        %v2049 = vld [vmem:[%s201 + $0x3598] sm:$0xff]
        %v2050 = vld [vmem:[%s201 + $0x35a0] sm:$0xff]
        %v2051 = vld [vmem:[%s201 + $0x35a8] sm:$0xff]
        %v2052 = vld [vmem:[%s201 + $0x35b0] sm:$0xff]
        %v2053 = vld [vmem:[%s201 + $0x35b8] sm:$0xff]
        %v2054 = vld [vmem:[%s201 + $0x35c0] sm:$0xff]
        %v2055 = vld [vmem:[%s201 + $0x35c8] sm:$0xff]
        %v2056 = vld [vmem:[%s201 + $0x35d0] sm:$0xff]
        %v2057 = vld [vmem:[%s201 + $0x35d8] sm:$0xff]
        %v2058 = vld [vmem:[%s201 + $0x35e0] sm:$0xff]
        %v2059 = vld [vmem:[%s201 + $0x35e8] sm:$0xff]
        %v2060 = vld [vmem:[%s201 + $0x35f0] sm:$0xff]
        %v2061 = vld [vmem:[%s201 + $0x35f8] sm:$0xff]
        %v2062 = vld [vmem:[%s201 + $0x3600] sm:$0xff]
        %v2063 = vld [vmem:[%s201 + $0x3608] sm:$0xff]
        %v2064 = vld [vmem:[%s201 + $0x3610] sm:$0xff]
        %v2065 = vld [vmem:[%s201 + $0x3618] sm:$0xff]
        %v2066 = vld [vmem:[%s201 + $0x3620] sm:$0xff]
        %v2067 = vld [vmem:[%s201 + $0x3628] sm:$0xff]
        %v2068 = vld [vmem:[%s201 + $0x3630] sm:$0xff]
        %v2069 = vld [vmem:[%s201 + $0x3638] sm:$0xff]
        %v2070 = vld [vmem:[%s201 + $0x3640] sm:$0xff]
        %v2071 = vld [vmem:[%s201 + $0x3648] sm:$0xff]
        %v2072 = vld [vmem:[%s201 + $0x3650] sm:$0xff]
        %v2073 = vld [vmem:[%s201 + $0x3658] sm:$0xff]
        %v2074 = vld [vmem:[%s201 + $0x3660] sm:$0xff]
        %v2075 = vld [vmem:[%s201 + $0x3668] sm:$0xff]
        %v2076 = vld [vmem:[%s201 + $0x3670] sm:$0xff]
        %v2077 = vld [vmem:[%s201 + $0x3678] sm:$0xff]
        %v2078 = vld [vmem:[%s201 + $0x3680] sm:$0xff]
        %v2079 = vld [vmem:[%s201 + $0x3688] sm:$0xff]
        %v2080 = vld [vmem:[%s201 + $0x3690] sm:$0xff]
        %v2081 = vld [vmem:[%s201 + $0x3698] sm:$0xff]
        %v2082 = vld [vmem:[%s201 + $0x36a0] sm:$0xff]
        %v2083 = vld [vmem:[%s201 + $0x36a8] sm:$0xff]
        %v2084 = vld [vmem:[%s201 + $0x36b0] sm:$0xff]
        %v2085 = vld [vmem:[%s201 + $0x36b8] sm:$0xff]
        %v2086 = vld [vmem:[%s201 + $0x36c0] sm:$0xff]
        %v2087 = vld [vmem:[%s201 + $0x36c8] sm:$0xff]
        %v2088 = vld [vmem:[%s201 + $0x36d0] sm:$0xff]
        %v2089 = vld [vmem:[%s201 + $0x36d8] sm:$0xff]
        %v2090 = vld [vmem:[%s201 + $0x36e0] sm:$0xff]
        %v2091 = vld [vmem:[%s201 + $0x36e8] sm:$0xff]
        %v2092 = vld [vmem:[%s201 + $0x36f0] sm:$0xff]
        %v2093 = vld [vmem:[%s201 + $0x36f8] sm:$0xff]
        %v2094 = vld [vmem:[%s201 + $0x3700] sm:$0xff]
        %v2095 = vld [vmem:[%s201 + $0x3708] sm:$0xff]
        %v2096 = vld [vmem:[%s201 + $0x3710] sm:$0xff]
        %v2097 = vld [vmem:[%s201 + $0x3718] sm:$0xff]
        %v2098 = vld [vmem:[%s201 + $0x3720] sm:$0xff]
        %v2099 = vld [vmem:[%s201 + $0x3728] sm:$0xff]
        %v2100 = vld [vmem:[%s201 + $0x3730] sm:$0xff]
        %v2101 = vld [vmem:[%s201 + $0x3738] sm:$0xff]
        %v2102 = vld [vmem:[%s201 + $0x3740] sm:$0xff]
        %v2103 = vld [vmem:[%s201 + $0x3748] sm:$0xff]
        %v2104 = vld [vmem:[%s201 + $0x3750] sm:$0xff]
        %v2105 = vld [vmem:[%s201 + $0x3758] sm:$0xff]
        %v2106 = vld [vmem:[%s201 + $0x3760] sm:$0xff]
        %v2107 = vld [vmem:[%s201 + $0x3768] sm:$0xff]
        %v2108 = vld [vmem:[%s201 + $0x3770] sm:$0xff]
        %v2109 = vld [vmem:[%s201 + $0x3778] sm:$0xff]
        %v2110 = vld [vmem:[%s201 + $0x3780] sm:$0xff]
        %v2111 = vld [vmem:[%s201 + $0x3788] sm:$0xff]
        %v2112 = vld [vmem:[%s201 + $0x3790] sm:$0xff]
        %v2113 = vld [vmem:[%s201 + $0x3798] sm:$0xff]
        %v2114 = vld [vmem:[%s201 + $0x37a0] sm:$0xff]
        %v2115 = vld [vmem:[%s201 + $0x37a8] sm:$0xff]
        %v2116 = vld [vmem:[%s201 + $0x37b0] sm:$0xff]
        %v2117 = vld [vmem:[%s201 + $0x37b8] sm:$0xff]
        %v2118 = vld [vmem:[%s201 + $0x37c0] sm:$0xff]
        %v2119 = vld [vmem:[%s201 + $0x37c8] sm:$0xff]
        %v2120 = vld [vmem:[%s201 + $0x37d0] sm:$0xff]
        %v2121 = vld [vmem:[%s201 + $0x37d8] sm:$0xff]
        %v2122 = vld [vmem:[%s201 + $0x37e0] sm:$0xff]
        %v2123 = vld [vmem:[%s201 + $0x37e8] sm:$0xff]
        %v2124 = vld [vmem:[%s201 + $0x37f0] sm:$0xff]
        %v2125 = vld [vmem:[%s201 + $0x37f8] sm:$0xff]
        %v2126 = vld [vmem:[%s201 + $0x3800] sm:$0xff]
        %v2127 = vld [vmem:[%s201 + $0x3808] sm:$0xff]
        %v2128 = vld [vmem:[%s201 + $0x3810] sm:$0xff]
        %v2129 = vld [vmem:[%s201 + $0x3818] sm:$0xff]
        %v2130 = vld [vmem:[%s201 + $0x3820] sm:$0xff]
        %v2131 = vld [vmem:[%s201 + $0x3828] sm:$0xff]
        %v2132 = vld [vmem:[%s201 + $0x3830] sm:$0xff]
        %v2133 = vld [vmem:[%s201 + $0x3838] sm:$0xff]
        %v2134 = vld [vmem:[%s201 + $0x3840] sm:$0xff]
        %v2135 = vld [vmem:[%s201 + $0x3848] sm:$0xff]
        %v2136 = vld [vmem:[%s201 + $0x3850] sm:$0xff]
        %v2137 = vld [vmem:[%s201 + $0x3858] sm:$0xff]
        %v2138 = vld [vmem:[%s201 + $0x3860] sm:$0xff]
        %v2139 = vld [vmem:[%s201 + $0x3868] sm:$0xff]
        %v2140 = vld [vmem:[%s201 + $0x3870] sm:$0xff]
        %v2141 = vld [vmem:[%s201 + $0x3878] sm:$0xff]
        %v2142 = vld [vmem:[%s201 + $0x3880] sm:$0xff]
        %v2143 = vld [vmem:[%s201 + $0x3888] sm:$0xff]
        %v2144 = vld [vmem:[%s201 + $0x3890] sm:$0xff]
        %v2145 = vld [vmem:[%s201 + $0x3898] sm:$0xff]
        %v2146 = vld [vmem:[%s201 + $0x38a0] sm:$0xff]
        %v2147 = vld [vmem:[%s201 + $0x38a8] sm:$0xff]
        %v2148 = vld [vmem:[%s201 + $0x38b0] sm:$0xff]
        %v2149 = vld [vmem:[%s201 + $0x38b8] sm:$0xff]
        %v2150 = vld [vmem:[%s201 + $0x38c0] sm:$0xff]
        %v2151 = vld [vmem:[%s201 + $0x38c8] sm:$0xff]
        %v2152 = vld [vmem:[%s201 + $0x38d0] sm:$0xff]
        %v2153 = vld [vmem:[%s201 + $0x38d8] sm:$0xff]
        %v2154 = vld [vmem:[%s201 + $0x38e0] sm:$0xff]
        %v2155 = vld [vmem:[%s201 + $0x38e8] sm:$0xff]
        %v2156 = vld [vmem:[%s201 + $0x38f0] sm:$0xff]
        %v2157 = vld [vmem:[%s201 + $0x38f8] sm:$0xff]
        %v2158 = vld [vmem:[%s201 + $0x3900] sm:$0xff]
        %v2159 = vld [vmem:[%s201 + $0x3908] sm:$0xff]
        %v2160 = vld [vmem:[%s201 + $0x3910] sm:$0xff]
        %v2161 = vld [vmem:[%s201 + $0x3918] sm:$0xff]
        %v2162 = vld [vmem:[%s201 + $0x3920] sm:$0xff]
        %v2163 = vld [vmem:[%s201 + $0x3928] sm:$0xff]
        %v2164 = vld [vmem:[%s201 + $0x3930] sm:$0xff]
        %v2165 = vld [vmem:[%s201 + $0x3938] sm:$0xff]
        %v2166 = vld [vmem:[%s201 + $0x3940] sm:$0xff]
        %v2167 = vld [vmem:[%s201 + $0x3948] sm:$0xff]
        %v2168 = vld [vmem:[%s201 + $0x3950] sm:$0xff]
        %v2169 = vld [vmem:[%s201 + $0x3958] sm:$0xff]
        %v2170 = vld [vmem:[%s201 + $0x3960] sm:$0xff]
        %v2171 = vld [vmem:[%s201 + $0x3968] sm:$0xff]
        %v2172 = vld [vmem:[%s201 + $0x3970] sm:$0xff]
        %v2173 = vld [vmem:[%s201 + $0x3978] sm:$0xff]
        %v2174 = vld [vmem:[%s201 + $0x3980] sm:$0xff]
        %v2175 = vld [vmem:[%s201 + $0x3988] sm:$0xff]
        %v2176 = vld [vmem:[%s201 + $0x3990] sm:$0xff]
        %v2177 = vld [vmem:[%s201 + $0x3998] sm:$0xff]
        %v2178 = vld [vmem:[%s201 + $0x39a0] sm:$0xff]
        %v2179 = vld [vmem:[%s201 + $0x39a8] sm:$0xff]
        %v2180 = vld [vmem:[%s201 + $0x39b0] sm:$0xff]
        %v2181 = vld [vmem:[%s201 + $0x39b8] sm:$0xff]
        %v2182 = vld [vmem:[%s201 + $0x39c0] sm:$0xff]
        %v2183 = vld [vmem:[%s201 + $0x39c8] sm:$0xff]
        %v2184 = vld [vmem:[%s201 + $0x39d0] sm:$0xff]
        %v2185 = vld [vmem:[%s201 + $0x39d8] sm:$0xff]
        %v2186 = vld [vmem:[%s201 + $0x39e0] sm:$0xff]
        %v2187 = vld [vmem:[%s201 + $0x39e8] sm:$0xff]
        %v2188 = vld [vmem:[%s201 + $0x39f0] sm:$0xff]
        %v2189 = vld [vmem:[%s201 + $0x39f8] sm:$0xff]
        %v2190 = vld [vmem:[%s201 + $0x3a00] sm:$0xff]
        %v2191 = vld [vmem:[%s201 + $0x3a08] sm:$0xff]
        %v2192 = vld [vmem:[%s201 + $0x3a10] sm:$0xff]
        %v2193 = vld [vmem:[%s201 + $0x3a18] sm:$0xff]
        %v2194 = vld [vmem:[%s201 + $0x3a20] sm:$0xff]
        %v2195 = vld [vmem:[%s201 + $0x3a28] sm:$0xff]
        %v2196 = vld [vmem:[%s201 + $0x3a30] sm:$0xff]
        %v2197 = vld [vmem:[%s201 + $0x3a38] sm:$0xff]
        %v2198 = vld [vmem:[%s201 + $0x3a40] sm:$0xff]
        %v2199 = vld [vmem:[%s201 + $0x3a48] sm:$0xff]
        %v2200 = vld [vmem:[%s201 + $0x3a50] sm:$0xff]
        %v2201 = vld [vmem:[%s201 + $0x3a58] sm:$0xff]
        %v2202 = vld [vmem:[%s201 + $0x3a60] sm:$0xff]
        %v2203 = vld [vmem:[%s201 + $0x3a68] sm:$0xff]
        %v2204 = vld [vmem:[%s201 + $0x3a70] sm:$0xff]
        %v2205 = vld [vmem:[%s201 + $0x3a78] sm:$0xff]
        %v2206 = vld [vmem:[%s201 + $0x3a80] sm:$0xff]
        %v2207 = vld [vmem:[%s201 + $0x3a88] sm:$0xff]
        %v2208 = vld [vmem:[%s201 + $0x3a90] sm:$0xff]
        %v2209 = vld [vmem:[%s201 + $0x3a98] sm:$0xff]
        %v2210 = vld [vmem:[%s201 + $0x3aa0] sm:$0xff]
        %v2211 = vld [vmem:[%s201 + $0x3aa8] sm:$0xff]
        %v2212 = vld [vmem:[%s201 + $0x3ab0] sm:$0xff]
        %v2213 = vld [vmem:[%s201 + $0x3ab8] sm:$0xff]
        %v2214 = vld [vmem:[%s201 + $0x3ac0] sm:$0xff]
        %v2215 = vld [vmem:[%s201 + $0x3ac8] sm:$0xff]
        %v2216 = vld [vmem:[%s201 + $0x3ad0] sm:$0xff]
        %v2217 = vld [vmem:[%s201 + $0x3ad8] sm:$0xff]
        %v2218 = vld [vmem:[%s201 + $0x3ae0] sm:$0xff]
        %v2219 = vld [vmem:[%s201 + $0x3ae8] sm:$0xff]
        %v2220 = vld [vmem:[%s201 + $0x3af0] sm:$0xff]
        %v2221 = vld [vmem:[%s201 + $0x3af8] sm:$0xff]
        %v2222 = vld [vmem:[%s201 + $0x3b00] sm:$0xff]
        %v2223 = vld [vmem:[%s201 + $0x3b08] sm:$0xff]
        %v2224 = vld [vmem:[%s201 + $0x3b10] sm:$0xff]
        %v2225 = vld [vmem:[%s201 + $0x3b18] sm:$0xff]
        %v2226 = vld [vmem:[%s201 + $0x3b20] sm:$0xff]
        %v2227 = vld [vmem:[%s201 + $0x3b28] sm:$0xff]
        %v2228 = vld [vmem:[%s201 + $0x3b30] sm:$0xff]
        %v2229 = vld [vmem:[%s201 + $0x3b38] sm:$0xff]
        %v2230 = vld [vmem:[%s201 + $0x3b40] sm:$0xff]
        %v2231 = vld [vmem:[%s201 + $0x3b48] sm:$0xff]
        %v2232 = vld [vmem:[%s201 + $0x3b50] sm:$0xff]
        %v2233 = vld [vmem:[%s201 + $0x3b58] sm:$0xff]
        %v2234 = vld [vmem:[%s201 + $0x3b60] sm:$0xff]
        %v2235 = vld [vmem:[%s201 + $0x3b68] sm:$0xff]
        %v2236 = vld [vmem:[%s201 + $0x3b70] sm:$0xff]
        %v2237 = vld [vmem:[%s201 + $0x3b78] sm:$0xff]
        %v2238 = vld [vmem:[%s201 + $0x3b80] sm:$0xff]
        %v2239 = vld [vmem:[%s201 + $0x3b88] sm:$0xff]
        %v2240 = vld [vmem:[%s201 + $0x3b90] sm:$0xff]
        %v2241 = vld [vmem:[%s201 + $0x3b98] sm:$0xff]
        %v2242 = vld [vmem:[%s201 + $0x3ba0] sm:$0xff]
        %v2243 = vld [vmem:[%s201 + $0x3ba8] sm:$0xff]
        %v2244 = vld [vmem:[%s201 + $0x3bb0] sm:$0xff]
        %v2245 = vld [vmem:[%s201 + $0x3bb8] sm:$0xff]
        %v2246 = vld [vmem:[%s201 + $0x3bc0] sm:$0xff]
        %v2247 = vld [vmem:[%s201 + $0x3bc8] sm:$0xff]
        %v2248 = vld [vmem:[%s201 + $0x3bd0] sm:$0xff]
        %v2249 = vld [vmem:[%s201 + $0x3bd8] sm:$0xff]
        %v2250 = vld [vmem:[%s201 + $0x3be0] sm:$0xff]
        %v2251 = vld [vmem:[%s201 + $0x3be8] sm:$0xff]
        %v2252 = vld [vmem:[%s201 + $0x3bf0] sm:$0xff]
        %v2253 = vld [vmem:[%s201 + $0x3bf8] sm:$0xff]
        %v2254 = vld [vmem:[%s201 + $0x3c00] sm:$0xff]
        %v2255 = vld [vmem:[%s201 + $0x3c08] sm:$0xff]
        %v2256 = vld [vmem:[%s201 + $0x3c10] sm:$0xff]
        %v2257 = vld [vmem:[%s201 + $0x3c18] sm:$0xff]
        %v2258 = vld [vmem:[%s201 + $0x3c20] sm:$0xff]
        %v2259 = vld [vmem:[%s201 + $0x3c28] sm:$0xff]
        %v2260 = vld [vmem:[%s201 + $0x3c30] sm:$0xff]
        %v2261 = vld [vmem:[%s201 + $0x3c38] sm:$0xff]
        %v2262 = vld [vmem:[%s201 + $0x3c40] sm:$0xff]
        %v2263 = vld [vmem:[%s201 + $0x3c48] sm:$0xff]
        %v2264 = vld [vmem:[%s201 + $0x3c50] sm:$0xff]
        %v2265 = vld [vmem:[%s201 + $0x3c58] sm:$0xff]
        %v2266 = vld [vmem:[%s201 + $0x3c60] sm:$0xff]
        %v2267 = vld [vmem:[%s201 + $0x3c68] sm:$0xff]
        %v2268 = vld [vmem:[%s201 + $0x3c70] sm:$0xff]
        %v2269 = vld [vmem:[%s201 + $0x3c78] sm:$0xff]
        %v2270 = vld [vmem:[%s201 + $0x3c80] sm:$0xff]
        %v2271 = vld [vmem:[%s201 + $0x3c88] sm:$0xff]
        %v2272 = vld [vmem:[%s201 + $0x3c90] sm:$0xff]
        %v2273 = vld [vmem:[%s201 + $0x3c98] sm:$0xff]
        %v2274 = vld [vmem:[%s201 + $0x3ca0] sm:$0xff]
        %v2275 = vld [vmem:[%s201 + $0x3ca8] sm:$0xff]
        %v2276 = vld [vmem:[%s201 + $0x3cb0] sm:$0xff]
        %v2277 = vld [vmem:[%s201 + $0x3cb8] sm:$0xff]
        %v2278 = vld [vmem:[%s201 + $0x3cc0] sm:$0xff]
        %v2279 = vld [vmem:[%s201 + $0x3cc8] sm:$0xff]
        %v2280 = vld [vmem:[%s201 + $0x3cd0] sm:$0xff]
        %v2281 = vld [vmem:[%s201 + $0x3cd8] sm:$0xff]
        %v2282 = vld [vmem:[%s201 + $0x3ce0] sm:$0xff]
        %v2283 = vld [vmem:[%s201 + $0x3ce8] sm:$0xff]
        %v2284 = vld [vmem:[%s201 + $0x3cf0] sm:$0xff]
        %v2285 = vld [vmem:[%s201 + $0x3cf8] sm:$0xff]
        %v2286 = vld [vmem:[%s201 + $0x3d00] sm:$0xff]
        %v2287 = vld [vmem:[%s201 + $0x3d08] sm:$0xff]
        %v2288 = vld [vmem:[%s201 + $0x3d10] sm:$0xff]
        %v2289 = vld [vmem:[%s201 + $0x3d18] sm:$0xff]
        %v2290 = vld [vmem:[%s201 + $0x3d20] sm:$0xff]
        %v2291 = vld [vmem:[%s201 + $0x3d28] sm:$0xff]
        %v2292 = vld [vmem:[%s201 + $0x3d30] sm:$0xff]
        %v2293 = vld [vmem:[%s201 + $0x3d38] sm:$0xff]
        %v2294 = vld [vmem:[%s201 + $0x3d40] sm:$0xff]
        %v2295 = vld [vmem:[%s201 + $0x3d48] sm:$0xff]
        %v2296 = vld [vmem:[%s201 + $0x3d50] sm:$0xff]
        %v2297 = vld [vmem:[%s201 + $0x3d58] sm:$0xff]
        %v2298 = vld [vmem:[%s201 + $0x3d60] sm:$0xff]
        %v2299 = vld [vmem:[%s201 + $0x3d68] sm:$0xff]
        %v2300 = vld [vmem:[%s201 + $0x3d70] sm:$0xff]
        %v2301 = vld [vmem:[%s201 + $0x3d78] sm:$0xff]
        %v2302 = vld [vmem:[%s201 + $0x3d80] sm:$0xff]
        %v2303 = vld [vmem:[%s201 + $0x3d88] sm:$0xff]
        %v2304 = vld [vmem:[%s201 + $0x3d90] sm:$0xff]
        %v2305 = vld [vmem:[%s201 + $0x3d98] sm:$0xff]
        %v2306 = vld [vmem:[%s201 + $0x3da0] sm:$0xff]
        %v2307 = vld [vmem:[%s201 + $0x3da8] sm:$0xff]
        %v2308 = vld [vmem:[%s201 + $0x3db0] sm:$0xff]
        %v2309 = vld [vmem:[%s201 + $0x3db8] sm:$0xff]
        %v2310 = vld [vmem:[%s201 + $0x3dc0] sm:$0xff]
        %v2311 = vld [vmem:[%s201 + $0x3dc8] sm:$0xff]
        %v2312 = vld [vmem:[%s201 + $0x3dd0] sm:$0xff]
        %v2313 = vld [vmem:[%s201 + $0x3dd8] sm:$0xff]
        %v2314 = vld [vmem:[%s201 + $0x3de0] sm:$0xff]
        %v2315 = vld [vmem:[%s201 + $0x3de8] sm:$0xff]
        %v2316 = vld [vmem:[%s201 + $0x3df0] sm:$0xff]
        %v2317 = vld [vmem:[%s201 + $0x3df8] sm:$0xff]
        %v2318 = vld [vmem:[%s201 + $0x3e00] sm:$0xff]
        %v2319 = vld [vmem:[%s201 + $0x3e08] sm:$0xff]
        %v2320 = vld [vmem:[%s201 + $0x3e10] sm:$0xff]
        %v2321 = vld [vmem:[%s201 + $0x3e18] sm:$0xff]
        %v2322 = vld [vmem:[%s201 + $0x3e20] sm:$0xff]
        %v2323 = vld [vmem:[%s201 + $0x3e28] sm:$0xff]
        %v2324 = vld [vmem:[%s201 + $0x3e30] sm:$0xff]
        %v2325 = vld [vmem:[%s201 + $0x3e38] sm:$0xff]
        %v2326 = vld [vmem:[%s201 + $0x3e40] sm:$0xff]
        %v2327 = vld [vmem:[%s201 + $0x3e48] sm:$0xff]
        %v2328 = vld [vmem:[%s201 + $0x3e50] sm:$0xff]
        %v2329 = vld [vmem:[%s201 + $0x3e58] sm:$0xff]
        %v2330 = vld [vmem:[%s201 + $0x3e60] sm:$0xff]
        %v2331 = vld [vmem:[%s201 + $0x3e68] sm:$0xff]
        %v2332 = vld [vmem:[%s201 + $0x3e70] sm:$0xff]
        %v2333 = vld [vmem:[%s201 + $0x3e78] sm:$0xff]
        %v2334 = vld [vmem:[%s201 + $0x3e80] sm:$0xff]
        %v2335 = vld [vmem:[%s201 + $0x3e88] sm:$0xff]
        %v2336 = vld [vmem:[%s201 + $0x3e90] sm:$0xff]
        %v2337 = vld [vmem:[%s201 + $0x3e98] sm:$0xff]
        %v2338 = vld [vmem:[%s201 + $0x3ea0] sm:$0xff]
        %v2339 = vld [vmem:[%s201 + $0x3ea8] sm:$0xff]
        %v2340 = vld [vmem:[%s201 + $0x3eb0] sm:$0xff]
        %v2341 = vld [vmem:[%s201 + $0x3eb8] sm:$0xff]
        %v2342 = vld [vmem:[%s201 + $0x3ec0] sm:$0xff]
        %v2343 = vld [vmem:[%s201 + $0x3ec8] sm:$0xff]
        %v2344 = vld [vmem:[%s201 + $0x3ed0] sm:$0xff]
        %v2345 = vld [vmem:[%s201 + $0x3ed8] sm:$0xff]
        %v2346 = vld [vmem:[%s201 + $0x3ee0] sm:$0xff]
        %v2347 = vld [vmem:[%s201 + $0x3ee8] sm:$0xff]
        %v2348 = vld [vmem:[%s201 + $0x3ef0] sm:$0xff]
        %v2349 = vld [vmem:[%s201 + $0x3ef8] sm:$0xff]
        %v2350 = vld [vmem:[%s201 + $0x3f00] sm:$0xff]
        %v2351 = vld [vmem:[%s201 + $0x3f08] sm:$0xff]
        %v2352 = vld [vmem:[%s201 + $0x3f10] sm:$0xff]
        %v2353 = vld [vmem:[%s201 + $0x3f18] sm:$0xff]
        %v2354 = vld [vmem:[%s201 + $0x3f20] sm:$0xff]
        %v2355 = vld [vmem:[%s201 + $0x3f28] sm:$0xff]
        %v2356 = vld [vmem:[%s201 + $0x3f30] sm:$0xff]
        %v2357 = vld [vmem:[%s201 + $0x3f38] sm:$0xff]
        %v2358 = vld [vmem:[%s201 + $0x3f40] sm:$0xff]
        %v2359 = vld [vmem:[%s201 + $0x3f48] sm:$0xff]
        %v2360 = vld [vmem:[%s201 + $0x3f50] sm:$0xff]
        %v2361 = vld [vmem:[%s201 + $0x3f58] sm:$0xff]
        %v2362 = vld [vmem:[%s201 + $0x3f60] sm:$0xff]
        %v2363 = vld [vmem:[%s201 + $0x3f68] sm:$0xff]
        %v2364 = vld [vmem:[%s201 + $0x3f70] sm:$0xff]
        %v2365 = vld [vmem:[%s201 + $0x3f78] sm:$0xff]
        %v2366 = vld [vmem:[%s201 + $0x3f80] sm:$0xff]
        %v2367 = vld [vmem:[%s201 + $0x3f88] sm:$0xff]
        %v2368 = vld [vmem:[%s201 + $0x3f90] sm:$0xff]
        %v2369 = vld [vmem:[%s201 + $0x3f98] sm:$0xff]
        %v2370 = vld [vmem:[%s201 + $0x3fa0] sm:$0xff]
        %v2371 = vld [vmem:[%s201 + $0x3fa8] sm:$0xff]
        %v2372 = vld [vmem:[%s201 + $0x3fb0] sm:$0xff]
        %v2373 = vld [vmem:[%s201 + $0x3fb8] sm:$0xff]
        %v2374 = vld [vmem:[%s201 + $0x3fc0] sm:$0xff]
        %v2375 = vld [vmem:[%s201 + $0x3fc8] sm:$0xff]
        %v2376 = vld [vmem:[%s201 + $0x3fd0] sm:$0xff]
        %v2377 = vld [vmem:[%s201 + $0x3fd8] sm:$0xff]
        %v2378 = vld [vmem:[%s201 + $0x3fe0] sm:$0xff]
        %v2379 = vld [vmem:[%s201 + $0x3fe8] sm:$0xff]
        %v2380 = vld [vmem:[%s201 + $0x3ff0] sm:$0xff]
        %v2381 = vld [vmem:[%s201 + $0x3ff8] sm:$0xff]
        %v2386 = vcombine.high %v330, %v330
        %v2388 = vunpack.c.l.s4 1983009808
        %v2389 = vunpack.c.0.s8 %v2388
        %v2390 = vlaneseq
        %v2391 = vshrl.u32 %v2390, 7
        %v2392 = vsub.s32 %v2389, %v2391
        %v2393 = vrot.slane %v330, %v2392
        %v2395 = vunpack.c.l.s4 1983009808
        %v2396 = vunpack.c.0.s8 %v2395
        %v2397 = vlaneseq
        %v2398 = vshrl.u32 %v2397, 7
        %v2399 = vsub.s32 %v2396, %v2398
        %v2400 = vrot.slane %v2386, %v2399
        %v2401 = vcombine.high %v2393, %v2393
        %v2402 = vcombine.high %v2400, %v2400
        %v2403 = vcombine.high %v331, %v331
        %v2405 = vunpack.c.l.s4 1983009808
        %v2406 = vunpack.c.0.s8 %v2405
        %v2407 = vlaneseq
        %v2408 = vshrl.u32 %v2407, 7
        %v2409 = vsub.s32 %v2406, %v2408
        %v2410 = vrot.slane %v331, %v2409
        %v2412 = vunpack.c.l.s4 1983009808
        %v2413 = vunpack.c.0.s8 %v2412
        %v2414 = vlaneseq
        %v2415 = vshrl.u32 %v2414, 7
        %v2416 = vsub.s32 %v2413, %v2415
        %v2417 = vrot.slane %v2403, %v2416
        %v2418 = vcombine.high %v2410, %v2410
        %v2419 = vcombine.high %v2417, %v2417
        %v2420 = vcombine.high %v332, %v332
        %v2422 = vunpack.c.l.s4 1983009808
        %v2423 = vunpack.c.0.s8 %v2422
        %v2424 = vlaneseq
        %v2425 = vshrl.u32 %v2424, 7
        %v2426 = vsub.s32 %v2423, %v2425
        %v2427 = vrot.slane %v332, %v2426
        %v2429 = vunpack.c.l.s4 1983009808
        %v2430 = vunpack.c.0.s8 %v2429
        %v2431 = vlaneseq
        %v2432 = vshrl.u32 %v2431, 7
        %v2433 = vsub.s32 %v2430, %v2432
        %v2434 = vrot.slane %v2420, %v2433
        %v2435 = vcombine.high %v2427, %v2427
        %v2436 = vcombine.high %v2434, %v2434
        %v2437 = vcombine.high %v333, %v333
        %v2439 = vunpack.c.l.s4 1983009808
        %v2440 = vunpack.c.0.s8 %v2439
        %v2441 = vlaneseq
        %v2442 = vshrl.u32 %v2441, 7
        %v2443 = vsub.s32 %v2440, %v2442
        %v2444 = vrot.slane %v333, %v2443
        %v2446 = vunpack.c.l.s4 1983009808
        %v2447 = vunpack.c.0.s8 %v2446
        %v2448 = vlaneseq
        %v2449 = vshrl.u32 %v2448, 7
        %v2450 = vsub.s32 %v2447, %v2449
        %v2451 = vrot.slane %v2437, %v2450
        %v2452 = vcombine.high %v2444, %v2444
        %v2453 = vcombine.high %v2451, %v2451
        %2470 = vmatprep.subr.mxu0 %v335
        %2471 = vmatpush1.msra.mxu0 %v334
        %2472 = vmatprep.subr.mxu0 %v343
        %2473 = vmatpush1.msra.mxu0 %v342
        %2474 = vmatprep.subr.mxu0 %v351
        %2475 = vmatpush1.msra.mxu0 %v350
        %2476 = vmatprep.subr.mxu0 %v359
        %2477 = vmatpush1.msra.mxu0 %v358
        %2478 = vmatprep.subr.mxu0 %v367
        %2479 = vmatpush1.msra.mxu0 %v366
        %2480 = vmatprep.subr.mxu0 %v375
        %2481 = vmatpush1.msra.mxu0 %v374
        %2482 = vmatprep.subr.mxu0 %v383
        %2483 = vmatpush1.msra.mxu0 %v382
        %2484 = vmatprep.subr.mxu0 %v391
        %2485 = vmatpush1.msra.mxu0 %v390
        %2486 = vmatprep.subr.mxu0 %v399
        %2487 = vmatpush1.msra.mxu0 %v398
        %2488 = vmatprep.subr.mxu0 %v407
        %2489 = vmatpush1.msra.mxu0 %v406
        %2490 = vmatprep.subr.mxu0 %v415
        %2491 = vmatpush1.msra.mxu0 %v414
        %2492 = vmatprep.subr.mxu0 %v423
        %2493 = vmatpush1.msra.mxu0 %v422
        %2494 = vmatprep.subr.mxu0 %v431
        %2495 = vmatpush1.msra.mxu0 %v430
        %2496 = vmatprep.subr.mxu0 %v439
        %2497 = vmatpush1.msra.mxu0 %v438
        %2498 = vmatprep.subr.mxu0 %v447
        %2499 = vmatpush1.msra.mxu0 %v446
        %2500 = vmatprep.subr.mxu0 %v455
        %2501 = vmatpush1.msra.mxu0 %v454
        %2502 = vmatprep.subr.mxu0 %v463
        %2503 = vmatpush1.msra.mxu0 %v462
        %2504 = vmatprep.subr.mxu0 %v471
        %2505 = vmatpush1.msra.mxu0 %v470
        %2506 = vmatprep.subr.mxu0 %v479
        %2507 = vmatpush1.msra.mxu0 %v478
        %2508 = vmatprep.subr.mxu0 %v487
        %2509 = vmatpush1.msra.mxu0 %v486
        %2510 = vmatprep.subr.mxu0 %v495
        %2511 = vmatpush1.msra.mxu0 %v494
        %2512 = vmatprep.subr.mxu0 %v503
        %2513 = vmatpush1.msra.mxu0 %v502
        %2514 = vmatprep.subr.mxu0 %v511
        %2515 = vmatpush1.msra.mxu0 %v510
        %2516 = vmatprep.subr.mxu0 %v519
        %2517 = vmatpush1.msra.mxu0 %v518
        %2518 = vmatprep.subr.mxu0 %v527
        %2519 = vmatpush1.msra.mxu0 %v526
        %2520 = vmatprep.subr.mxu0 %v535
        %2521 = vmatpush1.msra.mxu0 %v534
        %2522 = vmatprep.subr.mxu0 %v543
        %2523 = vmatpush1.msra.mxu0 %v542
        %2524 = vmatprep.subr.mxu0 %v551
        %2525 = vmatpush1.msra.mxu0 %v550
        %2526 = vmatprep.subr.mxu0 %v559
        %2527 = vmatpush1.msra.mxu0 %v558
        %2528 = vmatprep.subr.mxu0 %v567
        %2529 = vmatpush1.msra.mxu0 %v566
        %2530 = vmatprep.subr.mxu0 %v575
        %2531 = vmatpush1.msra.mxu0 %v574
        %2532 = vmatprep.subr.mxu0 %v583
        %2533 = vmatpush1.msra.mxu0 %v582
        %2534 = vmatprep.mubr.f32.mxu0 %v2401
        %2535 = vmatmul.mubr.f32.gmra.mrb[0].mxu0 %v2393
        %v2536 = vpop.f32.mrb[0].mxu0
        %v2537 = vadd.f32 0.0, %v2536
        %v2538 = vpop.f32.mrb[0].mxu0
        %v2539 = vadd.f32 0.0, %v2538
        %2540 = vdwg.mxu0
        %2541 = vmatprep.subr.mxu0 %v591
        %2542 = vmatpush1.msra.mxu0 %v590
        %2543 = vmatprep.subr.mxu0 %v599
        %2544 = vmatpush1.msra.mxu0 %v598
        %2545 = vmatprep.subr.mxu0 %v607
        %2546 = vmatpush1.msra.mxu0 %v606
        %2547 = vmatprep.subr.mxu0 %v615
        %2548 = vmatpush1.msra.mxu0 %v614
        %2549 = vmatprep.subr.mxu0 %v623
        %2550 = vmatpush1.msra.mxu0 %v622
        %2551 = vmatprep.subr.mxu0 %v631
        %2552 = vmatpush1.msra.mxu0 %v630
        %2553 = vmatprep.subr.mxu0 %v639
        %2554 = vmatpush1.msra.mxu0 %v638
        %2555 = vmatprep.subr.mxu0 %v647
        %2556 = vmatpush1.msra.mxu0 %v646
        %2557 = vmatprep.subr.mxu0 %v655
        %2558 = vmatpush1.msra.mxu0 %v654
        %2559 = vmatprep.subr.mxu0 %v663
        %2560 = vmatpush1.msra.mxu0 %v662
        %2561 = vmatprep.subr.mxu0 %v671
        %2562 = vmatpush1.msra.mxu0 %v670
        %2563 = vmatprep.subr.mxu0 %v679
        %2564 = vmatpush1.msra.mxu0 %v678
        %2565 = vmatprep.subr.mxu0 %v687
        %2566 = vmatpush1.msra.mxu0 %v686
        %2567 = vmatprep.subr.mxu0 %v695
        %2568 = vmatpush1.msra.mxu0 %v694
        %2569 = vmatprep.subr.mxu0 %v703
        %2570 = vmatpush1.msra.mxu0 %v702
        %2571 = vmatprep.subr.mxu0 %v711
        %2572 = vmatpush1.msra.mxu0 %v710
        %2573 = vmatprep.subr.mxu0 %v719
        %2574 = vmatpush1.msra.mxu0 %v718
        %2575 = vmatprep.subr.mxu0 %v727
        %2576 = vmatpush1.msra.mxu0 %v726
        %2577 = vmatprep.subr.mxu0 %v735
        %2578 = vmatpush1.msra.mxu0 %v734
        %2579 = vmatprep.subr.mxu0 %v743
        %2580 = vmatpush1.msra.mxu0 %v742
        %2581 = vmatprep.subr.mxu0 %v751
        %2582 = vmatpush1.msra.mxu0 %v750
        %2583 = vmatprep.subr.mxu0 %v759
        %2584 = vmatpush1.msra.mxu0 %v758
        %2585 = vmatprep.subr.mxu0 %v767
        %2586 = vmatpush1.msra.mxu0 %v766
        %2587 = vmatprep.subr.mxu0 %v775
        %2588 = vmatpush1.msra.mxu0 %v774
        %2589 = vmatprep.subr.mxu0 %v783
        %2590 = vmatpush1.msra.mxu0 %v782
        %2591 = vmatprep.subr.mxu0 %v791
        %2592 = vmatpush1.msra.mxu0 %v790
        %2593 = vmatprep.subr.mxu0 %v799
        %2594 = vmatpush1.msra.mxu0 %v798
        %2595 = vmatprep.subr.mxu0 %v807
        %2596 = vmatpush1.msra.mxu0 %v806
        %2597 = vmatprep.subr.mxu0 %v815
        %2598 = vmatpush1.msra.mxu0 %v814
        %2599 = vmatprep.subr.mxu0 %v823
        %2600 = vmatpush1.msra.mxu0 %v822
        %2601 = vmatprep.subr.mxu0 %v831
        %2602 = vmatpush1.msra.mxu0 %v830
        %2603 = vmatprep.subr.mxu0 %v839
        %2604 = vmatpush1.msra.mxu0 %v838
        %2605 = vmatprep.mubr.f32.mxu0 %v2402
        %2606 = vmatmul.mubr.f32.gmra.mrb[0].mxu0 %v2400
        %v2607 = vpop.f32.mrb[0].mxu0
        %v2608 = vadd.f32 %v2537, %v2607
        %v2609 = vpop.f32.mrb[0].mxu0
        %v2610 = vadd.f32 %v2539, %v2609
        %2611 = vdwg.mxu0
        %2612 = vmatprep.subr.mxu0 %v847
        %2613 = vmatpush1.msra.mxu0 %v846
        %2614 = vmatprep.subr.mxu0 %v855
        %2615 = vmatpush1.msra.mxu0 %v854
        %2616 = vmatprep.subr.mxu0 %v863
        %2617 = vmatpush1.msra.mxu0 %v862
        %2618 = vmatprep.subr.mxu0 %v871
        %2619 = vmatpush1.msra.mxu0 %v870
        %2620 = vmatprep.subr.mxu0 %v879
        %2621 = vmatpush1.msra.mxu0 %v878
        %2622 = vmatprep.subr.mxu0 %v887
        %2623 = vmatpush1.msra.mxu0 %v886
        %2624 = vmatprep.subr.mxu0 %v895
        %2625 = vmatpush1.msra.mxu0 %v894
        %2626 = vmatprep.subr.mxu0 %v903
        %2627 = vmatpush1.msra.mxu0 %v902
        %2628 = vmatprep.subr.mxu0 %v911
        %2629 = vmatpush1.msra.mxu0 %v910
        %2630 = vmatprep.subr.mxu0 %v919
        %2631 = vmatpush1.msra.mxu0 %v918
        %2632 = vmatprep.subr.mxu0 %v927
        %2633 = vmatpush1.msra.mxu0 %v926
        %2634 = vmatprep.subr.mxu0 %v935
        %2635 = vmatpush1.msra.mxu0 %v934
        %2636 = vmatprep.subr.mxu0 %v943
        %2637 = vmatpush1.msra.mxu0 %v942
        %2638 = vmatprep.subr.mxu0 %v951
        %2639 = vmatpush1.msra.mxu0 %v950
        %2640 = vmatprep.subr.mxu0 %v959
        %2641 = vmatpush1.msra.mxu0 %v958
        %2642 = vmatprep.subr.mxu0 %v967
        %2643 = vmatpush1.msra.mxu0 %v966
        %2644 = vmatprep.subr.mxu0 %v975
        %2645 = vmatpush1.msra.mxu0 %v974
        %2646 = vmatprep.subr.mxu0 %v983
        %2647 = vmatpush1.msra.mxu0 %v982
        %2648 = vmatprep.subr.mxu0 %v991
        %2649 = vmatpush1.msra.mxu0 %v990
        %2650 = vmatprep.subr.mxu0 %v999
        %2651 = vmatpush1.msra.mxu0 %v998
        %2652 = vmatprep.subr.mxu0 %v1007
        %2653 = vmatpush1.msra.mxu0 %v1006
        %2654 = vmatprep.subr.mxu0 %v1015
        %2655 = vmatpush1.msra.mxu0 %v1014
        %2656 = vmatprep.subr.mxu0 %v1023
        %2657 = vmatpush1.msra.mxu0 %v1022
        %2658 = vmatprep.subr.mxu0 %v1031
        %2659 = vmatpush1.msra.mxu0 %v1030
        %2660 = vmatprep.subr.mxu0 %v1039
        %2661 = vmatpush1.msra.mxu0 %v1038
        %2662 = vmatprep.subr.mxu0 %v1047
        %2663 = vmatpush1.msra.mxu0 %v1046
        %2664 = vmatprep.subr.mxu0 %v1055
        %2665 = vmatpush1.msra.mxu0 %v1054
        %2666 = vmatprep.subr.mxu0 %v1063
        %2667 = vmatpush1.msra.mxu0 %v1062
        %2668 = vmatprep.subr.mxu0 %v1071
        %2669 = vmatpush1.msra.mxu0 %v1070
        %2670 = vmatprep.subr.mxu0 %v1079
        %2671 = vmatpush1.msra.mxu0 %v1078
        %2672 = vmatprep.subr.mxu0 %v1087
        %2673 = vmatpush1.msra.mxu0 %v1086
        %2674 = vmatprep.subr.mxu0 %v1095
        %2675 = vmatpush1.msra.mxu0 %v1094
        %2676 = vmatprep.mubr.f32.mxu0 %v2418
        %2677 = vmatmul.mubr.f32.gmra.mrb[0].mxu0 %v2410
        %v2678 = vpop.f32.mrb[0].mxu0
        %v2679 = vadd.f32 %v2608, %v2678
        %v2680 = vpop.f32.mrb[0].mxu0
        %v2681 = vadd.f32 %v2610, %v2680
        %2682 = vdwg.mxu0
        %2683 = vmatprep.subr.mxu0 %v1103
        %2684 = vmatpush1.msra.mxu0 %v1102
        %2685 = vmatprep.subr.mxu0 %v1111
        %2686 = vmatpush1.msra.mxu0 %v1110
        %2687 = vmatprep.subr.mxu0 %v1119
        %2688 = vmatpush1.msra.mxu0 %v1118
        %2689 = vmatprep.subr.mxu0 %v1127
        %2690 = vmatpush1.msra.mxu0 %v1126
        %2691 = vmatprep.subr.mxu0 %v1135
        %2692 = vmatpush1.msra.mxu0 %v1134
        %2693 = vmatprep.subr.mxu0 %v1143
        %2694 = vmatpush1.msra.mxu0 %v1142
        %2695 = vmatprep.subr.mxu0 %v1151
        %2696 = vmatpush1.msra.mxu0 %v1150
        %2697 = vmatprep.subr.mxu0 %v1159
        %2698 = vmatpush1.msra.mxu0 %v1158
        %2699 = vmatprep.subr.mxu0 %v1167
        %2700 = vmatpush1.msra.mxu0 %v1166
        %2701 = vmatprep.subr.mxu0 %v1175
        %2702 = vmatpush1.msra.mxu0 %v1174
        %2703 = vmatprep.subr.mxu0 %v1183
        %2704 = vmatpush1.msra.mxu0 %v1182
        %2705 = vmatprep.subr.mxu0 %v1191
        %2706 = vmatpush1.msra.mxu0 %v1190
        %2707 = vmatprep.subr.mxu0 %v1199
        %2708 = vmatpush1.msra.mxu0 %v1198
        %2709 = vmatprep.subr.mxu0 %v1207
        %2710 = vmatpush1.msra.mxu0 %v1206
        %2711 = vmatprep.subr.mxu0 %v1215
        %2712 = vmatpush1.msra.mxu0 %v1214
        %2713 = vmatprep.subr.mxu0 %v1223
        %2714 = vmatpush1.msra.mxu0 %v1222
        %2715 = vmatprep.subr.mxu0 %v1231
        %2716 = vmatpush1.msra.mxu0 %v1230
        %2717 = vmatprep.subr.mxu0 %v1239
        %2718 = vmatpush1.msra.mxu0 %v1238
        %2719 = vmatprep.subr.mxu0 %v1247
        %2720 = vmatpush1.msra.mxu0 %v1246
        %2721 = vmatprep.subr.mxu0 %v1255
        %2722 = vmatpush1.msra.mxu0 %v1254
        %2723 = vmatprep.subr.mxu0 %v1263
        %2724 = vmatpush1.msra.mxu0 %v1262
        %2725 = vmatprep.subr.mxu0 %v1271
        %2726 = vmatpush1.msra.mxu0 %v1270
        %2727 = vmatprep.subr.mxu0 %v1279
        %2728 = vmatpush1.msra.mxu0 %v1278
        %2729 = vmatprep.subr.mxu0 %v1287
        %2730 = vmatpush1.msra.mxu0 %v1286
        %2731 = vmatprep.subr.mxu0 %v1295
        %2732 = vmatpush1.msra.mxu0 %v1294
        %2733 = vmatprep.subr.mxu0 %v1303
        %2734 = vmatpush1.msra.mxu0 %v1302
        %2735 = vmatprep.subr.mxu0 %v1311
        %2736 = vmatpush1.msra.mxu0 %v1310
        %2737 = vmatprep.subr.mxu0 %v1319
        %2738 = vmatpush1.msra.mxu0 %v1318
        %2739 = vmatprep.subr.mxu0 %v1327
        %2740 = vmatpush1.msra.mxu0 %v1326
        %2741 = vmatprep.subr.mxu0 %v1335
        %2742 = vmatpush1.msra.mxu0 %v1334
        %2743 = vmatprep.subr.mxu0 %v1343
        %2744 = vmatpush1.msra.mxu0 %v1342
        %2745 = vmatprep.subr.mxu0 %v1351
        %2746 = vmatpush1.msra.mxu0 %v1350
        %2747 = vmatprep.mubr.f32.mxu0 %v2419
        %2748 = vmatmul.mubr.f32.gmra.mrb[0].mxu0 %v2417
        %v2749 = vpop.f32.mrb[0].mxu0
        %v2750 = vadd.f32 %v2679, %v2749
        %v2751 = vpop.f32.mrb[0].mxu0
        %v2752 = vadd.f32 %v2681, %v2751
        %2753 = vdwg.mxu0
        %2754 = vmatprep.subr.mxu0 %v1359
        %2755 = vmatpush1.msra.mxu0 %v1358
        %2756 = vmatprep.subr.mxu0 %v1367
        %2757 = vmatpush1.msra.mxu0 %v1366
        %2758 = vmatprep.subr.mxu0 %v1375
        %2759 = vmatpush1.msra.mxu0 %v1374
        %2760 = vmatprep.subr.mxu0 %v1383
        %2761 = vmatpush1.msra.mxu0 %v1382
        %2762 = vmatprep.subr.mxu0 %v1391
        %2763 = vmatpush1.msra.mxu0 %v1390
        %2764 = vmatprep.subr.mxu0 %v1399
        %2765 = vmatpush1.msra.mxu0 %v1398
        %2766 = vmatprep.subr.mxu0 %v1407
        %2767 = vmatpush1.msra.mxu0 %v1406
        %2768 = vmatprep.subr.mxu0 %v1415
        %2769 = vmatpush1.msra.mxu0 %v1414
        %2770 = vmatprep.subr.mxu0 %v1423
        %2771 = vmatpush1.msra.mxu0 %v1422
        %2772 = vmatprep.subr.mxu0 %v1431
        %2773 = vmatpush1.msra.mxu0 %v1430
        %2774 = vmatprep.subr.mxu0 %v1439
        %2775 = vmatpush1.msra.mxu0 %v1438
        %2776 = vmatprep.subr.mxu0 %v1447
        %2777 = vmatpush1.msra.mxu0 %v1446
        %2778 = vmatprep.subr.mxu0 %v1455
        %2779 = vmatpush1.msra.mxu0 %v1454
        %2780 = vmatprep.subr.mxu0 %v1463
        %2781 = vmatpush1.msra.mxu0 %v1462
        %2782 = vmatprep.subr.mxu0 %v1471
        %2783 = vmatpush1.msra.mxu0 %v1470
        %2784 = vmatprep.subr.mxu0 %v1479
        %2785 = vmatpush1.msra.mxu0 %v1478
        %2786 = vmatprep.subr.mxu0 %v1487
        %2787 = vmatpush1.msra.mxu0 %v1486
        %2788 = vmatprep.subr.mxu0 %v1495
        %2789 = vmatpush1.msra.mxu0 %v1494
        %2790 = vmatprep.subr.mxu0 %v1503
        %2791 = vmatpush1.msra.mxu0 %v1502
        %2792 = vmatprep.subr.mxu0 %v1511
        %2793 = vmatpush1.msra.mxu0 %v1510
        %2794 = vmatprep.subr.mxu0 %v1519
        %2795 = vmatpush1.msra.mxu0 %v1518
        %2796 = vmatprep.subr.mxu0 %v1527
        %2797 = vmatpush1.msra.mxu0 %v1526
        %2798 = vmatprep.subr.mxu0 %v1535
        %2799 = vmatpush1.msra.mxu0 %v1534
        %2800 = vmatprep.subr.mxu0 %v1543
        %2801 = vmatpush1.msra.mxu0 %v1542
        %2802 = vmatprep.subr.mxu0 %v1551
        %2803 = vmatpush1.msra.mxu0 %v1550
        %2804 = vmatprep.subr.mxu0 %v1559
        %2805 = vmatpush1.msra.mxu0 %v1558
        %2806 = vmatprep.subr.mxu0 %v1567
        %2807 = vmatpush1.msra.mxu0 %v1566
        %2808 = vmatprep.subr.mxu0 %v1575
        %2809 = vmatpush1.msra.mxu0 %v1574
        %2810 = vmatprep.subr.mxu0 %v1583
        %2811 = vmatpush1.msra.mxu0 %v1582
        %2812 = vmatprep.subr.mxu0 %v1591
        %2813 = vmatpush1.msra.mxu0 %v1590
        %2814 = vmatprep.subr.mxu0 %v1599
        %2815 = vmatpush1.msra.mxu0 %v1598
        %2816 = vmatprep.subr.mxu0 %v1607
        %2817 = vmatpush1.msra.mxu0 %v1606
        %2818 = vmatprep.mubr.f32.mxu0 %v2435
        %2819 = vmatmul.mubr.f32.gmra.mrb[0].mxu0 %v2427
        %v2820 = vpop.f32.mrb[0].mxu0
        %v2821 = vadd.f32 %v2750, %v2820
        %v2822 = vpop.f32.mrb[0].mxu0
        %v2823 = vadd.f32 %v2752, %v2822
        %2824 = vdwg.mxu0
        %2825 = vmatprep.subr.mxu0 %v1615
        %2826 = vmatpush1.msra.mxu0 %v1614
        %2827 = vmatprep.subr.mxu0 %v1623
        %2828 = vmatpush1.msra.mxu0 %v1622
        %2829 = vmatprep.subr.mxu0 %v1631
        %2830 = vmatpush1.msra.mxu0 %v1630
        %2831 = vmatprep.subr.mxu0 %v1639
        %2832 = vmatpush1.msra.mxu0 %v1638
        %2833 = vmatprep.subr.mxu0 %v1647
        %2834 = vmatpush1.msra.mxu0 %v1646
        %2835 = vmatprep.subr.mxu0 %v1655
        %2836 = vmatpush1.msra.mxu0 %v1654
        %2837 = vmatprep.subr.mxu0 %v1663
        %2838 = vmatpush1.msra.mxu0 %v1662
        %2839 = vmatprep.subr.mxu0 %v1671
        %2840 = vmatpush1.msra.mxu0 %v1670
        %2841 = vmatprep.subr.mxu0 %v1679
        %2842 = vmatpush1.msra.mxu0 %v1678
        %2843 = vmatprep.subr.mxu0 %v1687
        %2844 = vmatpush1.msra.mxu0 %v1686
        %2845 = vmatprep.subr.mxu0 %v1695
        %2846 = vmatpush1.msra.mxu0 %v1694
        %2847 = vmatprep.subr.mxu0 %v1703
        %2848 = vmatpush1.msra.mxu0 %v1702
        %2849 = vmatprep.subr.mxu0 %v1711
        %2850 = vmatpush1.msra.mxu0 %v1710
        %2851 = vmatprep.subr.mxu0 %v1719
        %2852 = vmatpush1.msra.mxu0 %v1718
        %2853 = vmatprep.subr.mxu0 %v1727
        %2854 = vmatpush1.msra.mxu0 %v1726
        %2855 = vmatprep.subr.mxu0 %v1735
        %2856 = vmatpush1.msra.mxu0 %v1734
        %2857 = vmatprep.subr.mxu0 %v1743
        %2858 = vmatpush1.msra.mxu0 %v1742
        %2859 = vmatprep.subr.mxu0 %v1751
        %2860 = vmatpush1.msra.mxu0 %v1750
        %2861 = vmatprep.subr.mxu0 %v1759
        %2862 = vmatpush1.msra.mxu0 %v1758
        %2863 = vmatprep.subr.mxu0 %v1767
        %2864 = vmatpush1.msra.mxu0 %v1766
        %2865 = vmatprep.subr.mxu0 %v1775
        %2866 = vmatpush1.msra.mxu0 %v1774
        %2867 = vmatprep.subr.mxu0 %v1783
        %2868 = vmatpush1.msra.mxu0 %v1782
        %2869 = vmatprep.subr.mxu0 %v1791
        %2870 = vmatpush1.msra.mxu0 %v1790
        %2871 = vmatprep.subr.mxu0 %v1799
        %2872 = vmatpush1.msra.mxu0 %v1798
        %2873 = vmatprep.subr.mxu0 %v1807
        %2874 = vmatpush1.msra.mxu0 %v1806
        %2875 = vmatprep.subr.mxu0 %v1815
        %2876 = vmatpush1.msra.mxu0 %v1814
        %2877 = vmatprep.subr.mxu0 %v1823
        %2878 = vmatpush1.msra.mxu0 %v1822
        %2879 = vmatprep.subr.mxu0 %v1831
        %2880 = vmatpush1.msra.mxu0 %v1830
        %2881 = vmatprep.subr.mxu0 %v1839
        %2882 = vmatpush1.msra.mxu0 %v1838
        %2883 = vmatprep.subr.mxu0 %v1847
        %2884 = vmatpush1.msra.mxu0 %v1846
        %2885 = vmatprep.subr.mxu0 %v1855
        %2886 = vmatpush1.msra.mxu0 %v1854
        %2887 = vmatprep.subr.mxu0 %v1863
        %2888 = vmatpush1.msra.mxu0 %v1862
        %2889 = vmatprep.mubr.f32.mxu0 %v2436
        %2890 = vmatmul.mubr.f32.gmra.mrb[0].mxu0 %v2434
        %v2891 = vpop.f32.mrb[0].mxu0
        %v2892 = vadd.f32 %v2821, %v2891
        %v2893 = vpop.f32.mrb[0].mxu0
        %v2894 = vadd.f32 %v2823, %v2893
        %2895 = vdwg.mxu0
        %2896 = vmatprep.subr.mxu0 %v1871
        %2897 = vmatpush1.msra.mxu0 %v1870
        %2898 = vmatprep.subr.mxu0 %v1879
        %2899 = vmatpush1.msra.mxu0 %v1878
        %2900 = vmatprep.subr.mxu0 %v1887
        %2901 = vmatpush1.msra.mxu0 %v1886
        %2902 = vmatprep.subr.mxu0 %v1895
        %2903 = vmatpush1.msra.mxu0 %v1894
        %2904 = vmatprep.subr.mxu0 %v1903
        %2905 = vmatpush1.msra.mxu0 %v1902
        %2906 = vmatprep.subr.mxu0 %v1911
        %2907 = vmatpush1.msra.mxu0 %v1910
        %2908 = vmatprep.subr.mxu0 %v1919
        %2909 = vmatpush1.msra.mxu0 %v1918
        %2910 = vmatprep.subr.mxu0 %v1927
        %2911 = vmatpush1.msra.mxu0 %v1926
        %2912 = vmatprep.subr.mxu0 %v1935
        %2913 = vmatpush1.msra.mxu0 %v1934
        %2914 = vmatprep.subr.mxu0 %v1943
        %2915 = vmatpush1.msra.mxu0 %v1942
        %2916 = vmatprep.subr.mxu0 %v1951
        %2917 = vmatpush1.msra.mxu0 %v1950
        %2918 = vmatprep.subr.mxu0 %v1959
        %2919 = vmatpush1.msra.mxu0 %v1958
        %2920 = vmatprep.subr.mxu0 %v1967
        %2921 = vmatpush1.msra.mxu0 %v1966
        %2922 = vmatprep.subr.mxu0 %v1975
        %2923 = vmatpush1.msra.mxu0 %v1974
        %2924 = vmatprep.subr.mxu0 %v1983
        %2925 = vmatpush1.msra.mxu0 %v1982
        %2926 = vmatprep.subr.mxu0 %v1991
        %2927 = vmatpush1.msra.mxu0 %v1990
        %2928 = vmatprep.subr.mxu0 %v1999
        %2929 = vmatpush1.msra.mxu0 %v1998
        %2930 = vmatprep.subr.mxu0 %v2007
        %2931 = vmatpush1.msra.mxu0 %v2006
        %2932 = vmatprep.subr.mxu0 %v2015
        %2933 = vmatpush1.msra.mxu0 %v2014
        %2934 = vmatprep.subr.mxu0 %v2023
        %2935 = vmatpush1.msra.mxu0 %v2022
        %2936 = vmatprep.subr.mxu0 %v2031
        %2937 = vmatpush1.msra.mxu0 %v2030
        %2938 = vmatprep.subr.mxu0 %v2039
        %2939 = vmatpush1.msra.mxu0 %v2038
        %2940 = vmatprep.subr.mxu0 %v2047
        %2941 = vmatpush1.msra.mxu0 %v2046
        %2942 = vmatprep.subr.mxu0 %v2055
        %2943 = vmatpush1.msra.mxu0 %v2054
        %2944 = vmatprep.subr.mxu0 %v2063
        %2945 = vmatpush1.msra.mxu0 %v2062
        %2946 = vmatprep.subr.mxu0 %v2071
        %2947 = vmatpush1.msra.mxu0 %v2070
        %2948 = vmatprep.subr.mxu0 %v2079
        %2949 = vmatpush1.msra.mxu0 %v2078
        %2950 = vmatprep.subr.mxu0 %v2087
        %2951 = vmatpush1.msra.mxu0 %v2086
        %2952 = vmatprep.subr.mxu0 %v2095
        %2953 = vmatpush1.msra.mxu0 %v2094
        %2954 = vmatprep.subr.mxu0 %v2103
        %2955 = vmatpush1.msra.mxu0 %v2102
        %2956 = vmatprep.subr.mxu0 %v2111
        %2957 = vmatpush1.msra.mxu0 %v2110
        %2958 = vmatprep.subr.mxu0 %v2119
        %2959 = vmatpush1.msra.mxu0 %v2118
        %2960 = vmatprep.mubr.f32.mxu0 %v2452
        %2961 = vmatmul.mubr.f32.gmra.mrb[0].mxu0 %v2444
        %v2962 = vpop.f32.mrb[0].mxu0
        %v2963 = vadd.f32 %v2892, %v2962
        %v2964 = vpop.f32.mrb[0].mxu0
        %v2965 = vadd.f32 %v2894, %v2964
        %2966 = vdwg.mxu0
        %2967 = vmatprep.subr.mxu0 %v2127
        %2968 = vmatpush1.msra.mxu0 %v2126
        %2969 = vmatprep.subr.mxu0 %v2135
        %2970 = vmatpush1.msra.mxu0 %v2134
        %2971 = vmatprep.subr.mxu0 %v2143
        %2972 = vmatpush1.msra.mxu0 %v2142
        %2973 = vmatprep.subr.mxu0 %v2151
        %2974 = vmatpush1.msra.mxu0 %v2150
        %2975 = vmatprep.subr.mxu0 %v2159
        %2976 = vmatpush1.msra.mxu0 %v2158
        %2977 = vmatprep.subr.mxu0 %v2167
        %2978 = vmatpush1.msra.mxu0 %v2166
        %2979 = vmatprep.subr.mxu0 %v2175
        %2980 = vmatpush1.msra.mxu0 %v2174
        %2981 = vmatprep.subr.mxu0 %v2183
        %2982 = vmatpush1.msra.mxu0 %v2182
        %2983 = vmatprep.subr.mxu0 %v2191
        %2984 = vmatpush1.msra.mxu0 %v2190
        %2985 = vmatprep.subr.mxu0 %v2199
        %2986 = vmatpush1.msra.mxu0 %v2198
        %2987 = vmatprep.subr.mxu0 %v2207
        %2988 = vmatpush1.msra.mxu0 %v2206
        %2989 = vmatprep.subr.mxu0 %v2215
        %2990 = vmatpush1.msra.mxu0 %v2214
        %2991 = vmatprep.subr.mxu0 %v2223
        %2992 = vmatpush1.msra.mxu0 %v2222
        %2993 = vmatprep.subr.mxu0 %v2231
        %2994 = vmatpush1.msra.mxu0 %v2230
        %2995 = vmatprep.subr.mxu0 %v2239
        %2996 = vmatpush1.msra.mxu0 %v2238
        %2997 = vmatprep.subr.mxu0 %v2247
        %2998 = vmatpush1.msra.mxu0 %v2246
        %2999 = vmatprep.subr.mxu0 %v2255
        %3000 = vmatpush1.msra.mxu0 %v2254
        %3001 = vmatprep.subr.mxu0 %v2263
        %3002 = vmatpush1.msra.mxu0 %v2262
        %3003 = vmatprep.subr.mxu0 %v2271
        %3004 = vmatpush1.msra.mxu0 %v2270
        %3005 = vmatprep.subr.mxu0 %v2279
        %3006 = vmatpush1.msra.mxu0 %v2278
        %3007 = vmatprep.subr.mxu0 %v2287
        %3008 = vmatpush1.msra.mxu0 %v2286
        %3009 = vmatprep.subr.mxu0 %v2295
        %3010 = vmatpush1.msra.mxu0 %v2294
        %3011 = vmatprep.subr.mxu0 %v2303
        %3012 = vmatpush1.msra.mxu0 %v2302
        %3013 = vmatprep.subr.mxu0 %v2311
        %3014 = vmatpush1.msra.mxu0 %v2310
        %3015 = vmatprep.subr.mxu0 %v2319
        %3016 = vmatpush1.msra.mxu0 %v2318
        %3017 = vmatprep.subr.mxu0 %v2327
        %3018 = vmatpush1.msra.mxu0 %v2326
        %3019 = vmatprep.subr.mxu0 %v2335
        %3020 = vmatpush1.msra.mxu0 %v2334
        %3021 = vmatprep.subr.mxu0 %v2343
        %3022 = vmatpush1.msra.mxu0 %v2342
        %3023 = vmatprep.subr.mxu0 %v2351
        %3024 = vmatpush1.msra.mxu0 %v2350
        %3025 = vmatprep.subr.mxu0 %v2359
        %3026 = vmatpush1.msra.mxu0 %v2358
        %3027 = vmatprep.subr.mxu0 %v2367
        %3028 = vmatpush1.msra.mxu0 %v2366
        %3029 = vmatprep.subr.mxu0 %v2375
        %3030 = vmatpush1.msra.mxu0 %v2374
        %3031 = vmatprep.mubr.f32.mxu0 %v2453
        %3032 = vmatmul.mubr.f32.gmra.mrb[0].mxu0 %v2451
        %v3033 = vpop.f32.mrb[0].mxu0
        %v3034 = vadd.f32 %v2963, %v3033
        %v3035 = vpop.f32.mrb[0].mxu0
        %v3036 = vadd.f32 %v2965, %v3035
        %3037 = vdwg.mxu0
        %3038 = vmatprep.subr.mxu0 %v337
        %3039 = vmatpush1.msra.mxu0 %v336
        %3040 = vmatprep.subr.mxu0 %v345
        %3041 = vmatpush1.msra.mxu0 %v344
        %3042 = vmatprep.subr.mxu0 %v353
        %3043 = vmatpush1.msra.mxu0 %v352
        %3044 = vmatprep.subr.mxu0 %v361
        %3045 = vmatpush1.msra.mxu0 %v360
        %3046 = vmatprep.subr.mxu0 %v369
        %3047 = vmatpush1.msra.mxu0 %v368
        %3048 = vmatprep.subr.mxu0 %v377
        %3049 = vmatpush1.msra.mxu0 %v376
        %3050 = vmatprep.subr.mxu0 %v385
        %3051 = vmatpush1.msra.mxu0 %v384
        %3052 = vmatprep.subr.mxu0 %v393
        %3053 = vmatpush1.msra.mxu0 %v392
        %3054 = vmatprep.subr.mxu0 %v401
        %3055 = vmatpush1.msra.mxu0 %v400
        %3056 = vmatprep.subr.mxu0 %v409
        %3057 = vmatpush1.msra.mxu0 %v408
        %3058 = vmatprep.subr.mxu0 %v417
        %3059 = vmatpush1.msra.mxu0 %v416
        %3060 = vmatprep.subr.mxu0 %v425
        %3061 = vmatpush1.msra.mxu0 %v424
        %3062 = vmatprep.subr.mxu0 %v433
        %3063 = vmatpush1.msra.mxu0 %v432
        %3064 = vmatprep.subr.mxu0 %v441
        %3065 = vmatpush1.msra.mxu0 %v440
        %3066 = vmatprep.subr.mxu0 %v449
        %3067 = vmatpush1.msra.mxu0 %v448
        %3068 = vmatprep.subr.mxu0 %v457
        %3069 = vmatpush1.msra.mxu0 %v456
        %3070 = vmatprep.subr.mxu0 %v465
        %3071 = vmatpush1.msra.mxu0 %v464
        %3072 = vmatprep.subr.mxu0 %v473
        %3073 = vmatpush1.msra.mxu0 %v472
        %3074 = vmatprep.subr.mxu0 %v481
        %3075 = vmatpush1.msra.mxu0 %v480
        %3076 = vmatprep.subr.mxu0 %v489
        %3077 = vmatpush1.msra.mxu0 %v488
        %3078 = vmatprep.subr.mxu0 %v497
        %3079 = vmatpush1.msra.mxu0 %v496
        %3080 = vmatprep.subr.mxu0 %v505
        %3081 = vmatpush1.msra.mxu0 %v504
        %3082 = vmatprep.subr.mxu0 %v513
        %3083 = vmatpush1.msra.mxu0 %v512
        %3084 = vmatprep.subr.mxu0 %v521
        %3085 = vmatpush1.msra.mxu0 %v520
        %3086 = vmatprep.subr.mxu0 %v529
        %3087 = vmatpush1.msra.mxu0 %v528
        %3088 = vmatprep.subr.mxu0 %v537
        %3089 = vmatpush1.msra.mxu0 %v536
        %3090 = vmatprep.subr.mxu0 %v545
        %3091 = vmatpush1.msra.mxu0 %v544
        %3092 = vmatprep.subr.mxu0 %v553
        %3093 = vmatpush1.msra.mxu0 %v552
        %3094 = vmatprep.subr.mxu0 %v561
        %3095 = vmatpush1.msra.mxu0 %v560
        %3096 = vmatprep.subr.mxu0 %v569
        %3097 = vmatpush1.msra.mxu0 %v568
        %3098 = vmatprep.subr.mxu0 %v577
        %3099 = vmatpush1.msra.mxu0 %v576
        %3100 = vmatprep.subr.mxu0 %v585
        %3101 = vmatpush1.msra.mxu0 %v584
        %3102 = vmatprep.mubr.f32.mxu0 %v2401
        %3103 = vmatmul.mubr.f32.gmra.mrb[0].mxu0 %v2393
        %v3104 = vpop.f32.mrb[0].mxu0
        %v3105 = vadd.f32 0.0, %v3104
        %v3106 = vpop.f32.mrb[0].mxu0
        %v3107 = vadd.f32 0.0, %v3106
        %3108 = vdwg.mxu0
        %3109 = vmatprep.subr.mxu0 %v593
        %3110 = vmatpush1.msra.mxu0 %v592
        %3111 = vmatprep.subr.mxu0 %v601
        %3112 = vmatpush1.msra.mxu0 %v600
        %3113 = vmatprep.subr.mxu0 %v609
        %3114 = vmatpush1.msra.mxu0 %v608
        %3115 = vmatprep.subr.mxu0 %v617
        %3116 = vmatpush1.msra.mxu0 %v616
        %3117 = vmatprep.subr.mxu0 %v625
        %3118 = vmatpush1.msra.mxu0 %v624
        %3119 = vmatprep.subr.mxu0 %v633
        %3120 = vmatpush1.msra.mxu0 %v632
        %3121 = vmatprep.subr.mxu0 %v641
        %3122 = vmatpush1.msra.mxu0 %v640
        %3123 = vmatprep.subr.mxu0 %v649
        %3124 = vmatpush1.msra.mxu0 %v648
        %3125 = vmatprep.subr.mxu0 %v657
        %3126 = vmatpush1.msra.mxu0 %v656
        %3127 = vmatprep.subr.mxu0 %v665
        %3128 = vmatpush1.msra.mxu0 %v664
        %3129 = vmatprep.subr.mxu0 %v673
        %3130 = vmatpush1.msra.mxu0 %v672
        %3131 = vmatprep.subr.mxu0 %v681
        %3132 = vmatpush1.msra.mxu0 %v680
        %3133 = vmatprep.subr.mxu0 %v689
        %3134 = vmatpush1.msra.mxu0 %v688
        %3135 = vmatprep.subr.mxu0 %v697
        %3136 = vmatpush1.msra.mxu0 %v696
        %3137 = vmatprep.subr.mxu0 %v705
        %3138 = vmatpush1.msra.mxu0 %v704
        %3139 = vmatprep.subr.mxu0 %v713
        %3140 = vmatpush1.msra.mxu0 %v712
        %3141 = vmatprep.subr.mxu0 %v721
        %3142 = vmatpush1.msra.mxu0 %v720
        %3143 = vmatprep.subr.mxu0 %v729
        %3144 = vmatpush1.msra.mxu0 %v728
        %3145 = vmatprep.subr.mxu0 %v737
        %3146 = vmatpush1.msra.mxu0 %v736
        %3147 = vmatprep.subr.mxu0 %v745
        %3148 = vmatpush1.msra.mxu0 %v744
        %3149 = vmatprep.subr.mxu0 %v753
        %3150 = vmatpush1.msra.mxu0 %v752
        %3151 = vmatprep.subr.mxu0 %v761
        %3152 = vmatpush1.msra.mxu0 %v760
        %3153 = vmatprep.subr.mxu0 %v769
        %3154 = vmatpush1.msra.mxu0 %v768
        %3155 = vmatprep.subr.mxu0 %v777
        %3156 = vmatpush1.msra.mxu0 %v776
        %3157 = vmatprep.subr.mxu0 %v785
        %3158 = vmatpush1.msra.mxu0 %v784
        %3159 = vmatprep.subr.mxu0 %v793
        %3160 = vmatpush1.msra.mxu0 %v792
        %3161 = vmatprep.subr.mxu0 %v801
        %3162 = vmatpush1.msra.mxu0 %v800
        %3163 = vmatprep.subr.mxu0 %v809
        %3164 = vmatpush1.msra.mxu0 %v808
        %3165 = vmatprep.subr.mxu0 %v817
        %3166 = vmatpush1.msra.mxu0 %v816
        %3167 = vmatprep.subr.mxu0 %v825
        %3168 = vmatpush1.msra.mxu0 %v824
        %3169 = vmatprep.subr.mxu0 %v833
        %3170 = vmatpush1.msra.mxu0 %v832
        %3171 = vmatprep.subr.mxu0 %v841
        %3172 = vmatpush1.msra.mxu0 %v840
        %3173 = vmatprep.mubr.f32.mxu0 %v2402
        %3174 = vmatmul.mubr.f32.gmra.mrb[0].mxu0 %v2400
        %v3175 = vpop.f32.mrb[0].mxu0
        %v3176 = vadd.f32 %v3105, %v3175
        %v3177 = vpop.f32.mrb[0].mxu0
        %v3178 = vadd.f32 %v3107, %v3177
        %3179 = vdwg.mxu0
        %3180 = vmatprep.subr.mxu0 %v849
        %3181 = vmatpush1.msra.mxu0 %v848
        %3182 = vmatprep.subr.mxu0 %v857
        %3183 = vmatpush1.msra.mxu0 %v856
        %3184 = vmatprep.subr.mxu0 %v865
        %3185 = vmatpush1.msra.mxu0 %v864
        %3186 = vmatprep.subr.mxu0 %v873
        %3187 = vmatpush1.msra.mxu0 %v872
        %3188 = vmatprep.subr.mxu0 %v881
        %3189 = vmatpush1.msra.mxu0 %v880
        %3190 = vmatprep.subr.mxu0 %v889
        %3191 = vmatpush1.msra.mxu0 %v888
        %3192 = vmatprep.subr.mxu0 %v897
        %3193 = vmatpush1.msra.mxu0 %v896
        %3194 = vmatprep.subr.mxu0 %v905
        %3195 = vmatpush1.msra.mxu0 %v904
        %3196 = vmatprep.subr.mxu0 %v913
        %3197 = vmatpush1.msra.mxu0 %v912
        %3198 = vmatprep.subr.mxu0 %v921
        %3199 = vmatpush1.msra.mxu0 %v920
        %3200 = vmatprep.subr.mxu0 %v929
        %3201 = vmatpush1.msra.mxu0 %v928
        %3202 = vmatprep.subr.mxu0 %v937
        %3203 = vmatpush1.msra.mxu0 %v936
        %3204 = vmatprep.subr.mxu0 %v945
        %3205 = vmatpush1.msra.mxu0 %v944
        %3206 = vmatprep.subr.mxu0 %v953
        %3207 = vmatpush1.msra.mxu0 %v952
        %3208 = vmatprep.subr.mxu0 %v961
        %3209 = vmatpush1.msra.mxu0 %v960
        %3210 = vmatprep.subr.mxu0 %v969
        %3211 = vmatpush1.msra.mxu0 %v968
        %3212 = vmatprep.subr.mxu0 %v977
        %3213 = vmatpush1.msra.mxu0 %v976
        %3214 = vmatprep.subr.mxu0 %v985
        %3215 = vmatpush1.msra.mxu0 %v984
        %3216 = vmatprep.subr.mxu0 %v993
        %3217 = vmatpush1.msra.mxu0 %v992
        %3218 = vmatprep.subr.mxu0 %v1001
        %3219 = vmatpush1.msra.mxu0 %v1000
        %3220 = vmatprep.subr.mxu0 %v1009
        %3221 = vmatpush1.msra.mxu0 %v1008
        %3222 = vmatprep.subr.mxu0 %v1017
        %3223 = vmatpush1.msra.mxu0 %v1016
        %3224 = vmatprep.subr.mxu0 %v1025
        %3225 = vmatpush1.msra.mxu0 %v1024
        %3226 = vmatprep.subr.mxu0 %v1033
        %3227 = vmatpush1.msra.mxu0 %v1032
        %3228 = vmatprep.subr.mxu0 %v1041
        %3229 = vmatpush1.msra.mxu0 %v1040
        %3230 = vmatprep.subr.mxu0 %v1049
        %3231 = vmatpush1.msra.mxu0 %v1048
        %3232 = vmatprep.subr.mxu0 %v1057
        %3233 = vmatpush1.msra.mxu0 %v1056
        %3234 = vmatprep.subr.mxu0 %v1065
        %3235 = vmatpush1.msra.mxu0 %v1064
        %3236 = vmatprep.subr.mxu0 %v1073
        %3237 = vmatpush1.msra.mxu0 %v1072
        %3238 = vmatprep.subr.mxu0 %v1081
        %3239 = vmatpush1.msra.mxu0 %v1080
        %3240 = vmatprep.subr.mxu0 %v1089
        %3241 = vmatpush1.msra.mxu0 %v1088
        %3242 = vmatprep.subr.mxu0 %v1097
        %3243 = vmatpush1.msra.mxu0 %v1096
        %3244 = vmatprep.mubr.f32.mxu0 %v2418
        %3245 = vmatmul.mubr.f32.gmra.mrb[0].mxu0 %v2410
        %v3246 = vpop.f32.mrb[0].mxu0
        %v3247 = vadd.f32 %v3176, %v3246
        %v3248 = vpop.f32.mrb[0].mxu0
        %v3249 = vadd.f32 %v3178, %v3248
        %3250 = vdwg.mxu0
        %3251 = vmatprep.subr.mxu0 %v1105
        %3252 = vmatpush1.msra.mxu0 %v1104
        %3253 = vmatprep.subr.mxu0 %v1113
        %3254 = vmatpush1.msra.mxu0 %v1112
        %3255 = vmatprep.subr.mxu0 %v1121
        %3256 = vmatpush1.msra.mxu0 %v1120
        %3257 = vmatprep.subr.mxu0 %v1129
        %3258 = vmatpush1.msra.mxu0 %v1128
        %3259 = vmatprep.subr.mxu0 %v1137
        %3260 = vmatpush1.msra.mxu0 %v1136
        %3261 = vmatprep.subr.mxu0 %v1145
        %3262 = vmatpush1.msra.mxu0 %v1144
        %3263 = vmatprep.subr.mxu0 %v1153
        %3264 = vmatpush1.msra.mxu0 %v1152
        %3265 = vmatprep.subr.mxu0 %v1161
        %3266 = vmatpush1.msra.mxu0 %v1160
        %3267 = vmatprep.subr.mxu0 %v1169
        %3268 = vmatpush1.msra.mxu0 %v1168
        %3269 = vmatprep.subr.mxu0 %v1177
        %3270 = vmatpush1.msra.mxu0 %v1176
        %3271 = vmatprep.subr.mxu0 %v1185
        %3272 = vmatpush1.msra.mxu0 %v1184
        %3273 = vmatprep.subr.mxu0 %v1193
        %3274 = vmatpush1.msra.mxu0 %v1192
        %3275 = vmatprep.subr.mxu0 %v1201
        %3276 = vmatpush1.msra.mxu0 %v1200
        %3277 = vmatprep.subr.mxu0 %v1209
        %3278 = vmatpush1.msra.mxu0 %v1208
        %3279 = vmatprep.subr.mxu0 %v1217
        %3280 = vmatpush1.msra.mxu0 %v1216
        %3281 = vmatprep.subr.mxu0 %v1225
        %3282 = vmatpush1.msra.mxu0 %v1224
        %3283 = vmatprep.subr.mxu0 %v1233
        %3284 = vmatpush1.msra.mxu0 %v1232
        %3285 = vmatprep.subr.mxu0 %v1241
        %3286 = vmatpush1.msra.mxu0 %v1240
        %3287 = vmatprep.subr.mxu0 %v1249
        %3288 = vmatpush1.msra.mxu0 %v1248
        %3289 = vmatprep.subr.mxu0 %v1257
        %3290 = vmatpush1.msra.mxu0 %v1256
        %3291 = vmatprep.subr.mxu0 %v1265
        %3292 = vmatpush1.msra.mxu0 %v1264
        %3293 = vmatprep.subr.mxu0 %v1273
        %3294 = vmatpush1.msra.mxu0 %v1272
        %3295 = vmatprep.subr.mxu0 %v1281
        %3296 = vmatpush1.msra.mxu0 %v1280
        %3297 = vmatprep.subr.mxu0 %v1289
        %3298 = vmatpush1.msra.mxu0 %v1288
        %3299 = vmatprep.subr.mxu0 %v1297
        %3300 = vmatpush1.msra.mxu0 %v1296
        %3301 = vmatprep.subr.mxu0 %v1305
        %3302 = vmatpush1.msra.mxu0 %v1304
        %3303 = vmatprep.subr.mxu0 %v1313
        %3304 = vmatpush1.msra.mxu0 %v1312
        %3305 = vmatprep.subr.mxu0 %v1321
        %3306 = vmatpush1.msra.mxu0 %v1320
        %3307 = vmatprep.subr.mxu0 %v1329
        %3308 = vmatpush1.msra.mxu0 %v1328
        %3309 = vmatprep.subr.mxu0 %v1337
        %3310 = vmatpush1.msra.mxu0 %v1336
        %3311 = vmatprep.subr.mxu0 %v1345
        %3312 = vmatpush1.msra.mxu0 %v1344
        %3313 = vmatprep.subr.mxu0 %v1353
        %3314 = vmatpush1.msra.mxu0 %v1352
        %3315 = vmatprep.mubr.f32.mxu0 %v2419
        %3316 = vmatmul.mubr.f32.gmra.mrb[0].mxu0 %v2417
        %v3317 = vpop.f32.mrb[0].mxu0
        %v3318 = vadd.f32 %v3247, %v3317
        %v3319 = vpop.f32.mrb[0].mxu0
        %v3320 = vadd.f32 %v3249, %v3319
        %3321 = vdwg.mxu0
        %3322 = vmatprep.subr.mxu0 %v1361
        %3323 = vmatpush1.msra.mxu0 %v1360
        %3324 = vmatprep.subr.mxu0 %v1369
        %3325 = vmatpush1.msra.mxu0 %v1368
        %3326 = vmatprep.subr.mxu0 %v1377
        %3327 = vmatpush1.msra.mxu0 %v1376
        %3328 = vmatprep.subr.mxu0 %v1385
        %3329 = vmatpush1.msra.mxu0 %v1384
        %3330 = vmatprep.subr.mxu0 %v1393
        %3331 = vmatpush1.msra.mxu0 %v1392
        %3332 = vmatprep.subr.mxu0 %v1401
        %3333 = vmatpush1.msra.mxu0 %v1400
        %3334 = vmatprep.subr.mxu0 %v1409
        %3335 = vmatpush1.msra.mxu0 %v1408
        %3336 = vmatprep.subr.mxu0 %v1417
        %3337 = vmatpush1.msra.mxu0 %v1416
        %3338 = vmatprep.subr.mxu0 %v1425
        %3339 = vmatpush1.msra.mxu0 %v1424
        %3340 = vmatprep.subr.mxu0 %v1433
        %3341 = vmatpush1.msra.mxu0 %v1432
        %3342 = vmatprep.subr.mxu0 %v1441
        %3343 = vmatpush1.msra.mxu0 %v1440
        %3344 = vmatprep.subr.mxu0 %v1449
        %3345 = vmatpush1.msra.mxu0 %v1448
        %3346 = vmatprep.subr.mxu0 %v1457
        %3347 = vmatpush1.msra.mxu0 %v1456
        %3348 = vmatprep.subr.mxu0 %v1465
        %3349 = vmatpush1.msra.mxu0 %v1464
        %3350 = vmatprep.subr.mxu0 %v1473
        %3351 = vmatpush1.msra.mxu0 %v1472
        %3352 = vmatprep.subr.mxu0 %v1481
        %3353 = vmatpush1.msra.mxu0 %v1480
        %3354 = vmatprep.subr.mxu0 %v1489
        %3355 = vmatpush1.msra.mxu0 %v1488
        %3356 = vmatprep.subr.mxu0 %v1497
        %3357 = vmatpush1.msra.mxu0 %v1496
        %3358 = vmatprep.subr.mxu0 %v1505
        %3359 = vmatpush1.msra.mxu0 %v1504
        %3360 = vmatprep.subr.mxu0 %v1513
        %3361 = vmatpush1.msra.mxu0 %v1512
        %3362 = vmatprep.subr.mxu0 %v1521
        %3363 = vmatpush1.msra.mxu0 %v1520
        %3364 = vmatprep.subr.mxu0 %v1529
        %3365 = vmatpush1.msra.mxu0 %v1528
        %3366 = vmatprep.subr.mxu0 %v1537
        %3367 = vmatpush1.msra.mxu0 %v1536
        %3368 = vmatprep.subr.mxu0 %v1545
        %3369 = vmatpush1.msra.mxu0 %v1544
        %3370 = vmatprep.subr.mxu0 %v1553
        %3371 = vmatpush1.msra.mxu0 %v1552
        %3372 = vmatprep.subr.mxu0 %v1561
        %3373 = vmatpush1.msra.mxu0 %v1560
        %3374 = vmatprep.subr.mxu0 %v1569
        %3375 = vmatpush1.msra.mxu0 %v1568
        %3376 = vmatprep.subr.mxu0 %v1577
        %3377 = vmatpush1.msra.mxu0 %v1576
        %3378 = vmatprep.subr.mxu0 %v1585
        %3379 = vmatpush1.msra.mxu0 %v1584
        %3380 = vmatprep.subr.mxu0 %v1593
        %3381 = vmatpush1.msra.mxu0 %v1592
        %3382 = vmatprep.subr.mxu0 %v1601
        %3383 = vmatpush1.msra.mxu0 %v1600
        %3384 = vmatprep.subr.mxu0 %v1609
        %3385 = vmatpush1.msra.mxu0 %v1608
        %3386 = vmatprep.mubr.f32.mxu0 %v2435
        %3387 = vmatmul.mubr.f32.gmra.mrb[0].mxu0 %v2427
        %v3388 = vpop.f32.mrb[0].mxu0
        %v3389 = vadd.f32 %v3318, %v3388
        %v3390 = vpop.f32.mrb[0].mxu0
        %v3391 = vadd.f32 %v3320, %v3390
        %3392 = vdwg.mxu0
        %3393 = vmatprep.subr.mxu0 %v1617
        %3394 = vmatpush1.msra.mxu0 %v1616
        %3395 = vmatprep.subr.mxu0 %v1625
        %3396 = vmatpush1.msra.mxu0 %v1624
        %3397 = vmatprep.subr.mxu0 %v1633
        %3398 = vmatpush1.msra.mxu0 %v1632
        %3399 = vmatprep.subr.mxu0 %v1641
        %3400 = vmatpush1.msra.mxu0 %v1640
        %3401 = vmatprep.subr.mxu0 %v1649
        %3402 = vmatpush1.msra.mxu0 %v1648
        %3403 = vmatprep.subr.mxu0 %v1657
        %3404 = vmatpush1.msra.mxu0 %v1656
        %3405 = vmatprep.subr.mxu0 %v1665
        %3406 = vmatpush1.msra.mxu0 %v1664
        %3407 = vmatprep.subr.mxu0 %v1673
        %3408 = vmatpush1.msra.mxu0 %v1672
        %3409 = vmatprep.subr.mxu0 %v1681
        %3410 = vmatpush1.msra.mxu0 %v1680
        %3411 = vmatprep.subr.mxu0 %v1689
        %3412 = vmatpush1.msra.mxu0 %v1688
        %3413 = vmatprep.subr.mxu0 %v1697
        %3414 = vmatpush1.msra.mxu0 %v1696
        %3415 = vmatprep.subr.mxu0 %v1705
        %3416 = vmatpush1.msra.mxu0 %v1704
        %3417 = vmatprep.subr.mxu0 %v1713
        %3418 = vmatpush1.msra.mxu0 %v1712
        %3419 = vmatprep.subr.mxu0 %v1721
        %3420 = vmatpush1.msra.mxu0 %v1720
        %3421 = vmatprep.subr.mxu0 %v1729
        %3422 = vmatpush1.msra.mxu0 %v1728
        %3423 = vmatprep.subr.mxu0 %v1737
        %3424 = vmatpush1.msra.mxu0 %v1736
        %3425 = vmatprep.subr.mxu0 %v1745
        %3426 = vmatpush1.msra.mxu0 %v1744
        %3427 = vmatprep.subr.mxu0 %v1753
        %3428 = vmatpush1.msra.mxu0 %v1752
        %3429 = vmatprep.subr.mxu0 %v1761
        %3430 = vmatpush1.msra.mxu0 %v1760
        %3431 = vmatprep.subr.mxu0 %v1769
        %3432 = vmatpush1.msra.mxu0 %v1768
        %3433 = vmatprep.subr.mxu0 %v1777
        %3434 = vmatpush1.msra.mxu0 %v1776
        %3435 = vmatprep.subr.mxu0 %v1785
        %3436 = vmatpush1.msra.mxu0 %v1784
        %3437 = vmatprep.subr.mxu0 %v1793
        %3438 = vmatpush1.msra.mxu0 %v1792
        %3439 = vmatprep.subr.mxu0 %v1801
        %3440 = vmatpush1.msra.mxu0 %v1800
        %3441 = vmatprep.subr.mxu0 %v1809
        %3442 = vmatpush1.msra.mxu0 %v1808
        %3443 = vmatprep.subr.mxu0 %v1817
        %3444 = vmatpush1.msra.mxu0 %v1816
        %3445 = vmatprep.subr.mxu0 %v1825
        %3446 = vmatpush1.msra.mxu0 %v1824
        %3447 = vmatprep.subr.mxu0 %v1833
        %3448 = vmatpush1.msra.mxu0 %v1832
        %3449 = vmatprep.subr.mxu0 %v1841
        %3450 = vmatpush1.msra.mxu0 %v1840
        %3451 = vmatprep.subr.mxu0 %v1849
        %3452 = vmatpush1.msra.mxu0 %v1848
        %3453 = vmatprep.subr.mxu0 %v1857
        %3454 = vmatpush1.msra.mxu0 %v1856
        %3455 = vmatprep.subr.mxu0 %v1865
        %3456 = vmatpush1.msra.mxu0 %v1864
        %3457 = vmatprep.mubr.f32.mxu0 %v2436
        %3458 = vmatmul.mubr.f32.gmra.mrb[0].mxu0 %v2434
        %v3459 = vpop.f32.mrb[0].mxu0
        %v3460 = vadd.f32 %v3389, %v3459
        %v3461 = vpop.f32.mrb[0].mxu0
        %v3462 = vadd.f32 %v3391, %v3461
        %3463 = vdwg.mxu0
        %3464 = vmatprep.subr.mxu0 %v1873
        %3465 = vmatpush1.msra.mxu0 %v1872
        %3466 = vmatprep.subr.mxu0 %v1881
        %3467 = vmatpush1.msra.mxu0 %v1880
        %3468 = vmatprep.subr.mxu0 %v1889
        %3469 = vmatpush1.msra.mxu0 %v1888
        %3470 = vmatprep.subr.mxu0 %v1897
        %3471 = vmatpush1.msra.mxu0 %v1896
        %3472 = vmatprep.subr.mxu0 %v1905
        %3473 = vmatpush1.msra.mxu0 %v1904
        %3474 = vmatprep.subr.mxu0 %v1913
        %3475 = vmatpush1.msra.mxu0 %v1912
        %3476 = vmatprep.subr.mxu0 %v1921
        %3477 = vmatpush1.msra.mxu0 %v1920
        %3478 = vmatprep.subr.mxu0 %v1929
        %3479 = vmatpush1.msra.mxu0 %v1928
        %3480 = vmatprep.subr.mxu0 %v1937
        %3481 = vmatpush1.msra.mxu0 %v1936
        %3482 = vmatprep.subr.mxu0 %v1945
        %3483 = vmatpush1.msra.mxu0 %v1944
        %3484 = vmatprep.subr.mxu0 %v1953
        %3485 = vmatpush1.msra.mxu0 %v1952
        %3486 = vmatprep.subr.mxu0 %v1961
        %3487 = vmatpush1.msra.mxu0 %v1960
        %3488 = vmatprep.subr.mxu0 %v1969
        %3489 = vmatpush1.msra.mxu0 %v1968
        %3490 = vmatprep.subr.mxu0 %v1977
        %3491 = vmatpush1.msra.mxu0 %v1976
        %3492 = vmatprep.subr.mxu0 %v1985
        %3493 = vmatpush1.msra.mxu0 %v1984
        %3494 = vmatprep.subr.mxu0 %v1993
        %3495 = vmatpush1.msra.mxu0 %v1992
        %3496 = vmatprep.subr.mxu0 %v2001
        %3497 = vmatpush1.msra.mxu0 %v2000
        %3498 = vmatprep.subr.mxu0 %v2009
        %3499 = vmatpush1.msra.mxu0 %v2008
        %3500 = vmatprep.subr.mxu0 %v2017
        %3501 = vmatpush1.msra.mxu0 %v2016
        %3502 = vmatprep.subr.mxu0 %v2025
        %3503 = vmatpush1.msra.mxu0 %v2024
        %3504 = vmatprep.subr.mxu0 %v2033
        %3505 = vmatpush1.msra.mxu0 %v2032
        %3506 = vmatprep.subr.mxu0 %v2041
        %3507 = vmatpush1.msra.mxu0 %v2040
        %3508 = vmatprep.subr.mxu0 %v2049
        %3509 = vmatpush1.msra.mxu0 %v2048
        %3510 = vmatprep.subr.mxu0 %v2057
        %3511 = vmatpush1.msra.mxu0 %v2056
        %3512 = vmatprep.subr.mxu0 %v2065
        %3513 = vmatpush1.msra.mxu0 %v2064
        %3514 = vmatprep.subr.mxu0 %v2073
        %3515 = vmatpush1.msra.mxu0 %v2072
        %3516 = vmatprep.subr.mxu0 %v2081
        %3517 = vmatpush1.msra.mxu0 %v2080
        %3518 = vmatprep.subr.mxu0 %v2089
        %3519 = vmatpush1.msra.mxu0 %v2088
        %3520 = vmatprep.subr.mxu0 %v2097
        %3521 = vmatpush1.msra.mxu0 %v2096
        %3522 = vmatprep.subr.mxu0 %v2105
        %3523 = vmatpush1.msra.mxu0 %v2104
        %3524 = vmatprep.subr.mxu0 %v2113
        %3525 = vmatpush1.msra.mxu0 %v2112
        %3526 = vmatprep.subr.mxu0 %v2121
        %3527 = vmatpush1.msra.mxu0 %v2120
        %3528 = vmatprep.mubr.f32.mxu0 %v2452
        %3529 = vmatmul.mubr.f32.gmra.mrb[0].mxu0 %v2444
        %v3530 = vpop.f32.mrb[0].mxu0
        %v3531 = vadd.f32 %v3460, %v3530
        %v3532 = vpop.f32.mrb[0].mxu0
        %v3533 = vadd.f32 %v3462, %v3532
        %3534 = vdwg.mxu0
        %3535 = vmatprep.subr.mxu0 %v2129
        %3536 = vmatpush1.msra.mxu0 %v2128
        %3537 = vmatprep.subr.mxu0 %v2137
        %3538 = vmatpush1.msra.mxu0 %v2136
        %3539 = vmatprep.subr.mxu0 %v2145
        %3540 = vmatpush1.msra.mxu0 %v2144
        %3541 = vmatprep.subr.mxu0 %v2153
        %3542 = vmatpush1.msra.mxu0 %v2152
        %3543 = vmatprep.subr.mxu0 %v2161
        %3544 = vmatpush1.msra.mxu0 %v2160
        %3545 = vmatprep.subr.mxu0 %v2169
        %3546 = vmatpush1.msra.mxu0 %v2168
        %3547 = vmatprep.subr.mxu0 %v2177
        %3548 = vmatpush1.msra.mxu0 %v2176
        %3549 = vmatprep.subr.mxu0 %v2185
        %3550 = vmatpush1.msra.mxu0 %v2184
        %3551 = vmatprep.subr.mxu0 %v2193
        %3552 = vmatpush1.msra.mxu0 %v2192
        %3553 = vmatprep.subr.mxu0 %v2201
        %3554 = vmatpush1.msra.mxu0 %v2200
        %3555 = vmatprep.subr.mxu0 %v2209
        %3556 = vmatpush1.msra.mxu0 %v2208
        %3557 = vmatprep.subr.mxu0 %v2217
        %3558 = vmatpush1.msra.mxu0 %v2216
        %3559 = vmatprep.subr.mxu0 %v2225
        %3560 = vmatpush1.msra.mxu0 %v2224
        %3561 = vmatprep.subr.mxu0 %v2233
        %3562 = vmatpush1.msra.mxu0 %v2232
        %3563 = vmatprep.subr.mxu0 %v2241
        %3564 = vmatpush1.msra.mxu0 %v2240
        %3565 = vmatprep.subr.mxu0 %v2249
        %3566 = vmatpush1.msra.mxu0 %v2248
        %3567 = vmatprep.subr.mxu0 %v2257
        %3568 = vmatpush1.msra.mxu0 %v2256
        %3569 = vmatprep.subr.mxu0 %v2265
        %3570 = vmatpush1.msra.mxu0 %v2264
        %3571 = vmatprep.subr.mxu0 %v2273
        %3572 = vmatpush1.msra.mxu0 %v2272
        %3573 = vmatprep.subr.mxu0 %v2281
        %3574 = vmatpush1.msra.mxu0 %v2280
        %3575 = vmatprep.subr.mxu0 %v2289
        %3576 = vmatpush1.msra.mxu0 %v2288
        %3577 = vmatprep.subr.mxu0 %v2297
        %3578 = vmatpush1.msra.mxu0 %v2296
        %3579 = vmatprep.subr.mxu0 %v2305
        %3580 = vmatpush1.msra.mxu0 %v2304
        %3581 = vmatprep.subr.mxu0 %v2313
        %3582 = vmatpush1.msra.mxu0 %v2312
        %3583 = vmatprep.subr.mxu0 %v2321
        %3584 = vmatpush1.msra.mxu0 %v2320
        %3585 = vmatprep.subr.mxu0 %v2329
        %3586 = vmatpush1.msra.mxu0 %v2328
        %3587 = vmatprep.subr.mxu0 %v2337
        %3588 = vmatpush1.msra.mxu0 %v2336
        %3589 = vmatprep.subr.mxu0 %v2345
        %3590 = vmatpush1.msra.mxu0 %v2344
        %3591 = vmatprep.subr.mxu0 %v2353
        %3592 = vmatpush1.msra.mxu0 %v2352
        %3593 = vmatprep.subr.mxu0 %v2361
        %3594 = vmatpush1.msra.mxu0 %v2360
        %3595 = vmatprep.subr.mxu0 %v2369
        %3596 = vmatpush1.msra.mxu0 %v2368
        %3597 = vmatprep.subr.mxu0 %v2377
        %3598 = vmatpush1.msra.mxu0 %v2376
        %3599 = vmatprep.mubr.f32.mxu0 %v2453
        %3600 = vmatmul.mubr.f32.gmra.mrb[0].mxu0 %v2451
        %v3601 = vpop.f32.mrb[0].mxu0
        %v3602 = vadd.f32 %v3531, %v3601
        %v3603 = vpop.f32.mrb[0].mxu0
        %v3604 = vadd.f32 %v3533, %v3603
        %3605 = vdwg.mxu0
        %3606 = vmatprep.subr.mxu0 %v339
        %3607 = vmatpush1.msra.mxu0 %v338
        %3608 = vmatprep.subr.mxu0 %v347
        %3609 = vmatpush1.msra.mxu0 %v346
        %3610 = vmatprep.subr.mxu0 %v355
        %3611 = vmatpush1.msra.mxu0 %v354
        %3612 = vmatprep.subr.mxu0 %v363
        %3613 = vmatpush1.msra.mxu0 %v362
        %3614 = vmatprep.subr.mxu0 %v371
        %3615 = vmatpush1.msra.mxu0 %v370
        %3616 = vmatprep.subr.mxu0 %v379
        %3617 = vmatpush1.msra.mxu0 %v378
        %3618 = vmatprep.subr.mxu0 %v387
        %3619 = vmatpush1.msra.mxu0 %v386
        %3620 = vmatprep.subr.mxu0 %v395
        %3621 = vmatpush1.msra.mxu0 %v394
        %3622 = vmatprep.subr.mxu0 %v403
        %3623 = vmatpush1.msra.mxu0 %v402
        %3624 = vmatprep.subr.mxu0 %v411
        %3625 = vmatpush1.msra.mxu0 %v410
        %3626 = vmatprep.subr.mxu0 %v419
        %3627 = vmatpush1.msra.mxu0 %v418
        %3628 = vmatprep.subr.mxu0 %v427
        %3629 = vmatpush1.msra.mxu0 %v426
        %3630 = vmatprep.subr.mxu0 %v435
        %3631 = vmatpush1.msra.mxu0 %v434
        %3632 = vmatprep.subr.mxu0 %v443
        %3633 = vmatpush1.msra.mxu0 %v442
        %3634 = vmatprep.subr.mxu0 %v451
        %3635 = vmatpush1.msra.mxu0 %v450
        %3636 = vmatprep.subr.mxu0 %v459
        %3637 = vmatpush1.msra.mxu0 %v458
        %3638 = vmatprep.subr.mxu0 %v467
        %3639 = vmatpush1.msra.mxu0 %v466
        %3640 = vmatprep.subr.mxu0 %v475
        %3641 = vmatpush1.msra.mxu0 %v474
        %3642 = vmatprep.subr.mxu0 %v483
        %3643 = vmatpush1.msra.mxu0 %v482
        %3644 = vmatprep.subr.mxu0 %v491
        %3645 = vmatpush1.msra.mxu0 %v490
        %3646 = vmatprep.subr.mxu0 %v499
        %3647 = vmatpush1.msra.mxu0 %v498
        %3648 = vmatprep.subr.mxu0 %v507
        %3649 = vmatpush1.msra.mxu0 %v506
        %3650 = vmatprep.subr.mxu0 %v515
        %3651 = vmatpush1.msra.mxu0 %v514
        %3652 = vmatprep.subr.mxu0 %v523
        %3653 = vmatpush1.msra.mxu0 %v522
        %3654 = vmatprep.subr.mxu0 %v531
        %3655 = vmatpush1.msra.mxu0 %v530
        %3656 = vmatprep.subr.mxu0 %v539
        %3657 = vmatpush1.msra.mxu0 %v538
        %3658 = vmatprep.subr.mxu0 %v547
        %3659 = vmatpush1.msra.mxu0 %v546
        %3660 = vmatprep.subr.mxu0 %v555
        %3661 = vmatpush1.msra.mxu0 %v554
        %3662 = vmatprep.subr.mxu0 %v563
        %3663 = vmatpush1.msra.mxu0 %v562
        %3664 = vmatprep.subr.mxu0 %v571
        %3665 = vmatpush1.msra.mxu0 %v570
        %3666 = vmatprep.subr.mxu0 %v579
        %3667 = vmatpush1.msra.mxu0 %v578
        %3668 = vmatprep.subr.mxu0 %v587
        %3669 = vmatpush1.msra.mxu0 %v586
        %3670 = vmatprep.mubr.f32.mxu0 %v2401
        %3671 = vmatmul.mubr.f32.gmra.mrb[0].mxu0 %v2393
        %v3672 = vpop.f32.mrb[0].mxu0
        %v3673 = vadd.f32 0.0, %v3672
        %v3674 = vpop.f32.mrb[0].mxu0
        %v3675 = vadd.f32 0.0, %v3674
        %3676 = vdwg.mxu0
        %3677 = vmatprep.subr.mxu0 %v595
        %3678 = vmatpush1.msra.mxu0 %v594
        %3679 = vmatprep.subr.mxu0 %v603
        %3680 = vmatpush1.msra.mxu0 %v602
        %3681 = vmatprep.subr.mxu0 %v611
        %3682 = vmatpush1.msra.mxu0 %v610
        %3683 = vmatprep.subr.mxu0 %v619
        %3684 = vmatpush1.msra.mxu0 %v618
        %3685 = vmatprep.subr.mxu0 %v627
        %3686 = vmatpush1.msra.mxu0 %v626
        %3687 = vmatprep.subr.mxu0 %v635
        %3688 = vmatpush1.msra.mxu0 %v634
        %3689 = vmatprep.subr.mxu0 %v643
        %3690 = vmatpush1.msra.mxu0 %v642
        %3691 = vmatprep.subr.mxu0 %v651
        %3692 = vmatpush1.msra.mxu0 %v650
        %3693 = vmatprep.subr.mxu0 %v659
        %3694 = vmatpush1.msra.mxu0 %v658
        %3695 = vmatprep.subr.mxu0 %v667
        %3696 = vmatpush1.msra.mxu0 %v666
        %3697 = vmatprep.subr.mxu0 %v675
        %3698 = vmatpush1.msra.mxu0 %v674
        %3699 = vmatprep.subr.mxu0 %v683
        %3700 = vmatpush1.msra.mxu0 %v682
        %3701 = vmatprep.subr.mxu0 %v691
        %3702 = vmatpush1.msra.mxu0 %v690
        %3703 = vmatprep.subr.mxu0 %v699
        %3704 = vmatpush1.msra.mxu0 %v698
        %3705 = vmatprep.subr.mxu0 %v707
        %3706 = vmatpush1.msra.mxu0 %v706
        %3707 = vmatprep.subr.mxu0 %v715
        %3708 = vmatpush1.msra.mxu0 %v714
        %3709 = vmatprep.subr.mxu0 %v723
        %3710 = vmatpush1.msra.mxu0 %v722
        %3711 = vmatprep.subr.mxu0 %v731
        %3712 = vmatpush1.msra.mxu0 %v730
        %3713 = vmatprep.subr.mxu0 %v739
        %3714 = vmatpush1.msra.mxu0 %v738
        %3715 = vmatprep.subr.mxu0 %v747
        %3716 = vmatpush1.msra.mxu0 %v746
        %3717 = vmatprep.subr.mxu0 %v755
        %3718 = vmatpush1.msra.mxu0 %v754
        %3719 = vmatprep.subr.mxu0 %v763
        %3720 = vmatpush1.msra.mxu0 %v762
        %3721 = vmatprep.subr.mxu0 %v771
        %3722 = vmatpush1.msra.mxu0 %v770
        %3723 = vmatprep.subr.mxu0 %v779
        %3724 = vmatpush1.msra.mxu0 %v778
        %3725 = vmatprep.subr.mxu0 %v787
        %3726 = vmatpush1.msra.mxu0 %v786
        %3727 = vmatprep.subr.mxu0 %v795
        %3728 = vmatpush1.msra.mxu0 %v794
        %3729 = vmatprep.subr.mxu0 %v803
        %3730 = vmatpush1.msra.mxu0 %v802
        %3731 = vmatprep.subr.mxu0 %v811
        %3732 = vmatpush1.msra.mxu0 %v810
        %3733 = vmatprep.subr.mxu0 %v819
        %3734 = vmatpush1.msra.mxu0 %v818
        %3735 = vmatprep.subr.mxu0 %v827
        %3736 = vmatpush1.msra.mxu0 %v826
        %3737 = vmatprep.subr.mxu0 %v835
        %3738 = vmatpush1.msra.mxu0 %v834
        %3739 = vmatprep.subr.mxu0 %v843
        %3740 = vmatpush1.msra.mxu0 %v842
        %3741 = vmatprep.mubr.f32.mxu0 %v2402
        %3742 = vmatmul.mubr.f32.gmra.mrb[0].mxu0 %v2400
        %v3743 = vpop.f32.mrb[0].mxu0
        %v3744 = vadd.f32 %v3673, %v3743
        %v3745 = vpop.f32.mrb[0].mxu0
        %v3746 = vadd.f32 %v3675, %v3745
        %3747 = vdwg.mxu0
        %3748 = vmatprep.subr.mxu0 %v851
        %3749 = vmatpush1.msra.mxu0 %v850
        %3750 = vmatprep.subr.mxu0 %v859
        %3751 = vmatpush1.msra.mxu0 %v858
        %3752 = vmatprep.subr.mxu0 %v867
        %3753 = vmatpush1.msra.mxu0 %v866
        %3754 = vmatprep.subr.mxu0 %v875
        %3755 = vmatpush1.msra.mxu0 %v874
        %3756 = vmatprep.subr.mxu0 %v883
        %3757 = vmatpush1.msra.mxu0 %v882
        %3758 = vmatprep.subr.mxu0 %v891
        %3759 = vmatpush1.msra.mxu0 %v890
        %3760 = vmatprep.subr.mxu0 %v899
        %3761 = vmatpush1.msra.mxu0 %v898
        %3762 = vmatprep.subr.mxu0 %v907
        %3763 = vmatpush1.msra.mxu0 %v906
        %3764 = vmatprep.subr.mxu0 %v915
        %3765 = vmatpush1.msra.mxu0 %v914
        %3766 = vmatprep.subr.mxu0 %v923
        %3767 = vmatpush1.msra.mxu0 %v922
        %3768 = vmatprep.subr.mxu0 %v931
        %3769 = vmatpush1.msra.mxu0 %v930
        %3770 = vmatprep.subr.mxu0 %v939
        %3771 = vmatpush1.msra.mxu0 %v938
        %3772 = vmatprep.subr.mxu0 %v947
        %3773 = vmatpush1.msra.mxu0 %v946
        %3774 = vmatprep.subr.mxu0 %v955
        %3775 = vmatpush1.msra.mxu0 %v954
        %3776 = vmatprep.subr.mxu0 %v963
        %3777 = vmatpush1.msra.mxu0 %v962
        %3778 = vmatprep.subr.mxu0 %v971
        %3779 = vmatpush1.msra.mxu0 %v970
        %3780 = vmatprep.subr.mxu0 %v979
        %3781 = vmatpush1.msra.mxu0 %v978
        %3782 = vmatprep.subr.mxu0 %v987
        %3783 = vmatpush1.msra.mxu0 %v986
        %3784 = vmatprep.subr.mxu0 %v995
        %3785 = vmatpush1.msra.mxu0 %v994
        %3786 = vmatprep.subr.mxu0 %v1003
        %3787 = vmatpush1.msra.mxu0 %v1002
        %3788 = vmatprep.subr.mxu0 %v1011
        %3789 = vmatpush1.msra.mxu0 %v1010
        %3790 = vmatprep.subr.mxu0 %v1019
        %3791 = vmatpush1.msra.mxu0 %v1018
        %3792 = vmatprep.subr.mxu0 %v1027
        %3793 = vmatpush1.msra.mxu0 %v1026
        %3794 = vmatprep.subr.mxu0 %v1035
        %3795 = vmatpush1.msra.mxu0 %v1034
        %3796 = vmatprep.subr.mxu0 %v1043
        %3797 = vmatpush1.msra.mxu0 %v1042
        %3798 = vmatprep.subr.mxu0 %v1051
        %3799 = vmatpush1.msra.mxu0 %v1050
        %3800 = vmatprep.subr.mxu0 %v1059
        %3801 = vmatpush1.msra.mxu0 %v1058
        %3802 = vmatprep.subr.mxu0 %v1067
        %3803 = vmatpush1.msra.mxu0 %v1066
        %3804 = vmatprep.subr.mxu0 %v1075
        %3805 = vmatpush1.msra.mxu0 %v1074
        %3806 = vmatprep.subr.mxu0 %v1083
        %3807 = vmatpush1.msra.mxu0 %v1082
        %3808 = vmatprep.subr.mxu0 %v1091
        %3809 = vmatpush1.msra.mxu0 %v1090
        %3810 = vmatprep.subr.mxu0 %v1099
        %3811 = vmatpush1.msra.mxu0 %v1098
        %3812 = vmatprep.mubr.f32.mxu0 %v2418
        %3813 = vmatmul.mubr.f32.gmra.mrb[0].mxu0 %v2410
        %v3814 = vpop.f32.mrb[0].mxu0
        %v3815 = vadd.f32 %v3744, %v3814
        %v3816 = vpop.f32.mrb[0].mxu0
        %v3817 = vadd.f32 %v3746, %v3816
        %3818 = vdwg.mxu0
        %3819 = vmatprep.subr.mxu0 %v1107
        %3820 = vmatpush1.msra.mxu0 %v1106
        %3821 = vmatprep.subr.mxu0 %v1115
        %3822 = vmatpush1.msra.mxu0 %v1114
        %3823 = vmatprep.subr.mxu0 %v1123
        %3824 = vmatpush1.msra.mxu0 %v1122
        %3825 = vmatprep.subr.mxu0 %v1131
        %3826 = vmatpush1.msra.mxu0 %v1130
        %3827 = vmatprep.subr.mxu0 %v1139
        %3828 = vmatpush1.msra.mxu0 %v1138
        %3829 = vmatprep.subr.mxu0 %v1147
        %3830 = vmatpush1.msra.mxu0 %v1146
        %3831 = vmatprep.subr.mxu0 %v1155
        %3832 = vmatpush1.msra.mxu0 %v1154
        %3833 = vmatprep.subr.mxu0 %v1163
        %3834 = vmatpush1.msra.mxu0 %v1162
        %3835 = vmatprep.subr.mxu0 %v1171
        %3836 = vmatpush1.msra.mxu0 %v1170
        %3837 = vmatprep.subr.mxu0 %v1179
        %3838 = vmatpush1.msra.mxu0 %v1178
        %3839 = vmatprep.subr.mxu0 %v1187
        %3840 = vmatpush1.msra.mxu0 %v1186
        %3841 = vmatprep.subr.mxu0 %v1195
        %3842 = vmatpush1.msra.mxu0 %v1194
        %3843 = vmatprep.subr.mxu0 %v1203
        %3844 = vmatpush1.msra.mxu0 %v1202
        %3845 = vmatprep.subr.mxu0 %v1211
        %3846 = vmatpush1.msra.mxu0 %v1210
        %3847 = vmatprep.subr.mxu0 %v1219
        %3848 = vmatpush1.msra.mxu0 %v1218
        %3849 = vmatprep.subr.mxu0 %v1227
        %3850 = vmatpush1.msra.mxu0 %v1226
        %3851 = vmatprep.subr.mxu0 %v1235
        %3852 = vmatpush1.msra.mxu0 %v1234
        %3853 = vmatprep.subr.mxu0 %v1243
        %3854 = vmatpush1.msra.mxu0 %v1242
        %3855 = vmatprep.subr.mxu0 %v1251
        %3856 = vmatpush1.msra.mxu0 %v1250
        %3857 = vmatprep.subr.mxu0 %v1259
        %3858 = vmatpush1.msra.mxu0 %v1258
        %3859 = vmatprep.subr.mxu0 %v1267
        %3860 = vmatpush1.msra.mxu0 %v1266
        %3861 = vmatprep.subr.mxu0 %v1275
        %3862 = vmatpush1.msra.mxu0 %v1274
        %3863 = vmatprep.subr.mxu0 %v1283
        %3864 = vmatpush1.msra.mxu0 %v1282
        %3865 = vmatprep.subr.mxu0 %v1291
        %3866 = vmatpush1.msra.mxu0 %v1290
        %3867 = vmatprep.subr.mxu0 %v1299
        %3868 = vmatpush1.msra.mxu0 %v1298
        %3869 = vmatprep.subr.mxu0 %v1307
        %3870 = vmatpush1.msra.mxu0 %v1306
        %3871 = vmatprep.subr.mxu0 %v1315
        %3872 = vmatpush1.msra.mxu0 %v1314
        %3873 = vmatprep.subr.mxu0 %v1323
        %3874 = vmatpush1.msra.mxu0 %v1322
        %3875 = vmatprep.subr.mxu0 %v1331
        %3876 = vmatpush1.msra.mxu0 %v1330
        %3877 = vmatprep.subr.mxu0 %v1339
        %3878 = vmatpush1.msra.mxu0 %v1338
        %3879 = vmatprep.subr.mxu0 %v1347
        %3880 = vmatpush1.msra.mxu0 %v1346
        %3881 = vmatprep.subr.mxu0 %v1355
        %3882 = vmatpush1.msra.mxu0 %v1354
        %3883 = vmatprep.mubr.f32.mxu0 %v2419
        %3884 = vmatmul.mubr.f32.gmra.mrb[0].mxu0 %v2417
        %v3885 = vpop.f32.mrb[0].mxu0
        %v3886 = vadd.f32 %v3815, %v3885
        %v3887 = vpop.f32.mrb[0].mxu0
        %v3888 = vadd.f32 %v3817, %v3887
        %3889 = vdwg.mxu0
        %3890 = vmatprep.subr.mxu0 %v1363
        %3891 = vmatpush1.msra.mxu0 %v1362
        %3892 = vmatprep.subr.mxu0 %v1371
        %3893 = vmatpush1.msra.mxu0 %v1370
        %3894 = vmatprep.subr.mxu0 %v1379
        %3895 = vmatpush1.msra.mxu0 %v1378
        %3896 = vmatprep.subr.mxu0 %v1387
        %3897 = vmatpush1.msra.mxu0 %v1386
        %3898 = vmatprep.subr.mxu0 %v1395
        %3899 = vmatpush1.msra.mxu0 %v1394
        %3900 = vmatprep.subr.mxu0 %v1403
        %3901 = vmatpush1.msra.mxu0 %v1402
        %3902 = vmatprep.subr.mxu0 %v1411
        %3903 = vmatpush1.msra.mxu0 %v1410
        %3904 = vmatprep.subr.mxu0 %v1419
        %3905 = vmatpush1.msra.mxu0 %v1418
        %3906 = vmatprep.subr.mxu0 %v1427
        %3907 = vmatpush1.msra.mxu0 %v1426
        %3908 = vmatprep.subr.mxu0 %v1435
        %3909 = vmatpush1.msra.mxu0 %v1434
        %3910 = vmatprep.subr.mxu0 %v1443
        %3911 = vmatpush1.msra.mxu0 %v1442
        %3912 = vmatprep.subr.mxu0 %v1451
        %3913 = vmatpush1.msra.mxu0 %v1450
        %3914 = vmatprep.subr.mxu0 %v1459
        %3915 = vmatpush1.msra.mxu0 %v1458
        %3916 = vmatprep.subr.mxu0 %v1467
        %3917 = vmatpush1.msra.mxu0 %v1466
        %3918 = vmatprep.subr.mxu0 %v1475
        %3919 = vmatpush1.msra.mxu0 %v1474
        %3920 = vmatprep.subr.mxu0 %v1483
        %3921 = vmatpush1.msra.mxu0 %v1482
        %3922 = vmatprep.subr.mxu0 %v1491
        %3923 = vmatpush1.msra.mxu0 %v1490
        %3924 = vmatprep.subr.mxu0 %v1499
        %3925 = vmatpush1.msra.mxu0 %v1498
        %3926 = vmatprep.subr.mxu0 %v1507
        %3927 = vmatpush1.msra.mxu0 %v1506
        %3928 = vmatprep.subr.mxu0 %v1515
        %3929 = vmatpush1.msra.mxu0 %v1514
        %3930 = vmatprep.subr.mxu0 %v1523
        %3931 = vmatpush1.msra.mxu0 %v1522
        %3932 = vmatprep.subr.mxu0 %v1531
        %3933 = vmatpush1.msra.mxu0 %v1530
        %3934 = vmatprep.subr.mxu0 %v1539
        %3935 = vmatpush1.msra.mxu0 %v1538
        %3936 = vmatprep.subr.mxu0 %v1547
        %3937 = vmatpush1.msra.mxu0 %v1546
        %3938 = vmatprep.subr.mxu0 %v1555
        %3939 = vmatpush1.msra.mxu0 %v1554
        %3940 = vmatprep.subr.mxu0 %v1563
        %3941 = vmatpush1.msra.mxu0 %v1562
        %3942 = vmatprep.subr.mxu0 %v1571
        %3943 = vmatpush1.msra.mxu0 %v1570
        %3944 = vmatprep.subr.mxu0 %v1579
        %3945 = vmatpush1.msra.mxu0 %v1578
        %3946 = vmatprep.subr.mxu0 %v1587
        %3947 = vmatpush1.msra.mxu0 %v1586
        %3948 = vmatprep.subr.mxu0 %v1595
        %3949 = vmatpush1.msra.mxu0 %v1594
        %3950 = vmatprep.subr.mxu0 %v1603
        %3951 = vmatpush1.msra.mxu0 %v1602
        %3952 = vmatprep.subr.mxu0 %v1611
        %3953 = vmatpush1.msra.mxu0 %v1610
        %3954 = vmatprep.mubr.f32.mxu0 %v2435
        %3955 = vmatmul.mubr.f32.gmra.mrb[0].mxu0 %v2427
        %v3956 = vpop.f32.mrb[0].mxu0
        %v3957 = vadd.f32 %v3886, %v3956
        %v3958 = vpop.f32.mrb[0].mxu0
        %v3959 = vadd.f32 %v3888, %v3958
        %3960 = vdwg.mxu0
        %3961 = vmatprep.subr.mxu0 %v1619
        %3962 = vmatpush1.msra.mxu0 %v1618
        %3963 = vmatprep.subr.mxu0 %v1627
        %3964 = vmatpush1.msra.mxu0 %v1626
        %3965 = vmatprep.subr.mxu0 %v1635
        %3966 = vmatpush1.msra.mxu0 %v1634
        %3967 = vmatprep.subr.mxu0 %v1643
        %3968 = vmatpush1.msra.mxu0 %v1642
        %3969 = vmatprep.subr.mxu0 %v1651
        %3970 = vmatpush1.msra.mxu0 %v1650
        %3971 = vmatprep.subr.mxu0 %v1659
        %3972 = vmatpush1.msra.mxu0 %v1658
        %3973 = vmatprep.subr.mxu0 %v1667
        %3974 = vmatpush1.msra.mxu0 %v1666
        %3975 = vmatprep.subr.mxu0 %v1675
        %3976 = vmatpush1.msra.mxu0 %v1674
        %3977 = vmatprep.subr.mxu0 %v1683
        %3978 = vmatpush1.msra.mxu0 %v1682
        %3979 = vmatprep.subr.mxu0 %v1691
        %3980 = vmatpush1.msra.mxu0 %v1690
        %3981 = vmatprep.subr.mxu0 %v1699
        %3982 = vmatpush1.msra.mxu0 %v1698
        %3983 = vmatprep.subr.mxu0 %v1707
        %3984 = vmatpush1.msra.mxu0 %v1706
        %3985 = vmatprep.subr.mxu0 %v1715
        %3986 = vmatpush1.msra.mxu0 %v1714
        %3987 = vmatprep.subr.mxu0 %v1723
        %3988 = vmatpush1.msra.mxu0 %v1722
        %3989 = vmatprep.subr.mxu0 %v1731
        %3990 = vmatpush1.msra.mxu0 %v1730
        %3991 = vmatprep.subr.mxu0 %v1739
        %3992 = vmatpush1.msra.mxu0 %v1738
        %3993 = vmatprep.subr.mxu0 %v1747
        %3994 = vmatpush1.msra.mxu0 %v1746
        %3995 = vmatprep.subr.mxu0 %v1755
        %3996 = vmatpush1.msra.mxu0 %v1754
        %3997 = vmatprep.subr.mxu0 %v1763
        %3998 = vmatpush1.msra.mxu0 %v1762
        %3999 = vmatprep.subr.mxu0 %v1771
        %4000 = vmatpush1.msra.mxu0 %v1770
        %4001 = vmatprep.subr.mxu0 %v1779
        %4002 = vmatpush1.msra.mxu0 %v1778
        %4003 = vmatprep.subr.mxu0 %v1787
        %4004 = vmatpush1.msra.mxu0 %v1786
        %4005 = vmatprep.subr.mxu0 %v1795
        %4006 = vmatpush1.msra.mxu0 %v1794
        %4007 = vmatprep.subr.mxu0 %v1803
        %4008 = vmatpush1.msra.mxu0 %v1802
        %4009 = vmatprep.subr.mxu0 %v1811
        %4010 = vmatpush1.msra.mxu0 %v1810
        %4011 = vmatprep.subr.mxu0 %v1819
        %4012 = vmatpush1.msra.mxu0 %v1818
        %4013 = vmatprep.subr.mxu0 %v1827
        %4014 = vmatpush1.msra.mxu0 %v1826
        %4015 = vmatprep.subr.mxu0 %v1835
        %4016 = vmatpush1.msra.mxu0 %v1834
        %4017 = vmatprep.subr.mxu0 %v1843
        %4018 = vmatpush1.msra.mxu0 %v1842
        %4019 = vmatprep.subr.mxu0 %v1851
        %4020 = vmatpush1.msra.mxu0 %v1850
        %4021 = vmatprep.subr.mxu0 %v1859
        %4022 = vmatpush1.msra.mxu0 %v1858
        %4023 = vmatprep.subr.mxu0 %v1867
        %4024 = vmatpush1.msra.mxu0 %v1866
        %4025 = vmatprep.mubr.f32.mxu0 %v2436
        %4026 = vmatmul.mubr.f32.gmra.mrb[0].mxu0 %v2434
        %v4027 = vpop.f32.mrb[0].mxu0
        %v4028 = vadd.f32 %v3957, %v4027
        %v4029 = vpop.f32.mrb[0].mxu0
        %v4030 = vadd.f32 %v3959, %v4029
        %4031 = vdwg.mxu0
        %4032 = vmatprep.subr.mxu0 %v1875
        %4033 = vmatpush1.msra.mxu0 %v1874
        %4034 = vmatprep.subr.mxu0 %v1883
        %4035 = vmatpush1.msra.mxu0 %v1882
        %4036 = vmatprep.subr.mxu0 %v1891
        %4037 = vmatpush1.msra.mxu0 %v1890
        %4038 = vmatprep.subr.mxu0 %v1899
        %4039 = vmatpush1.msra.mxu0 %v1898
        %4040 = vmatprep.subr.mxu0 %v1907
        %4041 = vmatpush1.msra.mxu0 %v1906
        %4042 = vmatprep.subr.mxu0 %v1915
        %4043 = vmatpush1.msra.mxu0 %v1914
        %4044 = vmatprep.subr.mxu0 %v1923
        %4045 = vmatpush1.msra.mxu0 %v1922
        %4046 = vmatprep.subr.mxu0 %v1931
        %4047 = vmatpush1.msra.mxu0 %v1930
        %4048 = vmatprep.subr.mxu0 %v1939
        %4049 = vmatpush1.msra.mxu0 %v1938
        %4050 = vmatprep.subr.mxu0 %v1947
        %4051 = vmatpush1.msra.mxu0 %v1946
        %4052 = vmatprep.subr.mxu0 %v1955
        %4053 = vmatpush1.msra.mxu0 %v1954
        %4054 = vmatprep.subr.mxu0 %v1963
        %4055 = vmatpush1.msra.mxu0 %v1962
        %4056 = vmatprep.subr.mxu0 %v1971
        %4057 = vmatpush1.msra.mxu0 %v1970
        %4058 = vmatprep.subr.mxu0 %v1979
        %4059 = vmatpush1.msra.mxu0 %v1978
        %4060 = vmatprep.subr.mxu0 %v1987
        %4061 = vmatpush1.msra.mxu0 %v1986
        %4062 = vmatprep.subr.mxu0 %v1995
        %4063 = vmatpush1.msra.mxu0 %v1994
        %4064 = vmatprep.subr.mxu0 %v2003
        %4065 = vmatpush1.msra.mxu0 %v2002
        %4066 = vmatprep.subr.mxu0 %v2011
        %4067 = vmatpush1.msra.mxu0 %v2010
        %4068 = vmatprep.subr.mxu0 %v2019
        %4069 = vmatpush1.msra.mxu0 %v2018
        %4070 = vmatprep.subr.mxu0 %v2027
        %4071 = vmatpush1.msra.mxu0 %v2026
        %4072 = vmatprep.subr.mxu0 %v2035
        %4073 = vmatpush1.msra.mxu0 %v2034
        %4074 = vmatprep.subr.mxu0 %v2043
        %4075 = vmatpush1.msra.mxu0 %v2042
        %4076 = vmatprep.subr.mxu0 %v2051
        %4077 = vmatpush1.msra.mxu0 %v2050
        %4078 = vmatprep.subr.mxu0 %v2059
        %4079 = vmatpush1.msra.mxu0 %v2058
        %4080 = vmatprep.subr.mxu0 %v2067
        %4081 = vmatpush1.msra.mxu0 %v2066
        %4082 = vmatprep.subr.mxu0 %v2075
        %4083 = vmatpush1.msra.mxu0 %v2074
        %4084 = vmatprep.subr.mxu0 %v2083
        %4085 = vmatpush1.msra.mxu0 %v2082
        %4086 = vmatprep.subr.mxu0 %v2091
        %4087 = vmatpush1.msra.mxu0 %v2090
        %4088 = vmatprep.subr.mxu0 %v2099
        %4089 = vmatpush1.msra.mxu0 %v2098
        %4090 = vmatprep.subr.mxu0 %v2107
        %4091 = vmatpush1.msra.mxu0 %v2106
        %4092 = vmatprep.subr.mxu0 %v2115
        %4093 = vmatpush1.msra.mxu0 %v2114
        %4094 = vmatprep.subr.mxu0 %v2123
        %4095 = vmatpush1.msra.mxu0 %v2122
        %4096 = vmatprep.mubr.f32.mxu0 %v2452
        %4097 = vmatmul.mubr.f32.gmra.mrb[0].mxu0 %v2444
        %v4098 = vpop.f32.mrb[0].mxu0
        %v4099 = vadd.f32 %v4028, %v4098
        %v4100 = vpop.f32.mrb[0].mxu0
        %v4101 = vadd.f32 %v4030, %v4100
        %4102 = vdwg.mxu0
        %4103 = vmatprep.subr.mxu0 %v2131
        %4104 = vmatpush1.msra.mxu0 %v2130
        %4105 = vmatprep.subr.mxu0 %v2139
        %4106 = vmatpush1.msra.mxu0 %v2138
        %4107 = vmatprep.subr.mxu0 %v2147
        %4108 = vmatpush1.msra.mxu0 %v2146
        %4109 = vmatprep.subr.mxu0 %v2155
        %4110 = vmatpush1.msra.mxu0 %v2154
        %4111 = vmatprep.subr.mxu0 %v2163
        %4112 = vmatpush1.msra.mxu0 %v2162
        %4113 = vmatprep.subr.mxu0 %v2171
        %4114 = vmatpush1.msra.mxu0 %v2170
        %4115 = vmatprep.subr.mxu0 %v2179
        %4116 = vmatpush1.msra.mxu0 %v2178
        %4117 = vmatprep.subr.mxu0 %v2187
        %4118 = vmatpush1.msra.mxu0 %v2186
        %4119 = vmatprep.subr.mxu0 %v2195
        %4120 = vmatpush1.msra.mxu0 %v2194
        %4121 = vmatprep.subr.mxu0 %v2203
        %4122 = vmatpush1.msra.mxu0 %v2202
        %4123 = vmatprep.subr.mxu0 %v2211
        %4124 = vmatpush1.msra.mxu0 %v2210
        %4125 = vmatprep.subr.mxu0 %v2219
        %4126 = vmatpush1.msra.mxu0 %v2218
        %4127 = vmatprep.subr.mxu0 %v2227
        %4128 = vmatpush1.msra.mxu0 %v2226
        %4129 = vmatprep.subr.mxu0 %v2235
        %4130 = vmatpush1.msra.mxu0 %v2234
        %4131 = vmatprep.subr.mxu0 %v2243
        %4132 = vmatpush1.msra.mxu0 %v2242
        %4133 = vmatprep.subr.mxu0 %v2251
        %4134 = vmatpush1.msra.mxu0 %v2250
        %4135 = vmatprep.subr.mxu0 %v2259
        %4136 = vmatpush1.msra.mxu0 %v2258
        %4137 = vmatprep.subr.mxu0 %v2267
        %4138 = vmatpush1.msra.mxu0 %v2266
        %4139 = vmatprep.subr.mxu0 %v2275
        %4140 = vmatpush1.msra.mxu0 %v2274
        %4141 = vmatprep.subr.mxu0 %v2283
        %4142 = vmatpush1.msra.mxu0 %v2282
        %4143 = vmatprep.subr.mxu0 %v2291
        %4144 = vmatpush1.msra.mxu0 %v2290
        %4145 = vmatprep.subr.mxu0 %v2299
        %4146 = vmatpush1.msra.mxu0 %v2298
        %4147 = vmatprep.subr.mxu0 %v2307
        %4148 = vmatpush1.msra.mxu0 %v2306
        %4149 = vmatprep.subr.mxu0 %v2315
        %4150 = vmatpush1.msra.mxu0 %v2314
        %4151 = vmatprep.subr.mxu0 %v2323
        %4152 = vmatpush1.msra.mxu0 %v2322
        %4153 = vmatprep.subr.mxu0 %v2331
        %4154 = vmatpush1.msra.mxu0 %v2330
        %4155 = vmatprep.subr.mxu0 %v2339
        %4156 = vmatpush1.msra.mxu0 %v2338
        %4157 = vmatprep.subr.mxu0 %v2347
        %4158 = vmatpush1.msra.mxu0 %v2346
        %4159 = vmatprep.subr.mxu0 %v2355
        %4160 = vmatpush1.msra.mxu0 %v2354
        %4161 = vmatprep.subr.mxu0 %v2363
        %4162 = vmatpush1.msra.mxu0 %v2362
        %4163 = vmatprep.subr.mxu0 %v2371
        %4164 = vmatpush1.msra.mxu0 %v2370
        %4165 = vmatprep.subr.mxu0 %v2379
        %4166 = vmatpush1.msra.mxu0 %v2378
        %4167 = vmatprep.mubr.f32.mxu0 %v2453
        %4168 = vmatmul.mubr.f32.gmra.mrb[0].mxu0 %v2451
        %v4169 = vpop.f32.mrb[0].mxu0
        %v4170 = vadd.f32 %v4099, %v4169
        %v4171 = vpop.f32.mrb[0].mxu0
        %v4172 = vadd.f32 %v4101, %v4171
        %4173 = vdwg.mxu0
        %4174 = vmatprep.subr.mxu0 %v341
        %4175 = vmatpush1.msra.mxu0 %v340
        %4176 = vmatprep.subr.mxu0 %v349
        %4177 = vmatpush1.msra.mxu0 %v348
        %4178 = vmatprep.subr.mxu0 %v357
        %4179 = vmatpush1.msra.mxu0 %v356
        %4180 = vmatprep.subr.mxu0 %v365
        %4181 = vmatpush1.msra.mxu0 %v364
        %4182 = vmatprep.subr.mxu0 %v373
        %4183 = vmatpush1.msra.mxu0 %v372
        %4184 = vmatprep.subr.mxu0 %v381
        %4185 = vmatpush1.msra.mxu0 %v380
        %4186 = vmatprep.subr.mxu0 %v389
        %4187 = vmatpush1.msra.mxu0 %v388
        %4188 = vmatprep.subr.mxu0 %v397
        %4189 = vmatpush1.msra.mxu0 %v396
        %4190 = vmatprep.subr.mxu0 %v405
        %4191 = vmatpush1.msra.mxu0 %v404
        %4192 = vmatprep.subr.mxu0 %v413
        %4193 = vmatpush1.msra.mxu0 %v412
        %4194 = vmatprep.subr.mxu0 %v421
        %4195 = vmatpush1.msra.mxu0 %v420
        %4196 = vmatprep.subr.mxu0 %v429
        %4197 = vmatpush1.msra.mxu0 %v428
        %4198 = vmatprep.subr.mxu0 %v437
        %4199 = vmatpush1.msra.mxu0 %v436
        %4200 = vmatprep.subr.mxu0 %v445
        %4201 = vmatpush1.msra.mxu0 %v444
        %4202 = vmatprep.subr.mxu0 %v453
        %4203 = vmatpush1.msra.mxu0 %v452
        %4204 = vmatprep.subr.mxu0 %v461
        %4205 = vmatpush1.msra.mxu0 %v460
        %4206 = vmatprep.subr.mxu0 %v469
        %4207 = vmatpush1.msra.mxu0 %v468
        %4208 = vmatprep.subr.mxu0 %v477
        %4209 = vmatpush1.msra.mxu0 %v476
        %4210 = vmatprep.subr.mxu0 %v485
        %4211 = vmatpush1.msra.mxu0 %v484
        %4212 = vmatprep.subr.mxu0 %v493
        %4213 = vmatpush1.msra.mxu0 %v492
        %4214 = vmatprep.subr.mxu0 %v501
        %4215 = vmatpush1.msra.mxu0 %v500
        %4216 = vmatprep.subr.mxu0 %v509
        %4217 = vmatpush1.msra.mxu0 %v508
        %4218 = vmatprep.subr.mxu0 %v517
        %4219 = vmatpush1.msra.mxu0 %v516
        %4220 = vmatprep.subr.mxu0 %v525
        %4221 = vmatpush1.msra.mxu0 %v524
        %4222 = vmatprep.subr.mxu0 %v533
        %4223 = vmatpush1.msra.mxu0 %v532
        %4224 = vmatprep.subr.mxu0 %v541
        %4225 = vmatpush1.msra.mxu0 %v540
        %4226 = vmatprep.subr.mxu0 %v549
        %4227 = vmatpush1.msra.mxu0 %v548
        %4228 = vmatprep.subr.mxu0 %v557
        %4229 = vmatpush1.msra.mxu0 %v556
        %4230 = vmatprep.subr.mxu0 %v565
        %4231 = vmatpush1.msra.mxu0 %v564
        %4232 = vmatprep.subr.mxu0 %v573
        %4233 = vmatpush1.msra.mxu0 %v572
        %4234 = vmatprep.subr.mxu0 %v581
        %4235 = vmatpush1.msra.mxu0 %v580
        %4236 = vmatprep.subr.mxu0 %v589
        %4237 = vmatpush1.msra.mxu0 %v588
        %4238 = vmatprep.mubr.f32.mxu0 %v2401
        %4239 = vmatmul.mubr.f32.gmra.mrb[0].mxu0 %v2393
        %v4240 = vpop.f32.mrb[0].mxu0
        %v4241 = vadd.f32 0.0, %v4240
        %v4242 = vpop.f32.mrb[0].mxu0
        %v4243 = vadd.f32 0.0, %v4242
        %4244 = vdwg.mxu0
        %4245 = vmatprep.subr.mxu0 %v597
        %4246 = vmatpush1.msra.mxu0 %v596
        %4247 = vmatprep.subr.mxu0 %v605
        %4248 = vmatpush1.msra.mxu0 %v604
        %4249 = vmatprep.subr.mxu0 %v613
        %4250 = vmatpush1.msra.mxu0 %v612
        %4251 = vmatprep.subr.mxu0 %v621
        %4252 = vmatpush1.msra.mxu0 %v620
        %4253 = vmatprep.subr.mxu0 %v629
        %4254 = vmatpush1.msra.mxu0 %v628
        %4255 = vmatprep.subr.mxu0 %v637
        %4256 = vmatpush1.msra.mxu0 %v636
        %4257 = vmatprep.subr.mxu0 %v645
        %4258 = vmatpush1.msra.mxu0 %v644
        %4259 = vmatprep.subr.mxu0 %v653
        %4260 = vmatpush1.msra.mxu0 %v652
        %4261 = vmatprep.subr.mxu0 %v661
        %4262 = vmatpush1.msra.mxu0 %v660
        %4263 = vmatprep.subr.mxu0 %v669
        %4264 = vmatpush1.msra.mxu0 %v668
        %4265 = vmatprep.subr.mxu0 %v677
        %4266 = vmatpush1.msra.mxu0 %v676
        %4267 = vmatprep.subr.mxu0 %v685
        %4268 = vmatpush1.msra.mxu0 %v684
        %4269 = vmatprep.subr.mxu0 %v693
        %4270 = vmatpush1.msra.mxu0 %v692
        %4271 = vmatprep.subr.mxu0 %v701
        %4272 = vmatpush1.msra.mxu0 %v700
        %4273 = vmatprep.subr.mxu0 %v709
        %4274 = vmatpush1.msra.mxu0 %v708
        %4275 = vmatprep.subr.mxu0 %v717
        %4276 = vmatpush1.msra.mxu0 %v716
        %4277 = vmatprep.subr.mxu0 %v725
        %4278 = vmatpush1.msra.mxu0 %v724
        %4279 = vmatprep.subr.mxu0 %v733
        %4280 = vmatpush1.msra.mxu0 %v732
        %4281 = vmatprep.subr.mxu0 %v741
        %4282 = vmatpush1.msra.mxu0 %v740
        %4283 = vmatprep.subr.mxu0 %v749
        %4284 = vmatpush1.msra.mxu0 %v748
        %4285 = vmatprep.subr.mxu0 %v757
        %4286 = vmatpush1.msra.mxu0 %v756
        %4287 = vmatprep.subr.mxu0 %v765
        %4288 = vmatpush1.msra.mxu0 %v764
        %4289 = vmatprep.subr.mxu0 %v773
        %4290 = vmatpush1.msra.mxu0 %v772
        %4291 = vmatprep.subr.mxu0 %v781
        %4292 = vmatpush1.msra.mxu0 %v780
        %4293 = vmatprep.subr.mxu0 %v789
        %4294 = vmatpush1.msra.mxu0 %v788
        %4295 = vmatprep.subr.mxu0 %v797
        %4296 = vmatpush1.msra.mxu0 %v796
        %4297 = vmatprep.subr.mxu0 %v805
        %4298 = vmatpush1.msra.mxu0 %v804
        %4299 = vmatprep.subr.mxu0 %v813
        %4300 = vmatpush1.msra.mxu0 %v812
        %4301 = vmatprep.subr.mxu0 %v821
        %4302 = vmatpush1.msra.mxu0 %v820
        %4303 = vmatprep.subr.mxu0 %v829
        %4304 = vmatpush1.msra.mxu0 %v828
        %4305 = vmatprep.subr.mxu0 %v837
        %4306 = vmatpush1.msra.mxu0 %v836
        %4307 = vmatprep.subr.mxu0 %v845
        %4308 = vmatpush1.msra.mxu0 %v844
        %4309 = vmatprep.mubr.f32.mxu0 %v2402
        %4310 = vmatmul.mubr.f32.gmra.mrb[0].mxu0 %v2400
        %v4311 = vpop.f32.mrb[0].mxu0
        %v4312 = vadd.f32 %v4241, %v4311
        %v4313 = vpop.f32.mrb[0].mxu0
        %v4314 = vadd.f32 %v4243, %v4313
        %4315 = vdwg.mxu0
        %4316 = vmatprep.subr.mxu0 %v853
        %4317 = vmatpush1.msra.mxu0 %v852
        %4318 = vmatprep.subr.mxu0 %v861
        %4319 = vmatpush1.msra.mxu0 %v860
        %4320 = vmatprep.subr.mxu0 %v869
        %4321 = vmatpush1.msra.mxu0 %v868
        %4322 = vmatprep.subr.mxu0 %v877
        %4323 = vmatpush1.msra.mxu0 %v876
        %4324 = vmatprep.subr.mxu0 %v885
        %4325 = vmatpush1.msra.mxu0 %v884
        %4326 = vmatprep.subr.mxu0 %v893
        %4327 = vmatpush1.msra.mxu0 %v892
        %4328 = vmatprep.subr.mxu0 %v901
        %4329 = vmatpush1.msra.mxu0 %v900
        %4330 = vmatprep.subr.mxu0 %v909
        %4331 = vmatpush1.msra.mxu0 %v908
        %4332 = vmatprep.subr.mxu0 %v917
        %4333 = vmatpush1.msra.mxu0 %v916
        %4334 = vmatprep.subr.mxu0 %v925
        %4335 = vmatpush1.msra.mxu0 %v924
        %4336 = vmatprep.subr.mxu0 %v933
        %4337 = vmatpush1.msra.mxu0 %v932
        %4338 = vmatprep.subr.mxu0 %v941
        %4339 = vmatpush1.msra.mxu0 %v940
        %4340 = vmatprep.subr.mxu0 %v949
        %4341 = vmatpush1.msra.mxu0 %v948
        %4342 = vmatprep.subr.mxu0 %v957
        %4343 = vmatpush1.msra.mxu0 %v956
        %4344 = vmatprep.subr.mxu0 %v965
        %4345 = vmatpush1.msra.mxu0 %v964
        %4346 = vmatprep.subr.mxu0 %v973
        %4347 = vmatpush1.msra.mxu0 %v972
        %4348 = vmatprep.subr.mxu0 %v981
        %4349 = vmatpush1.msra.mxu0 %v980
        %4350 = vmatprep.subr.mxu0 %v989
        %4351 = vmatpush1.msra.mxu0 %v988
        %4352 = vmatprep.subr.mxu0 %v997
        %4353 = vmatpush1.msra.mxu0 %v996
        %4354 = vmatprep.subr.mxu0 %v1005
        %4355 = vmatpush1.msra.mxu0 %v1004
        %4356 = vmatprep.subr.mxu0 %v1013
        %4357 = vmatpush1.msra.mxu0 %v1012
        %4358 = vmatprep.subr.mxu0 %v1021
        %4359 = vmatpush1.msra.mxu0 %v1020
        %4360 = vmatprep.subr.mxu0 %v1029
        %4361 = vmatpush1.msra.mxu0 %v1028
        %4362 = vmatprep.subr.mxu0 %v1037
        %4363 = vmatpush1.msra.mxu0 %v1036
        %4364 = vmatprep.subr.mxu0 %v1045
        %4365 = vmatpush1.msra.mxu0 %v1044
        %4366 = vmatprep.subr.mxu0 %v1053
        %4367 = vmatpush1.msra.mxu0 %v1052
        %4368 = vmatprep.subr.mxu0 %v1061
        %4369 = vmatpush1.msra.mxu0 %v1060
        %4370 = vmatprep.subr.mxu0 %v1069
        %4371 = vmatpush1.msra.mxu0 %v1068
        %4372 = vmatprep.subr.mxu0 %v1077
        %4373 = vmatpush1.msra.mxu0 %v1076
        %4374 = vmatprep.subr.mxu0 %v1085
        %4375 = vmatpush1.msra.mxu0 %v1084
        %4376 = vmatprep.subr.mxu0 %v1093
        %4377 = vmatpush1.msra.mxu0 %v1092
        %4378 = vmatprep.subr.mxu0 %v1101
        %4379 = vmatpush1.msra.mxu0 %v1100
        %4380 = vmatprep.mubr.f32.mxu0 %v2418
        %4381 = vmatmul.mubr.f32.gmra.mrb[0].mxu0 %v2410
        %v4382 = vpop.f32.mrb[0].mxu0
        %v4383 = vadd.f32 %v4312, %v4382
        %v4384 = vpop.f32.mrb[0].mxu0
        %v4385 = vadd.f32 %v4314, %v4384
        %4386 = vdwg.mxu0
        %4387 = vmatprep.subr.mxu0 %v1109
        %4388 = vmatpush1.msra.mxu0 %v1108
        %4389 = vmatprep.subr.mxu0 %v1117
        %4390 = vmatpush1.msra.mxu0 %v1116
        %4391 = vmatprep.subr.mxu0 %v1125
        %4392 = vmatpush1.msra.mxu0 %v1124
        %4393 = vmatprep.subr.mxu0 %v1133
        %4394 = vmatpush1.msra.mxu0 %v1132
        %4395 = vmatprep.subr.mxu0 %v1141
        %4396 = vmatpush1.msra.mxu0 %v1140
        %4397 = vmatprep.subr.mxu0 %v1149
        %4398 = vmatpush1.msra.mxu0 %v1148
        %4399 = vmatprep.subr.mxu0 %v1157
        %4400 = vmatpush1.msra.mxu0 %v1156
        %4401 = vmatprep.subr.mxu0 %v1165
        %4402 = vmatpush1.msra.mxu0 %v1164
        %4403 = vmatprep.subr.mxu0 %v1173
        %4404 = vmatpush1.msra.mxu0 %v1172
        %4405 = vmatprep.subr.mxu0 %v1181
        %4406 = vmatpush1.msra.mxu0 %v1180
        %4407 = vmatprep.subr.mxu0 %v1189
        %4408 = vmatpush1.msra.mxu0 %v1188
        %4409 = vmatprep.subr.mxu0 %v1197
        %4410 = vmatpush1.msra.mxu0 %v1196
        %4411 = vmatprep.subr.mxu0 %v1205
        %4412 = vmatpush1.msra.mxu0 %v1204
        %4413 = vmatprep.subr.mxu0 %v1213
        %4414 = vmatpush1.msra.mxu0 %v1212
        %4415 = vmatprep.subr.mxu0 %v1221
        %4416 = vmatpush1.msra.mxu0 %v1220
        %4417 = vmatprep.subr.mxu0 %v1229
        %4418 = vmatpush1.msra.mxu0 %v1228
        %4419 = vmatprep.subr.mxu0 %v1237
        %4420 = vmatpush1.msra.mxu0 %v1236
        %4421 = vmatprep.subr.mxu0 %v1245
        %4422 = vmatpush1.msra.mxu0 %v1244
        %4423 = vmatprep.subr.mxu0 %v1253
        %4424 = vmatpush1.msra.mxu0 %v1252
        %4425 = vmatprep.subr.mxu0 %v1261
        %4426 = vmatpush1.msra.mxu0 %v1260
        %4427 = vmatprep.subr.mxu0 %v1269
        %4428 = vmatpush1.msra.mxu0 %v1268
        %4429 = vmatprep.subr.mxu0 %v1277
        %4430 = vmatpush1.msra.mxu0 %v1276
        %4431 = vmatprep.subr.mxu0 %v1285
        %4432 = vmatpush1.msra.mxu0 %v1284
        %4433 = vmatprep.subr.mxu0 %v1293
        %4434 = vmatpush1.msra.mxu0 %v1292
        %4435 = vmatprep.subr.mxu0 %v1301
        %4436 = vmatpush1.msra.mxu0 %v1300
        %4437 = vmatprep.subr.mxu0 %v1309
        %4438 = vmatpush1.msra.mxu0 %v1308
        %4439 = vmatprep.subr.mxu0 %v1317
        %4440 = vmatpush1.msra.mxu0 %v1316
        %4441 = vmatprep.subr.mxu0 %v1325
        %4442 = vmatpush1.msra.mxu0 %v1324
        %4443 = vmatprep.subr.mxu0 %v1333
        %4444 = vmatpush1.msra.mxu0 %v1332
        %4445 = vmatprep.subr.mxu0 %v1341
        %4446 = vmatpush1.msra.mxu0 %v1340
        %4447 = vmatprep.subr.mxu0 %v1349
        %4448 = vmatpush1.msra.mxu0 %v1348
        %4449 = vmatprep.subr.mxu0 %v1357
        %4450 = vmatpush1.msra.mxu0 %v1356
        %4451 = vmatprep.mubr.f32.mxu0 %v2419
        %4452 = vmatmul.mubr.f32.gmra.mrb[0].mxu0 %v2417
        %v4453 = vpop.f32.mrb[0].mxu0
        %v4454 = vadd.f32 %v4383, %v4453
        %v4455 = vpop.f32.mrb[0].mxu0
        %v4456 = vadd.f32 %v4385, %v4455
        %4457 = vdwg.mxu0
        %4458 = vmatprep.subr.mxu0 %v1365
        %4459 = vmatpush1.msra.mxu0 %v1364
        %4460 = vmatprep.subr.mxu0 %v1373
        %4461 = vmatpush1.msra.mxu0 %v1372
        %4462 = vmatprep.subr.mxu0 %v1381
        %4463 = vmatpush1.msra.mxu0 %v1380
        %4464 = vmatprep.subr.mxu0 %v1389
        %4465 = vmatpush1.msra.mxu0 %v1388
        %4466 = vmatprep.subr.mxu0 %v1397
        %4467 = vmatpush1.msra.mxu0 %v1396
        %4468 = vmatprep.subr.mxu0 %v1405
        %4469 = vmatpush1.msra.mxu0 %v1404
        %4470 = vmatprep.subr.mxu0 %v1413
        %4471 = vmatpush1.msra.mxu0 %v1412
        %4472 = vmatprep.subr.mxu0 %v1421
        %4473 = vmatpush1.msra.mxu0 %v1420
        %4474 = vmatprep.subr.mxu0 %v1429
        %4475 = vmatpush1.msra.mxu0 %v1428
        %4476 = vmatprep.subr.mxu0 %v1437
        %4477 = vmatpush1.msra.mxu0 %v1436
        %4478 = vmatprep.subr.mxu0 %v1445
        %4479 = vmatpush1.msra.mxu0 %v1444
        %4480 = vmatprep.subr.mxu0 %v1453
        %4481 = vmatpush1.msra.mxu0 %v1452
        %4482 = vmatprep.subr.mxu0 %v1461
        %4483 = vmatpush1.msra.mxu0 %v1460
        %4484 = vmatprep.subr.mxu0 %v1469
        %4485 = vmatpush1.msra.mxu0 %v1468
        %4486 = vmatprep.subr.mxu0 %v1477
        %4487 = vmatpush1.msra.mxu0 %v1476
        %4488 = vmatprep.subr.mxu0 %v1485
        %4489 = vmatpush1.msra.mxu0 %v1484
        %4490 = vmatprep.subr.mxu0 %v1493
        %4491 = vmatpush1.msra.mxu0 %v1492
        %4492 = vmatprep.subr.mxu0 %v1501
        %4493 = vmatpush1.msra.mxu0 %v1500
        %4494 = vmatprep.subr.mxu0 %v1509
        %4495 = vmatpush1.msra.mxu0 %v1508
        %4496 = vmatprep.subr.mxu0 %v1517
        %4497 = vmatpush1.msra.mxu0 %v1516
        %4498 = vmatprep.subr.mxu0 %v1525
        %4499 = vmatpush1.msra.mxu0 %v1524
        %4500 = vmatprep.subr.mxu0 %v1533
        %4501 = vmatpush1.msra.mxu0 %v1532
        %4502 = vmatprep.subr.mxu0 %v1541
        %4503 = vmatpush1.msra.mxu0 %v1540
        %4504 = vmatprep.subr.mxu0 %v1549
        %4505 = vmatpush1.msra.mxu0 %v1548
        %4506 = vmatprep.subr.mxu0 %v1557
        %4507 = vmatpush1.msra.mxu0 %v1556
        %4508 = vmatprep.subr.mxu0 %v1565
        %4509 = vmatpush1.msra.mxu0 %v1564
        %4510 = vmatprep.subr.mxu0 %v1573
        %4511 = vmatpush1.msra.mxu0 %v1572
        %4512 = vmatprep.subr.mxu0 %v1581
        %4513 = vmatpush1.msra.mxu0 %v1580
        %4514 = vmatprep.subr.mxu0 %v1589
        %4515 = vmatpush1.msra.mxu0 %v1588
        %4516 = vmatprep.subr.mxu0 %v1597
        %4517 = vmatpush1.msra.mxu0 %v1596
        %4518 = vmatprep.subr.mxu0 %v1605
        %4519 = vmatpush1.msra.mxu0 %v1604
        %4520 = vmatprep.subr.mxu0 %v1613
        %4521 = vmatpush1.msra.mxu0 %v1612
        %4522 = vmatprep.mubr.f32.mxu0 %v2435
        %4523 = vmatmul.mubr.f32.gmra.mrb[0].mxu0 %v2427
        %v4524 = vpop.f32.mrb[0].mxu0
        %v4525 = vadd.f32 %v4454, %v4524
        %v4526 = vpop.f32.mrb[0].mxu0
        %v4527 = vadd.f32 %v4456, %v4526
        %4528 = vdwg.mxu0
        %4529 = vmatprep.subr.mxu0 %v1621
        %4530 = vmatpush1.msra.mxu0 %v1620
        %4531 = vmatprep.subr.mxu0 %v1629
        %4532 = vmatpush1.msra.mxu0 %v1628
        %4533 = vmatprep.subr.mxu0 %v1637
        %4534 = vmatpush1.msra.mxu0 %v1636
        %4535 = vmatprep.subr.mxu0 %v1645
        %4536 = vmatpush1.msra.mxu0 %v1644
        %4537 = vmatprep.subr.mxu0 %v1653
        %4538 = vmatpush1.msra.mxu0 %v1652
        %4539 = vmatprep.subr.mxu0 %v1661
        %4540 = vmatpush1.msra.mxu0 %v1660
        %4541 = vmatprep.subr.mxu0 %v1669
        %4542 = vmatpush1.msra.mxu0 %v1668
        %4543 = vmatprep.subr.mxu0 %v1677
        %4544 = vmatpush1.msra.mxu0 %v1676
        %4545 = vmatprep.subr.mxu0 %v1685
        %4546 = vmatpush1.msra.mxu0 %v1684
        %4547 = vmatprep.subr.mxu0 %v1693
        %4548 = vmatpush1.msra.mxu0 %v1692
        %4549 = vmatprep.subr.mxu0 %v1701
        %4550 = vmatpush1.msra.mxu0 %v1700
        %4551 = vmatprep.subr.mxu0 %v1709
        %4552 = vmatpush1.msra.mxu0 %v1708
        %4553 = vmatprep.subr.mxu0 %v1717
        %4554 = vmatpush1.msra.mxu0 %v1716
        %4555 = vmatprep.subr.mxu0 %v1725
        %4556 = vmatpush1.msra.mxu0 %v1724
        %4557 = vmatprep.subr.mxu0 %v1733
        %4558 = vmatpush1.msra.mxu0 %v1732
        %4559 = vmatprep.subr.mxu0 %v1741
        %4560 = vmatpush1.msra.mxu0 %v1740
        %4561 = vmatprep.subr.mxu0 %v1749
        %4562 = vmatpush1.msra.mxu0 %v1748
        %4563 = vmatprep.subr.mxu0 %v1757
        %4564 = vmatpush1.msra.mxu0 %v1756
        %4565 = vmatprep.subr.mxu0 %v1765
        %4566 = vmatpush1.msra.mxu0 %v1764
        %4567 = vmatprep.subr.mxu0 %v1773
        %4568 = vmatpush1.msra.mxu0 %v1772
        %4569 = vmatprep.subr.mxu0 %v1781
        %4570 = vmatpush1.msra.mxu0 %v1780
        %4571 = vmatprep.subr.mxu0 %v1789
        %4572 = vmatpush1.msra.mxu0 %v1788
        %4573 = vmatprep.subr.mxu0 %v1797
        %4574 = vmatpush1.msra.mxu0 %v1796
        %4575 = vmatprep.subr.mxu0 %v1805
        %4576 = vmatpush1.msra.mxu0 %v1804
        %4577 = vmatprep.subr.mxu0 %v1813
        %4578 = vmatpush1.msra.mxu0 %v1812
        %4579 = vmatprep.subr.mxu0 %v1821
        %4580 = vmatpush1.msra.mxu0 %v1820
        %4581 = vmatprep.subr.mxu0 %v1829
        %4582 = vmatpush1.msra.mxu0 %v1828
        %4583 = vmatprep.subr.mxu0 %v1837
        %4584 = vmatpush1.msra.mxu0 %v1836
        %4585 = vmatprep.subr.mxu0 %v1845
        %4586 = vmatpush1.msra.mxu0 %v1844
        %4587 = vmatprep.subr.mxu0 %v1853
        %4588 = vmatpush1.msra.mxu0 %v1852
        %4589 = vmatprep.subr.mxu0 %v1861
        %4590 = vmatpush1.msra.mxu0 %v1860
        %4591 = vmatprep.subr.mxu0 %v1869
        %4592 = vmatpush1.msra.mxu0 %v1868
        %4593 = vmatprep.mubr.f32.mxu0 %v2436
        %4594 = vmatmul.mubr.f32.gmra.mrb[0].mxu0 %v2434
        %v4595 = vpop.f32.mrb[0].mxu0
        %v4596 = vadd.f32 %v4525, %v4595
        %v4597 = vpop.f32.mrb[0].mxu0
        %v4598 = vadd.f32 %v4527, %v4597
        %4599 = vdwg.mxu0
        %4600 = vmatprep.subr.mxu0 %v1877
        %4601 = vmatpush1.msra.mxu0 %v1876
        %4602 = vmatprep.subr.mxu0 %v1885
        %4603 = vmatpush1.msra.mxu0 %v1884
        %4604 = vmatprep.subr.mxu0 %v1893
        %4605 = vmatpush1.msra.mxu0 %v1892
        %4606 = vmatprep.subr.mxu0 %v1901
        %4607 = vmatpush1.msra.mxu0 %v1900
        %4608 = vmatprep.subr.mxu0 %v1909
        %4609 = vmatpush1.msra.mxu0 %v1908
        %4610 = vmatprep.subr.mxu0 %v1917
        %4611 = vmatpush1.msra.mxu0 %v1916
        %4612 = vmatprep.subr.mxu0 %v1925
        %4613 = vmatpush1.msra.mxu0 %v1924
        %4614 = vmatprep.subr.mxu0 %v1933
        %4615 = vmatpush1.msra.mxu0 %v1932
        %4616 = vmatprep.subr.mxu0 %v1941
        %4617 = vmatpush1.msra.mxu0 %v1940
        %4618 = vmatprep.subr.mxu0 %v1949
        %4619 = vmatpush1.msra.mxu0 %v1948
        %4620 = vmatprep.subr.mxu0 %v1957
        %4621 = vmatpush1.msra.mxu0 %v1956
        %4622 = vmatprep.subr.mxu0 %v1965
        %4623 = vmatpush1.msra.mxu0 %v1964
        %4624 = vmatprep.subr.mxu0 %v1973
        %4625 = vmatpush1.msra.mxu0 %v1972
        %4626 = vmatprep.subr.mxu0 %v1981
        %4627 = vmatpush1.msra.mxu0 %v1980
        %4628 = vmatprep.subr.mxu0 %v1989
        %4629 = vmatpush1.msra.mxu0 %v1988
        %4630 = vmatprep.subr.mxu0 %v1997
        %4631 = vmatpush1.msra.mxu0 %v1996
        %4632 = vmatprep.subr.mxu0 %v2005
        %4633 = vmatpush1.msra.mxu0 %v2004
        %4634 = vmatprep.subr.mxu0 %v2013
        %4635 = vmatpush1.msra.mxu0 %v2012
        %4636 = vmatprep.subr.mxu0 %v2021
        %4637 = vmatpush1.msra.mxu0 %v2020
        %4638 = vmatprep.subr.mxu0 %v2029
        %4639 = vmatpush1.msra.mxu0 %v2028
        %4640 = vmatprep.subr.mxu0 %v2037
        %4641 = vmatpush1.msra.mxu0 %v2036
        %4642 = vmatprep.subr.mxu0 %v2045
        %4643 = vmatpush1.msra.mxu0 %v2044
        %4644 = vmatprep.subr.mxu0 %v2053
        %4645 = vmatpush1.msra.mxu0 %v2052
        %4646 = vmatprep.subr.mxu0 %v2061
        %4647 = vmatpush1.msra.mxu0 %v2060
        %4648 = vmatprep.subr.mxu0 %v2069
        %4649 = vmatpush1.msra.mxu0 %v2068
        %4650 = vmatprep.subr.mxu0 %v2077
        %4651 = vmatpush1.msra.mxu0 %v2076
        %4652 = vmatprep.subr.mxu0 %v2085
        %4653 = vmatpush1.msra.mxu0 %v2084
        %4654 = vmatprep.subr.mxu0 %v2093
        %4655 = vmatpush1.msra.mxu0 %v2092
        %4656 = vmatprep.subr.mxu0 %v2101
        %4657 = vmatpush1.msra.mxu0 %v2100
        %4658 = vmatprep.subr.mxu0 %v2109
        %4659 = vmatpush1.msra.mxu0 %v2108
        %4660 = vmatprep.subr.mxu0 %v2117
        %4661 = vmatpush1.msra.mxu0 %v2116
        %4662 = vmatprep.subr.mxu0 %v2125
        %4663 = vmatpush1.msra.mxu0 %v2124
        %4664 = vmatprep.mubr.f32.mxu0 %v2452
        %4665 = vmatmul.mubr.f32.gmra.mrb[0].mxu0 %v2444
        %v4666 = vpop.f32.mrb[0].mxu0
        %v4667 = vadd.f32 %v4596, %v4666
        %v4668 = vpop.f32.mrb[0].mxu0
        %v4669 = vadd.f32 %v4598, %v4668
        %4670 = vdwg.mxu0
        %4671 = vmatprep.subr.mxu0 %v2133
        %4672 = vmatpush1.msra.mxu0 %v2132
        %4673 = vmatprep.subr.mxu0 %v2141
        %4674 = vmatpush1.msra.mxu0 %v2140
        %4675 = vmatprep.subr.mxu0 %v2149
        %4676 = vmatpush1.msra.mxu0 %v2148
        %4677 = vmatprep.subr.mxu0 %v2157
        %4678 = vmatpush1.msra.mxu0 %v2156
        %4679 = vmatprep.subr.mxu0 %v2165
        %4680 = vmatpush1.msra.mxu0 %v2164
        %4681 = vmatprep.subr.mxu0 %v2173
        %4682 = vmatpush1.msra.mxu0 %v2172
        %4683 = vmatprep.subr.mxu0 %v2181
        %4684 = vmatpush1.msra.mxu0 %v2180
        %4685 = vmatprep.subr.mxu0 %v2189
        %4686 = vmatpush1.msra.mxu0 %v2188
        %4687 = vmatprep.subr.mxu0 %v2197
        %4688 = vmatpush1.msra.mxu0 %v2196
        %4689 = vmatprep.subr.mxu0 %v2205
        %4690 = vmatpush1.msra.mxu0 %v2204
        %4691 = vmatprep.subr.mxu0 %v2213
        %4692 = vmatpush1.msra.mxu0 %v2212
        %4693 = vmatprep.subr.mxu0 %v2221
        %4694 = vmatpush1.msra.mxu0 %v2220
        %4695 = vmatprep.subr.mxu0 %v2229
        %4696 = vmatpush1.msra.mxu0 %v2228
        %4697 = vmatprep.subr.mxu0 %v2237
        %4698 = vmatpush1.msra.mxu0 %v2236
        %4699 = vmatprep.subr.mxu0 %v2245
        %4700 = vmatpush1.msra.mxu0 %v2244
        %4701 = vmatprep.subr.mxu0 %v2253
        %4702 = vmatpush1.msra.mxu0 %v2252
        %4703 = vmatprep.subr.mxu0 %v2261
        %4704 = vmatpush1.msra.mxu0 %v2260
        %4705 = vmatprep.subr.mxu0 %v2269
        %4706 = vmatpush1.msra.mxu0 %v2268
        %4707 = vmatprep.subr.mxu0 %v2277
        %4708 = vmatpush1.msra.mxu0 %v2276
        %4709 = vmatprep.subr.mxu0 %v2285
        %4710 = vmatpush1.msra.mxu0 %v2284
        %4711 = vmatprep.subr.mxu0 %v2293
        %4712 = vmatpush1.msra.mxu0 %v2292
        %4713 = vmatprep.subr.mxu0 %v2301
        %4714 = vmatpush1.msra.mxu0 %v2300
        %4715 = vmatprep.subr.mxu0 %v2309
        %4716 = vmatpush1.msra.mxu0 %v2308
        %4717 = vmatprep.subr.mxu0 %v2317
        %4718 = vmatpush1.msra.mxu0 %v2316
        %4719 = vmatprep.subr.mxu0 %v2325
        %4720 = vmatpush1.msra.mxu0 %v2324
        %4721 = vmatprep.subr.mxu0 %v2333
        %4722 = vmatpush1.msra.mxu0 %v2332
        %4723 = vmatprep.subr.mxu0 %v2341
        %4724 = vmatpush1.msra.mxu0 %v2340
        %4725 = vmatprep.subr.mxu0 %v2349
        %4726 = vmatpush1.msra.mxu0 %v2348
        %4727 = vmatprep.subr.mxu0 %v2357
        %4728 = vmatpush1.msra.mxu0 %v2356
        %4729 = vmatprep.subr.mxu0 %v2365
        %4730 = vmatpush1.msra.mxu0 %v2364
        %4731 = vmatprep.subr.mxu0 %v2373
        %4732 = vmatpush1.msra.mxu0 %v2372
        %4733 = vmatprep.subr.mxu0 %v2381
        %4734 = vmatpush1.msra.mxu0 %v2380
        %4735 = vmatprep.mubr.f32.mxu0 %v2453
        %4736 = vmatmul.mubr.f32.gmra.mrb[0].mxu0 %v2451
        %v4737 = vpop.f32.mrb[0].mxu0
        %v4738 = vadd.f32 %v4667, %v4737
        %v4739 = vpop.f32.mrb[0].mxu0
        %v4740 = vadd.f32 %v4669, %v4739
        %4741 = vdwg.mxu0
        %v4750 = vcombine.low %v3034, %v3036
        %v4751 = vcombine.low %v3602, %v3604
        %v4753 = vunpack.c.l.s4 1983009808
        %v4754 = vunpack.c.0.s8 %v4753
        %v4755 = vlaneseq
        %v4756 = vshrl.u32 %v4755, 7
        %v4757 = vsub.s32 %v4754, %v4756
        %v4758 = vrot.slane %v4750, %v4757
        %v4760 = vunpack.c.l.s4 1983009808
        %v4761 = vunpack.c.0.s8 %v4760
        %v4762 = vlaneseq
        %v4763 = vshrl.u32 %v4762, 7
        %v4764 = vsub.s32 %v4761, %v4763
        %v4765 = vrot.slane %v4751, %v4764
        %v4766 = vcombine.low %v4758, %v4765
        %v4767 = vcombine.low %v4170, %v4172
        %v4768 = vcombine.low %v4738, %v4740
        %v4770 = vunpack.c.l.s4 1983009808
        %v4771 = vunpack.c.0.s8 %v4770
        %v4772 = vlaneseq
        %v4773 = vshrl.u32 %v4772, 7
        %v4774 = vsub.s32 %v4771, %v4773
        %v4775 = vrot.slane %v4767, %v4774
        %v4777 = vunpack.c.l.s4 1983009808
        %v4778 = vunpack.c.0.s8 %v4777
        %v4779 = vlaneseq
        %v4780 = vshrl.u32 %v4779, 7
        %v4781 = vsub.s32 %v4778, %v4780
        %v4782 = vrot.slane %v4768, %v4781
        %v4783 = vcombine.low %v4775, %v4782
        %v4786 = vadd.f32 %v328, %v4766
        %v4787 = vadd.f32 %v329, %v4783
        %4788 = vst [vmem:[%s250] sm:$0xff] %v4786
        %4789 = vst [vmem:[%s250 + $0x8] sm:$0xff] %v4787
        %s4790 = smul.u32 8, %s21
        %p4791 = scmp.lt.s32.totalorder %s4790, 15
        %s4792 = scalar_select %p4791, %s4790, 15
        %s4793 = smul.addr %s4792, 2
        %s4794 = scalar_lea.vmem %s3, %s4793
        // Predicated region
        $region41: #{net_lstm_forward.6} parent=31 // pred_check
          %p4795 = pneg %p127
        $region42: #{net_lstm_forward.6} parent=31 // pred_check_branch
          %4797 = sbr.rel (%p4795) target = $region44
        $region43: #{net_lstm_forward.6} parent=31 // pred_region
          %s4798 = smul.u32 8, %s21
        $region44: #{net_lstm_forward.6} parent=31 // pred_fallthru
          _
      $region32: #{net_lstm_forward.6} parent=5 // pred_fallthru
        _
      %p4799 = scmp.le.s32.totalorder 2, %s12
      // Predicated region
      $region45: #{net_lstm_forward.6} parent=5 // pred_check
        %p4800 = pneg %p4799
      $region46: #{net_lstm_forward.6} parent=5 // pred_check_branch
        %4802 = sbr.rel (%p4800) target = $region48
      $region47: #{net_lstm_forward.6} parent=5 // pred_region
        %s4803 = ssub.s32 %s12, 2
        // Predicated region
        $region49: #{net_lstm_forward.6} parent=47 // pred_check
          %p4804 = pneg %p133
        $region50: #{net_lstm_forward.6} parent=47 // pred_check_branch
          %4806 = sbr.rel (%p4804) target = $region52
        $region51: #{net_lstm_forward.6} parent=47 // pred_region
          %s4807 = smul.u32 8, %s23
          %p4808 = scmp.lt.s32.totalorder %s4807, 15
          %s4809 = scalar_select %p4808, %s4807, 15
          %s4810 = smul.addr %s4809, 2
          %s4811 = scalar_lea.vmem %s3, %s4810
        $region52: #{net_lstm_forward.6} parent=47 // pred_fallthru
          _
      $region48: #{net_lstm_forward.6} parent=5 // pred_fallthru
        _
    $region6: #{net_lstm_forward.6} parent=1 // loop_footer
      %s16 = sadd.s32 1, %s12
    $region7: #{net_lstm_forward.6} parent=1 // loop_footer_branch
      %11 = sbr.rel target = $region3
    $region8: #{net_lstm_forward.6} parent=1 // loop_exit
      _
    %4812 = vsyncpa [#allocation3], 1
    %s4813 = scalar_lea.sflag [#allocation3], 1
    %4814 = vsyncpa %s4813, 1

// kernel: net_lstm_forward.7
$region0: #{net_lstm_forward.7}
  #allocation0 [shape = 'u32[]', space=smem, size = 0x4, offset = 0x4, fixed_abs, tag = 'smem constant byte address 0x4 - core index']
  #allocation1 [shape = 'u32[144,128]{1,0:T(1,128)}', space=vmem, size = 0x12000, scoped, tag = 'internal scratch']
  #allocation2 [shape = 'f32[1,1]{1,0:T(1,128)S(1)}', space=vmem, size = 0x200, scoped, tag = 'scoped memory for net_lstm_forward.7']
  %s0 = inlined_call_operand.vmem [shape: f32[2,2048], index: 0, kind: input, shape index: {}]
  %s1 = inlined_call_operand.vmem [shape: f32[2048,512], index: 1, kind: input, shape index: {}]
  %s2 = inlined_call_operand.vmem [shape: f32[1,512], index: 2, kind: input, shape index: {}]
  %s3 = inlined_call_operand.vmem [shape: f32[512,1], index: 3, kind: input, shape index: {}]
  %s4 = inlined_call_operand.<no memory space> [shape: f32[1,1], index: 4, kind: input, shape index: {}]
  %s5 = inlined_call_operand.vmem [shape: f32[2,1], index: 5, kind: output, shape index: {}]
  %s6 = sld [smem:[#allocation0]]
  $region30: #{net_lstm_forward.7} parent=0
    _
  %s8 = ssub.s32 1, %s6
  %s9 = scalar_select 0, %s8, %s6
  %v10 = vstv %s4
  %11 = vst [vmem:[#allocation2] sm:$0x1] %v10
  // Predicated region
  $region2: #{net_lstm_forward.7} parent=0 // pred_check
    _
  $region3: #{net_lstm_forward.7} parent=0 // pred_check_branch
    %13 = sbr.rel (0) target = $region5
  $region4: #{net_lstm_forward.7} parent=0 // pred_region
    _
  $region5: #{net_lstm_forward.7} parent=0 // pred_fallthru
    _
  // Predicated region
  $region6: #{net_lstm_forward.7} parent=0 // pred_check
    _
  $region7: #{net_lstm_forward.7} parent=0 // pred_check_branch
    %15 = sbr.rel (0) target = $region9
  $region8: #{net_lstm_forward.7} parent=0 // pred_region
    _
  $region9: #{net_lstm_forward.7} parent=0 // pred_fallthru
    _
  // Predicated region
  $region10: #{net_lstm_forward.7} parent=0 // pred_check
    _
  $region11: #{net_lstm_forward.7} parent=0 // pred_check_branch
    %17 = sbr.rel (0) target = $region13
  $region12: #{net_lstm_forward.7} parent=0 // pred_region
    _
  $region13: #{net_lstm_forward.7} parent=0 // pred_fallthru
    _
  // Predicated region
  $region14: #{net_lstm_forward.7} parent=0 // pred_check
    _
  $region15: #{net_lstm_forward.7} parent=0 // pred_check_branch
    %19 = sbr.rel (0) target = $region17
  $region16: #{net_lstm_forward.7} parent=0 // pred_region
    _
  $region17: #{net_lstm_forward.7} parent=0 // pred_fallthru
    _
  // Predicated region
  $region18: #{net_lstm_forward.7} parent=0 // pred_check
    _
  $region19: #{net_lstm_forward.7} parent=0 // pred_check_branch
    %21 = sbr.rel (0) target = $region21
  $region20: #{net_lstm_forward.7} parent=0 // pred_region
    _
  $region21: #{net_lstm_forward.7} parent=0 // pred_fallthru
    _
  %v22 = vld [vmem:[%s0] sm:$0xff]
  %v23 = vld [vmem:[%s0 + $0x8] sm:$0xff]
  %v24 = vld [vmem:[%s0 + $0x10] sm:$0xff]
  %v25 = vld [vmem:[%s0 + $0x18] sm:$0xff]
  %v26 = vld [vmem:[%s1] sm:$0xff]
  %v27 = vld [vmem:[%s1 + $0x8] sm:$0xff]
  %v28 = vld [vmem:[%s1 + $0x10] sm:$0xff]
  %v29 = vld [vmem:[%s1 + $0x18] sm:$0xff]
  %v30 = vld [vmem:[%s1 + $0x20] sm:$0xff]
  %v31 = vld [vmem:[%s1 + $0x28] sm:$0xff]
  %v32 = vld [vmem:[%s1 + $0x30] sm:$0xff]
  %v33 = vld [vmem:[%s1 + $0x38] sm:$0xff]
  %v34 = vld [vmem:[%s1 + $0x40] sm:$0xff]
  %v35 = vld [vmem:[%s1 + $0x48] sm:$0xff]
  %v36 = vld [vmem:[%s1 + $0x50] sm:$0xff]
  %v37 = vld [vmem:[%s1 + $0x58] sm:$0xff]
  %v38 = vld [vmem:[%s1 + $0x60] sm:$0xff]
  %v39 = vld [vmem:[%s1 + $0x68] sm:$0xff]
  %v40 = vld [vmem:[%s1 + $0x70] sm:$0xff]
  %v41 = vld [vmem:[%s1 + $0x78] sm:$0xff]
  %v42 = vld [vmem:[%s1 + $0x80] sm:$0xff]
  %v43 = vld [vmem:[%s1 + $0x88] sm:$0xff]
  %v44 = vld [vmem:[%s1 + $0x90] sm:$0xff]
  %v45 = vld [vmem:[%s1 + $0x98] sm:$0xff]
  %v46 = vld [vmem:[%s1 + $0xa0] sm:$0xff]
  %v47 = vld [vmem:[%s1 + $0xa8] sm:$0xff]
  %v48 = vld [vmem:[%s1 + $0xb0] sm:$0xff]
  %v49 = vld [vmem:[%s1 + $0xb8] sm:$0xff]
  %v50 = vld [vmem:[%s1 + $0xc0] sm:$0xff]
  %v51 = vld [vmem:[%s1 + $0xc8] sm:$0xff]
  %v52 = vld [vmem:[%s1 + $0xd0] sm:$0xff]
  %v53 = vld [vmem:[%s1 + $0xd8] sm:$0xff]
  %v54 = vld [vmem:[%s1 + $0xe0] sm:$0xff]
  %v55 = vld [vmem:[%s1 + $0xe8] sm:$0xff]
  %v56 = vld [vmem:[%s1 + $0xf0] sm:$0xff]
  %v57 = vld [vmem:[%s1 + $0xf8] sm:$0xff]
  %v58 = vld [vmem:[%s1 + $0x100] sm:$0xff]
  %v59 = vld [vmem:[%s1 + $0x108] sm:$0xff]
  %v60 = vld [vmem:[%s1 + $0x110] sm:$0xff]
  %v61 = vld [vmem:[%s1 + $0x118] sm:$0xff]
  %v62 = vld [vmem:[%s1 + $0x120] sm:$0xff]
  %v63 = vld [vmem:[%s1 + $0x128] sm:$0xff]
  %v64 = vld [vmem:[%s1 + $0x130] sm:$0xff]
  %v65 = vld [vmem:[%s1 + $0x138] sm:$0xff]
  %v66 = vld [vmem:[%s1 + $0x140] sm:$0xff]
  %v67 = vld [vmem:[%s1 + $0x148] sm:$0xff]
  %v68 = vld [vmem:[%s1 + $0x150] sm:$0xff]
  %v69 = vld [vmem:[%s1 + $0x158] sm:$0xff]
  %v70 = vld [vmem:[%s1 + $0x160] sm:$0xff]
  %v71 = vld [vmem:[%s1 + $0x168] sm:$0xff]
  %v72 = vld [vmem:[%s1 + $0x170] sm:$0xff]
  %v73 = vld [vmem:[%s1 + $0x178] sm:$0xff]
  %v74 = vld [vmem:[%s1 + $0x180] sm:$0xff]
  %v75 = vld [vmem:[%s1 + $0x188] sm:$0xff]
  %v76 = vld [vmem:[%s1 + $0x190] sm:$0xff]
  %v77 = vld [vmem:[%s1 + $0x198] sm:$0xff]
  %v78 = vld [vmem:[%s1 + $0x1a0] sm:$0xff]
  %v79 = vld [vmem:[%s1 + $0x1a8] sm:$0xff]
  %v80 = vld [vmem:[%s1 + $0x1b0] sm:$0xff]
  %v81 = vld [vmem:[%s1 + $0x1b8] sm:$0xff]
  %v82 = vld [vmem:[%s1 + $0x1c0] sm:$0xff]
  %v83 = vld [vmem:[%s1 + $0x1c8] sm:$0xff]
  %v84 = vld [vmem:[%s1 + $0x1d0] sm:$0xff]
  %v85 = vld [vmem:[%s1 + $0x1d8] sm:$0xff]
  %v86 = vld [vmem:[%s1 + $0x1e0] sm:$0xff]
  %v87 = vld [vmem:[%s1 + $0x1e8] sm:$0xff]
  %v88 = vld [vmem:[%s1 + $0x1f0] sm:$0xff]
  %v89 = vld [vmem:[%s1 + $0x1f8] sm:$0xff]
  %v90 = vld [vmem:[%s1 + $0x200] sm:$0xff]
  %v91 = vld [vmem:[%s1 + $0x208] sm:$0xff]
  %v92 = vld [vmem:[%s1 + $0x210] sm:$0xff]
  %v93 = vld [vmem:[%s1 + $0x218] sm:$0xff]
  %v94 = vld [vmem:[%s1 + $0x220] sm:$0xff]
  %v95 = vld [vmem:[%s1 + $0x228] sm:$0xff]
  %v96 = vld [vmem:[%s1 + $0x230] sm:$0xff]
  %v97 = vld [vmem:[%s1 + $0x238] sm:$0xff]
  %v98 = vld [vmem:[%s1 + $0x240] sm:$0xff]
  %v99 = vld [vmem:[%s1 + $0x248] sm:$0xff]
  %v100 = vld [vmem:[%s1 + $0x250] sm:$0xff]
  %v101 = vld [vmem:[%s1 + $0x258] sm:$0xff]
  %v102 = vld [vmem:[%s1 + $0x260] sm:$0xff]
  %v103 = vld [vmem:[%s1 + $0x268] sm:$0xff]
  %v104 = vld [vmem:[%s1 + $0x270] sm:$0xff]
  %v105 = vld [vmem:[%s1 + $0x278] sm:$0xff]
  %v106 = vld [vmem:[%s1 + $0x280] sm:$0xff]
  %v107 = vld [vmem:[%s1 + $0x288] sm:$0xff]
  %v108 = vld [vmem:[%s1 + $0x290] sm:$0xff]
  %v109 = vld [vmem:[%s1 + $0x298] sm:$0xff]
  %v110 = vld [vmem:[%s1 + $0x2a0] sm:$0xff]
  %v111 = vld [vmem:[%s1 + $0x2a8] sm:$0xff]
  %v112 = vld [vmem:[%s1 + $0x2b0] sm:$0xff]
  %v113 = vld [vmem:[%s1 + $0x2b8] sm:$0xff]
  %v114 = vld [vmem:[%s1 + $0x2c0] sm:$0xff]
  %v115 = vld [vmem:[%s1 + $0x2c8] sm:$0xff]
  %v116 = vld [vmem:[%s1 + $0x2d0] sm:$0xff]
  %v117 = vld [vmem:[%s1 + $0x2d8] sm:$0xff]
  %v118 = vld [vmem:[%s1 + $0x2e0] sm:$0xff]
  %v119 = vld [vmem:[%s1 + $0x2e8] sm:$0xff]
  %v120 = vld [vmem:[%s1 + $0x2f0] sm:$0xff]
  %v121 = vld [vmem:[%s1 + $0x2f8] sm:$0xff]
  %v122 = vld [vmem:[%s1 + $0x300] sm:$0xff]
  %v123 = vld [vmem:[%s1 + $0x308] sm:$0xff]
  %v124 = vld [vmem:[%s1 + $0x310] sm:$0xff]
  %v125 = vld [vmem:[%s1 + $0x318] sm:$0xff]
  %v126 = vld [vmem:[%s1 + $0x320] sm:$0xff]
  %v127 = vld [vmem:[%s1 + $0x328] sm:$0xff]
  %v128 = vld [vmem:[%s1 + $0x330] sm:$0xff]
  %v129 = vld [vmem:[%s1 + $0x338] sm:$0xff]
  %v130 = vld [vmem:[%s1 + $0x340] sm:$0xff]
  %v131 = vld [vmem:[%s1 + $0x348] sm:$0xff]
  %v132 = vld [vmem:[%s1 + $0x350] sm:$0xff]
  %v133 = vld [vmem:[%s1 + $0x358] sm:$0xff]
  %v134 = vld [vmem:[%s1 + $0x360] sm:$0xff]
  %v135 = vld [vmem:[%s1 + $0x368] sm:$0xff]
  %v136 = vld [vmem:[%s1 + $0x370] sm:$0xff]
  %v137 = vld [vmem:[%s1 + $0x378] sm:$0xff]
  %v138 = vld [vmem:[%s1 + $0x380] sm:$0xff]
  %v139 = vld [vmem:[%s1 + $0x388] sm:$0xff]
  %v140 = vld [vmem:[%s1 + $0x390] sm:$0xff]
  %v141 = vld [vmem:[%s1 + $0x398] sm:$0xff]
  %v142 = vld [vmem:[%s1 + $0x3a0] sm:$0xff]
  %v143 = vld [vmem:[%s1 + $0x3a8] sm:$0xff]
  %v144 = vld [vmem:[%s1 + $0x3b0] sm:$0xff]
  %v145 = vld [vmem:[%s1 + $0x3b8] sm:$0xff]
  %v146 = vld [vmem:[%s1 + $0x3c0] sm:$0xff]
  %v147 = vld [vmem:[%s1 + $0x3c8] sm:$0xff]
  %v148 = vld [vmem:[%s1 + $0x3d0] sm:$0xff]
  %v149 = vld [vmem:[%s1 + $0x3d8] sm:$0xff]
  %v150 = vld [vmem:[%s1 + $0x3e0] sm:$0xff]
  %v151 = vld [vmem:[%s1 + $0x3e8] sm:$0xff]
  %v152 = vld [vmem:[%s1 + $0x3f0] sm:$0xff]
  %v153 = vld [vmem:[%s1 + $0x3f8] sm:$0xff]
  %v154 = vld [vmem:[%s1 + $0x400] sm:$0xff]
  %v155 = vld [vmem:[%s1 + $0x408] sm:$0xff]
  %v156 = vld [vmem:[%s1 + $0x410] sm:$0xff]
  %v157 = vld [vmem:[%s1 + $0x418] sm:$0xff]
  %v158 = vld [vmem:[%s1 + $0x420] sm:$0xff]
  %v159 = vld [vmem:[%s1 + $0x428] sm:$0xff]
  %v160 = vld [vmem:[%s1 + $0x430] sm:$0xff]
  %v161 = vld [vmem:[%s1 + $0x438] sm:$0xff]
  %v162 = vld [vmem:[%s1 + $0x440] sm:$0xff]
  %v163 = vld [vmem:[%s1 + $0x448] sm:$0xff]
  %v164 = vld [vmem:[%s1 + $0x450] sm:$0xff]
  %v165 = vld [vmem:[%s1 + $0x458] sm:$0xff]
  %v166 = vld [vmem:[%s1 + $0x460] sm:$0xff]
  %v167 = vld [vmem:[%s1 + $0x468] sm:$0xff]
  %v168 = vld [vmem:[%s1 + $0x470] sm:$0xff]
  %v169 = vld [vmem:[%s1 + $0x478] sm:$0xff]
  %v170 = vld [vmem:[%s1 + $0x480] sm:$0xff]
  %v171 = vld [vmem:[%s1 + $0x488] sm:$0xff]
  %v172 = vld [vmem:[%s1 + $0x490] sm:$0xff]
  %v173 = vld [vmem:[%s1 + $0x498] sm:$0xff]
  %v174 = vld [vmem:[%s1 + $0x4a0] sm:$0xff]
  %v175 = vld [vmem:[%s1 + $0x4a8] sm:$0xff]
  %v176 = vld [vmem:[%s1 + $0x4b0] sm:$0xff]
  %v177 = vld [vmem:[%s1 + $0x4b8] sm:$0xff]
  %v178 = vld [vmem:[%s1 + $0x4c0] sm:$0xff]
  %v179 = vld [vmem:[%s1 + $0x4c8] sm:$0xff]
  %v180 = vld [vmem:[%s1 + $0x4d0] sm:$0xff]
  %v181 = vld [vmem:[%s1 + $0x4d8] sm:$0xff]
  %v182 = vld [vmem:[%s1 + $0x4e0] sm:$0xff]
  %v183 = vld [vmem:[%s1 + $0x4e8] sm:$0xff]
  %v184 = vld [vmem:[%s1 + $0x4f0] sm:$0xff]
  %v185 = vld [vmem:[%s1 + $0x4f8] sm:$0xff]
  %v186 = vld [vmem:[%s1 + $0x500] sm:$0xff]
  %v187 = vld [vmem:[%s1 + $0x508] sm:$0xff]
  %v188 = vld [vmem:[%s1 + $0x510] sm:$0xff]
  %v189 = vld [vmem:[%s1 + $0x518] sm:$0xff]
  %v190 = vld [vmem:[%s1 + $0x520] sm:$0xff]
  %v191 = vld [vmem:[%s1 + $0x528] sm:$0xff]
  %v192 = vld [vmem:[%s1 + $0x530] sm:$0xff]
  %v193 = vld [vmem:[%s1 + $0x538] sm:$0xff]
  %v194 = vld [vmem:[%s1 + $0x540] sm:$0xff]
  %v195 = vld [vmem:[%s1 + $0x548] sm:$0xff]
  %v196 = vld [vmem:[%s1 + $0x550] sm:$0xff]
  %v197 = vld [vmem:[%s1 + $0x558] sm:$0xff]
  %v198 = vld [vmem:[%s1 + $0x560] sm:$0xff]
  %v199 = vld [vmem:[%s1 + $0x568] sm:$0xff]
  %v200 = vld [vmem:[%s1 + $0x570] sm:$0xff]
  %v201 = vld [vmem:[%s1 + $0x578] sm:$0xff]
  %v202 = vld [vmem:[%s1 + $0x580] sm:$0xff]
  %v203 = vld [vmem:[%s1 + $0x588] sm:$0xff]
  %v204 = vld [vmem:[%s1 + $0x590] sm:$0xff]
  %v205 = vld [vmem:[%s1 + $0x598] sm:$0xff]
  %v206 = vld [vmem:[%s1 + $0x5a0] sm:$0xff]
  %v207 = vld [vmem:[%s1 + $0x5a8] sm:$0xff]
  %v208 = vld [vmem:[%s1 + $0x5b0] sm:$0xff]
  %v209 = vld [vmem:[%s1 + $0x5b8] sm:$0xff]
  %v210 = vld [vmem:[%s1 + $0x5c0] sm:$0xff]
  %v211 = vld [vmem:[%s1 + $0x5c8] sm:$0xff]
  %v212 = vld [vmem:[%s1 + $0x5d0] sm:$0xff]
  %v213 = vld [vmem:[%s1 + $0x5d8] sm:$0xff]
  %v214 = vld [vmem:[%s1 + $0x5e0] sm:$0xff]
  %v215 = vld [vmem:[%s1 + $0x5e8] sm:$0xff]
  %v216 = vld [vmem:[%s1 + $0x5f0] sm:$0xff]
  %v217 = vld [vmem:[%s1 + $0x5f8] sm:$0xff]
  %v218 = vld [vmem:[%s1 + $0x600] sm:$0xff]
  %v219 = vld [vmem:[%s1 + $0x608] sm:$0xff]
  %v220 = vld [vmem:[%s1 + $0x610] sm:$0xff]
  %v221 = vld [vmem:[%s1 + $0x618] sm:$0xff]
  %v222 = vld [vmem:[%s1 + $0x620] sm:$0xff]
  %v223 = vld [vmem:[%s1 + $0x628] sm:$0xff]
  %v224 = vld [vmem:[%s1 + $0x630] sm:$0xff]
  %v225 = vld [vmem:[%s1 + $0x638] sm:$0xff]
  %v226 = vld [vmem:[%s1 + $0x640] sm:$0xff]
  %v227 = vld [vmem:[%s1 + $0x648] sm:$0xff]
  %v228 = vld [vmem:[%s1 + $0x650] sm:$0xff]
  %v229 = vld [vmem:[%s1 + $0x658] sm:$0xff]
  %v230 = vld [vmem:[%s1 + $0x660] sm:$0xff]
  %v231 = vld [vmem:[%s1 + $0x668] sm:$0xff]
  %v232 = vld [vmem:[%s1 + $0x670] sm:$0xff]
  %v233 = vld [vmem:[%s1 + $0x678] sm:$0xff]
  %v234 = vld [vmem:[%s1 + $0x680] sm:$0xff]
  %v235 = vld [vmem:[%s1 + $0x688] sm:$0xff]
  %v236 = vld [vmem:[%s1 + $0x690] sm:$0xff]
  %v237 = vld [vmem:[%s1 + $0x698] sm:$0xff]
  %v238 = vld [vmem:[%s1 + $0x6a0] sm:$0xff]
  %v239 = vld [vmem:[%s1 + $0x6a8] sm:$0xff]
  %v240 = vld [vmem:[%s1 + $0x6b0] sm:$0xff]
  %v241 = vld [vmem:[%s1 + $0x6b8] sm:$0xff]
  %v242 = vld [vmem:[%s1 + $0x6c0] sm:$0xff]
  %v243 = vld [vmem:[%s1 + $0x6c8] sm:$0xff]
  %v244 = vld [vmem:[%s1 + $0x6d0] sm:$0xff]
  %v245 = vld [vmem:[%s1 + $0x6d8] sm:$0xff]
  %v246 = vld [vmem:[%s1 + $0x6e0] sm:$0xff]
  %v247 = vld [vmem:[%s1 + $0x6e8] sm:$0xff]
  %v248 = vld [vmem:[%s1 + $0x6f0] sm:$0xff]
  %v249 = vld [vmem:[%s1 + $0x6f8] sm:$0xff]
  %v250 = vld [vmem:[%s1 + $0x700] sm:$0xff]
  %v251 = vld [vmem:[%s1 + $0x708] sm:$0xff]
  %v252 = vld [vmem:[%s1 + $0x710] sm:$0xff]
  %v253 = vld [vmem:[%s1 + $0x718] sm:$0xff]
  %v254 = vld [vmem:[%s1 + $0x720] sm:$0xff]
  %v255 = vld [vmem:[%s1 + $0x728] sm:$0xff]
  %v256 = vld [vmem:[%s1 + $0x730] sm:$0xff]
  %v257 = vld [vmem:[%s1 + $0x738] sm:$0xff]
  %v258 = vld [vmem:[%s1 + $0x740] sm:$0xff]
  %v259 = vld [vmem:[%s1 + $0x748] sm:$0xff]
  %v260 = vld [vmem:[%s1 + $0x750] sm:$0xff]
  %v261 = vld [vmem:[%s1 + $0x758] sm:$0xff]
  %v262 = vld [vmem:[%s1 + $0x760] sm:$0xff]
  %v263 = vld [vmem:[%s1 + $0x768] sm:$0xff]
  %v264 = vld [vmem:[%s1 + $0x770] sm:$0xff]
  %v265 = vld [vmem:[%s1 + $0x778] sm:$0xff]
  %v266 = vld [vmem:[%s1 + $0x780] sm:$0xff]
  %v267 = vld [vmem:[%s1 + $0x788] sm:$0xff]
  %v268 = vld [vmem:[%s1 + $0x790] sm:$0xff]
  %v269 = vld [vmem:[%s1 + $0x798] sm:$0xff]
  %v270 = vld [vmem:[%s1 + $0x7a0] sm:$0xff]
  %v271 = vld [vmem:[%s1 + $0x7a8] sm:$0xff]
  %v272 = vld [vmem:[%s1 + $0x7b0] sm:$0xff]
  %v273 = vld [vmem:[%s1 + $0x7b8] sm:$0xff]
  %v274 = vld [vmem:[%s1 + $0x7c0] sm:$0xff]
  %v275 = vld [vmem:[%s1 + $0x7c8] sm:$0xff]
  %v276 = vld [vmem:[%s1 + $0x7d0] sm:$0xff]
  %v277 = vld [vmem:[%s1 + $0x7d8] sm:$0xff]
  %v278 = vld [vmem:[%s1 + $0x7e0] sm:$0xff]
  %v279 = vld [vmem:[%s1 + $0x7e8] sm:$0xff]
  %v280 = vld [vmem:[%s1 + $0x7f0] sm:$0xff]
  %v281 = vld [vmem:[%s1 + $0x7f8] sm:$0xff]
  %v282 = vld [vmem:[%s1 + $0x800] sm:$0xff]
  %v283 = vld [vmem:[%s1 + $0x808] sm:$0xff]
  %v284 = vld [vmem:[%s1 + $0x810] sm:$0xff]
  %v285 = vld [vmem:[%s1 + $0x818] sm:$0xff]
  %v286 = vld [vmem:[%s1 + $0x820] sm:$0xff]
  %v287 = vld [vmem:[%s1 + $0x828] sm:$0xff]
  %v288 = vld [vmem:[%s1 + $0x830] sm:$0xff]
  %v289 = vld [vmem:[%s1 + $0x838] sm:$0xff]
  %v290 = vld [vmem:[%s1 + $0x840] sm:$0xff]
  %v291 = vld [vmem:[%s1 + $0x848] sm:$0xff]
  %v292 = vld [vmem:[%s1 + $0x850] sm:$0xff]
  %v293 = vld [vmem:[%s1 + $0x858] sm:$0xff]
  %v294 = vld [vmem:[%s1 + $0x860] sm:$0xff]
  %v295 = vld [vmem:[%s1 + $0x868] sm:$0xff]
  %v296 = vld [vmem:[%s1 + $0x870] sm:$0xff]
  %v297 = vld [vmem:[%s1 + $0x878] sm:$0xff]
  %v298 = vld [vmem:[%s1 + $0x880] sm:$0xff]
  %v299 = vld [vmem:[%s1 + $0x888] sm:$0xff]
  %v300 = vld [vmem:[%s1 + $0x890] sm:$0xff]
  %v301 = vld [vmem:[%s1 + $0x898] sm:$0xff]
  %v302 = vld [vmem:[%s1 + $0x8a0] sm:$0xff]
  %v303 = vld [vmem:[%s1 + $0x8a8] sm:$0xff]
  %v304 = vld [vmem:[%s1 + $0x8b0] sm:$0xff]
  %v305 = vld [vmem:[%s1 + $0x8b8] sm:$0xff]
  %v306 = vld [vmem:[%s1 + $0x8c0] sm:$0xff]
  %v307 = vld [vmem:[%s1 + $0x8c8] sm:$0xff]
  %v308 = vld [vmem:[%s1 + $0x8d0] sm:$0xff]
  %v309 = vld [vmem:[%s1 + $0x8d8] sm:$0xff]
  %v310 = vld [vmem:[%s1 + $0x8e0] sm:$0xff]
  %v311 = vld [vmem:[%s1 + $0x8e8] sm:$0xff]
  %v312 = vld [vmem:[%s1 + $0x8f0] sm:$0xff]
  %v313 = vld [vmem:[%s1 + $0x8f8] sm:$0xff]
  %v314 = vld [vmem:[%s1 + $0x900] sm:$0xff]
  %v315 = vld [vmem:[%s1 + $0x908] sm:$0xff]
  %v316 = vld [vmem:[%s1 + $0x910] sm:$0xff]
  %v317 = vld [vmem:[%s1 + $0x918] sm:$0xff]
  %v318 = vld [vmem:[%s1 + $0x920] sm:$0xff]
  %v319 = vld [vmem:[%s1 + $0x928] sm:$0xff]
  %v320 = vld [vmem:[%s1 + $0x930] sm:$0xff]
  %v321 = vld [vmem:[%s1 + $0x938] sm:$0xff]
  %v322 = vld [vmem:[%s1 + $0x940] sm:$0xff]
  %v323 = vld [vmem:[%s1 + $0x948] sm:$0xff]
  %v324 = vld [vmem:[%s1 + $0x950] sm:$0xff]
  %v325 = vld [vmem:[%s1 + $0x958] sm:$0xff]
  %v326 = vld [vmem:[%s1 + $0x960] sm:$0xff]
  %v327 = vld [vmem:[%s1 + $0x968] sm:$0xff]
  %v328 = vld [vmem:[%s1 + $0x970] sm:$0xff]
  %v329 = vld [vmem:[%s1 + $0x978] sm:$0xff]
  %v330 = vld [vmem:[%s1 + $0x980] sm:$0xff]
  %v331 = vld [vmem:[%s1 + $0x988] sm:$0xff]
  %v332 = vld [vmem:[%s1 + $0x990] sm:$0xff]
  %v333 = vld [vmem:[%s1 + $0x998] sm:$0xff]
  %v334 = vld [vmem:[%s1 + $0x9a0] sm:$0xff]
  %v335 = vld [vmem:[%s1 + $0x9a8] sm:$0xff]
  %v336 = vld [vmem:[%s1 + $0x9b0] sm:$0xff]
  %v337 = vld [vmem:[%s1 + $0x9b8] sm:$0xff]
  %v338 = vld [vmem:[%s1 + $0x9c0] sm:$0xff]
  %v339 = vld [vmem:[%s1 + $0x9c8] sm:$0xff]
  %v340 = vld [vmem:[%s1 + $0x9d0] sm:$0xff]
  %v341 = vld [vmem:[%s1 + $0x9d8] sm:$0xff]
  %v342 = vld [vmem:[%s1 + $0x9e0] sm:$0xff]
  %v343 = vld [vmem:[%s1 + $0x9e8] sm:$0xff]
  %v344 = vld [vmem:[%s1 + $0x9f0] sm:$0xff]
  %v345 = vld [vmem:[%s1 + $0x9f8] sm:$0xff]
  %v346 = vld [vmem:[%s1 + $0xa00] sm:$0xff]
  %v347 = vld [vmem:[%s1 + $0xa08] sm:$0xff]
  %v348 = vld [vmem:[%s1 + $0xa10] sm:$0xff]
  %v349 = vld [vmem:[%s1 + $0xa18] sm:$0xff]
  %v350 = vld [vmem:[%s1 + $0xa20] sm:$0xff]
  %v351 = vld [vmem:[%s1 + $0xa28] sm:$0xff]
  %v352 = vld [vmem:[%s1 + $0xa30] sm:$0xff]
  %v353 = vld [vmem:[%s1 + $0xa38] sm:$0xff]
  %v354 = vld [vmem:[%s1 + $0xa40] sm:$0xff]
  %v355 = vld [vmem:[%s1 + $0xa48] sm:$0xff]
  %v356 = vld [vmem:[%s1 + $0xa50] sm:$0xff]
  %v357 = vld [vmem:[%s1 + $0xa58] sm:$0xff]
  %v358 = vld [vmem:[%s1 + $0xa60] sm:$0xff]
  %v359 = vld [vmem:[%s1 + $0xa68] sm:$0xff]
  %v360 = vld [vmem:[%s1 + $0xa70] sm:$0xff]
  %v361 = vld [vmem:[%s1 + $0xa78] sm:$0xff]
  %v362 = vld [vmem:[%s1 + $0xa80] sm:$0xff]
  %v363 = vld [vmem:[%s1 + $0xa88] sm:$0xff]
  %v364 = vld [vmem:[%s1 + $0xa90] sm:$0xff]
  %v365 = vld [vmem:[%s1 + $0xa98] sm:$0xff]
  %v366 = vld [vmem:[%s1 + $0xaa0] sm:$0xff]
  %v367 = vld [vmem:[%s1 + $0xaa8] sm:$0xff]
  %v368 = vld [vmem:[%s1 + $0xab0] sm:$0xff]
  %v369 = vld [vmem:[%s1 + $0xab8] sm:$0xff]
  %v370 = vld [vmem:[%s1 + $0xac0] sm:$0xff]
  %v371 = vld [vmem:[%s1 + $0xac8] sm:$0xff]
  %v372 = vld [vmem:[%s1 + $0xad0] sm:$0xff]
  %v373 = vld [vmem:[%s1 + $0xad8] sm:$0xff]
  %v374 = vld [vmem:[%s1 + $0xae0] sm:$0xff]
  %v375 = vld [vmem:[%s1 + $0xae8] sm:$0xff]
  %v376 = vld [vmem:[%s1 + $0xaf0] sm:$0xff]
  %v377 = vld [vmem:[%s1 + $0xaf8] sm:$0xff]
  %v378 = vld [vmem:[%s1 + $0xb00] sm:$0xff]
  %v379 = vld [vmem:[%s1 + $0xb08] sm:$0xff]
  %v380 = vld [vmem:[%s1 + $0xb10] sm:$0xff]
  %v381 = vld [vmem:[%s1 + $0xb18] sm:$0xff]
  %v382 = vld [vmem:[%s1 + $0xb20] sm:$0xff]
  %v383 = vld [vmem:[%s1 + $0xb28] sm:$0xff]
  %v384 = vld [vmem:[%s1 + $0xb30] sm:$0xff]
  %v385 = vld [vmem:[%s1 + $0xb38] sm:$0xff]
  %v386 = vld [vmem:[%s1 + $0xb40] sm:$0xff]
  %v387 = vld [vmem:[%s1 + $0xb48] sm:$0xff]
  %v388 = vld [vmem:[%s1 + $0xb50] sm:$0xff]
  %v389 = vld [vmem:[%s1 + $0xb58] sm:$0xff]
  %v390 = vld [vmem:[%s1 + $0xb60] sm:$0xff]
  %v391 = vld [vmem:[%s1 + $0xb68] sm:$0xff]
  %v392 = vld [vmem:[%s1 + $0xb70] sm:$0xff]
  %v393 = vld [vmem:[%s1 + $0xb78] sm:$0xff]
  %v394 = vld [vmem:[%s1 + $0xb80] sm:$0xff]
  %v395 = vld [vmem:[%s1 + $0xb88] sm:$0xff]
  %v396 = vld [vmem:[%s1 + $0xb90] sm:$0xff]
  %v397 = vld [vmem:[%s1 + $0xb98] sm:$0xff]
  %v398 = vld [vmem:[%s1 + $0xba0] sm:$0xff]
  %v399 = vld [vmem:[%s1 + $0xba8] sm:$0xff]
  %v400 = vld [vmem:[%s1 + $0xbb0] sm:$0xff]
  %v401 = vld [vmem:[%s1 + $0xbb8] sm:$0xff]
  %v402 = vld [vmem:[%s1 + $0xbc0] sm:$0xff]
  %v403 = vld [vmem:[%s1 + $0xbc8] sm:$0xff]
  %v404 = vld [vmem:[%s1 + $0xbd0] sm:$0xff]
  %v405 = vld [vmem:[%s1 + $0xbd8] sm:$0xff]
  %v406 = vld [vmem:[%s1 + $0xbe0] sm:$0xff]
  %v407 = vld [vmem:[%s1 + $0xbe8] sm:$0xff]
  %v408 = vld [vmem:[%s1 + $0xbf0] sm:$0xff]
  %v409 = vld [vmem:[%s1 + $0xbf8] sm:$0xff]
  %v410 = vld [vmem:[%s1 + $0xc00] sm:$0xff]
  %v411 = vld [vmem:[%s1 + $0xc08] sm:$0xff]
  %v412 = vld [vmem:[%s1 + $0xc10] sm:$0xff]
  %v413 = vld [vmem:[%s1 + $0xc18] sm:$0xff]
  %v414 = vld [vmem:[%s1 + $0xc20] sm:$0xff]
  %v415 = vld [vmem:[%s1 + $0xc28] sm:$0xff]
  %v416 = vld [vmem:[%s1 + $0xc30] sm:$0xff]
  %v417 = vld [vmem:[%s1 + $0xc38] sm:$0xff]
  %v418 = vld [vmem:[%s1 + $0xc40] sm:$0xff]
  %v419 = vld [vmem:[%s1 + $0xc48] sm:$0xff]
  %v420 = vld [vmem:[%s1 + $0xc50] sm:$0xff]
  %v421 = vld [vmem:[%s1 + $0xc58] sm:$0xff]
  %v422 = vld [vmem:[%s1 + $0xc60] sm:$0xff]
  %v423 = vld [vmem:[%s1 + $0xc68] sm:$0xff]
  %v424 = vld [vmem:[%s1 + $0xc70] sm:$0xff]
  %v425 = vld [vmem:[%s1 + $0xc78] sm:$0xff]
  %v426 = vld [vmem:[%s1 + $0xc80] sm:$0xff]
  %v427 = vld [vmem:[%s1 + $0xc88] sm:$0xff]
  %v428 = vld [vmem:[%s1 + $0xc90] sm:$0xff]
  %v429 = vld [vmem:[%s1 + $0xc98] sm:$0xff]
  %v430 = vld [vmem:[%s1 + $0xca0] sm:$0xff]
  %v431 = vld [vmem:[%s1 + $0xca8] sm:$0xff]
  %v432 = vld [vmem:[%s1 + $0xcb0] sm:$0xff]
  %v433 = vld [vmem:[%s1 + $0xcb8] sm:$0xff]
  %v434 = vld [vmem:[%s1 + $0xcc0] sm:$0xff]
  %v435 = vld [vmem:[%s1 + $0xcc8] sm:$0xff]
  %v436 = vld [vmem:[%s1 + $0xcd0] sm:$0xff]
  %v437 = vld [vmem:[%s1 + $0xcd8] sm:$0xff]
  %v438 = vld [vmem:[%s1 + $0xce0] sm:$0xff]
  %v439 = vld [vmem:[%s1 + $0xce8] sm:$0xff]
  %v440 = vld [vmem:[%s1 + $0xcf0] sm:$0xff]
  %v441 = vld [vmem:[%s1 + $0xcf8] sm:$0xff]
  %v442 = vld [vmem:[%s1 + $0xd00] sm:$0xff]
  %v443 = vld [vmem:[%s1 + $0xd08] sm:$0xff]
  %v444 = vld [vmem:[%s1 + $0xd10] sm:$0xff]
  %v445 = vld [vmem:[%s1 + $0xd18] sm:$0xff]
  %v446 = vld [vmem:[%s1 + $0xd20] sm:$0xff]
  %v447 = vld [vmem:[%s1 + $0xd28] sm:$0xff]
  %v448 = vld [vmem:[%s1 + $0xd30] sm:$0xff]
  %v449 = vld [vmem:[%s1 + $0xd38] sm:$0xff]
  %v450 = vld [vmem:[%s1 + $0xd40] sm:$0xff]
  %v451 = vld [vmem:[%s1 + $0xd48] sm:$0xff]
  %v452 = vld [vmem:[%s1 + $0xd50] sm:$0xff]
  %v453 = vld [vmem:[%s1 + $0xd58] sm:$0xff]
  %v454 = vld [vmem:[%s1 + $0xd60] sm:$0xff]
  %v455 = vld [vmem:[%s1 + $0xd68] sm:$0xff]
  %v456 = vld [vmem:[%s1 + $0xd70] sm:$0xff]
  %v457 = vld [vmem:[%s1 + $0xd78] sm:$0xff]
  %v458 = vld [vmem:[%s1 + $0xd80] sm:$0xff]
  %v459 = vld [vmem:[%s1 + $0xd88] sm:$0xff]
  %v460 = vld [vmem:[%s1 + $0xd90] sm:$0xff]
  %v461 = vld [vmem:[%s1 + $0xd98] sm:$0xff]
  %v462 = vld [vmem:[%s1 + $0xda0] sm:$0xff]
  %v463 = vld [vmem:[%s1 + $0xda8] sm:$0xff]
  %v464 = vld [vmem:[%s1 + $0xdb0] sm:$0xff]
  %v465 = vld [vmem:[%s1 + $0xdb8] sm:$0xff]
  %v466 = vld [vmem:[%s1 + $0xdc0] sm:$0xff]
  %v467 = vld [vmem:[%s1 + $0xdc8] sm:$0xff]
  %v468 = vld [vmem:[%s1 + $0xdd0] sm:$0xff]
  %v469 = vld [vmem:[%s1 + $0xdd8] sm:$0xff]
  %v470 = vld [vmem:[%s1 + $0xde0] sm:$0xff]
  %v471 = vld [vmem:[%s1 + $0xde8] sm:$0xff]
  %v472 = vld [vmem:[%s1 + $0xdf0] sm:$0xff]
  %v473 = vld [vmem:[%s1 + $0xdf8] sm:$0xff]
  %v474 = vld [vmem:[%s1 + $0xe00] sm:$0xff]
  %v475 = vld [vmem:[%s1 + $0xe08] sm:$0xff]
  %v476 = vld [vmem:[%s1 + $0xe10] sm:$0xff]
  %v477 = vld [vmem:[%s1 + $0xe18] sm:$0xff]
  %v478 = vld [vmem:[%s1 + $0xe20] sm:$0xff]
  %v479 = vld [vmem:[%s1 + $0xe28] sm:$0xff]
  %v480 = vld [vmem:[%s1 + $0xe30] sm:$0xff]
  %v481 = vld [vmem:[%s1 + $0xe38] sm:$0xff]
  %v482 = vld [vmem:[%s1 + $0xe40] sm:$0xff]
  %v483 = vld [vmem:[%s1 + $0xe48] sm:$0xff]
  %v484 = vld [vmem:[%s1 + $0xe50] sm:$0xff]
  %v485 = vld [vmem:[%s1 + $0xe58] sm:$0xff]
  %v486 = vld [vmem:[%s1 + $0xe60] sm:$0xff]
  %v487 = vld [vmem:[%s1 + $0xe68] sm:$0xff]
  %v488 = vld [vmem:[%s1 + $0xe70] sm:$0xff]
  %v489 = vld [vmem:[%s1 + $0xe78] sm:$0xff]
  %v490 = vld [vmem:[%s1 + $0xe80] sm:$0xff]
  %v491 = vld [vmem:[%s1 + $0xe88] sm:$0xff]
  %v492 = vld [vmem:[%s1 + $0xe90] sm:$0xff]
  %v493 = vld [vmem:[%s1 + $0xe98] sm:$0xff]
  %v494 = vld [vmem:[%s1 + $0xea0] sm:$0xff]
  %v495 = vld [vmem:[%s1 + $0xea8] sm:$0xff]
  %v496 = vld [vmem:[%s1 + $0xeb0] sm:$0xff]
  %v497 = vld [vmem:[%s1 + $0xeb8] sm:$0xff]
  %v498 = vld [vmem:[%s1 + $0xec0] sm:$0xff]
  %v499 = vld [vmem:[%s1 + $0xec8] sm:$0xff]
  %v500 = vld [vmem:[%s1 + $0xed0] sm:$0xff]
  %v501 = vld [vmem:[%s1 + $0xed8] sm:$0xff]
  %v502 = vld [vmem:[%s1 + $0xee0] sm:$0xff]
  %v503 = vld [vmem:[%s1 + $0xee8] sm:$0xff]
  %v504 = vld [vmem:[%s1 + $0xef0] sm:$0xff]
  %v505 = vld [vmem:[%s1 + $0xef8] sm:$0xff]
  %v506 = vld [vmem:[%s1 + $0xf00] sm:$0xff]
  %v507 = vld [vmem:[%s1 + $0xf08] sm:$0xff]
  %v508 = vld [vmem:[%s1 + $0xf10] sm:$0xff]
  %v509 = vld [vmem:[%s1 + $0xf18] sm:$0xff]
  %v510 = vld [vmem:[%s1 + $0xf20] sm:$0xff]
  %v511 = vld [vmem:[%s1 + $0xf28] sm:$0xff]
  %v512 = vld [vmem:[%s1 + $0xf30] sm:$0xff]
  %v513 = vld [vmem:[%s1 + $0xf38] sm:$0xff]
  %v514 = vld [vmem:[%s1 + $0xf40] sm:$0xff]
  %v515 = vld [vmem:[%s1 + $0xf48] sm:$0xff]
  %v516 = vld [vmem:[%s1 + $0xf50] sm:$0xff]
  %v517 = vld [vmem:[%s1 + $0xf58] sm:$0xff]
  %v518 = vld [vmem:[%s1 + $0xf60] sm:$0xff]
  %v519 = vld [vmem:[%s1 + $0xf68] sm:$0xff]
  %v520 = vld [vmem:[%s1 + $0xf70] sm:$0xff]
  %v521 = vld [vmem:[%s1 + $0xf78] sm:$0xff]
  %v522 = vld [vmem:[%s1 + $0xf80] sm:$0xff]
  %v523 = vld [vmem:[%s1 + $0xf88] sm:$0xff]
  %v524 = vld [vmem:[%s1 + $0xf90] sm:$0xff]
  %v525 = vld [vmem:[%s1 + $0xf98] sm:$0xff]
  %v526 = vld [vmem:[%s1 + $0xfa0] sm:$0xff]
  %v527 = vld [vmem:[%s1 + $0xfa8] sm:$0xff]
  %v528 = vld [vmem:[%s1 + $0xfb0] sm:$0xff]
  %v529 = vld [vmem:[%s1 + $0xfb8] sm:$0xff]
  %v530 = vld [vmem:[%s1 + $0xfc0] sm:$0xff]
  %v531 = vld [vmem:[%s1 + $0xfc8] sm:$0xff]
  %v532 = vld [vmem:[%s1 + $0xfd0] sm:$0xff]
  %v533 = vld [vmem:[%s1 + $0xfd8] sm:$0xff]
  %v534 = vld [vmem:[%s1 + $0xfe0] sm:$0xff]
  %v535 = vld [vmem:[%s1 + $0xfe8] sm:$0xff]
  %v536 = vld [vmem:[%s1 + $0xff0] sm:$0xff]
  %v537 = vld [vmem:[%s1 + $0xff8] sm:$0xff]
  %v538 = vld [vmem:[%s1 + $0x1000] sm:$0xff]
  %v539 = vld [vmem:[%s1 + $0x1008] sm:$0xff]
  %v540 = vld [vmem:[%s1 + $0x1010] sm:$0xff]
  %v541 = vld [vmem:[%s1 + $0x1018] sm:$0xff]
  %v542 = vld [vmem:[%s1 + $0x1020] sm:$0xff]
  %v543 = vld [vmem:[%s1 + $0x1028] sm:$0xff]
  %v544 = vld [vmem:[%s1 + $0x1030] sm:$0xff]
  %v545 = vld [vmem:[%s1 + $0x1038] sm:$0xff]
  %v546 = vld [vmem:[%s1 + $0x1040] sm:$0xff]
  %v547 = vld [vmem:[%s1 + $0x1048] sm:$0xff]
  %v548 = vld [vmem:[%s1 + $0x1050] sm:$0xff]
  %v549 = vld [vmem:[%s1 + $0x1058] sm:$0xff]
  %v550 = vld [vmem:[%s1 + $0x1060] sm:$0xff]
  %v551 = vld [vmem:[%s1 + $0x1068] sm:$0xff]
  %v552 = vld [vmem:[%s1 + $0x1070] sm:$0xff]
  %v553 = vld [vmem:[%s1 + $0x1078] sm:$0xff]
  %v554 = vld [vmem:[%s1 + $0x1080] sm:$0xff]
  %v555 = vld [vmem:[%s1 + $0x1088] sm:$0xff]
  %v556 = vld [vmem:[%s1 + $0x1090] sm:$0xff]
  %v557 = vld [vmem:[%s1 + $0x1098] sm:$0xff]
  %v558 = vld [vmem:[%s1 + $0x10a0] sm:$0xff]
  %v559 = vld [vmem:[%s1 + $0x10a8] sm:$0xff]
  %v560 = vld [vmem:[%s1 + $0x10b0] sm:$0xff]
  %v561 = vld [vmem:[%s1 + $0x10b8] sm:$0xff]
  %v562 = vld [vmem:[%s1 + $0x10c0] sm:$0xff]
  %v563 = vld [vmem:[%s1 + $0x10c8] sm:$0xff]
  %v564 = vld [vmem:[%s1 + $0x10d0] sm:$0xff]
  %v565 = vld [vmem:[%s1 + $0x10d8] sm:$0xff]
  %v566 = vld [vmem:[%s1 + $0x10e0] sm:$0xff]
  %v567 = vld [vmem:[%s1 + $0x10e8] sm:$0xff]
  %v568 = vld [vmem:[%s1 + $0x10f0] sm:$0xff]
  %v569 = vld [vmem:[%s1 + $0x10f8] sm:$0xff]
  %v570 = vld [vmem:[%s1 + $0x1100] sm:$0xff]
  %v571 = vld [vmem:[%s1 + $0x1108] sm:$0xff]
  %v572 = vld [vmem:[%s1 + $0x1110] sm:$0xff]
  %v573 = vld [vmem:[%s1 + $0x1118] sm:$0xff]
  %v574 = vld [vmem:[%s1 + $0x1120] sm:$0xff]
  %v575 = vld [vmem:[%s1 + $0x1128] sm:$0xff]
  %v576 = vld [vmem:[%s1 + $0x1130] sm:$0xff]
  %v577 = vld [vmem:[%s1 + $0x1138] sm:$0xff]
  %v578 = vld [vmem:[%s1 + $0x1140] sm:$0xff]
  %v579 = vld [vmem:[%s1 + $0x1148] sm:$0xff]
  %v580 = vld [vmem:[%s1 + $0x1150] sm:$0xff]
  %v581 = vld [vmem:[%s1 + $0x1158] sm:$0xff]
  %v582 = vld [vmem:[%s1 + $0x1160] sm:$0xff]
  %v583 = vld [vmem:[%s1 + $0x1168] sm:$0xff]
  %v584 = vld [vmem:[%s1 + $0x1170] sm:$0xff]
  %v585 = vld [vmem:[%s1 + $0x1178] sm:$0xff]
  %v586 = vld [vmem:[%s1 + $0x1180] sm:$0xff]
  %v587 = vld [vmem:[%s1 + $0x1188] sm:$0xff]
  %v588 = vld [vmem:[%s1 + $0x1190] sm:$0xff]
  %v589 = vld [vmem:[%s1 + $0x1198] sm:$0xff]
  %v590 = vld [vmem:[%s1 + $0x11a0] sm:$0xff]
  %v591 = vld [vmem:[%s1 + $0x11a8] sm:$0xff]
  %v592 = vld [vmem:[%s1 + $0x11b0] sm:$0xff]
  %v593 = vld [vmem:[%s1 + $0x11b8] sm:$0xff]
  %v594 = vld [vmem:[%s1 + $0x11c0] sm:$0xff]
  %v595 = vld [vmem:[%s1 + $0x11c8] sm:$0xff]
  %v596 = vld [vmem:[%s1 + $0x11d0] sm:$0xff]
  %v597 = vld [vmem:[%s1 + $0x11d8] sm:$0xff]
  %v598 = vld [vmem:[%s1 + $0x11e0] sm:$0xff]
  %v599 = vld [vmem:[%s1 + $0x11e8] sm:$0xff]
  %v600 = vld [vmem:[%s1 + $0x11f0] sm:$0xff]
  %v601 = vld [vmem:[%s1 + $0x11f8] sm:$0xff]
  %v602 = vld [vmem:[%s1 + $0x1200] sm:$0xff]
  %v603 = vld [vmem:[%s1 + $0x1208] sm:$0xff]
  %v604 = vld [vmem:[%s1 + $0x1210] sm:$0xff]
  %v605 = vld [vmem:[%s1 + $0x1218] sm:$0xff]
  %v606 = vld [vmem:[%s1 + $0x1220] sm:$0xff]
  %v607 = vld [vmem:[%s1 + $0x1228] sm:$0xff]
  %v608 = vld [vmem:[%s1 + $0x1230] sm:$0xff]
  %v609 = vld [vmem:[%s1 + $0x1238] sm:$0xff]
  %v610 = vld [vmem:[%s1 + $0x1240] sm:$0xff]
  %v611 = vld [vmem:[%s1 + $0x1248] sm:$0xff]
  %v612 = vld [vmem:[%s1 + $0x1250] sm:$0xff]
  %v613 = vld [vmem:[%s1 + $0x1258] sm:$0xff]
  %v614 = vld [vmem:[%s1 + $0x1260] sm:$0xff]
  %v615 = vld [vmem:[%s1 + $0x1268] sm:$0xff]
  %v616 = vld [vmem:[%s1 + $0x1270] sm:$0xff]
  %v617 = vld [vmem:[%s1 + $0x1278] sm:$0xff]
  %v618 = vld [vmem:[%s1 + $0x1280] sm:$0xff]
  %v619 = vld [vmem:[%s1 + $0x1288] sm:$0xff]
  %v620 = vld [vmem:[%s1 + $0x1290] sm:$0xff]
  %v621 = vld [vmem:[%s1 + $0x1298] sm:$0xff]
  %v622 = vld [vmem:[%s1 + $0x12a0] sm:$0xff]
  %v623 = vld [vmem:[%s1 + $0x12a8] sm:$0xff]
  %v624 = vld [vmem:[%s1 + $0x12b0] sm:$0xff]
  %v625 = vld [vmem:[%s1 + $0x12b8] sm:$0xff]
  %v626 = vld [vmem:[%s1 + $0x12c0] sm:$0xff]
  %v627 = vld [vmem:[%s1 + $0x12c8] sm:$0xff]
  %v628 = vld [vmem:[%s1 + $0x12d0] sm:$0xff]
  %v629 = vld [vmem:[%s1 + $0x12d8] sm:$0xff]
  %v630 = vld [vmem:[%s1 + $0x12e0] sm:$0xff]
  %v631 = vld [vmem:[%s1 + $0x12e8] sm:$0xff]
  %v632 = vld [vmem:[%s1 + $0x12f0] sm:$0xff]
  %v633 = vld [vmem:[%s1 + $0x12f8] sm:$0xff]
  %v634 = vld [vmem:[%s1 + $0x1300] sm:$0xff]
  %v635 = vld [vmem:[%s1 + $0x1308] sm:$0xff]
  %v636 = vld [vmem:[%s1 + $0x1310] sm:$0xff]
  %v637 = vld [vmem:[%s1 + $0x1318] sm:$0xff]
  %v638 = vld [vmem:[%s1 + $0x1320] sm:$0xff]
  %v639 = vld [vmem:[%s1 + $0x1328] sm:$0xff]
  %v640 = vld [vmem:[%s1 + $0x1330] sm:$0xff]
  %v641 = vld [vmem:[%s1 + $0x1338] sm:$0xff]
  %v642 = vld [vmem:[%s1 + $0x1340] sm:$0xff]
  %v643 = vld [vmem:[%s1 + $0x1348] sm:$0xff]
  %v644 = vld [vmem:[%s1 + $0x1350] sm:$0xff]
  %v645 = vld [vmem:[%s1 + $0x1358] sm:$0xff]
  %v646 = vld [vmem:[%s1 + $0x1360] sm:$0xff]
  %v647 = vld [vmem:[%s1 + $0x1368] sm:$0xff]
  %v648 = vld [vmem:[%s1 + $0x1370] sm:$0xff]
  %v649 = vld [vmem:[%s1 + $0x1378] sm:$0xff]
  %v650 = vld [vmem:[%s1 + $0x1380] sm:$0xff]
  %v651 = vld [vmem:[%s1 + $0x1388] sm:$0xff]
  %v652 = vld [vmem:[%s1 + $0x1390] sm:$0xff]
  %v653 = vld [vmem:[%s1 + $0x1398] sm:$0xff]
  %v654 = vld [vmem:[%s1 + $0x13a0] sm:$0xff]
  %v655 = vld [vmem:[%s1 + $0x13a8] sm:$0xff]
  %v656 = vld [vmem:[%s1 + $0x13b0] sm:$0xff]
  %v657 = vld [vmem:[%s1 + $0x13b8] sm:$0xff]
  %v658 = vld [vmem:[%s1 + $0x13c0] sm:$0xff]
  %v659 = vld [vmem:[%s1 + $0x13c8] sm:$0xff]
  %v660 = vld [vmem:[%s1 + $0x13d0] sm:$0xff]
  %v661 = vld [vmem:[%s1 + $0x13d8] sm:$0xff]
  %v662 = vld [vmem:[%s1 + $0x13e0] sm:$0xff]
  %v663 = vld [vmem:[%s1 + $0x13e8] sm:$0xff]
  %v664 = vld [vmem:[%s1 + $0x13f0] sm:$0xff]
  %v665 = vld [vmem:[%s1 + $0x13f8] sm:$0xff]
  %v666 = vld [vmem:[%s1 + $0x1400] sm:$0xff]
  %v667 = vld [vmem:[%s1 + $0x1408] sm:$0xff]
  %v668 = vld [vmem:[%s1 + $0x1410] sm:$0xff]
  %v669 = vld [vmem:[%s1 + $0x1418] sm:$0xff]
  %v670 = vld [vmem:[%s1 + $0x1420] sm:$0xff]
  %v671 = vld [vmem:[%s1 + $0x1428] sm:$0xff]
  %v672 = vld [vmem:[%s1 + $0x1430] sm:$0xff]
  %v673 = vld [vmem:[%s1 + $0x1438] sm:$0xff]
  %v674 = vld [vmem:[%s1 + $0x1440] sm:$0xff]
  %v675 = vld [vmem:[%s1 + $0x1448] sm:$0xff]
  %v676 = vld [vmem:[%s1 + $0x1450] sm:$0xff]
  %v677 = vld [vmem:[%s1 + $0x1458] sm:$0xff]
  %v678 = vld [vmem:[%s1 + $0x1460] sm:$0xff]
  %v679 = vld [vmem:[%s1 + $0x1468] sm:$0xff]
  %v680 = vld [vmem:[%s1 + $0x1470] sm:$0xff]
  %v681 = vld [vmem:[%s1 + $0x1478] sm:$0xff]
  %v682 = vld [vmem:[%s1 + $0x1480] sm:$0xff]
  %v683 = vld [vmem:[%s1 + $0x1488] sm:$0xff]
  %v684 = vld [vmem:[%s1 + $0x1490] sm:$0xff]
  %v685 = vld [vmem:[%s1 + $0x1498] sm:$0xff]
  %v686 = vld [vmem:[%s1 + $0x14a0] sm:$0xff]
  %v687 = vld [vmem:[%s1 + $0x14a8] sm:$0xff]
  %v688 = vld [vmem:[%s1 + $0x14b0] sm:$0xff]
  %v689 = vld [vmem:[%s1 + $0x14b8] sm:$0xff]
  %v690 = vld [vmem:[%s1 + $0x14c0] sm:$0xff]
  %v691 = vld [vmem:[%s1 + $0x14c8] sm:$0xff]
  %v692 = vld [vmem:[%s1 + $0x14d0] sm:$0xff]
  %v693 = vld [vmem:[%s1 + $0x14d8] sm:$0xff]
  %v694 = vld [vmem:[%s1 + $0x14e0] sm:$0xff]
  %v695 = vld [vmem:[%s1 + $0x14e8] sm:$0xff]
  %v696 = vld [vmem:[%s1 + $0x14f0] sm:$0xff]
  %v697 = vld [vmem:[%s1 + $0x14f8] sm:$0xff]
  %v698 = vld [vmem:[%s1 + $0x1500] sm:$0xff]
  %v699 = vld [vmem:[%s1 + $0x1508] sm:$0xff]
  %v700 = vld [vmem:[%s1 + $0x1510] sm:$0xff]
  %v701 = vld [vmem:[%s1 + $0x1518] sm:$0xff]
  %v702 = vld [vmem:[%s1 + $0x1520] sm:$0xff]
  %v703 = vld [vmem:[%s1 + $0x1528] sm:$0xff]
  %v704 = vld [vmem:[%s1 + $0x1530] sm:$0xff]
  %v705 = vld [vmem:[%s1 + $0x1538] sm:$0xff]
  %v706 = vld [vmem:[%s1 + $0x1540] sm:$0xff]
  %v707 = vld [vmem:[%s1 + $0x1548] sm:$0xff]
  %v708 = vld [vmem:[%s1 + $0x1550] sm:$0xff]
  %v709 = vld [vmem:[%s1 + $0x1558] sm:$0xff]
  %v710 = vld [vmem:[%s1 + $0x1560] sm:$0xff]
  %v711 = vld [vmem:[%s1 + $0x1568] sm:$0xff]
  %v712 = vld [vmem:[%s1 + $0x1570] sm:$0xff]
  %v713 = vld [vmem:[%s1 + $0x1578] sm:$0xff]
  %v714 = vld [vmem:[%s1 + $0x1580] sm:$0xff]
  %v715 = vld [vmem:[%s1 + $0x1588] sm:$0xff]
  %v716 = vld [vmem:[%s1 + $0x1590] sm:$0xff]
  %v717 = vld [vmem:[%s1 + $0x1598] sm:$0xff]
  %v718 = vld [vmem:[%s1 + $0x15a0] sm:$0xff]
  %v719 = vld [vmem:[%s1 + $0x15a8] sm:$0xff]
  %v720 = vld [vmem:[%s1 + $0x15b0] sm:$0xff]
  %v721 = vld [vmem:[%s1 + $0x15b8] sm:$0xff]
  %v722 = vld [vmem:[%s1 + $0x15c0] sm:$0xff]
  %v723 = vld [vmem:[%s1 + $0x15c8] sm:$0xff]
  %v724 = vld [vmem:[%s1 + $0x15d0] sm:$0xff]
  %v725 = vld [vmem:[%s1 + $0x15d8] sm:$0xff]
  %v726 = vld [vmem:[%s1 + $0x15e0] sm:$0xff]
  %v727 = vld [vmem:[%s1 + $0x15e8] sm:$0xff]
  %v728 = vld [vmem:[%s1 + $0x15f0] sm:$0xff]
  %v729 = vld [vmem:[%s1 + $0x15f8] sm:$0xff]
  %v730 = vld [vmem:[%s1 + $0x1600] sm:$0xff]
  %v731 = vld [vmem:[%s1 + $0x1608] sm:$0xff]
  %v732 = vld [vmem:[%s1 + $0x1610] sm:$0xff]
  %v733 = vld [vmem:[%s1 + $0x1618] sm:$0xff]
  %v734 = vld [vmem:[%s1 + $0x1620] sm:$0xff]
  %v735 = vld [vmem:[%s1 + $0x1628] sm:$0xff]
  %v736 = vld [vmem:[%s1 + $0x1630] sm:$0xff]
  %v737 = vld [vmem:[%s1 + $0x1638] sm:$0xff]
  %v738 = vld [vmem:[%s1 + $0x1640] sm:$0xff]
  %v739 = vld [vmem:[%s1 + $0x1648] sm:$0xff]
  %v740 = vld [vmem:[%s1 + $0x1650] sm:$0xff]
  %v741 = vld [vmem:[%s1 + $0x1658] sm:$0xff]
  %v742 = vld [vmem:[%s1 + $0x1660] sm:$0xff]
  %v743 = vld [vmem:[%s1 + $0x1668] sm:$0xff]
  %v744 = vld [vmem:[%s1 + $0x1670] sm:$0xff]
  %v745 = vld [vmem:[%s1 + $0x1678] sm:$0xff]
  %v746 = vld [vmem:[%s1 + $0x1680] sm:$0xff]
  %v747 = vld [vmem:[%s1 + $0x1688] sm:$0xff]
  %v748 = vld [vmem:[%s1 + $0x1690] sm:$0xff]
  %v749 = vld [vmem:[%s1 + $0x1698] sm:$0xff]
  %v750 = vld [vmem:[%s1 + $0x16a0] sm:$0xff]
  %v751 = vld [vmem:[%s1 + $0x16a8] sm:$0xff]
  %v752 = vld [vmem:[%s1 + $0x16b0] sm:$0xff]
  %v753 = vld [vmem:[%s1 + $0x16b8] sm:$0xff]
  %v754 = vld [vmem:[%s1 + $0x16c0] sm:$0xff]
  %v755 = vld [vmem:[%s1 + $0x16c8] sm:$0xff]
  %v756 = vld [vmem:[%s1 + $0x16d0] sm:$0xff]
  %v757 = vld [vmem:[%s1 + $0x16d8] sm:$0xff]
  %v758 = vld [vmem:[%s1 + $0x16e0] sm:$0xff]
  %v759 = vld [vmem:[%s1 + $0x16e8] sm:$0xff]
  %v760 = vld [vmem:[%s1 + $0x16f0] sm:$0xff]
  %v761 = vld [vmem:[%s1 + $0x16f8] sm:$0xff]
  %v762 = vld [vmem:[%s1 + $0x1700] sm:$0xff]
  %v763 = vld [vmem:[%s1 + $0x1708] sm:$0xff]
  %v764 = vld [vmem:[%s1 + $0x1710] sm:$0xff]
  %v765 = vld [vmem:[%s1 + $0x1718] sm:$0xff]
  %v766 = vld [vmem:[%s1 + $0x1720] sm:$0xff]
  %v767 = vld [vmem:[%s1 + $0x1728] sm:$0xff]
  %v768 = vld [vmem:[%s1 + $0x1730] sm:$0xff]
  %v769 = vld [vmem:[%s1 + $0x1738] sm:$0xff]
  %v770 = vld [vmem:[%s1 + $0x1740] sm:$0xff]
  %v771 = vld [vmem:[%s1 + $0x1748] sm:$0xff]
  %v772 = vld [vmem:[%s1 + $0x1750] sm:$0xff]
  %v773 = vld [vmem:[%s1 + $0x1758] sm:$0xff]
  %v774 = vld [vmem:[%s1 + $0x1760] sm:$0xff]
  %v775 = vld [vmem:[%s1 + $0x1768] sm:$0xff]
  %v776 = vld [vmem:[%s1 + $0x1770] sm:$0xff]
  %v777 = vld [vmem:[%s1 + $0x1778] sm:$0xff]
  %v778 = vld [vmem:[%s1 + $0x1780] sm:$0xff]
  %v779 = vld [vmem:[%s1 + $0x1788] sm:$0xff]
  %v780 = vld [vmem:[%s1 + $0x1790] sm:$0xff]
  %v781 = vld [vmem:[%s1 + $0x1798] sm:$0xff]
  %v782 = vld [vmem:[%s1 + $0x17a0] sm:$0xff]
  %v783 = vld [vmem:[%s1 + $0x17a8] sm:$0xff]
  %v784 = vld [vmem:[%s1 + $0x17b0] sm:$0xff]
  %v785 = vld [vmem:[%s1 + $0x17b8] sm:$0xff]
  %v786 = vld [vmem:[%s1 + $0x17c0] sm:$0xff]
  %v787 = vld [vmem:[%s1 + $0x17c8] sm:$0xff]
  %v788 = vld [vmem:[%s1 + $0x17d0] sm:$0xff]
  %v789 = vld [vmem:[%s1 + $0x17d8] sm:$0xff]
  %v790 = vld [vmem:[%s1 + $0x17e0] sm:$0xff]
  %v791 = vld [vmem:[%s1 + $0x17e8] sm:$0xff]
  %v792 = vld [vmem:[%s1 + $0x17f0] sm:$0xff]
  %v793 = vld [vmem:[%s1 + $0x17f8] sm:$0xff]
  %v794 = vld [vmem:[%s1 + $0x1800] sm:$0xff]
  %v795 = vld [vmem:[%s1 + $0x1808] sm:$0xff]
  %v796 = vld [vmem:[%s1 + $0x1810] sm:$0xff]
  %v797 = vld [vmem:[%s1 + $0x1818] sm:$0xff]
  %v798 = vld [vmem:[%s1 + $0x1820] sm:$0xff]
  %v799 = vld [vmem:[%s1 + $0x1828] sm:$0xff]
  %v800 = vld [vmem:[%s1 + $0x1830] sm:$0xff]
  %v801 = vld [vmem:[%s1 + $0x1838] sm:$0xff]
  %v802 = vld [vmem:[%s1 + $0x1840] sm:$0xff]
  %v803 = vld [vmem:[%s1 + $0x1848] sm:$0xff]
  %v804 = vld [vmem:[%s1 + $0x1850] sm:$0xff]
  %v805 = vld [vmem:[%s1 + $0x1858] sm:$0xff]
  %v806 = vld [vmem:[%s1 + $0x1860] sm:$0xff]
  %v807 = vld [vmem:[%s1 + $0x1868] sm:$0xff]
  %v808 = vld [vmem:[%s1 + $0x1870] sm:$0xff]
  %v809 = vld [vmem:[%s1 + $0x1878] sm:$0xff]
  %v810 = vld [vmem:[%s1 + $0x1880] sm:$0xff]
  %v811 = vld [vmem:[%s1 + $0x1888] sm:$0xff]
  %v812 = vld [vmem:[%s1 + $0x1890] sm:$0xff]
  %v813 = vld [vmem:[%s1 + $0x1898] sm:$0xff]
  %v814 = vld [vmem:[%s1 + $0x18a0] sm:$0xff]
  %v815 = vld [vmem:[%s1 + $0x18a8] sm:$0xff]
  %v816 = vld [vmem:[%s1 + $0x18b0] sm:$0xff]
  %v817 = vld [vmem:[%s1 + $0x18b8] sm:$0xff]
  %v818 = vld [vmem:[%s1 + $0x18c0] sm:$0xff]
  %v819 = vld [vmem:[%s1 + $0x18c8] sm:$0xff]
  %v820 = vld [vmem:[%s1 + $0x18d0] sm:$0xff]
  %v821 = vld [vmem:[%s1 + $0x18d8] sm:$0xff]
  %v822 = vld [vmem:[%s1 + $0x18e0] sm:$0xff]
  %v823 = vld [vmem:[%s1 + $0x18e8] sm:$0xff]
  %v824 = vld [vmem:[%s1 + $0x18f0] sm:$0xff]
  %v825 = vld [vmem:[%s1 + $0x18f8] sm:$0xff]
  %v826 = vld [vmem:[%s1 + $0x1900] sm:$0xff]
  %v827 = vld [vmem:[%s1 + $0x1908] sm:$0xff]
  %v828 = vld [vmem:[%s1 + $0x1910] sm:$0xff]
  %v829 = vld [vmem:[%s1 + $0x1918] sm:$0xff]
  %v830 = vld [vmem:[%s1 + $0x1920] sm:$0xff]
  %v831 = vld [vmem:[%s1 + $0x1928] sm:$0xff]
  %v832 = vld [vmem:[%s1 + $0x1930] sm:$0xff]
  %v833 = vld [vmem:[%s1 + $0x1938] sm:$0xff]
  %v834 = vld [vmem:[%s1 + $0x1940] sm:$0xff]
  %v835 = vld [vmem:[%s1 + $0x1948] sm:$0xff]
  %v836 = vld [vmem:[%s1 + $0x1950] sm:$0xff]
  %v837 = vld [vmem:[%s1 + $0x1958] sm:$0xff]
  %v838 = vld [vmem:[%s1 + $0x1960] sm:$0xff]
  %v839 = vld [vmem:[%s1 + $0x1968] sm:$0xff]
  %v840 = vld [vmem:[%s1 + $0x1970] sm:$0xff]
  %v841 = vld [vmem:[%s1 + $0x1978] sm:$0xff]
  %v842 = vld [vmem:[%s1 + $0x1980] sm:$0xff]
  %v843 = vld [vmem:[%s1 + $0x1988] sm:$0xff]
  %v844 = vld [vmem:[%s1 + $0x1990] sm:$0xff]
  %v845 = vld [vmem:[%s1 + $0x1998] sm:$0xff]
  %v846 = vld [vmem:[%s1 + $0x19a0] sm:$0xff]
  %v847 = vld [vmem:[%s1 + $0x19a8] sm:$0xff]
  %v848 = vld [vmem:[%s1 + $0x19b0] sm:$0xff]
  %v849 = vld [vmem:[%s1 + $0x19b8] sm:$0xff]
  %v850 = vld [vmem:[%s1 + $0x19c0] sm:$0xff]
  %v851 = vld [vmem:[%s1 + $0x19c8] sm:$0xff]
  %v852 = vld [vmem:[%s1 + $0x19d0] sm:$0xff]
  %v853 = vld [vmem:[%s1 + $0x19d8] sm:$0xff]
  %v854 = vld [vmem:[%s1 + $0x19e0] sm:$0xff]
  %v855 = vld [vmem:[%s1 + $0x19e8] sm:$0xff]
  %v856 = vld [vmem:[%s1 + $0x19f0] sm:$0xff]
  %v857 = vld [vmem:[%s1 + $0x19f8] sm:$0xff]
  %v858 = vld [vmem:[%s1 + $0x1a00] sm:$0xff]
  %v859 = vld [vmem:[%s1 + $0x1a08] sm:$0xff]
  %v860 = vld [vmem:[%s1 + $0x1a10] sm:$0xff]
  %v861 = vld [vmem:[%s1 + $0x1a18] sm:$0xff]
  %v862 = vld [vmem:[%s1 + $0x1a20] sm:$0xff]
  %v863 = vld [vmem:[%s1 + $0x1a28] sm:$0xff]
  %v864 = vld [vmem:[%s1 + $0x1a30] sm:$0xff]
  %v865 = vld [vmem:[%s1 + $0x1a38] sm:$0xff]
  %v866 = vld [vmem:[%s1 + $0x1a40] sm:$0xff]
  %v867 = vld [vmem:[%s1 + $0x1a48] sm:$0xff]
  %v868 = vld [vmem:[%s1 + $0x1a50] sm:$0xff]
  %v869 = vld [vmem:[%s1 + $0x1a58] sm:$0xff]
  %v870 = vld [vmem:[%s1 + $0x1a60] sm:$0xff]
  %v871 = vld [vmem:[%s1 + $0x1a68] sm:$0xff]
  %v872 = vld [vmem:[%s1 + $0x1a70] sm:$0xff]
  %v873 = vld [vmem:[%s1 + $0x1a78] sm:$0xff]
  %v874 = vld [vmem:[%s1 + $0x1a80] sm:$0xff]
  %v875 = vld [vmem:[%s1 + $0x1a88] sm:$0xff]
  %v876 = vld [vmem:[%s1 + $0x1a90] sm:$0xff]
  %v877 = vld [vmem:[%s1 + $0x1a98] sm:$0xff]
  %v878 = vld [vmem:[%s1 + $0x1aa0] sm:$0xff]
  %v879 = vld [vmem:[%s1 + $0x1aa8] sm:$0xff]
  %v880 = vld [vmem:[%s1 + $0x1ab0] sm:$0xff]
  %v881 = vld [vmem:[%s1 + $0x1ab8] sm:$0xff]
  %v882 = vld [vmem:[%s1 + $0x1ac0] sm:$0xff]
  %v883 = vld [vmem:[%s1 + $0x1ac8] sm:$0xff]
  %v884 = vld [vmem:[%s1 + $0x1ad0] sm:$0xff]
  %v885 = vld [vmem:[%s1 + $0x1ad8] sm:$0xff]
  %v886 = vld [vmem:[%s1 + $0x1ae0] sm:$0xff]
  %v887 = vld [vmem:[%s1 + $0x1ae8] sm:$0xff]
  %v888 = vld [vmem:[%s1 + $0x1af0] sm:$0xff]
  %v889 = vld [vmem:[%s1 + $0x1af8] sm:$0xff]
  %v890 = vld [vmem:[%s1 + $0x1b00] sm:$0xff]
  %v891 = vld [vmem:[%s1 + $0x1b08] sm:$0xff]
  %v892 = vld [vmem:[%s1 + $0x1b10] sm:$0xff]
  %v893 = vld [vmem:[%s1 + $0x1b18] sm:$0xff]
  %v894 = vld [vmem:[%s1 + $0x1b20] sm:$0xff]
  %v895 = vld [vmem:[%s1 + $0x1b28] sm:$0xff]
  %v896 = vld [vmem:[%s1 + $0x1b30] sm:$0xff]
  %v897 = vld [vmem:[%s1 + $0x1b38] sm:$0xff]
  %v898 = vld [vmem:[%s1 + $0x1b40] sm:$0xff]
  %v899 = vld [vmem:[%s1 + $0x1b48] sm:$0xff]
  %v900 = vld [vmem:[%s1 + $0x1b50] sm:$0xff]
  %v901 = vld [vmem:[%s1 + $0x1b58] sm:$0xff]
  %v902 = vld [vmem:[%s1 + $0x1b60] sm:$0xff]
  %v903 = vld [vmem:[%s1 + $0x1b68] sm:$0xff]
  %v904 = vld [vmem:[%s1 + $0x1b70] sm:$0xff]
  %v905 = vld [vmem:[%s1 + $0x1b78] sm:$0xff]
  %v906 = vld [vmem:[%s1 + $0x1b80] sm:$0xff]
  %v907 = vld [vmem:[%s1 + $0x1b88] sm:$0xff]
  %v908 = vld [vmem:[%s1 + $0x1b90] sm:$0xff]
  %v909 = vld [vmem:[%s1 + $0x1b98] sm:$0xff]
  %v910 = vld [vmem:[%s1 + $0x1ba0] sm:$0xff]
  %v911 = vld [vmem:[%s1 + $0x1ba8] sm:$0xff]
  %v912 = vld [vmem:[%s1 + $0x1bb0] sm:$0xff]
  %v913 = vld [vmem:[%s1 + $0x1bb8] sm:$0xff]
  %v914 = vld [vmem:[%s1 + $0x1bc0] sm:$0xff]
  %v915 = vld [vmem:[%s1 + $0x1bc8] sm:$0xff]
  %v916 = vld [vmem:[%s1 + $0x1bd0] sm:$0xff]
  %v917 = vld [vmem:[%s1 + $0x1bd8] sm:$0xff]
  %v918 = vld [vmem:[%s1 + $0x1be0] sm:$0xff]
  %v919 = vld [vmem:[%s1 + $0x1be8] sm:$0xff]
  %v920 = vld [vmem:[%s1 + $0x1bf0] sm:$0xff]
  %v921 = vld [vmem:[%s1 + $0x1bf8] sm:$0xff]
  %v922 = vld [vmem:[%s1 + $0x1c00] sm:$0xff]
  %v923 = vld [vmem:[%s1 + $0x1c08] sm:$0xff]
  %v924 = vld [vmem:[%s1 + $0x1c10] sm:$0xff]
  %v925 = vld [vmem:[%s1 + $0x1c18] sm:$0xff]
  %v926 = vld [vmem:[%s1 + $0x1c20] sm:$0xff]
  %v927 = vld [vmem:[%s1 + $0x1c28] sm:$0xff]
  %v928 = vld [vmem:[%s1 + $0x1c30] sm:$0xff]
  %v929 = vld [vmem:[%s1 + $0x1c38] sm:$0xff]
  %v930 = vld [vmem:[%s1 + $0x1c40] sm:$0xff]
  %v931 = vld [vmem:[%s1 + $0x1c48] sm:$0xff]
  %v932 = vld [vmem:[%s1 + $0x1c50] sm:$0xff]
  %v933 = vld [vmem:[%s1 + $0x1c58] sm:$0xff]
  %v934 = vld [vmem:[%s1 + $0x1c60] sm:$0xff]
  %v935 = vld [vmem:[%s1 + $0x1c68] sm:$0xff]
  %v936 = vld [vmem:[%s1 + $0x1c70] sm:$0xff]
  %v937 = vld [vmem:[%s1 + $0x1c78] sm:$0xff]
  %v938 = vld [vmem:[%s1 + $0x1c80] sm:$0xff]
  %v939 = vld [vmem:[%s1 + $0x1c88] sm:$0xff]
  %v940 = vld [vmem:[%s1 + $0x1c90] sm:$0xff]
  %v941 = vld [vmem:[%s1 + $0x1c98] sm:$0xff]
  %v942 = vld [vmem:[%s1 + $0x1ca0] sm:$0xff]
  %v943 = vld [vmem:[%s1 + $0x1ca8] sm:$0xff]
  %v944 = vld [vmem:[%s1 + $0x1cb0] sm:$0xff]
  %v945 = vld [vmem:[%s1 + $0x1cb8] sm:$0xff]
  %v946 = vld [vmem:[%s1 + $0x1cc0] sm:$0xff]
  %v947 = vld [vmem:[%s1 + $0x1cc8] sm:$0xff]
  %v948 = vld [vmem:[%s1 + $0x1cd0] sm:$0xff]
  %v949 = vld [vmem:[%s1 + $0x1cd8] sm:$0xff]
  %v950 = vld [vmem:[%s1 + $0x1ce0] sm:$0xff]
  %v951 = vld [vmem:[%s1 + $0x1ce8] sm:$0xff]
  %v952 = vld [vmem:[%s1 + $0x1cf0] sm:$0xff]
  %v953 = vld [vmem:[%s1 + $0x1cf8] sm:$0xff]
  %v954 = vld [vmem:[%s1 + $0x1d00] sm:$0xff]
  %v955 = vld [vmem:[%s1 + $0x1d08] sm:$0xff]
  %v956 = vld [vmem:[%s1 + $0x1d10] sm:$0xff]
  %v957 = vld [vmem:[%s1 + $0x1d18] sm:$0xff]
  %v958 = vld [vmem:[%s1 + $0x1d20] sm:$0xff]
  %v959 = vld [vmem:[%s1 + $0x1d28] sm:$0xff]
  %v960 = vld [vmem:[%s1 + $0x1d30] sm:$0xff]
  %v961 = vld [vmem:[%s1 + $0x1d38] sm:$0xff]
  %v962 = vld [vmem:[%s1 + $0x1d40] sm:$0xff]
  %v963 = vld [vmem:[%s1 + $0x1d48] sm:$0xff]
  %v964 = vld [vmem:[%s1 + $0x1d50] sm:$0xff]
  %v965 = vld [vmem:[%s1 + $0x1d58] sm:$0xff]
  %v966 = vld [vmem:[%s1 + $0x1d60] sm:$0xff]
  %v967 = vld [vmem:[%s1 + $0x1d68] sm:$0xff]
  %v968 = vld [vmem:[%s1 + $0x1d70] sm:$0xff]
  %v969 = vld [vmem:[%s1 + $0x1d78] sm:$0xff]
  %v970 = vld [vmem:[%s1 + $0x1d80] sm:$0xff]
  %v971 = vld [vmem:[%s1 + $0x1d88] sm:$0xff]
  %v972 = vld [vmem:[%s1 + $0x1d90] sm:$0xff]
  %v973 = vld [vmem:[%s1 + $0x1d98] sm:$0xff]
  %v974 = vld [vmem:[%s1 + $0x1da0] sm:$0xff]
  %v975 = vld [vmem:[%s1 + $0x1da8] sm:$0xff]
  %v976 = vld [vmem:[%s1 + $0x1db0] sm:$0xff]
  %v977 = vld [vmem:[%s1 + $0x1db8] sm:$0xff]
  %v978 = vld [vmem:[%s1 + $0x1dc0] sm:$0xff]
  %v979 = vld [vmem:[%s1 + $0x1dc8] sm:$0xff]
  %v980 = vld [vmem:[%s1 + $0x1dd0] sm:$0xff]
  %v981 = vld [vmem:[%s1 + $0x1dd8] sm:$0xff]
  %v982 = vld [vmem:[%s1 + $0x1de0] sm:$0xff]
  %v983 = vld [vmem:[%s1 + $0x1de8] sm:$0xff]
  %v984 = vld [vmem:[%s1 + $0x1df0] sm:$0xff]
  %v985 = vld [vmem:[%s1 + $0x1df8] sm:$0xff]
  %v986 = vld [vmem:[%s1 + $0x1e00] sm:$0xff]
  %v987 = vld [vmem:[%s1 + $0x1e08] sm:$0xff]
  %v988 = vld [vmem:[%s1 + $0x1e10] sm:$0xff]
  %v989 = vld [vmem:[%s1 + $0x1e18] sm:$0xff]
  %v990 = vld [vmem:[%s1 + $0x1e20] sm:$0xff]
  %v991 = vld [vmem:[%s1 + $0x1e28] sm:$0xff]
  %v992 = vld [vmem:[%s1 + $0x1e30] sm:$0xff]
  %v993 = vld [vmem:[%s1 + $0x1e38] sm:$0xff]
  %v994 = vld [vmem:[%s1 + $0x1e40] sm:$0xff]
  %v995 = vld [vmem:[%s1 + $0x1e48] sm:$0xff]
  %v996 = vld [vmem:[%s1 + $0x1e50] sm:$0xff]
  %v997 = vld [vmem:[%s1 + $0x1e58] sm:$0xff]
  %v998 = vld [vmem:[%s1 + $0x1e60] sm:$0xff]
  %v999 = vld [vmem:[%s1 + $0x1e68] sm:$0xff]
  %v1000 = vld [vmem:[%s1 + $0x1e70] sm:$0xff]
  %v1001 = vld [vmem:[%s1 + $0x1e78] sm:$0xff]
  %v1002 = vld [vmem:[%s1 + $0x1e80] sm:$0xff]
  %v1003 = vld [vmem:[%s1 + $0x1e88] sm:$0xff]
  %v1004 = vld [vmem:[%s1 + $0x1e90] sm:$0xff]
  %v1005 = vld [vmem:[%s1 + $0x1e98] sm:$0xff]
  %v1006 = vld [vmem:[%s1 + $0x1ea0] sm:$0xff]
  %v1007 = vld [vmem:[%s1 + $0x1ea8] sm:$0xff]
  %v1008 = vld [vmem:[%s1 + $0x1eb0] sm:$0xff]
  %v1009 = vld [vmem:[%s1 + $0x1eb8] sm:$0xff]
  %v1010 = vld [vmem:[%s1 + $0x1ec0] sm:$0xff]
  %v1011 = vld [vmem:[%s1 + $0x1ec8] sm:$0xff]
  %v1012 = vld [vmem:[%s1 + $0x1ed0] sm:$0xff]
  %v1013 = vld [vmem:[%s1 + $0x1ed8] sm:$0xff]
  %v1014 = vld [vmem:[%s1 + $0x1ee0] sm:$0xff]
  %v1015 = vld [vmem:[%s1 + $0x1ee8] sm:$0xff]
  %v1016 = vld [vmem:[%s1 + $0x1ef0] sm:$0xff]
  %v1017 = vld [vmem:[%s1 + $0x1ef8] sm:$0xff]
  %v1018 = vld [vmem:[%s1 + $0x1f00] sm:$0xff]
  %v1019 = vld [vmem:[%s1 + $0x1f08] sm:$0xff]
  %v1020 = vld [vmem:[%s1 + $0x1f10] sm:$0xff]
  %v1021 = vld [vmem:[%s1 + $0x1f18] sm:$0xff]
  %v1022 = vld [vmem:[%s1 + $0x1f20] sm:$0xff]
  %v1023 = vld [vmem:[%s1 + $0x1f28] sm:$0xff]
  %v1024 = vld [vmem:[%s1 + $0x1f30] sm:$0xff]
  %v1025 = vld [vmem:[%s1 + $0x1f38] sm:$0xff]
  %v1026 = vld [vmem:[%s1 + $0x1f40] sm:$0xff]
  %v1027 = vld [vmem:[%s1 + $0x1f48] sm:$0xff]
  %v1028 = vld [vmem:[%s1 + $0x1f50] sm:$0xff]
  %v1029 = vld [vmem:[%s1 + $0x1f58] sm:$0xff]
  %v1030 = vld [vmem:[%s1 + $0x1f60] sm:$0xff]
  %v1031 = vld [vmem:[%s1 + $0x1f68] sm:$0xff]
  %v1032 = vld [vmem:[%s1 + $0x1f70] sm:$0xff]
  %v1033 = vld [vmem:[%s1 + $0x1f78] sm:$0xff]
  %v1034 = vld [vmem:[%s1 + $0x1f80] sm:$0xff]
  %v1035 = vld [vmem:[%s1 + $0x1f88] sm:$0xff]
  %v1036 = vld [vmem:[%s1 + $0x1f90] sm:$0xff]
  %v1037 = vld [vmem:[%s1 + $0x1f98] sm:$0xff]
  %v1038 = vld [vmem:[%s1 + $0x1fa0] sm:$0xff]
  %v1039 = vld [vmem:[%s1 + $0x1fa8] sm:$0xff]
  %v1040 = vld [vmem:[%s1 + $0x1fb0] sm:$0xff]
  %v1041 = vld [vmem:[%s1 + $0x1fb8] sm:$0xff]
  %v1042 = vld [vmem:[%s1 + $0x1fc0] sm:$0xff]
  %v1043 = vld [vmem:[%s1 + $0x1fc8] sm:$0xff]
  %v1044 = vld [vmem:[%s1 + $0x1fd0] sm:$0xff]
  %v1045 = vld [vmem:[%s1 + $0x1fd8] sm:$0xff]
  %v1046 = vld [vmem:[%s1 + $0x1fe0] sm:$0xff]
  %v1047 = vld [vmem:[%s1 + $0x1fe8] sm:$0xff]
  %v1048 = vld [vmem:[%s1 + $0x1ff0] sm:$0xff]
  %v1049 = vld [vmem:[%s1 + $0x1ff8] sm:$0xff]
  %v1050 = vld [vmem:[%s2] sm:$0xf]
  %v1052 = vlaneseq
  %v1053 = vshrl.u32 %v1052, 7
  %v1054 = vsub.s32 0, %v1053
  %v1055 = vrot.slane %v1050, %v1054
  %v1056 = vlaneseq
  %v1057 = vshrl.u32 %v1056, 7
  %v1058 = vsub.s32 1, %v1057
  %v1059 = vrot.slane %v1050, %v1058
  %v1060 = vlaneseq
  %v1061 = vshrl.u32 %v1060, 7
  %v1062 = vsub.s32 2, %v1061
  %v1063 = vrot.slane %v1050, %v1062
  %v1064 = vlaneseq
  %v1065 = vshrl.u32 %v1064, 7
  %v1066 = vsub.s32 3, %v1065
  %v1067 = vrot.slane %v1050, %v1066
  %v1076 = vcombine.high %v22, %v22
  %v1078 = vunpack.c.l.s4 1983009808
  %v1079 = vunpack.c.0.s8 %v1078
  %v1080 = vlaneseq
  %v1081 = vshrl.u32 %v1080, 7
  %v1082 = vsub.s32 %v1079, %v1081
  %v1083 = vrot.slane %v22, %v1082
  %v1085 = vunpack.c.l.s4 1983009808
  %v1086 = vunpack.c.0.s8 %v1085
  %v1087 = vlaneseq
  %v1088 = vshrl.u32 %v1087, 7
  %v1089 = vsub.s32 %v1086, %v1088
  %v1090 = vrot.slane %v1076, %v1089
  %v1091 = vcombine.high %v1083, %v1083
  %v1092 = vcombine.high %v1090, %v1090
  %v1093 = vcombine.high %v23, %v23
  %v1095 = vunpack.c.l.s4 1983009808
  %v1096 = vunpack.c.0.s8 %v1095
  %v1097 = vlaneseq
  %v1098 = vshrl.u32 %v1097, 7
  %v1099 = vsub.s32 %v1096, %v1098
  %v1100 = vrot.slane %v23, %v1099
  %v1102 = vunpack.c.l.s4 1983009808
  %v1103 = vunpack.c.0.s8 %v1102
  %v1104 = vlaneseq
  %v1105 = vshrl.u32 %v1104, 7
  %v1106 = vsub.s32 %v1103, %v1105
  %v1107 = vrot.slane %v1093, %v1106
  %v1108 = vcombine.high %v1100, %v1100
  %v1109 = vcombine.high %v1107, %v1107
  %v1110 = vcombine.high %v24, %v24
  %v1112 = vunpack.c.l.s4 1983009808
  %v1113 = vunpack.c.0.s8 %v1112
  %v1114 = vlaneseq
  %v1115 = vshrl.u32 %v1114, 7
  %v1116 = vsub.s32 %v1113, %v1115
  %v1117 = vrot.slane %v24, %v1116
  %v1119 = vunpack.c.l.s4 1983009808
  %v1120 = vunpack.c.0.s8 %v1119
  %v1121 = vlaneseq
  %v1122 = vshrl.u32 %v1121, 7
  %v1123 = vsub.s32 %v1120, %v1122
  %v1124 = vrot.slane %v1110, %v1123
  %v1125 = vcombine.high %v1117, %v1117
  %v1126 = vcombine.high %v1124, %v1124
  %v1127 = vcombine.high %v25, %v25
  %v1129 = vunpack.c.l.s4 1983009808
  %v1130 = vunpack.c.0.s8 %v1129
  %v1131 = vlaneseq
  %v1132 = vshrl.u32 %v1131, 7
  %v1133 = vsub.s32 %v1130, %v1132
  %v1134 = vrot.slane %v25, %v1133
  %v1136 = vunpack.c.l.s4 1983009808
  %v1137 = vunpack.c.0.s8 %v1136
  %v1138 = vlaneseq
  %v1139 = vshrl.u32 %v1138, 7
  %v1140 = vsub.s32 %v1137, %v1139
  %v1141 = vrot.slane %v1127, %v1140
  %v1142 = vcombine.high %v1134, %v1134
  %v1143 = vcombine.high %v1141, %v1141
  %1160 = vmatprep.subr.mxu0 %v27
  %1161 = vmatpush1.msra.mxu0 %v26
  %1162 = vmatprep.subr.mxu0 %v31
  %1163 = vmatpush1.msra.mxu0 %v30
  %1164 = vmatprep.subr.mxu0 %v35
  %1165 = vmatpush1.msra.mxu0 %v34
  %1166 = vmatprep.subr.mxu0 %v39
  %1167 = vmatpush1.msra.mxu0 %v38
  %1168 = vmatprep.subr.mxu0 %v43
  %1169 = vmatpush1.msra.mxu0 %v42
  %1170 = vmatprep.subr.mxu0 %v47
  %1171 = vmatpush1.msra.mxu0 %v46
  %1172 = vmatprep.subr.mxu0 %v51
  %1173 = vmatpush1.msra.mxu0 %v50
  %1174 = vmatprep.subr.mxu0 %v55
  %1175 = vmatpush1.msra.mxu0 %v54
  %1176 = vmatprep.subr.mxu0 %v59
  %1177 = vmatpush1.msra.mxu0 %v58
  %1178 = vmatprep.subr.mxu0 %v63
  %1179 = vmatpush1.msra.mxu0 %v62
  %1180 = vmatprep.subr.mxu0 %v67
  %1181 = vmatpush1.msra.mxu0 %v66
  %1182 = vmatprep.subr.mxu0 %v71
  %1183 = vmatpush1.msra.mxu0 %v70
  %1184 = vmatprep.subr.mxu0 %v75
  %1185 = vmatpush1.msra.mxu0 %v74
  %1186 = vmatprep.subr.mxu0 %v79
  %1187 = vmatpush1.msra.mxu0 %v78
  %1188 = vmatprep.subr.mxu0 %v83
  %1189 = vmatpush1.msra.mxu0 %v82
  %1190 = vmatprep.subr.mxu0 %v87
  %1191 = vmatpush1.msra.mxu0 %v86
  %1192 = vmatprep.subr.mxu0 %v91
  %1193 = vmatpush1.msra.mxu0 %v90
  %1194 = vmatprep.subr.mxu0 %v95
  %1195 = vmatpush1.msra.mxu0 %v94
  %1196 = vmatprep.subr.mxu0 %v99
  %1197 = vmatpush1.msra.mxu0 %v98
  %1198 = vmatprep.subr.mxu0 %v103
  %1199 = vmatpush1.msra.mxu0 %v102
  %1200 = vmatprep.subr.mxu0 %v107
  %1201 = vmatpush1.msra.mxu0 %v106
  %1202 = vmatprep.subr.mxu0 %v111
  %1203 = vmatpush1.msra.mxu0 %v110
  %1204 = vmatprep.subr.mxu0 %v115
  %1205 = vmatpush1.msra.mxu0 %v114
  %1206 = vmatprep.subr.mxu0 %v119
  %1207 = vmatpush1.msra.mxu0 %v118
  %1208 = vmatprep.subr.mxu0 %v123
  %1209 = vmatpush1.msra.mxu0 %v122
  %1210 = vmatprep.subr.mxu0 %v127
  %1211 = vmatpush1.msra.mxu0 %v126
  %1212 = vmatprep.subr.mxu0 %v131
  %1213 = vmatpush1.msra.mxu0 %v130
  %1214 = vmatprep.subr.mxu0 %v135
  %1215 = vmatpush1.msra.mxu0 %v134
  %1216 = vmatprep.subr.mxu0 %v139
  %1217 = vmatpush1.msra.mxu0 %v138
  %1218 = vmatprep.subr.mxu0 %v143
  %1219 = vmatpush1.msra.mxu0 %v142
  %1220 = vmatprep.subr.mxu0 %v147
  %1221 = vmatpush1.msra.mxu0 %v146
  %1222 = vmatprep.subr.mxu0 %v151
  %1223 = vmatpush1.msra.mxu0 %v150
  %1224 = vmatprep.mubr.f32.mxu0 %v1091
  %1225 = vmatmul.mubr.f32.gmra.mrb[0].mxu0 %v1083
  %v1226 = vpop.f32.mrb[0].mxu0
  %v1227 = vadd.f32 %v1055, %v1226
  %v1228 = vpop.f32.mrb[0].mxu0
  %v1229 = vadd.f32 %v1059, %v1228
  %1230 = vdwg.mxu0
  %1231 = vmatprep.subr.mxu0 %v155
  %1232 = vmatpush1.msra.mxu0 %v154
  %1233 = vmatprep.subr.mxu0 %v159
  %1234 = vmatpush1.msra.mxu0 %v158
  %1235 = vmatprep.subr.mxu0 %v163
  %1236 = vmatpush1.msra.mxu0 %v162
  %1237 = vmatprep.subr.mxu0 %v167
  %1238 = vmatpush1.msra.mxu0 %v166
  %1239 = vmatprep.subr.mxu0 %v171
  %1240 = vmatpush1.msra.mxu0 %v170
  %1241 = vmatprep.subr.mxu0 %v175
  %1242 = vmatpush1.msra.mxu0 %v174
  %1243 = vmatprep.subr.mxu0 %v179
  %1244 = vmatpush1.msra.mxu0 %v178
  %1245 = vmatprep.subr.mxu0 %v183
  %1246 = vmatpush1.msra.mxu0 %v182
  %1247 = vmatprep.subr.mxu0 %v187
  %1248 = vmatpush1.msra.mxu0 %v186
  %1249 = vmatprep.subr.mxu0 %v191
  %1250 = vmatpush1.msra.mxu0 %v190
  %1251 = vmatprep.subr.mxu0 %v195
  %1252 = vmatpush1.msra.mxu0 %v194
  %1253 = vmatprep.subr.mxu0 %v199
  %1254 = vmatpush1.msra.mxu0 %v198
  %1255 = vmatprep.subr.mxu0 %v203
  %1256 = vmatpush1.msra.mxu0 %v202
  %1257 = vmatprep.subr.mxu0 %v207
  %1258 = vmatpush1.msra.mxu0 %v206
  %1259 = vmatprep.subr.mxu0 %v211
  %1260 = vmatpush1.msra.mxu0 %v210
  %1261 = vmatprep.subr.mxu0 %v215
  %1262 = vmatpush1.msra.mxu0 %v214
  %1263 = vmatprep.subr.mxu0 %v219
  %1264 = vmatpush1.msra.mxu0 %v218
  %1265 = vmatprep.subr.mxu0 %v223
  %1266 = vmatpush1.msra.mxu0 %v222
  %1267 = vmatprep.subr.mxu0 %v227
  %1268 = vmatpush1.msra.mxu0 %v226
  %1269 = vmatprep.subr.mxu0 %v231
  %1270 = vmatpush1.msra.mxu0 %v230
  %1271 = vmatprep.subr.mxu0 %v235
  %1272 = vmatpush1.msra.mxu0 %v234
  %1273 = vmatprep.subr.mxu0 %v239
  %1274 = vmatpush1.msra.mxu0 %v238
  %1275 = vmatprep.subr.mxu0 %v243
  %1276 = vmatpush1.msra.mxu0 %v242
  %1277 = vmatprep.subr.mxu0 %v247
  %1278 = vmatpush1.msra.mxu0 %v246
  %1279 = vmatprep.subr.mxu0 %v251
  %1280 = vmatpush1.msra.mxu0 %v250
  %1281 = vmatprep.subr.mxu0 %v255
  %1282 = vmatpush1.msra.mxu0 %v254
  %1283 = vmatprep.subr.mxu0 %v259
  %1284 = vmatpush1.msra.mxu0 %v258
  %1285 = vmatprep.subr.mxu0 %v263
  %1286 = vmatpush1.msra.mxu0 %v262
  %1287 = vmatprep.subr.mxu0 %v267
  %1288 = vmatpush1.msra.mxu0 %v266
  %1289 = vmatprep.subr.mxu0 %v271
  %1290 = vmatpush1.msra.mxu0 %v270
  %1291 = vmatprep.subr.mxu0 %v275
  %1292 = vmatpush1.msra.mxu0 %v274
  %1293 = vmatprep.subr.mxu0 %v279
  %1294 = vmatpush1.msra.mxu0 %v278
  %1295 = vmatprep.mubr.f32.mxu0 %v1092
  %1296 = vmatmul.mubr.f32.gmra.mrb[0].mxu0 %v1090
  %v1297 = vpop.f32.mrb[0].mxu0
  %v1298 = vadd.f32 %v1227, %v1297
  %v1299 = vpop.f32.mrb[0].mxu0
  %v1300 = vadd.f32 %v1229, %v1299
  %1301 = vdwg.mxu0
  %1302 = vmatprep.subr.mxu0 %v283
  %1303 = vmatpush1.msra.mxu0 %v282
  %1304 = vmatprep.subr.mxu0 %v287
  %1305 = vmatpush1.msra.mxu0 %v286
  %1306 = vmatprep.subr.mxu0 %v291
  %1307 = vmatpush1.msra.mxu0 %v290
  %1308 = vmatprep.subr.mxu0 %v295
  %1309 = vmatpush1.msra.mxu0 %v294
  %1310 = vmatprep.subr.mxu0 %v299
  %1311 = vmatpush1.msra.mxu0 %v298
  %1312 = vmatprep.subr.mxu0 %v303
  %1313 = vmatpush1.msra.mxu0 %v302
  %1314 = vmatprep.subr.mxu0 %v307
  %1315 = vmatpush1.msra.mxu0 %v306
  %1316 = vmatprep.subr.mxu0 %v311
  %1317 = vmatpush1.msra.mxu0 %v310
  %1318 = vmatprep.subr.mxu0 %v315
  %1319 = vmatpush1.msra.mxu0 %v314
  %1320 = vmatprep.subr.mxu0 %v319
  %1321 = vmatpush1.msra.mxu0 %v318
  %1322 = vmatprep.subr.mxu0 %v323
  %1323 = vmatpush1.msra.mxu0 %v322
  %1324 = vmatprep.subr.mxu0 %v327
  %1325 = vmatpush1.msra.mxu0 %v326
  %1326 = vmatprep.subr.mxu0 %v331
  %1327 = vmatpush1.msra.mxu0 %v330
  %1328 = vmatprep.subr.mxu0 %v335
  %1329 = vmatpush1.msra.mxu0 %v334
  %1330 = vmatprep.subr.mxu0 %v339
  %1331 = vmatpush1.msra.mxu0 %v338
  %1332 = vmatprep.subr.mxu0 %v343
  %1333 = vmatpush1.msra.mxu0 %v342
  %1334 = vmatprep.subr.mxu0 %v347
  %1335 = vmatpush1.msra.mxu0 %v346
  %1336 = vmatprep.subr.mxu0 %v351
  %1337 = vmatpush1.msra.mxu0 %v350
  %1338 = vmatprep.subr.mxu0 %v355
  %1339 = vmatpush1.msra.mxu0 %v354
  %1340 = vmatprep.subr.mxu0 %v359
  %1341 = vmatpush1.msra.mxu0 %v358
  %1342 = vmatprep.subr.mxu0 %v363
  %1343 = vmatpush1.msra.mxu0 %v362
  %1344 = vmatprep.subr.mxu0 %v367
  %1345 = vmatpush1.msra.mxu0 %v366
  %1346 = vmatprep.subr.mxu0 %v371
  %1347 = vmatpush1.msra.mxu0 %v370
  %1348 = vmatprep.subr.mxu0 %v375
  %1349 = vmatpush1.msra.mxu0 %v374
  %1350 = vmatprep.subr.mxu0 %v379
  %1351 = vmatpush1.msra.mxu0 %v378
  %1352 = vmatprep.subr.mxu0 %v383
  %1353 = vmatpush1.msra.mxu0 %v382
  %1354 = vmatprep.subr.mxu0 %v387
  %1355 = vmatpush1.msra.mxu0 %v386
  %1356 = vmatprep.subr.mxu0 %v391
  %1357 = vmatpush1.msra.mxu0 %v390
  %1358 = vmatprep.subr.mxu0 %v395
  %1359 = vmatpush1.msra.mxu0 %v394
  %1360 = vmatprep.subr.mxu0 %v399
  %1361 = vmatpush1.msra.mxu0 %v398
  %1362 = vmatprep.subr.mxu0 %v403
  %1363 = vmatpush1.msra.mxu0 %v402
  %1364 = vmatprep.subr.mxu0 %v407
  %1365 = vmatpush1.msra.mxu0 %v406
  %1366 = vmatprep.mubr.f32.mxu0 %v1108
  %1367 = vmatmul.mubr.f32.gmra.mrb[0].mxu0 %v1100
  %v1368 = vpop.f32.mrb[0].mxu0
  %v1369 = vadd.f32 %v1298, %v1368
  %v1370 = vpop.f32.mrb[0].mxu0
  %v1371 = vadd.f32 %v1300, %v1370
  %1372 = vdwg.mxu0
  %1373 = vmatprep.subr.mxu0 %v411
  %1374 = vmatpush1.msra.mxu0 %v410
  %1375 = vmatprep.subr.mxu0 %v415
  %1376 = vmatpush1.msra.mxu0 %v414
  %1377 = vmatprep.subr.mxu0 %v419
  %1378 = vmatpush1.msra.mxu0 %v418
  %1379 = vmatprep.subr.mxu0 %v423
  %1380 = vmatpush1.msra.mxu0 %v422
  %1381 = vmatprep.subr.mxu0 %v427
  %1382 = vmatpush1.msra.mxu0 %v426
  %1383 = vmatprep.subr.mxu0 %v431
  %1384 = vmatpush1.msra.mxu0 %v430
  %1385 = vmatprep.subr.mxu0 %v435
  %1386 = vmatpush1.msra.mxu0 %v434
  %1387 = vmatprep.subr.mxu0 %v439
  %1388 = vmatpush1.msra.mxu0 %v438
  %1389 = vmatprep.subr.mxu0 %v443
  %1390 = vmatpush1.msra.mxu0 %v442
  %1391 = vmatprep.subr.mxu0 %v447
  %1392 = vmatpush1.msra.mxu0 %v446
  %1393 = vmatprep.subr.mxu0 %v451
  %1394 = vmatpush1.msra.mxu0 %v450
  %1395 = vmatprep.subr.mxu0 %v455
  %1396 = vmatpush1.msra.mxu0 %v454
  %1397 = vmatprep.subr.mxu0 %v459
  %1398 = vmatpush1.msra.mxu0 %v458
  %1399 = vmatprep.subr.mxu0 %v463
  %1400 = vmatpush1.msra.mxu0 %v462
  %1401 = vmatprep.subr.mxu0 %v467
  %1402 = vmatpush1.msra.mxu0 %v466
  %1403 = vmatprep.subr.mxu0 %v471
  %1404 = vmatpush1.msra.mxu0 %v470
  %1405 = vmatprep.subr.mxu0 %v475
  %1406 = vmatpush1.msra.mxu0 %v474
  %1407 = vmatprep.subr.mxu0 %v479
  %1408 = vmatpush1.msra.mxu0 %v478
  %1409 = vmatprep.subr.mxu0 %v483
  %1410 = vmatpush1.msra.mxu0 %v482
  %1411 = vmatprep.subr.mxu0 %v487
  %1412 = vmatpush1.msra.mxu0 %v486
  %1413 = vmatprep.subr.mxu0 %v491
  %1414 = vmatpush1.msra.mxu0 %v490
  %1415 = vmatprep.subr.mxu0 %v495
  %1416 = vmatpush1.msra.mxu0 %v494
  %1417 = vmatprep.subr.mxu0 %v499
  %1418 = vmatpush1.msra.mxu0 %v498
  %1419 = vmatprep.subr.mxu0 %v503
  %1420 = vmatpush1.msra.mxu0 %v502
  %1421 = vmatprep.subr.mxu0 %v507
  %1422 = vmatpush1.msra.mxu0 %v506
  %1423 = vmatprep.subr.mxu0 %v511
  %1424 = vmatpush1.msra.mxu0 %v510
  %1425 = vmatprep.subr.mxu0 %v515
  %1426 = vmatpush1.msra.mxu0 %v514
  %1427 = vmatprep.subr.mxu0 %v519
  %1428 = vmatpush1.msra.mxu0 %v518
  %1429 = vmatprep.subr.mxu0 %v523
  %1430 = vmatpush1.msra.mxu0 %v522
  %1431 = vmatprep.subr.mxu0 %v527
  %1432 = vmatpush1.msra.mxu0 %v526
  %1433 = vmatprep.subr.mxu0 %v531
  %1434 = vmatpush1.msra.mxu0 %v530
  %1435 = vmatprep.subr.mxu0 %v535
  %1436 = vmatpush1.msra.mxu0 %v534
  %1437 = vmatprep.mubr.f32.mxu0 %v1109
  %1438 = vmatmul.mubr.f32.gmra.mrb[0].mxu0 %v1107
  %v1439 = vpop.f32.mrb[0].mxu0
  %v1440 = vadd.f32 %v1369, %v1439
  %v1441 = vpop.f32.mrb[0].mxu0
  %v1442 = vadd.f32 %v1371, %v1441
  %1443 = vdwg.mxu0
  %1444 = vmatprep.subr.mxu0 %v539
  %1445 = vmatpush1.msra.mxu0 %v538
  %1446 = vmatprep.subr.mxu0 %v543
  %1447 = vmatpush1.msra.mxu0 %v542
  %1448 = vmatprep.subr.mxu0 %v547
  %1449 = vmatpush1.msra.mxu0 %v546
  %1450 = vmatprep.subr.mxu0 %v551
  %1451 = vmatpush1.msra.mxu0 %v550
  %1452 = vmatprep.subr.mxu0 %v555
  %1453 = vmatpush1.msra.mxu0 %v554
  %1454 = vmatprep.subr.mxu0 %v559
  %1455 = vmatpush1.msra.mxu0 %v558
  %1456 = vmatprep.subr.mxu0 %v563
  %1457 = vmatpush1.msra.mxu0 %v562
  %1458 = vmatprep.subr.mxu0 %v567
  %1459 = vmatpush1.msra.mxu0 %v566
  %1460 = vmatprep.subr.mxu0 %v571
  %1461 = vmatpush1.msra.mxu0 %v570
  %1462 = vmatprep.subr.mxu0 %v575
  %1463 = vmatpush1.msra.mxu0 %v574
  %1464 = vmatprep.subr.mxu0 %v579
  %1465 = vmatpush1.msra.mxu0 %v578
  %1466 = vmatprep.subr.mxu0 %v583
  %1467 = vmatpush1.msra.mxu0 %v582
  %1468 = vmatprep.subr.mxu0 %v587
  %1469 = vmatpush1.msra.mxu0 %v586
  %1470 = vmatprep.subr.mxu0 %v591
  %1471 = vmatpush1.msra.mxu0 %v590
  %1472 = vmatprep.subr.mxu0 %v595
  %1473 = vmatpush1.msra.mxu0 %v594
  %1474 = vmatprep.subr.mxu0 %v599
  %1475 = vmatpush1.msra.mxu0 %v598
  %1476 = vmatprep.subr.mxu0 %v603
  %1477 = vmatpush1.msra.mxu0 %v602
  %1478 = vmatprep.subr.mxu0 %v607
  %1479 = vmatpush1.msra.mxu0 %v606
  %1480 = vmatprep.subr.mxu0 %v611
  %1481 = vmatpush1.msra.mxu0 %v610
  %1482 = vmatprep.subr.mxu0 %v615
  %1483 = vmatpush1.msra.mxu0 %v614
  %1484 = vmatprep.subr.mxu0 %v619
  %1485 = vmatpush1.msra.mxu0 %v618
  %1486 = vmatprep.subr.mxu0 %v623
  %1487 = vmatpush1.msra.mxu0 %v622
  %1488 = vmatprep.subr.mxu0 %v627
  %1489 = vmatpush1.msra.mxu0 %v626
  %1490 = vmatprep.subr.mxu0 %v631
  %1491 = vmatpush1.msra.mxu0 %v630
  %1492 = vmatprep.subr.mxu0 %v635
  %1493 = vmatpush1.msra.mxu0 %v634
  %1494 = vmatprep.subr.mxu0 %v639
  %1495 = vmatpush1.msra.mxu0 %v638
  %1496 = vmatprep.subr.mxu0 %v643
  %1497 = vmatpush1.msra.mxu0 %v642
  %1498 = vmatprep.subr.mxu0 %v647
  %1499 = vmatpush1.msra.mxu0 %v646
  %1500 = vmatprep.subr.mxu0 %v651
  %1501 = vmatpush1.msra.mxu0 %v650
  %1502 = vmatprep.subr.mxu0 %v655
  %1503 = vmatpush1.msra.mxu0 %v654
  %1504 = vmatprep.subr.mxu0 %v659
  %1505 = vmatpush1.msra.mxu0 %v658
  %1506 = vmatprep.subr.mxu0 %v663
  %1507 = vmatpush1.msra.mxu0 %v662
  %1508 = vmatprep.mubr.f32.mxu0 %v1125
  %1509 = vmatmul.mubr.f32.gmra.mrb[0].mxu0 %v1117
  %v1510 = vpop.f32.mrb[0].mxu0
  %v1511 = vadd.f32 %v1440, %v1510
  %v1512 = vpop.f32.mrb[0].mxu0
  %v1513 = vadd.f32 %v1442, %v1512
  %1514 = vdwg.mxu0
  %1515 = vmatprep.subr.mxu0 %v667
  %1516 = vmatpush1.msra.mxu0 %v666
  %1517 = vmatprep.subr.mxu0 %v671
  %1518 = vmatpush1.msra.mxu0 %v670
  %1519 = vmatprep.subr.mxu0 %v675
  %1520 = vmatpush1.msra.mxu0 %v674
  %1521 = vmatprep.subr.mxu0 %v679
  %1522 = vmatpush1.msra.mxu0 %v678
  %1523 = vmatprep.subr.mxu0 %v683
  %1524 = vmatpush1.msra.mxu0 %v682
  %1525 = vmatprep.subr.mxu0 %v687
  %1526 = vmatpush1.msra.mxu0 %v686
  %1527 = vmatprep.subr.mxu0 %v691
  %1528 = vmatpush1.msra.mxu0 %v690
  %1529 = vmatprep.subr.mxu0 %v695
  %1530 = vmatpush1.msra.mxu0 %v694
  %1531 = vmatprep.subr.mxu0 %v699
  %1532 = vmatpush1.msra.mxu0 %v698
  %1533 = vmatprep.subr.mxu0 %v703
  %1534 = vmatpush1.msra.mxu0 %v702
  %1535 = vmatprep.subr.mxu0 %v707
  %1536 = vmatpush1.msra.mxu0 %v706
  %1537 = vmatprep.subr.mxu0 %v711
  %1538 = vmatpush1.msra.mxu0 %v710
  %1539 = vmatprep.subr.mxu0 %v715
  %1540 = vmatpush1.msra.mxu0 %v714
  %1541 = vmatprep.subr.mxu0 %v719
  %1542 = vmatpush1.msra.mxu0 %v718
  %1543 = vmatprep.subr.mxu0 %v723
  %1544 = vmatpush1.msra.mxu0 %v722
  %1545 = vmatprep.subr.mxu0 %v727
  %1546 = vmatpush1.msra.mxu0 %v726
  %1547 = vmatprep.subr.mxu0 %v731
  %1548 = vmatpush1.msra.mxu0 %v730
  %1549 = vmatprep.subr.mxu0 %v735
  %1550 = vmatpush1.msra.mxu0 %v734
  %1551 = vmatprep.subr.mxu0 %v739
  %1552 = vmatpush1.msra.mxu0 %v738
  %1553 = vmatprep.subr.mxu0 %v743
  %1554 = vmatpush1.msra.mxu0 %v742
  %1555 = vmatprep.subr.mxu0 %v747
  %1556 = vmatpush1.msra.mxu0 %v746
  %1557 = vmatprep.subr.mxu0 %v751
  %1558 = vmatpush1.msra.mxu0 %v750
  %1559 = vmatprep.subr.mxu0 %v755
  %1560 = vmatpush1.msra.mxu0 %v754
  %1561 = vmatprep.subr.mxu0 %v759
  %1562 = vmatpush1.msra.mxu0 %v758
  %1563 = vmatprep.subr.mxu0 %v763
  %1564 = vmatpush1.msra.mxu0 %v762
  %1565 = vmatprep.subr.mxu0 %v767
  %1566 = vmatpush1.msra.mxu0 %v766
  %1567 = vmatprep.subr.mxu0 %v771
  %1568 = vmatpush1.msra.mxu0 %v770
  %1569 = vmatprep.subr.mxu0 %v775
  %1570 = vmatpush1.msra.mxu0 %v774
  %1571 = vmatprep.subr.mxu0 %v779
  %1572 = vmatpush1.msra.mxu0 %v778
  %1573 = vmatprep.subr.mxu0 %v783
  %1574 = vmatpush1.msra.mxu0 %v782
  %1575 = vmatprep.subr.mxu0 %v787
  %1576 = vmatpush1.msra.mxu0 %v786
  %1577 = vmatprep.subr.mxu0 %v791
  %1578 = vmatpush1.msra.mxu0 %v790
  %1579 = vmatprep.mubr.f32.mxu0 %v1126
  %1580 = vmatmul.mubr.f32.gmra.mrb[0].mxu0 %v1124
  %v1581 = vpop.f32.mrb[0].mxu0
  %v1582 = vadd.f32 %v1511, %v1581
  %v1583 = vpop.f32.mrb[0].mxu0
  %v1584 = vadd.f32 %v1513, %v1583
  %1585 = vdwg.mxu0
  %1586 = vmatprep.subr.mxu0 %v795
  %1587 = vmatpush1.msra.mxu0 %v794
  %1588 = vmatprep.subr.mxu0 %v799
  %1589 = vmatpush1.msra.mxu0 %v798
  %1590 = vmatprep.subr.mxu0 %v803
  %1591 = vmatpush1.msra.mxu0 %v802
  %1592 = vmatprep.subr.mxu0 %v807
  %1593 = vmatpush1.msra.mxu0 %v806
  %1594 = vmatprep.subr.mxu0 %v811
  %1595 = vmatpush1.msra.mxu0 %v810
  %1596 = vmatprep.subr.mxu0 %v815
  %1597 = vmatpush1.msra.mxu0 %v814
  %1598 = vmatprep.subr.mxu0 %v819
  %1599 = vmatpush1.msra.mxu0 %v818
  %1600 = vmatprep.subr.mxu0 %v823
  %1601 = vmatpush1.msra.mxu0 %v822
  %1602 = vmatprep.subr.mxu0 %v827
  %1603 = vmatpush1.msra.mxu0 %v826
  %1604 = vmatprep.subr.mxu0 %v831
  %1605 = vmatpush1.msra.mxu0 %v830
  %1606 = vmatprep.subr.mxu0 %v835
  %1607 = vmatpush1.msra.mxu0 %v834
  %1608 = vmatprep.subr.mxu0 %v839
  %1609 = vmatpush1.msra.mxu0 %v838
  %1610 = vmatprep.subr.mxu0 %v843
  %1611 = vmatpush1.msra.mxu0 %v842
  %1612 = vmatprep.subr.mxu0 %v847
  %1613 = vmatpush1.msra.mxu0 %v846
  %1614 = vmatprep.subr.mxu0 %v851
  %1615 = vmatpush1.msra.mxu0 %v850
  %1616 = vmatprep.subr.mxu0 %v855
  %1617 = vmatpush1.msra.mxu0 %v854
  %1618 = vmatprep.subr.mxu0 %v859
  %1619 = vmatpush1.msra.mxu0 %v858
  %1620 = vmatprep.subr.mxu0 %v863
  %1621 = vmatpush1.msra.mxu0 %v862
  %1622 = vmatprep.subr.mxu0 %v867
  %1623 = vmatpush1.msra.mxu0 %v866
  %1624 = vmatprep.subr.mxu0 %v871
  %1625 = vmatpush1.msra.mxu0 %v870
  %1626 = vmatprep.subr.mxu0 %v875
  %1627 = vmatpush1.msra.mxu0 %v874
  %1628 = vmatprep.subr.mxu0 %v879
  %1629 = vmatpush1.msra.mxu0 %v878
  %1630 = vmatprep.subr.mxu0 %v883
  %1631 = vmatpush1.msra.mxu0 %v882
  %1632 = vmatprep.subr.mxu0 %v887
  %1633 = vmatpush1.msra.mxu0 %v886
  %1634 = vmatprep.subr.mxu0 %v891
  %1635 = vmatpush1.msra.mxu0 %v890
  %1636 = vmatprep.subr.mxu0 %v895
  %1637 = vmatpush1.msra.mxu0 %v894
  %1638 = vmatprep.subr.mxu0 %v899
  %1639 = vmatpush1.msra.mxu0 %v898
  %1640 = vmatprep.subr.mxu0 %v903
  %1641 = vmatpush1.msra.mxu0 %v902
  %1642 = vmatprep.subr.mxu0 %v907
  %1643 = vmatpush1.msra.mxu0 %v906
  %1644 = vmatprep.subr.mxu0 %v911
  %1645 = vmatpush1.msra.mxu0 %v910
  %1646 = vmatprep.subr.mxu0 %v915
  %1647 = vmatpush1.msra.mxu0 %v914
  %1648 = vmatprep.subr.mxu0 %v919
  %1649 = vmatpush1.msra.mxu0 %v918
  %1650 = vmatprep.mubr.f32.mxu0 %v1142
  %1651 = vmatmul.mubr.f32.gmra.mrb[0].mxu0 %v1134
  %v1652 = vpop.f32.mrb[0].mxu0
  %v1653 = vadd.f32 %v1582, %v1652
  %v1654 = vpop.f32.mrb[0].mxu0
  %v1655 = vadd.f32 %v1584, %v1654
  %1656 = vdwg.mxu0
  %1657 = vmatprep.subr.mxu0 %v923
  %1658 = vmatpush1.msra.mxu0 %v922
  %1659 = vmatprep.subr.mxu0 %v927
  %1660 = vmatpush1.msra.mxu0 %v926
  %1661 = vmatprep.subr.mxu0 %v931
  %1662 = vmatpush1.msra.mxu0 %v930
  %1663 = vmatprep.subr.mxu0 %v935
  %1664 = vmatpush1.msra.mxu0 %v934
  %1665 = vmatprep.subr.mxu0 %v939
  %1666 = vmatpush1.msra.mxu0 %v938
  %1667 = vmatprep.subr.mxu0 %v943
  %1668 = vmatpush1.msra.mxu0 %v942
  %1669 = vmatprep.subr.mxu0 %v947
  %1670 = vmatpush1.msra.mxu0 %v946
  %1671 = vmatprep.subr.mxu0 %v951
  %1672 = vmatpush1.msra.mxu0 %v950
  %1673 = vmatprep.subr.mxu0 %v955
  %1674 = vmatpush1.msra.mxu0 %v954
  %1675 = vmatprep.subr.mxu0 %v959
  %1676 = vmatpush1.msra.mxu0 %v958
  %1677 = vmatprep.subr.mxu0 %v963
  %1678 = vmatpush1.msra.mxu0 %v962
  %1679 = vmatprep.subr.mxu0 %v967
  %1680 = vmatpush1.msra.mxu0 %v966
  %1681 = vmatprep.subr.mxu0 %v971
  %1682 = vmatpush1.msra.mxu0 %v970
  %1683 = vmatprep.subr.mxu0 %v975
  %1684 = vmatpush1.msra.mxu0 %v974
  %1685 = vmatprep.subr.mxu0 %v979
  %1686 = vmatpush1.msra.mxu0 %v978
  %1687 = vmatprep.subr.mxu0 %v983
  %1688 = vmatpush1.msra.mxu0 %v982
  %1689 = vmatprep.subr.mxu0 %v987
  %1690 = vmatpush1.msra.mxu0 %v986
  %1691 = vmatprep.subr.mxu0 %v991
  %1692 = vmatpush1.msra.mxu0 %v990
  %1693 = vmatprep.subr.mxu0 %v995
  %1694 = vmatpush1.msra.mxu0 %v994
  %1695 = vmatprep.subr.mxu0 %v999
  %1696 = vmatpush1.msra.mxu0 %v998
  %1697 = vmatprep.subr.mxu0 %v1003
  %1698 = vmatpush1.msra.mxu0 %v1002
  %1699 = vmatprep.subr.mxu0 %v1007
  %1700 = vmatpush1.msra.mxu0 %v1006
  %1701 = vmatprep.subr.mxu0 %v1011
  %1702 = vmatpush1.msra.mxu0 %v1010
  %1703 = vmatprep.subr.mxu0 %v1015
  %1704 = vmatpush1.msra.mxu0 %v1014
  %1705 = vmatprep.subr.mxu0 %v1019
  %1706 = vmatpush1.msra.mxu0 %v1018
  %1707 = vmatprep.subr.mxu0 %v1023
  %1708 = vmatpush1.msra.mxu0 %v1022
  %1709 = vmatprep.subr.mxu0 %v1027
  %1710 = vmatpush1.msra.mxu0 %v1026
  %1711 = vmatprep.subr.mxu0 %v1031
  %1712 = vmatpush1.msra.mxu0 %v1030
  %1713 = vmatprep.subr.mxu0 %v1035
  %1714 = vmatpush1.msra.mxu0 %v1034
  %1715 = vmatprep.subr.mxu0 %v1039
  %1716 = vmatpush1.msra.mxu0 %v1038
  %1717 = vmatprep.subr.mxu0 %v1043
  %1718 = vmatpush1.msra.mxu0 %v1042
  %1719 = vmatprep.subr.mxu0 %v1047
  %1720 = vmatpush1.msra.mxu0 %v1046
  %1721 = vmatprep.mubr.f32.mxu0 %v1143
  %1722 = vmatmul.mubr.f32.gmra.mrb[0].mxu0 %v1141
  %v1723 = vpop.f32.mrb[0].mxu0
  %v1724 = vadd.f32 %v1653, %v1723
  %v1725 = vpop.f32.mrb[0].mxu0
  %v1726 = vadd.f32 %v1655, %v1725
  %1727 = vdwg.mxu0
  %1728 = vmatprep.subr.mxu0 %v29
  %1729 = vmatpush1.msra.mxu0 %v28
  %1730 = vmatprep.subr.mxu0 %v33
  %1731 = vmatpush1.msra.mxu0 %v32
  %1732 = vmatprep.subr.mxu0 %v37
  %1733 = vmatpush1.msra.mxu0 %v36
  %1734 = vmatprep.subr.mxu0 %v41
  %1735 = vmatpush1.msra.mxu0 %v40
  %1736 = vmatprep.subr.mxu0 %v45
  %1737 = vmatpush1.msra.mxu0 %v44
  %1738 = vmatprep.subr.mxu0 %v49
  %1739 = vmatpush1.msra.mxu0 %v48
  %1740 = vmatprep.subr.mxu0 %v53
  %1741 = vmatpush1.msra.mxu0 %v52
  %1742 = vmatprep.subr.mxu0 %v57
  %1743 = vmatpush1.msra.mxu0 %v56
  %1744 = vmatprep.subr.mxu0 %v61
  %1745 = vmatpush1.msra.mxu0 %v60
  %1746 = vmatprep.subr.mxu0 %v65
  %1747 = vmatpush1.msra.mxu0 %v64
  %1748 = vmatprep.subr.mxu0 %v69
  %1749 = vmatpush1.msra.mxu0 %v68
  %1750 = vmatprep.subr.mxu0 %v73
  %1751 = vmatpush1.msra.mxu0 %v72
  %1752 = vmatprep.subr.mxu0 %v77
  %1753 = vmatpush1.msra.mxu0 %v76
  %1754 = vmatprep.subr.mxu0 %v81
  %1755 = vmatpush1.msra.mxu0 %v80
  %1756 = vmatprep.subr.mxu0 %v85
  %1757 = vmatpush1.msra.mxu0 %v84
  %1758 = vmatprep.subr.mxu0 %v89
  %1759 = vmatpush1.msra.mxu0 %v88
  %1760 = vmatprep.subr.mxu0 %v93
  %1761 = vmatpush1.msra.mxu0 %v92
  %1762 = vmatprep.subr.mxu0 %v97
  %1763 = vmatpush1.msra.mxu0 %v96
  %1764 = vmatprep.subr.mxu0 %v101
  %1765 = vmatpush1.msra.mxu0 %v100
  %1766 = vmatprep.subr.mxu0 %v105
  %1767 = vmatpush1.msra.mxu0 %v104
  %1768 = vmatprep.subr.mxu0 %v109
  %1769 = vmatpush1.msra.mxu0 %v108
  %1770 = vmatprep.subr.mxu0 %v113
  %1771 = vmatpush1.msra.mxu0 %v112
  %1772 = vmatprep.subr.mxu0 %v117
  %1773 = vmatpush1.msra.mxu0 %v116
  %1774 = vmatprep.subr.mxu0 %v121
  %1775 = vmatpush1.msra.mxu0 %v120
  %1776 = vmatprep.subr.mxu0 %v125
  %1777 = vmatpush1.msra.mxu0 %v124
  %1778 = vmatprep.subr.mxu0 %v129
  %1779 = vmatpush1.msra.mxu0 %v128
  %1780 = vmatprep.subr.mxu0 %v133
  %1781 = vmatpush1.msra.mxu0 %v132
  %1782 = vmatprep.subr.mxu0 %v137
  %1783 = vmatpush1.msra.mxu0 %v136
  %1784 = vmatprep.subr.mxu0 %v141
  %1785 = vmatpush1.msra.mxu0 %v140
  %1786 = vmatprep.subr.mxu0 %v145
  %1787 = vmatpush1.msra.mxu0 %v144
  %1788 = vmatprep.subr.mxu0 %v149
  %1789 = vmatpush1.msra.mxu0 %v148
  %1790 = vmatprep.subr.mxu0 %v153
  %1791 = vmatpush1.msra.mxu0 %v152
  %1792 = vmatprep.mubr.f32.mxu0 %v1091
  %1793 = vmatmul.mubr.f32.gmra.mrb[0].mxu0 %v1083
  %v1794 = vpop.f32.mrb[0].mxu0
  %v1795 = vadd.f32 %v1063, %v1794
  %v1796 = vpop.f32.mrb[0].mxu0
  %v1797 = vadd.f32 %v1067, %v1796
  %1798 = vdwg.mxu0
  %1799 = vmatprep.subr.mxu0 %v157
  %1800 = vmatpush1.msra.mxu0 %v156
  %1801 = vmatprep.subr.mxu0 %v161
  %1802 = vmatpush1.msra.mxu0 %v160
  %1803 = vmatprep.subr.mxu0 %v165
  %1804 = vmatpush1.msra.mxu0 %v164
  %1805 = vmatprep.subr.mxu0 %v169
  %1806 = vmatpush1.msra.mxu0 %v168
  %1807 = vmatprep.subr.mxu0 %v173
  %1808 = vmatpush1.msra.mxu0 %v172
  %1809 = vmatprep.subr.mxu0 %v177
  %1810 = vmatpush1.msra.mxu0 %v176
  %1811 = vmatprep.subr.mxu0 %v181
  %1812 = vmatpush1.msra.mxu0 %v180
  %1813 = vmatprep.subr.mxu0 %v185
  %1814 = vmatpush1.msra.mxu0 %v184
  %1815 = vmatprep.subr.mxu0 %v189
  %1816 = vmatpush1.msra.mxu0 %v188
  %1817 = vmatprep.subr.mxu0 %v193
  %1818 = vmatpush1.msra.mxu0 %v192
  %1819 = vmatprep.subr.mxu0 %v197
  %1820 = vmatpush1.msra.mxu0 %v196
  %1821 = vmatprep.subr.mxu0 %v201
  %1822 = vmatpush1.msra.mxu0 %v200
  %1823 = vmatprep.subr.mxu0 %v205
  %1824 = vmatpush1.msra.mxu0 %v204
  %1825 = vmatprep.subr.mxu0 %v209
  %1826 = vmatpush1.msra.mxu0 %v208
  %1827 = vmatprep.subr.mxu0 %v213
  %1828 = vmatpush1.msra.mxu0 %v212
  %1829 = vmatprep.subr.mxu0 %v217
  %1830 = vmatpush1.msra.mxu0 %v216
  %1831 = vmatprep.subr.mxu0 %v221
  %1832 = vmatpush1.msra.mxu0 %v220
  %1833 = vmatprep.subr.mxu0 %v225
  %1834 = vmatpush1.msra.mxu0 %v224
  %1835 = vmatprep.subr.mxu0 %v229
  %1836 = vmatpush1.msra.mxu0 %v228
  %1837 = vmatprep.subr.mxu0 %v233
  %1838 = vmatpush1.msra.mxu0 %v232
  %1839 = vmatprep.subr.mxu0 %v237
  %1840 = vmatpush1.msra.mxu0 %v236
  %1841 = vmatprep.subr.mxu0 %v241
  %1842 = vmatpush1.msra.mxu0 %v240
  %1843 = vmatprep.subr.mxu0 %v245
  %1844 = vmatpush1.msra.mxu0 %v244
  %1845 = vmatprep.subr.mxu0 %v249
  %1846 = vmatpush1.msra.mxu0 %v248
  %1847 = vmatprep.subr.mxu0 %v253
  %1848 = vmatpush1.msra.mxu0 %v252
  %1849 = vmatprep.subr.mxu0 %v257
  %1850 = vmatpush1.msra.mxu0 %v256
  %1851 = vmatprep.subr.mxu0 %v261
  %1852 = vmatpush1.msra.mxu0 %v260
  %1853 = vmatprep.subr.mxu0 %v265
  %1854 = vmatpush1.msra.mxu0 %v264
  %1855 = vmatprep.subr.mxu0 %v269
  %1856 = vmatpush1.msra.mxu0 %v268
  %1857 = vmatprep.subr.mxu0 %v273
  %1858 = vmatpush1.msra.mxu0 %v272
  %1859 = vmatprep.subr.mxu0 %v277
  %1860 = vmatpush1.msra.mxu0 %v276
  %1861 = vmatprep.subr.mxu0 %v281
  %1862 = vmatpush1.msra.mxu0 %v280
  %1863 = vmatprep.mubr.f32.mxu0 %v1092
  %1864 = vmatmul.mubr.f32.gmra.mrb[0].mxu0 %v1090
  %v1865 = vpop.f32.mrb[0].mxu0
  %v1866 = vadd.f32 %v1795, %v1865
  %v1867 = vpop.f32.mrb[0].mxu0
  %v1868 = vadd.f32 %v1797, %v1867
  %1869 = vdwg.mxu0
  %1870 = vmatprep.subr.mxu0 %v285
  %1871 = vmatpush1.msra.mxu0 %v284
  %1872 = vmatprep.subr.mxu0 %v289
  %1873 = vmatpush1.msra.mxu0 %v288
  %1874 = vmatprep.subr.mxu0 %v293
  %1875 = vmatpush1.msra.mxu0 %v292
  %1876 = vmatprep.subr.mxu0 %v297
  %1877 = vmatpush1.msra.mxu0 %v296
  %1878 = vmatprep.subr.mxu0 %v301
  %1879 = vmatpush1.msra.mxu0 %v300
  %1880 = vmatprep.subr.mxu0 %v305
  %1881 = vmatpush1.msra.mxu0 %v304
  %1882 = vmatprep.subr.mxu0 %v309
  %1883 = vmatpush1.msra.mxu0 %v308
  %1884 = vmatprep.subr.mxu0 %v313
  %1885 = vmatpush1.msra.mxu0 %v312
  %1886 = vmatprep.subr.mxu0 %v317
  %1887 = vmatpush1.msra.mxu0 %v316
  %1888 = vmatprep.subr.mxu0 %v321
  %1889 = vmatpush1.msra.mxu0 %v320
  %1890 = vmatprep.subr.mxu0 %v325
  %1891 = vmatpush1.msra.mxu0 %v324
  %1892 = vmatprep.subr.mxu0 %v329
  %1893 = vmatpush1.msra.mxu0 %v328
  %1894 = vmatprep.subr.mxu0 %v333
  %1895 = vmatpush1.msra.mxu0 %v332
  %1896 = vmatprep.subr.mxu0 %v337
  %1897 = vmatpush1.msra.mxu0 %v336
  %1898 = vmatprep.subr.mxu0 %v341
  %1899 = vmatpush1.msra.mxu0 %v340
  %1900 = vmatprep.subr.mxu0 %v345
  %1901 = vmatpush1.msra.mxu0 %v344
  %1902 = vmatprep.subr.mxu0 %v349
  %1903 = vmatpush1.msra.mxu0 %v348
  %1904 = vmatprep.subr.mxu0 %v353
  %1905 = vmatpush1.msra.mxu0 %v352
  %1906 = vmatprep.subr.mxu0 %v357
  %1907 = vmatpush1.msra.mxu0 %v356
  %1908 = vmatprep.subr.mxu0 %v361
  %1909 = vmatpush1.msra.mxu0 %v360
  %1910 = vmatprep.subr.mxu0 %v365
  %1911 = vmatpush1.msra.mxu0 %v364
  %1912 = vmatprep.subr.mxu0 %v369
  %1913 = vmatpush1.msra.mxu0 %v368
  %1914 = vmatprep.subr.mxu0 %v373
  %1915 = vmatpush1.msra.mxu0 %v372
  %1916 = vmatprep.subr.mxu0 %v377
  %1917 = vmatpush1.msra.mxu0 %v376
  %1918 = vmatprep.subr.mxu0 %v381
  %1919 = vmatpush1.msra.mxu0 %v380
  %1920 = vmatprep.subr.mxu0 %v385
  %1921 = vmatpush1.msra.mxu0 %v384
  %1922 = vmatprep.subr.mxu0 %v389
  %1923 = vmatpush1.msra.mxu0 %v388
  %1924 = vmatprep.subr.mxu0 %v393
  %1925 = vmatpush1.msra.mxu0 %v392
  %1926 = vmatprep.subr.mxu0 %v397
  %1927 = vmatpush1.msra.mxu0 %v396
  %1928 = vmatprep.subr.mxu0 %v401
  %1929 = vmatpush1.msra.mxu0 %v400
  %1930 = vmatprep.subr.mxu0 %v405
  %1931 = vmatpush1.msra.mxu0 %v404
  %1932 = vmatprep.subr.mxu0 %v409
  %1933 = vmatpush1.msra.mxu0 %v408
  %1934 = vmatprep.mubr.f32.mxu0 %v1108
  %1935 = vmatmul.mubr.f32.gmra.mrb[0].mxu0 %v1100
  %v1936 = vpop.f32.mrb[0].mxu0
  %v1937 = vadd.f32 %v1866, %v1936
  %v1938 = vpop.f32.mrb[0].mxu0
  %v1939 = vadd.f32 %v1868, %v1938
  %1940 = vdwg.mxu0
  %1941 = vmatprep.subr.mxu0 %v413
  %1942 = vmatpush1.msra.mxu0 %v412
  %1943 = vmatprep.subr.mxu0 %v417
  %1944 = vmatpush1.msra.mxu0 %v416
  %1945 = vmatprep.subr.mxu0 %v421
  %1946 = vmatpush1.msra.mxu0 %v420
  %1947 = vmatprep.subr.mxu0 %v425
  %1948 = vmatpush1.msra.mxu0 %v424
  %1949 = vmatprep.subr.mxu0 %v429
  %1950 = vmatpush1.msra.mxu0 %v428
  %1951 = vmatprep.subr.mxu0 %v433
  %1952 = vmatpush1.msra.mxu0 %v432
  %1953 = vmatprep.subr.mxu0 %v437
  %1954 = vmatpush1.msra.mxu0 %v436
  %1955 = vmatprep.subr.mxu0 %v441
  %1956 = vmatpush1.msra.mxu0 %v440
  %1957 = vmatprep.subr.mxu0 %v445
  %1958 = vmatpush1.msra.mxu0 %v444
  %1959 = vmatprep.subr.mxu0 %v449
  %1960 = vmatpush1.msra.mxu0 %v448
  %1961 = vmatprep.subr.mxu0 %v453
  %1962 = vmatpush1.msra.mxu0 %v452
  %1963 = vmatprep.subr.mxu0 %v457
  %1964 = vmatpush1.msra.mxu0 %v456
  %1965 = vmatprep.subr.mxu0 %v461
  %1966 = vmatpush1.msra.mxu0 %v460
  %1967 = vmatprep.subr.mxu0 %v465
  %1968 = vmatpush1.msra.mxu0 %v464
  %1969 = vmatprep.subr.mxu0 %v469
  %1970 = vmatpush1.msra.mxu0 %v468
  %1971 = vmatprep.subr.mxu0 %v473
  %1972 = vmatpush1.msra.mxu0 %v472
  %1973 = vmatprep.subr.mxu0 %v477
  %1974 = vmatpush1.msra.mxu0 %v476
  %1975 = vmatprep.subr.mxu0 %v481
  %1976 = vmatpush1.msra.mxu0 %v480
  %1977 = vmatprep.subr.mxu0 %v485
  %1978 = vmatpush1.msra.mxu0 %v484
  %1979 = vmatprep.subr.mxu0 %v489
  %1980 = vmatpush1.msra.mxu0 %v488
  %1981 = vmatprep.subr.mxu0 %v493
  %1982 = vmatpush1.msra.mxu0 %v492
  %1983 = vmatprep.subr.mxu0 %v497
  %1984 = vmatpush1.msra.mxu0 %v496
  %1985 = vmatprep.subr.mxu0 %v501
  %1986 = vmatpush1.msra.mxu0 %v500
  %1987 = vmatprep.subr.mxu0 %v505
  %1988 = vmatpush1.msra.mxu0 %v504
  %1989 = vmatprep.subr.mxu0 %v509
  %1990 = vmatpush1.msra.mxu0 %v508
  %1991 = vmatprep.subr.mxu0 %v513
  %1992 = vmatpush1.msra.mxu0 %v512
  %1993 = vmatprep.subr.mxu0 %v517
  %1994 = vmatpush1.msra.mxu0 %v516
  %1995 = vmatprep.subr.mxu0 %v521
  %1996 = vmatpush1.msra.mxu0 %v520
  %1997 = vmatprep.subr.mxu0 %v525
  %1998 = vmatpush1.msra.mxu0 %v524
  %1999 = vmatprep.subr.mxu0 %v529
  %2000 = vmatpush1.msra.mxu0 %v528
  %2001 = vmatprep.subr.mxu0 %v533
  %2002 = vmatpush1.msra.mxu0 %v532
  %2003 = vmatprep.subr.mxu0 %v537
  %2004 = vmatpush1.msra.mxu0 %v536
  %2005 = vmatprep.mubr.f32.mxu0 %v1109
  %2006 = vmatmul.mubr.f32.gmra.mrb[0].mxu0 %v1107
  %v2007 = vpop.f32.mrb[0].mxu0
  %v2008 = vadd.f32 %v1937, %v2007
  %v2009 = vpop.f32.mrb[0].mxu0
  %v2010 = vadd.f32 %v1939, %v2009
  %2011 = vdwg.mxu0
  %2012 = vmatprep.subr.mxu0 %v541
  %2013 = vmatpush1.msra.mxu0 %v540
  %2014 = vmatprep.subr.mxu0 %v545
  %2015 = vmatpush1.msra.mxu0 %v544
  %2016 = vmatprep.subr.mxu0 %v549
  %2017 = vmatpush1.msra.mxu0 %v548
  %2018 = vmatprep.subr.mxu0 %v553
  %2019 = vmatpush1.msra.mxu0 %v552
  %2020 = vmatprep.subr.mxu0 %v557
  %2021 = vmatpush1.msra.mxu0 %v556
  %2022 = vmatprep.subr.mxu0 %v561
  %2023 = vmatpush1.msra.mxu0 %v560
  %2024 = vmatprep.subr.mxu0 %v565
  %2025 = vmatpush1.msra.mxu0 %v564
  %2026 = vmatprep.subr.mxu0 %v569
  %2027 = vmatpush1.msra.mxu0 %v568
  %2028 = vmatprep.subr.mxu0 %v573
  %2029 = vmatpush1.msra.mxu0 %v572
  %2030 = vmatprep.subr.mxu0 %v577
  %2031 = vmatpush1.msra.mxu0 %v576
  %2032 = vmatprep.subr.mxu0 %v581
  %2033 = vmatpush1.msra.mxu0 %v580
  %2034 = vmatprep.subr.mxu0 %v585
  %2035 = vmatpush1.msra.mxu0 %v584
  %2036 = vmatprep.subr.mxu0 %v589
  %2037 = vmatpush1.msra.mxu0 %v588
  %2038 = vmatprep.subr.mxu0 %v593
  %2039 = vmatpush1.msra.mxu0 %v592
  %2040 = vmatprep.subr.mxu0 %v597
  %2041 = vmatpush1.msra.mxu0 %v596
  %2042 = vmatprep.subr.mxu0 %v601
  %2043 = vmatpush1.msra.mxu0 %v600
  %2044 = vmatprep.subr.mxu0 %v605
  %2045 = vmatpush1.msra.mxu0 %v604
  %2046 = vmatprep.subr.mxu0 %v609
  %2047 = vmatpush1.msra.mxu0 %v608
  %2048 = vmatprep.subr.mxu0 %v613
  %2049 = vmatpush1.msra.mxu0 %v612
  %2050 = vmatprep.subr.mxu0 %v617
  %2051 = vmatpush1.msra.mxu0 %v616
  %2052 = vmatprep.subr.mxu0 %v621
  %2053 = vmatpush1.msra.mxu0 %v620
  %2054 = vmatprep.subr.mxu0 %v625
  %2055 = vmatpush1.msra.mxu0 %v624
  %2056 = vmatprep.subr.mxu0 %v629
  %2057 = vmatpush1.msra.mxu0 %v628
  %2058 = vmatprep.subr.mxu0 %v633
  %2059 = vmatpush1.msra.mxu0 %v632
  %2060 = vmatprep.subr.mxu0 %v637
  %2061 = vmatpush1.msra.mxu0 %v636
  %2062 = vmatprep.subr.mxu0 %v641
  %2063 = vmatpush1.msra.mxu0 %v640
  %2064 = vmatprep.subr.mxu0 %v645
  %2065 = vmatpush1.msra.mxu0 %v644
  %2066 = vmatprep.subr.mxu0 %v649
  %2067 = vmatpush1.msra.mxu0 %v648
  %2068 = vmatprep.subr.mxu0 %v653
  %2069 = vmatpush1.msra.mxu0 %v652
  %2070 = vmatprep.subr.mxu0 %v657
  %2071 = vmatpush1.msra.mxu0 %v656
  %2072 = vmatprep.subr.mxu0 %v661
  %2073 = vmatpush1.msra.mxu0 %v660
  %2074 = vmatprep.subr.mxu0 %v665
  %2075 = vmatpush1.msra.mxu0 %v664
  %2076 = vmatprep.mubr.f32.mxu0 %v1125
  %2077 = vmatmul.mubr.f32.gmra.mrb[0].mxu0 %v1117
  %v2078 = vpop.f32.mrb[0].mxu0
  %v2079 = vadd.f32 %v2008, %v2078
  %v2080 = vpop.f32.mrb[0].mxu0
  %v2081 = vadd.f32 %v2010, %v2080
  %2082 = vdwg.mxu0
  %2083 = vmatprep.subr.mxu0 %v669
  %2084 = vmatpush1.msra.mxu0 %v668
  %2085 = vmatprep.subr.mxu0 %v673
  %2086 = vmatpush1.msra.mxu0 %v672
  %2087 = vmatprep.subr.mxu0 %v677
  %2088 = vmatpush1.msra.mxu0 %v676
  %2089 = vmatprep.subr.mxu0 %v681
  %2090 = vmatpush1.msra.mxu0 %v680
  %2091 = vmatprep.subr.mxu0 %v685
  %2092 = vmatpush1.msra.mxu0 %v684
  %2093 = vmatprep.subr.mxu0 %v689
  %2094 = vmatpush1.msra.mxu0 %v688
  %2095 = vmatprep.subr.mxu0 %v693
  %2096 = vmatpush1.msra.mxu0 %v692
  %2097 = vmatprep.subr.mxu0 %v697
  %2098 = vmatpush1.msra.mxu0 %v696
  %2099 = vmatprep.subr.mxu0 %v701
  %2100 = vmatpush1.msra.mxu0 %v700
  %2101 = vmatprep.subr.mxu0 %v705
  %2102 = vmatpush1.msra.mxu0 %v704
  %2103 = vmatprep.subr.mxu0 %v709
  %2104 = vmatpush1.msra.mxu0 %v708
  %2105 = vmatprep.subr.mxu0 %v713
  %2106 = vmatpush1.msra.mxu0 %v712
  %2107 = vmatprep.subr.mxu0 %v717
  %2108 = vmatpush1.msra.mxu0 %v716
  %2109 = vmatprep.subr.mxu0 %v721
  %2110 = vmatpush1.msra.mxu0 %v720
  %2111 = vmatprep.subr.mxu0 %v725
  %2112 = vmatpush1.msra.mxu0 %v724
  %2113 = vmatprep.subr.mxu0 %v729
  %2114 = vmatpush1.msra.mxu0 %v728
  %2115 = vmatprep.subr.mxu0 %v733
  %2116 = vmatpush1.msra.mxu0 %v732
  %2117 = vmatprep.subr.mxu0 %v737
  %2118 = vmatpush1.msra.mxu0 %v736
  %2119 = vmatprep.subr.mxu0 %v741
  %2120 = vmatpush1.msra.mxu0 %v740
  %2121 = vmatprep.subr.mxu0 %v745
  %2122 = vmatpush1.msra.mxu0 %v744
  %2123 = vmatprep.subr.mxu0 %v749
  %2124 = vmatpush1.msra.mxu0 %v748
  %2125 = vmatprep.subr.mxu0 %v753
  %2126 = vmatpush1.msra.mxu0 %v752
  %2127 = vmatprep.subr.mxu0 %v757
  %2128 = vmatpush1.msra.mxu0 %v756
  %2129 = vmatprep.subr.mxu0 %v761
  %2130 = vmatpush1.msra.mxu0 %v760
  %2131 = vmatprep.subr.mxu0 %v765
  %2132 = vmatpush1.msra.mxu0 %v764
  %2133 = vmatprep.subr.mxu0 %v769
  %2134 = vmatpush1.msra.mxu0 %v768
  %2135 = vmatprep.subr.mxu0 %v773
  %2136 = vmatpush1.msra.mxu0 %v772
  %2137 = vmatprep.subr.mxu0 %v777
  %2138 = vmatpush1.msra.mxu0 %v776
  %2139 = vmatprep.subr.mxu0 %v781
  %2140 = vmatpush1.msra.mxu0 %v780
  %2141 = vmatprep.subr.mxu0 %v785
  %2142 = vmatpush1.msra.mxu0 %v784
  %2143 = vmatprep.subr.mxu0 %v789
  %2144 = vmatpush1.msra.mxu0 %v788
  %2145 = vmatprep.subr.mxu0 %v793
  %2146 = vmatpush1.msra.mxu0 %v792
  %2147 = vmatprep.mubr.f32.mxu0 %v1126
  %2148 = vmatmul.mubr.f32.gmra.mrb[0].mxu0 %v1124
  %v2149 = vpop.f32.mrb[0].mxu0
  %v2150 = vadd.f32 %v2079, %v2149
  %v2151 = vpop.f32.mrb[0].mxu0
  %v2152 = vadd.f32 %v2081, %v2151
  %2153 = vdwg.mxu0
  %2154 = vmatprep.subr.mxu0 %v797
  %2155 = vmatpush1.msra.mxu0 %v796
  %2156 = vmatprep.subr.mxu0 %v801
  %2157 = vmatpush1.msra.mxu0 %v800
  %2158 = vmatprep.subr.mxu0 %v805
  %2159 = vmatpush1.msra.mxu0 %v804
  %2160 = vmatprep.subr.mxu0 %v809
  %2161 = vmatpush1.msra.mxu0 %v808
  %2162 = vmatprep.subr.mxu0 %v813
  %2163 = vmatpush1.msra.mxu0 %v812
  %2164 = vmatprep.subr.mxu0 %v817
  %2165 = vmatpush1.msra.mxu0 %v816
  %2166 = vmatprep.subr.mxu0 %v821
  %2167 = vmatpush1.msra.mxu0 %v820
  %2168 = vmatprep.subr.mxu0 %v825
  %2169 = vmatpush1.msra.mxu0 %v824
  %2170 = vmatprep.subr.mxu0 %v829
  %2171 = vmatpush1.msra.mxu0 %v828
  %2172 = vmatprep.subr.mxu0 %v833
  %2173 = vmatpush1.msra.mxu0 %v832
  %2174 = vmatprep.subr.mxu0 %v837
  %2175 = vmatpush1.msra.mxu0 %v836
  %2176 = vmatprep.subr.mxu0 %v841
  %2177 = vmatpush1.msra.mxu0 %v840
  %2178 = vmatprep.subr.mxu0 %v845
  %2179 = vmatpush1.msra.mxu0 %v844
  %2180 = vmatprep.subr.mxu0 %v849
  %2181 = vmatpush1.msra.mxu0 %v848
  %2182 = vmatprep.subr.mxu0 %v853
  %2183 = vmatpush1.msra.mxu0 %v852
  %2184 = vmatprep.subr.mxu0 %v857
  %2185 = vmatpush1.msra.mxu0 %v856
  %2186 = vmatprep.subr.mxu0 %v861
  %2187 = vmatpush1.msra.mxu0 %v860
  %2188 = vmatprep.subr.mxu0 %v865
  %2189 = vmatpush1.msra.mxu0 %v864
  %2190 = vmatprep.subr.mxu0 %v869
  %2191 = vmatpush1.msra.mxu0 %v868
  %2192 = vmatprep.subr.mxu0 %v873
  %2193 = vmatpush1.msra.mxu0 %v872
  %2194 = vmatprep.subr.mxu0 %v877
  %2195 = vmatpush1.msra.mxu0 %v876
  %2196 = vmatprep.subr.mxu0 %v881
  %2197 = vmatpush1.msra.mxu0 %v880
  %2198 = vmatprep.subr.mxu0 %v885
  %2199 = vmatpush1.msra.mxu0 %v884
  %2200 = vmatprep.subr.mxu0 %v889
  %2201 = vmatpush1.msra.mxu0 %v888
  %2202 = vmatprep.subr.mxu0 %v893
  %2203 = vmatpush1.msra.mxu0 %v892
  %2204 = vmatprep.subr.mxu0 %v897
  %2205 = vmatpush1.msra.mxu0 %v896
  %2206 = vmatprep.subr.mxu0 %v901
  %2207 = vmatpush1.msra.mxu0 %v900
  %2208 = vmatprep.subr.mxu0 %v905
  %2209 = vmatpush1.msra.mxu0 %v904
  %2210 = vmatprep.subr.mxu0 %v909
  %2211 = vmatpush1.msra.mxu0 %v908
  %2212 = vmatprep.subr.mxu0 %v913
  %2213 = vmatpush1.msra.mxu0 %v912
  %2214 = vmatprep.subr.mxu0 %v917
  %2215 = vmatpush1.msra.mxu0 %v916
  %2216 = vmatprep.subr.mxu0 %v921
  %2217 = vmatpush1.msra.mxu0 %v920
  %2218 = vmatprep.mubr.f32.mxu0 %v1142
  %2219 = vmatmul.mubr.f32.gmra.mrb[0].mxu0 %v1134
  %v2220 = vpop.f32.mrb[0].mxu0
  %v2221 = vadd.f32 %v2150, %v2220
  %v2222 = vpop.f32.mrb[0].mxu0
  %v2223 = vadd.f32 %v2152, %v2222
  %2224 = vdwg.mxu0
  %2225 = vmatprep.subr.mxu0 %v925
  %2226 = vmatpush1.msra.mxu0 %v924
  %2227 = vmatprep.subr.mxu0 %v929
  %2228 = vmatpush1.msra.mxu0 %v928
  %2229 = vmatprep.subr.mxu0 %v933
  %2230 = vmatpush1.msra.mxu0 %v932
  %2231 = vmatprep.subr.mxu0 %v937
  %2232 = vmatpush1.msra.mxu0 %v936
  %2233 = vmatprep.subr.mxu0 %v941
  %2234 = vmatpush1.msra.mxu0 %v940
  %2235 = vmatprep.subr.mxu0 %v945
  %2236 = vmatpush1.msra.mxu0 %v944
  %2237 = vmatprep.subr.mxu0 %v949
  %2238 = vmatpush1.msra.mxu0 %v948
  %2239 = vmatprep.subr.mxu0 %v953
  %2240 = vmatpush1.msra.mxu0 %v952
  %2241 = vmatprep.subr.mxu0 %v957
  %2242 = vmatpush1.msra.mxu0 %v956
  %2243 = vmatprep.subr.mxu0 %v961
  %2244 = vmatpush1.msra.mxu0 %v960
  %2245 = vmatprep.subr.mxu0 %v965
  %2246 = vmatpush1.msra.mxu0 %v964
  %2247 = vmatprep.subr.mxu0 %v969
  %2248 = vmatpush1.msra.mxu0 %v968
  %2249 = vmatprep.subr.mxu0 %v973
  %2250 = vmatpush1.msra.mxu0 %v972
  %2251 = vmatprep.subr.mxu0 %v977
  %2252 = vmatpush1.msra.mxu0 %v976
  %2253 = vmatprep.subr.mxu0 %v981
  %2254 = vmatpush1.msra.mxu0 %v980
  %2255 = vmatprep.subr.mxu0 %v985
  %2256 = vmatpush1.msra.mxu0 %v984
  %2257 = vmatprep.subr.mxu0 %v989
  %2258 = vmatpush1.msra.mxu0 %v988
  %2259 = vmatprep.subr.mxu0 %v993
  %2260 = vmatpush1.msra.mxu0 %v992
  %2261 = vmatprep.subr.mxu0 %v997
  %2262 = vmatpush1.msra.mxu0 %v996
  %2263 = vmatprep.subr.mxu0 %v1001
  %2264 = vmatpush1.msra.mxu0 %v1000
  %2265 = vmatprep.subr.mxu0 %v1005
  %2266 = vmatpush1.msra.mxu0 %v1004
  %2267 = vmatprep.subr.mxu0 %v1009
  %2268 = vmatpush1.msra.mxu0 %v1008
  %2269 = vmatprep.subr.mxu0 %v1013
  %2270 = vmatpush1.msra.mxu0 %v1012
  %2271 = vmatprep.subr.mxu0 %v1017
  %2272 = vmatpush1.msra.mxu0 %v1016
  %2273 = vmatprep.subr.mxu0 %v1021
  %2274 = vmatpush1.msra.mxu0 %v1020
  %2275 = vmatprep.subr.mxu0 %v1025
  %2276 = vmatpush1.msra.mxu0 %v1024
  %2277 = vmatprep.subr.mxu0 %v1029
  %2278 = vmatpush1.msra.mxu0 %v1028
  %2279 = vmatprep.subr.mxu0 %v1033
  %2280 = vmatpush1.msra.mxu0 %v1032
  %2281 = vmatprep.subr.mxu0 %v1037
  %2282 = vmatpush1.msra.mxu0 %v1036
  %2283 = vmatprep.subr.mxu0 %v1041
  %2284 = vmatpush1.msra.mxu0 %v1040
  %2285 = vmatprep.subr.mxu0 %v1045
  %2286 = vmatpush1.msra.mxu0 %v1044
  %2287 = vmatprep.subr.mxu0 %v1049
  %2288 = vmatpush1.msra.mxu0 %v1048
  %2289 = vmatprep.mubr.f32.mxu0 %v1143
  %2290 = vmatmul.mubr.f32.gmra.mrb[0].mxu0 %v1141
  %v2291 = vpop.f32.mrb[0].mxu0
  %v2292 = vadd.f32 %v2221, %v2291
  %v2293 = vpop.f32.mrb[0].mxu0
  %v2294 = vadd.f32 %v2223, %v2293
  %2295 = vdwg.mxu0
  %v2296 = vmax.f32 %v1724, 0.0
  %v2297 = vmax.f32 %v1726, 0.0
  %v2298 = vmax.f32 %v2292, 0.0
  %v2299 = vmax.f32 %v2294, 0.0
  %v2300 = vld [vmem:[%s3] sm:$0xff]
  %v2301 = vld [vmem:[%s3 + $0x8] sm:$0xff]
  %v2302 = vld [vmem:[%s3 + $0x10] sm:$0xff]
  %v2303 = vld [vmem:[%s3 + $0x18] sm:$0xff]
  %v2304 = vld [vmem:[%s3 + $0x20] sm:$0xff]
  %v2305 = vld [vmem:[%s3 + $0x28] sm:$0xff]
  %v2306 = vld [vmem:[%s3 + $0x30] sm:$0xff]
  %v2307 = vld [vmem:[%s3 + $0x38] sm:$0xff]
  %v2308 = vld [vmem:[%s3 + $0x40] sm:$0xff]
  %v2309 = vld [vmem:[%s3 + $0x48] sm:$0xff]
  %v2310 = vld [vmem:[%s3 + $0x50] sm:$0xff]
  %v2311 = vld [vmem:[%s3 + $0x58] sm:$0xff]
  %v2312 = vld [vmem:[%s3 + $0x60] sm:$0xff]
  %v2313 = vld [vmem:[%s3 + $0x68] sm:$0xff]
  %v2314 = vld [vmem:[%s3 + $0x70] sm:$0xff]
  %v2315 = vld [vmem:[%s3 + $0x78] sm:$0xff]
  %v2316 = vld [vmem:[%s3 + $0x80] sm:$0xff]
  %v2317 = vld [vmem:[%s3 + $0x88] sm:$0xff]
  %v2318 = vld [vmem:[%s3 + $0x90] sm:$0xff]
  %v2319 = vld [vmem:[%s3 + $0x98] sm:$0xff]
  %v2320 = vld [vmem:[%s3 + $0xa0] sm:$0xff]
  %v2321 = vld [vmem:[%s3 + $0xa8] sm:$0xff]
  %v2322 = vld [vmem:[%s3 + $0xb0] sm:$0xff]
  %v2323 = vld [vmem:[%s3 + $0xb8] sm:$0xff]
  %v2324 = vld [vmem:[%s3 + $0xc0] sm:$0xff]
  %v2325 = vld [vmem:[%s3 + $0xc8] sm:$0xff]
  %v2326 = vld [vmem:[%s3 + $0xd0] sm:$0xff]
  %v2327 = vld [vmem:[%s3 + $0xd8] sm:$0xff]
  %v2328 = vld [vmem:[%s3 + $0xe0] sm:$0xff]
  %v2329 = vld [vmem:[%s3 + $0xe8] sm:$0xff]
  %v2330 = vld [vmem:[%s3 + $0xf0] sm:$0xff]
  %v2331 = vld [vmem:[%s3 + $0xf8] sm:$0xff]
  %v2332 = vld [vmem:[%s3 + $0x100] sm:$0xff]
  %v2333 = vld [vmem:[%s3 + $0x108] sm:$0xff]
  %v2334 = vld [vmem:[%s3 + $0x110] sm:$0xff]
  %v2335 = vld [vmem:[%s3 + $0x118] sm:$0xff]
  %v2336 = vld [vmem:[%s3 + $0x120] sm:$0xff]
  %v2337 = vld [vmem:[%s3 + $0x128] sm:$0xff]
  %v2338 = vld [vmem:[%s3 + $0x130] sm:$0xff]
  %v2339 = vld [vmem:[%s3 + $0x138] sm:$0xff]
  %v2340 = vld [vmem:[%s3 + $0x140] sm:$0xff]
  %v2341 = vld [vmem:[%s3 + $0x148] sm:$0xff]
  %v2342 = vld [vmem:[%s3 + $0x150] sm:$0xff]
  %v2343 = vld [vmem:[%s3 + $0x158] sm:$0xff]
  %v2344 = vld [vmem:[%s3 + $0x160] sm:$0xff]
  %v2345 = vld [vmem:[%s3 + $0x168] sm:$0xff]
  %v2346 = vld [vmem:[%s3 + $0x170] sm:$0xff]
  %v2347 = vld [vmem:[%s3 + $0x178] sm:$0xff]
  %v2348 = vld [vmem:[%s3 + $0x180] sm:$0xff]
  %v2349 = vld [vmem:[%s3 + $0x188] sm:$0xff]
  %v2350 = vld [vmem:[%s3 + $0x190] sm:$0xff]
  %v2351 = vld [vmem:[%s3 + $0x198] sm:$0xff]
  %v2352 = vld [vmem:[%s3 + $0x1a0] sm:$0xff]
  %v2353 = vld [vmem:[%s3 + $0x1a8] sm:$0xff]
  %v2354 = vld [vmem:[%s3 + $0x1b0] sm:$0xff]
  %v2355 = vld [vmem:[%s3 + $0x1b8] sm:$0xff]
  %v2356 = vld [vmem:[%s3 + $0x1c0] sm:$0xff]
  %v2357 = vld [vmem:[%s3 + $0x1c8] sm:$0xff]
  %v2358 = vld [vmem:[%s3 + $0x1d0] sm:$0xff]
  %v2359 = vld [vmem:[%s3 + $0x1d8] sm:$0xff]
  %v2360 = vld [vmem:[%s3 + $0x1e0] sm:$0xff]
  %v2361 = vld [vmem:[%s3 + $0x1e8] sm:$0xff]
  %v2362 = vld [vmem:[%s3 + $0x1f0] sm:$0xff]
  %v2363 = vld [vmem:[%s3 + $0x1f8] sm:$0xff]
  %v2364 = vld [vmem:[#allocation2] sm:$0x1]
  %v2366 = vlaneseq
  %v2367 = vshrl.u32 %v2366, 7
  %v2368 = vsub.s32 0, %v2367
  %v2369 = vrot.slane %v2364, %v2368
  %2371 = vmatprep.subr.mxu0 0.0
  %2372 = vmatpush1.msra.mxu0 %v2300
  %2373 = vmatprep.subr.mxu0 0.0
  %2374 = vmatpush1.msra.mxu0 %v2301
  %2375 = vmatprep.subr.mxu0 0.0
  %2376 = vmatpush1.msra.mxu0 %v2302
  %2377 = vmatprep.subr.mxu0 0.0
  %2378 = vmatpush1.msra.mxu0 %v2303
  %2379 = vmatprep.subr.mxu0 0.0
  %2380 = vmatpush1.msra.mxu0 %v2304
  %2381 = vmatprep.subr.mxu0 0.0
  %2382 = vmatpush1.msra.mxu0 %v2305
  %2383 = vmatprep.subr.mxu0 0.0
  %2384 = vmatpush1.msra.mxu0 %v2306
  %2385 = vmatprep.subr.mxu0 0.0
  %2386 = vmatpush1.msra.mxu0 %v2307
  %2387 = vmatprep.subr.mxu0 0.0
  %2388 = vmatpush1.msra.mxu0 %v2308
  %2389 = vmatprep.subr.mxu0 0.0
  %2390 = vmatpush1.msra.mxu0 %v2309
  %2391 = vmatprep.subr.mxu0 0.0
  %2392 = vmatpush1.msra.mxu0 %v2310
  %2393 = vmatprep.subr.mxu0 0.0
  %2394 = vmatpush1.msra.mxu0 %v2311
  %2395 = vmatprep.subr.mxu0 0.0
  %2396 = vmatpush1.msra.mxu0 %v2312
  %2397 = vmatprep.subr.mxu0 0.0
  %2398 = vmatpush1.msra.mxu0 %v2313
  %2399 = vmatprep.subr.mxu0 0.0
  %2400 = vmatpush1.msra.mxu0 %v2314
  %2401 = vmatprep.subr.mxu0 0.0
  %2402 = vmatpush1.msra.mxu0 %v2315
  %2403 = vmatprep.subr.mxu0 0.0
  %2404 = vmatpush1.msra.mxu0 %v2316
  %2405 = vmatprep.subr.mxu0 0.0
  %2406 = vmatpush1.msra.mxu0 %v2317
  %2407 = vmatprep.subr.mxu0 0.0
  %2408 = vmatpush1.msra.mxu0 %v2318
  %2409 = vmatprep.subr.mxu0 0.0
  %2410 = vmatpush1.msra.mxu0 %v2319
  %2411 = vmatprep.subr.mxu0 0.0
  %2412 = vmatpush1.msra.mxu0 %v2320
  %2413 = vmatprep.subr.mxu0 0.0
  %2414 = vmatpush1.msra.mxu0 %v2321
  %2415 = vmatprep.subr.mxu0 0.0
  %2416 = vmatpush1.msra.mxu0 %v2322
  %2417 = vmatprep.subr.mxu0 0.0
  %2418 = vmatpush1.msra.mxu0 %v2323
  %2419 = vmatprep.subr.mxu0 0.0
  %2420 = vmatpush1.msra.mxu0 %v2324
  %2421 = vmatprep.subr.mxu0 0.0
  %2422 = vmatpush1.msra.mxu0 %v2325
  %2423 = vmatprep.subr.mxu0 0.0
  %2424 = vmatpush1.msra.mxu0 %v2326
  %2425 = vmatprep.subr.mxu0 0.0
  %2426 = vmatpush1.msra.mxu0 %v2327
  %2427 = vmatprep.subr.mxu0 0.0
  %2428 = vmatpush1.msra.mxu0 %v2328
  %2429 = vmatprep.subr.mxu0 0.0
  %2430 = vmatpush1.msra.mxu0 %v2329
  %2431 = vmatprep.subr.mxu0 0.0
  %2432 = vmatpush1.msra.mxu0 %v2330
  %2433 = vmatprep.subr.mxu0 0.0
  %2434 = vmatpush1.msra.mxu0 %v2331
  %2435 = vmatprep.mubr.f32.mxu0 %v2297
  %2436 = vmatmul.mubr.f32.gmra.mrb[0].mxu0 %v2296
  %v2437 = vpop.f32.mrb[0].mxu0
  %v2438 = vadd.f32 %v2369, %v2437
  %v2439 = vpop.f32.mrb[0].mxu0
  %2440 = vdwg.mxu0
  %2441 = vmatprep.subr.mxu0 0.0
  %2442 = vmatpush1.msra.mxu0 %v2332
  %2443 = vmatprep.subr.mxu0 0.0
  %2444 = vmatpush1.msra.mxu0 %v2333
  %2445 = vmatprep.subr.mxu0 0.0
  %2446 = vmatpush1.msra.mxu0 %v2334
  %2447 = vmatprep.subr.mxu0 0.0
  %2448 = vmatpush1.msra.mxu0 %v2335
  %2449 = vmatprep.subr.mxu0 0.0
  %2450 = vmatpush1.msra.mxu0 %v2336
  %2451 = vmatprep.subr.mxu0 0.0
  %2452 = vmatpush1.msra.mxu0 %v2337
  %2453 = vmatprep.subr.mxu0 0.0
  %2454 = vmatpush1.msra.mxu0 %v2338
  %2455 = vmatprep.subr.mxu0 0.0
  %2456 = vmatpush1.msra.mxu0 %v2339
  %2457 = vmatprep.subr.mxu0 0.0
  %2458 = vmatpush1.msra.mxu0 %v2340
  %2459 = vmatprep.subr.mxu0 0.0
  %2460 = vmatpush1.msra.mxu0 %v2341
  %2461 = vmatprep.subr.mxu0 0.0
  %2462 = vmatpush1.msra.mxu0 %v2342
  %2463 = vmatprep.subr.mxu0 0.0
  %2464 = vmatpush1.msra.mxu0 %v2343
  %2465 = vmatprep.subr.mxu0 0.0
  %2466 = vmatpush1.msra.mxu0 %v2344
  %2467 = vmatprep.subr.mxu0 0.0
  %2468 = vmatpush1.msra.mxu0 %v2345
  %2469 = vmatprep.subr.mxu0 0.0
  %2470 = vmatpush1.msra.mxu0 %v2346
  %2471 = vmatprep.subr.mxu0 0.0
  %2472 = vmatpush1.msra.mxu0 %v2347
  %2473 = vmatprep.subr.mxu0 0.0
  %2474 = vmatpush1.msra.mxu0 %v2348
  %2475 = vmatprep.subr.mxu0 0.0
  %2476 = vmatpush1.msra.mxu0 %v2349
  %2477 = vmatprep.subr.mxu0 0.0
  %2478 = vmatpush1.msra.mxu0 %v2350
  %2479 = vmatprep.subr.mxu0 0.0
  %2480 = vmatpush1.msra.mxu0 %v2351
  %2481 = vmatprep.subr.mxu0 0.0
  %2482 = vmatpush1.msra.mxu0 %v2352
  %2483 = vmatprep.subr.mxu0 0.0
  %2484 = vmatpush1.msra.mxu0 %v2353
  %2485 = vmatprep.subr.mxu0 0.0
  %2486 = vmatpush1.msra.mxu0 %v2354
  %2487 = vmatprep.subr.mxu0 0.0
  %2488 = vmatpush1.msra.mxu0 %v2355
  %2489 = vmatprep.subr.mxu0 0.0
  %2490 = vmatpush1.msra.mxu0 %v2356
  %2491 = vmatprep.subr.mxu0 0.0
  %2492 = vmatpush1.msra.mxu0 %v2357
  %2493 = vmatprep.subr.mxu0 0.0
  %2494 = vmatpush1.msra.mxu0 %v2358
  %2495 = vmatprep.subr.mxu0 0.0
  %2496 = vmatpush1.msra.mxu0 %v2359
  %2497 = vmatprep.subr.mxu0 0.0
  %2498 = vmatpush1.msra.mxu0 %v2360
  %2499 = vmatprep.subr.mxu0 0.0
  %2500 = vmatpush1.msra.mxu0 %v2361
  %2501 = vmatprep.subr.mxu0 0.0
  %2502 = vmatpush1.msra.mxu0 %v2362
  %2503 = vmatprep.subr.mxu0 0.0
  %2504 = vmatpush1.msra.mxu0 %v2363
  %2505 = vmatprep.mubr.f32.mxu0 %v2299
  %2506 = vmatmul.mubr.f32.gmra.mrb[0].mxu0 %v2298
  %v2507 = vpop.f32.mrb[0].mxu0
  %v2508 = vadd.f32 %v2438, %v2507
  %v2509 = vpop.f32.mrb[0].mxu0
  %2510 = vdwg.mxu0
  %vm2511 = vcmask 1024
  %2512 = vst.msk [vmem:[%s5] sm:$0x3] %vm2511, %v2508
  // Predicated region
  $region22: #{net_lstm_forward.7} parent=0 // pred_check
    _
  $region23: #{net_lstm_forward.7} parent=0 // pred_check_branch
    %2514 = sbr.rel (0) target = $region25
  $region24: #{net_lstm_forward.7} parent=0 // pred_region
    _
  $region25: #{net_lstm_forward.7} parent=0 // pred_fallthru
    _
  // Predicated region
  $region26: #{net_lstm_forward.7} parent=0 // pred_check
    _
  $region27: #{net_lstm_forward.7} parent=0 // pred_check_branch
    %2516 = sbr.rel (0) target = $region29
  $region28: #{net_lstm_forward.7} parent=0 // pred_region
    _
  $region29: #{net_lstm_forward.7} parent=0 // pred_fallthru
    _

</llo_original>
